<compile_context>
chip_gen: v6e
topology: v6e:2x2x1
jax: 0.10.0
libtpu: 0.0.40
codegen_flags: <defaults>
</compile_context>

<pallas_src>
import functools

import jax
import jax.numpy as jnp
from jax.experimental import pallas as pl
from jax.experimental.pallas import tpu as pltpu

P = 9          # 3x3 spatial positions
C = 512        # conv channels / fc hidden width
OUT = 4        # output actions
OUT_PAD = 128  # lane-dense padded output width


def dqn_kernel(x_ref, w1_ref, b1_ref, w2_ref, b2_ref,
               wfc1_ref, bfc1_ref, wfc3_ref, bfc3_ref, o_ref):
    # x_ref: (1, P*TB, 1) f32, position-major within the tile
    # (row p*TB + j  <->  position p of sample j of this tile).
    tb = x_ref.shape[1] // P
    x = x_ref[0]                                                     # (P*TB, 1) f32

    # conv1 (1x1, in_channels=1): broadcast outer product + bias, relu (f32 VPU).
    h1 = jnp.maximum(x * w1_ref[...] + b1_ref[...], 0.0)             # (P*TB, C) f32

    # conv2 (1x1): one full-height MXU matmul, bf16 operands, f32 accumulation.
    h2 = jnp.maximum(
        jnp.dot(h1.astype(jnp.bfloat16), w2_ref[...],
                preferred_element_type=jnp.float32) + b2_ref[...], 0.0)  # (P*TB, C)

    # fc1: accumulate over the P spatial positions. Row block p of wfc1 holds
    # the (pre-permuted) weights for position p, so this reproduces PyTorch's
    # channel-major flatten with no scratch and no relayout.
    acc = jnp.zeros((tb, C), jnp.float32)
    for p in range(P):                                               # unrolled, 9 full-M matmuls
        acc = acc + jnp.dot(
            h2[p * tb:(p + 1) * tb, :].astype(jnp.bfloat16),
            wfc1_ref[p * C:(p + 1) * C, :],
            preferred_element_type=jnp.float32)
    h3 = jnp.maximum(acc + bfc1_ref[...], 0.0)                       # (TB, C) f32

    # fc3 head (padded to OUT_PAD lanes -> dense stores; wrapper slices to OUT).
    o_ref[...] = (jnp.dot(h3.astype(jnp.bfloat16), wfc3_ref[...],
                          preferred_element_type=jnp.float32)
                  + bfc3_ref[...])                                   # (TB, OUT_PAD)


def pack_params(raw):
    """Convert PyTorch-layout parameters into kernel-friendly (bf16) layouts."""
    conv1_w, conv1_b, conv2_w, conv2_b, fc1_w, fc1_b, fc3_w, fc3_b = raw
    w1 = conv1_w.reshape(C)[None, :].astype(jnp.float32)        # (1, C)        f32
    b1 = conv1_b[None, :].astype(jnp.float32)                   # (1, C)        f32
    w2 = conv2_w.reshape(C, C).T.astype(jnp.bfloat16)           # (Cin, Cout)   bf16
    b2 = conv2_b[None, :].astype(jnp.float32)                   # (1, C)        f32
    # fc1_w is (Cout, Cin*P) with flat column index c*P + p (torch .view order).
    # Reorder to row index p*C + c so per-position row blocks feed the fc1 sum.
    wfc1 = (fc1_w.reshape(C, C, P).transpose(2, 1, 0)
            .reshape(P * C, C).astype(jnp.bfloat16))            # (P*C, Cout)   bf16
    bfc1 = fc1_b[None, :].astype(jnp.float32)                   # (1, C)        f32
    wfc3 = jnp.zeros((C, OUT_PAD), jnp.bfloat16).at[:, :OUT].set(
        fc3_w.T.astype(jnp.bfloat16))                           # (C, OUT_PAD)  bf16
    bfc3 = jnp.zeros((1, OUT_PAD), jnp.float32).at[0, :OUT].set(
        fc3_b.astype(jnp.float32))                              # (1, OUT_PAD)  f32
    return w1, b1, w2, b2, wfc1, bfc1, wfc3, bfc3


def _round_up(n, m):
    return ((n + m - 1) // m) * m


@functools.partial(jax.jit, static_argnames=("max_tb",))
def dqn_forward(x, packed, max_tb=128):
    """x: (B, 1, 3, 3) NCHW.  B=1 reproduces the nn.Module forward exactly;
    B>1 processes each state independently with the weights VMEM-resident and
    the samples packed into the MXU M dimension.
    max_tb: samples per grid step (128 fills the v5e MXU; use 256 on v6e/v7x)."""
    w1, b1, w2, b2, wfc1, bfc1, wfc3, bfc3 = packed
    B = x.shape[0]
    tb = min(max_tb, _round_up(B, 8))
    b_pad = _round_up(B, tb)
    nb = b_pad // tb

    # Build the tile-major, position-major input slab in the wrapper (plain
    # JAX; zero in-kernel relayout): (nb, P*tb, 1), where row p*tb + j of tile
    # i is spatial position p of sample i*tb + j.
    xp = x.reshape(B, P)                                        # row-major over (H, W)
    xp = jnp.pad(xp, ((0, b_pad - B), (0, 0)))                  # (B_pad, P)
    xp = xp.reshape(nb, tb, P).transpose(0, 2, 1).reshape(nb, P * tb, 1)

    const = lambda i: (0, 0)
    grid_spec = pltpu.PrefetchScalarGridSpec(
        num_scalar_prefetch=0,
        grid=(nb,),
        in_specs=[
            pl.BlockSpec((1, P * tb, 1), lambda i: (i, 0, 0)),  # x tile (per step)
            pl.BlockSpec((1, C), const),                        # w1   (f32)
            pl.BlockSpec((1, C), const),                        # b1
            pl.BlockSpec((C, C), const),                        # w2   (bf16)
            pl.BlockSpec((1, C), const),                        # b2
            pl.BlockSpec((P * C, C), const),                    # wfc1 (bf16)
            pl.BlockSpec((1, C), const),                        # bfc1
            pl.BlockSpec((C, OUT_PAD), const),                  # wfc3 (bf16, padded)
            pl.BlockSpec((1, OUT_PAD), const),                  # bfc3 (padded)
        ],
        out_specs=pl.BlockSpec((tb, OUT_PAD), lambda i: (i, 0)),
    )

    # conv1 + conv2 + fc1 + fc3 (MAC-counted); weights counted once.
    flops = b_pad * (2 * P * C + 4 * P * C * C + 2 * C * OUT_PAD)
    weight_bytes = (C * C + P * C * C + C * OUT_PAD) * 2 + (4 * C + OUT_PAD) * 4
    io_bytes = b_pad * (P + OUT_PAD) * 4

    out = pl.pallas_call(
        dqn_kernel,
        out_shape=jax.ShapeDtypeStruct((b_pad, OUT_PAD), jnp.float32),
        grid_spec=grid_spec,
        compiler_params=pltpu.CompilerParams(
            dimension_semantics=("parallel",),
            vmem_limit_bytes=32 << 20,
        ),
        cost_estimate=pl.CostEstimate(
            flops=int(flops),
            transcendentals=0,
            bytes_accessed=int(weight_bytes + io_bytes),
        ),
    )(xp, w1, b1, w2, b2, wfc1, bfc1, wfc3, bfc3)
    return out[:B, :OUT]


def init_params(key):
    """Deterministic synthetic parameters matching nn.Module shapes (PyTorch layout)."""
    ks = jax.random.split(key, 8)
    conv1_w = jax.random.normal(ks[0], (C, 1, 1, 1), jnp.float32) * 0.05
    conv1_b = jax.random.normal(ks[1], (C,), jnp.float32) * 0.05
    conv2_w = jax.random.normal(ks[2], (C, C, 1, 1), jnp.float32) * 0.02
    conv2_b = jax.random.normal(ks[3], (C,), jnp.float32) * 0.02
    fc1_w = jax.random.normal(ks[4], (C, C * P), jnp.float32) * 0.01
    fc1_b = jax.random.normal(ks[5], (C,), jnp.float32) * 0.01
    fc3_w = jax.random.normal(ks[6], (OUT, C), jnp.float32) * 0.02
    fc3_b = jax.random.normal(ks[7], (OUT,), jnp.float32) * 0.02
    return conv1_w, conv1_b, conv2_w, conv2_b, fc1_w, fc1_b, fc3_w, fc3_b


def dqn_reference(x, raw):
    """Pure-JAX f32 replica of the PyTorch forward (NCHW, channel-major flatten)."""
    conv1_w, conv1_b, conv2_w, conv2_b, fc1_w, fc1_b, fc3_w, fc3_b = raw
    hp = jax.lax.Precision.HIGHEST
    h = jax.nn.relu(jnp.einsum('nchw,oc->nohw', x, conv1_w[:, :, 0, 0], precision=hp)
                    + conv1_b[None, :, None, None])
    h = jax.nn.relu(jnp.einsum('nchw,oc->nohw', h, conv2_w[:, :, 0, 0], precision=hp)
                    + conv2_b[None, :, None, None])
    flat = h.reshape(x.shape[0], C * P)                         # channel-major, as torch .view
    h = jax.nn.relu(jnp.dot(flat, fc1_w.T, precision=hp) + fc1_b)
    return jnp.dot(h, fc3_w.T, precision=hp) + fc3_b


if __name__ == "__main__":
    key = jax.random.PRNGKey(0)
    kx, kp, kb = jax.random.split(key, 3)
    raw = init_params(kp)
    packed = pack_params(raw)

    # Exact module semantics: batch=1, in_channels=1, 3x3 board (view(1, 512*9)).
    x1 = jax.random.normal(kx, (1, 1, 3, 3), jnp.float32)
    out1 = jax.block_until_ready(dqn_forward(x1, packed))
    ref1 = dqn_reference(x1, raw)
    assert out1.shape == (1, OUT)
    assert jnp.allclose(out1, ref1, atol=5e-3, rtol=5e-2), (out1, ref1)

    # Batched states: weights DMA'd once per call, samples packed into the MXU
    # M dimension (per-sample semantics identical to the module's forward).
    xb = jax.random.normal(kb, (32, 1, 3, 3), jnp.float32)
    outb = jax.block_until_ready(dqn_forward(xb, packed))
    refb = dqn_reference(xb, raw)
    assert outb.shape == (32, OUT)
    assert jnp.allclose(outb, refb, atol=5e-3, rtol=5e-2), (outb, refb)

    print("KERNEL_OK")
</pallas_src>

<mosaic_0001>
module attributes {stable_mosaic.version = 11 : i64} {
  func.func @dqn_kernel(%arg0: i32, %arg1: memref<1x72x1xf32, #tpu.memory_space<vmem>>, %arg2: memref<1x512xf32, #tpu.memory_space<vmem>>, %arg3: memref<1x512xf32, #tpu.memory_space<vmem>>, %arg4: memref<512x512xbf16, #tpu.memory_space<vmem>>, %arg5: memref<1x512xf32, #tpu.memory_space<vmem>>, %arg6: memref<4608x512xbf16, #tpu.memory_space<vmem>>, %arg7: memref<1x512xf32, #tpu.memory_space<vmem>>, %arg8: memref<512x128xbf16, #tpu.memory_space<vmem>>, %arg9: memref<1x128xf32, #tpu.memory_space<vmem>>, %arg10: memref<8x128xf32, #tpu.memory_space<vmem>>) attributes {dimension_semantics = [#tpu.dimension_semantics<parallel>], iteration_bounds = array<i64: 1>, scalar_prefetch = 0 : i64, scratch_operands = 0 : i64, tpu.core_type = #tpu.core_type<tc>, window_params = [{transform_indices = @transform_0, window_bounds = array<i64: 1, 72, 1>}, {pipeline_mode = #tpu.pipeline_mode<synchronous>, transform_indices = @transform_1, window_bounds = array<i64: 1, 512>}, {pipeline_mode = #tpu.pipeline_mode<synchronous>, transform_indices = @transform_2, window_bounds = array<i64: 1, 512>}, {pipeline_mode = #tpu.pipeline_mode<synchronous>, transform_indices = @transform_3, window_bounds = array<i64: 512, 512>}, {pipeline_mode = #tpu.pipeline_mode<synchronous>, transform_indices = @transform_4, window_bounds = array<i64: 1, 512>}, {pipeline_mode = #tpu.pipeline_mode<synchronous>, transform_indices = @transform_5, window_bounds = array<i64: 4608, 512>}, {pipeline_mode = #tpu.pipeline_mode<synchronous>, transform_indices = @transform_6, window_bounds = array<i64: 1, 512>}, {pipeline_mode = #tpu.pipeline_mode<synchronous>, transform_indices = @transform_7, window_bounds = array<i64: 512, 128>}, {pipeline_mode = #tpu.pipeline_mode<synchronous>, transform_indices = @transform_8, window_bounds = array<i64: 1, 128>}, {transform_indices = @transform_9, window_bounds = array<i64: 8, 128>}]} {
    %c0 = arith.constant 0 : index
    %c0_0 = arith.constant 0 : index
    %c0_1 = arith.constant 0 : index
    %0 = vector.load %arg1[%c0, %c0_0, %c0_1] : memref<1x72x1xf32, #tpu.memory_space<vmem>>, vector<1x72x1xf32>
    %1 = vector.shape_cast %0 : vector<1x72x1xf32> to vector<72x1xf32>
    %c0_2 = arith.constant 0 : index
    %c0_3 = arith.constant 0 : index
    %2 = vector.load %arg2[%c0_2, %c0_3] : memref<1x512xf32, #tpu.memory_space<vmem>>, vector<1x512xf32>
    %3 = vector.broadcast %1 : vector<72x1xf32> to vector<72x512xf32>
    %4 = vector.broadcast %2 : vector<1x512xf32> to vector<72x512xf32>
    %5 = arith.mulf %3, %4 : vector<72x512xf32>
    %c0_4 = arith.constant 0 : index
    %c0_5 = arith.constant 0 : index
    %6 = vector.load %arg3[%c0_4, %c0_5] : memref<1x512xf32, #tpu.memory_space<vmem>>, vector<1x512xf32>
    %7 = vector.broadcast %6 : vector<1x512xf32> to vector<72x512xf32>
    %8 = arith.addf %5, %7 : vector<72x512xf32>
    %cst = arith.constant 0.000000e+00 : f32
    %9 = vector.broadcast %cst : f32 to vector<72x512xf32>
    %10 = arith.maximumf %8, %9 : vector<72x512xf32>
    %11 = arith.truncf %10 : vector<72x512xf32> to vector<72x512xbf16>
    %c0_6 = arith.constant 0 : index
    %c0_7 = arith.constant 0 : index
    %12 = vector.load %arg4[%c0_6, %c0_7] : memref<512x512xbf16, #tpu.memory_space<vmem>>, vector<512x512xbf16>
    %cst_8 = arith.constant dense<0.000000e+00> : vector<72x512xf32>
    %13 = tpu.matmul %11, %12, %cst_8 {dimension_numbers = #tpu.dot_dimension_numbers<[1], [0], [0], [1], [0, 0, 1, 1], [], []>} : vector<72x512xbf16>, vector<512x512xbf16>, vector<72x512xf32> -> vector<72x512xf32>
    %c0_9 = arith.constant 0 : index
    %c0_10 = arith.constant 0 : index
    %14 = vector.load %arg5[%c0_9, %c0_10] : memref<1x512xf32, #tpu.memory_space<vmem>>, vector<1x512xf32>
    %15 = vector.broadcast %14 : vector<1x512xf32> to vector<72x512xf32>
    %16 = arith.addf %13, %15 : vector<72x512xf32>
    %cst_11 = arith.constant 0.000000e+00 : f32
    %17 = vector.broadcast %cst_11 : f32 to vector<72x512xf32>
    %18 = arith.maximumf %16, %17 : vector<72x512xf32>
    %cst_12 = arith.constant 0.000000e+00 : f32
    %19 = vector.broadcast %cst_12 : f32 to vector<8x512xf32>
    %20 = vector.extract_strided_slice %18 {offsets = [0, 0], sizes = [8, 512], strides = [1, 1]} : vector<72x512xf32> to vector<8x512xf32>
    %21 = arith.truncf %20 : vector<8x512xf32> to vector<8x512xbf16>
    %c0_13 = arith.constant 0 : index
    %c0_14 = arith.constant 0 : index
    %22 = vector.load %arg6[%c0_13, %c0_14] : memref<4608x512xbf16, #tpu.memory_space<vmem>>, vector<512x512xbf16>
    %cst_15 = arith.constant dense<0.000000e+00> : vector<8x512xf32>
    %23 = tpu.matmul %21, %22, %cst_15 {dimension_numbers = #tpu.dot_dimension_numbers<[1], [0], [0], [1], [0, 0, 1, 1], [], []>} : vector<8x512xbf16>, vector<512x512xbf16>, vector<8x512xf32> -> vector<8x512xf32>
    %24 = arith.addf %19, %23 : vector<8x512xf32>
    %25 = vector.extract_strided_slice %18 {offsets = [8, 0], sizes = [8, 512], strides = [1, 1]} : vector<72x512xf32> to vector<8x512xf32>
    %26 = arith.truncf %25 : vector<8x512xf32> to vector<8x512xbf16>
    %c512 = arith.constant 512 : index
    %c0_16 = arith.constant 0 : index
    %27 = vector.load %arg6[%c512, %c0_16] : memref<4608x512xbf16, #tpu.memory_space<vmem>>, vector<512x512xbf16>
    %cst_17 = arith.constant dense<0.000000e+00> : vector<8x512xf32>
    %28 = tpu.matmul %26, %27, %cst_17 {dimension_numbers = #tpu.dot_dimension_numbers<[1], [0], [0], [1], [0, 0, 1, 1], [], []>} : vector<8x512xbf16>, vector<512x512xbf16>, vector<8x512xf32> -> vector<8x512xf32>
    %29 = arith.addf %24, %28 : vector<8x512xf32>
    %30 = vector.extract_strided_slice %18 {offsets = [16, 0], sizes = [8, 512], strides = [1, 1]} : vector<72x512xf32> to vector<8x512xf32>
    %31 = arith.truncf %30 : vector<8x512xf32> to vector<8x512xbf16>
    %c1024 = arith.constant 1024 : index
    %c0_18 = arith.constant 0 : index
    %32 = vector.load %arg6[%c1024, %c0_18] : memref<4608x512xbf16, #tpu.memory_space<vmem>>, vector<512x512xbf16>
    %cst_19 = arith.constant dense<0.000000e+00> : vector<8x512xf32>
    %33 = tpu.matmul %31, %32, %cst_19 {dimension_numbers = #tpu.dot_dimension_numbers<[1], [0], [0], [1], [0, 0, 1, 1], [], []>} : vector<8x512xbf16>, vector<512x512xbf16>, vector<8x512xf32> -> vector<8x512xf32>
    %34 = arith.addf %29, %33 : vector<8x512xf32>
    %35 = vector.extract_strided_slice %18 {offsets = [24, 0], sizes = [8, 512], strides = [1, 1]} : vector<72x512xf32> to vector<8x512xf32>
    %36 = arith.truncf %35 : vector<8x512xf32> to vector<8x512xbf16>
    %c1536 = arith.constant 1536 : index
    %c0_20 = arith.constant 0 : index
    %37 = vector.load %arg6[%c1536, %c0_20] : memref<4608x512xbf16, #tpu.memory_space<vmem>>, vector<512x512xbf16>
    %cst_21 = arith.constant dense<0.000000e+00> : vector<8x512xf32>
    %38 = tpu.matmul %36, %37, %cst_21 {dimension_numbers = #tpu.dot_dimension_numbers<[1], [0], [0], [1], [0, 0, 1, 1], [], []>} : vector<8x512xbf16>, vector<512x512xbf16>, vector<8x512xf32> -> vector<8x512xf32>
    %39 = arith.addf %34, %38 : vector<8x512xf32>
    %40 = vector.extract_strided_slice %18 {offsets = [32, 0], sizes = [8, 512], strides = [1, 1]} : vector<72x512xf32> to vector<8x512xf32>
    %41 = arith.truncf %40 : vector<8x512xf32> to vector<8x512xbf16>
    %c2048 = arith.constant 2048 : index
    %c0_22 = arith.constant 0 : index
    %42 = vector.load %arg6[%c2048, %c0_22] : memref<4608x512xbf16, #tpu.memory_space<vmem>>, vector<512x512xbf16>
    %cst_23 = arith.constant dense<0.000000e+00> : vector<8x512xf32>
    %43 = tpu.matmul %41, %42, %cst_23 {dimension_numbers = #tpu.dot_dimension_numbers<[1], [0], [0], [1], [0, 0, 1, 1], [], []>} : vector<8x512xbf16>, vector<512x512xbf16>, vector<8x512xf32> -> vector<8x512xf32>
    %44 = arith.addf %39, %43 : vector<8x512xf32>
    %45 = vector.extract_strided_slice %18 {offsets = [40, 0], sizes = [8, 512], strides = [1, 1]} : vector<72x512xf32> to vector<8x512xf32>
    %46 = arith.truncf %45 : vector<8x512xf32> to vector<8x512xbf16>
    %c2560 = arith.constant 2560 : index
    %c0_24 = arith.constant 0 : index
    %47 = vector.load %arg6[%c2560, %c0_24] : memref<4608x512xbf16, #tpu.memory_space<vmem>>, vector<512x512xbf16>
    %cst_25 = arith.constant dense<0.000000e+00> : vector<8x512xf32>
    %48 = tpu.matmul %46, %47, %cst_25 {dimension_numbers = #tpu.dot_dimension_numbers<[1], [0], [0], [1], [0, 0, 1, 1], [], []>} : vector<8x512xbf16>, vector<512x512xbf16>, vector<8x512xf32> -> vector<8x512xf32>
    %49 = arith.addf %44, %48 : vector<8x512xf32>
    %50 = vector.extract_strided_slice %18 {offsets = [48, 0], sizes = [8, 512], strides = [1, 1]} : vector<72x512xf32> to vector<8x512xf32>
    %51 = arith.truncf %50 : vector<8x512xf32> to vector<8x512xbf16>
    %c3072 = arith.constant 3072 : index
    %c0_26 = arith.constant 0 : index
    %52 = vector.load %arg6[%c3072, %c0_26] : memref<4608x512xbf16, #tpu.memory_space<vmem>>, vector<512x512xbf16>
    %cst_27 = arith.constant dense<0.000000e+00> : vector<8x512xf32>
    %53 = tpu.matmul %51, %52, %cst_27 {dimension_numbers = #tpu.dot_dimension_numbers<[1], [0], [0], [1], [0, 0, 1, 1], [], []>} : vector<8x512xbf16>, vector<512x512xbf16>, vector<8x512xf32> -> vector<8x512xf32>
    %54 = arith.addf %49, %53 : vector<8x512xf32>
    %55 = vector.extract_strided_slice %18 {offsets = [56, 0], sizes = [8, 512], strides = [1, 1]} : vector<72x512xf32> to vector<8x512xf32>
    %56 = arith.truncf %55 : vector<8x512xf32> to vector<8x512xbf16>
    %c3584 = arith.constant 3584 : index
    %c0_28 = arith.constant 0 : index
    %57 = vector.load %arg6[%c3584, %c0_28] : memref<4608x512xbf16, #tpu.memory_space<vmem>>, vector<512x512xbf16>
    %cst_29 = arith.constant dense<0.000000e+00> : vector<8x512xf32>
    %58 = tpu.matmul %56, %57, %cst_29 {dimension_numbers = #tpu.dot_dimension_numbers<[1], [0], [0], [1], [0, 0, 1, 1], [], []>} : vector<8x512xbf16>, vector<512x512xbf16>, vector<8x512xf32> -> vector<8x512xf32>
    %59 = arith.addf %54, %58 : vector<8x512xf32>
    %60 = vector.extract_strided_slice %18 {offsets = [64, 0], sizes = [8, 512], strides = [1, 1]} : vector<72x512xf32> to vector<8x512xf32>
    %61 = arith.truncf %60 : vector<8x512xf32> to vector<8x512xbf16>
    %c4096 = arith.constant 4096 : index
    %c0_30 = arith.constant 0 : index
    %62 = vector.load %arg6[%c4096, %c0_30] : memref<4608x512xbf16, #tpu.memory_space<vmem>>, vector<512x512xbf16>
    %cst_31 = arith.constant dense<0.000000e+00> : vector<8x512xf32>
    %63 = tpu.matmul %61, %62, %cst_31 {dimension_numbers = #tpu.dot_dimension_numbers<[1], [0], [0], [1], [0, 0, 1, 1], [], []>} : vector<8x512xbf16>, vector<512x512xbf16>, vector<8x512xf32> -> vector<8x512xf32>
    %64 = arith.addf %59, %63 : vector<8x512xf32>
    %c0_32 = arith.constant 0 : index
    %c0_33 = arith.constant 0 : index
    %65 = vector.load %arg7[%c0_32, %c0_33] : memref<1x512xf32, #tpu.memory_space<vmem>>, vector<1x512xf32>
    %66 = vector.broadcast %65 : vector<1x512xf32> to vector<8x512xf32>
    %67 = arith.addf %64, %66 : vector<8x512xf32>
    %cst_34 = arith.constant 0.000000e+00 : f32
    %68 = vector.broadcast %cst_34 : f32 to vector<8x512xf32>
    %69 = arith.maximumf %67, %68 : vector<8x512xf32>
    %70 = arith.truncf %69 : vector<8x512xf32> to vector<8x512xbf16>
    %c0_35 = arith.constant 0 : index
    %c0_36 = arith.constant 0 : index
    %71 = vector.load %arg8[%c0_35, %c0_36] : memref<512x128xbf16, #tpu.memory_space<vmem>>, vector<512x128xbf16>
    %cst_37 = arith.constant dense<0.000000e+00> : vector<8x128xf32>
    %72 = tpu.matmul %70, %71, %cst_37 {dimension_numbers = #tpu.dot_dimension_numbers<[1], [0], [0], [1], [0, 0, 1, 1], [], []>} : vector<8x512xbf16>, vector<512x128xbf16>, vector<8x128xf32> -> vector<8x128xf32>
    %c0_38 = arith.constant 0 : index
    %c0_39 = arith.constant 0 : index
    %73 = vector.load %arg9[%c0_38, %c0_39] : memref<1x128xf32, #tpu.memory_space<vmem>>, vector<1x128xf32>
    %74 = vector.broadcast %73 : vector<1x128xf32> to vector<8x128xf32>
    %75 = arith.addf %72, %74 : vector<8x128xf32>
    %c0_40 = arith.constant 0 : index
    %c0_41 = arith.constant 0 : index
    %76 = vector.load %arg10[%c0_40, %c0_41] : memref<8x128xf32, #tpu.memory_space<vmem>>, vector<8x128xf32>
    tpu.vector_store %arg10[%c0_40, %c0_41], %75 {strides = array<i32>} : memref<8x128xf32, #tpu.memory_space<vmem>>, vector<8x128xf32>,
    return
  }
  func.func @transform_0(%arg0: i32) -> (i32, i32, i32) {
    %c0_i32 = arith.constant 0 : i32
    %c0_i32_0 = arith.constant 0 : i32
    %c0_i32_1 = arith.constant 0 : i32
    return %arg0, %c0_i32, %c0_i32_0 : i32, i32, i32
  }
  func.func @transform_1(%arg0: i32) -> (i32, i32) {
    %c0_i32 = arith.constant 0 : i32
    %c0_i32_0 = arith.constant 0 : i32
    %c0_i32_1 = arith.constant 0 : i32
    return %c0_i32, %c0_i32_0 : i32, i32
  }
  func.func @transform_2(%arg0: i32) -> (i32, i32) {
    %c0_i32 = arith.constant 0 : i32
    %c0_i32_0 = arith.constant 0 : i32
    %c0_i32_1 = arith.constant 0 : i32
    return %c0_i32, %c0_i32_0 : i32, i32
  }
  func.func @transform_3(%arg0: i32) -> (i32, i32) {
    %c0_i32 = arith.constant 0 : i32
    %c0_i32_0 = arith.constant 0 : i32
    %c0_i32_1 = arith.constant 0 : i32
    return %c0_i32, %c0_i32_0 : i32, i32
  }
  func.func @transform_4(%arg0: i32) -> (i32, i32) {
    %c0_i32 = arith.constant 0 : i32
    %c0_i32_0 = arith.constant 0 : i32
    %c0_i32_1 = arith.constant 0 : i32
    return %c0_i32, %c0_i32_0 : i32, i32
  }
  func.func @transform_5(%arg0: i32) -> (i32, i32) {
    %c0_i32 = arith.constant 0 : i32
    %c0_i32_0 = arith.constant 0 : i32
    %c0_i32_1 = arith.constant 0 : i32
    return %c0_i32, %c0_i32_0 : i32, i32
  }
  func.func @transform_6(%arg0: i32) -> (i32, i32) {
    %c0_i32 = arith.constant 0 : i32
    %c0_i32_0 = arith.constant 0 : i32
    %c0_i32_1 = arith.constant 0 : i32
    return %c0_i32, %c0_i32_0 : i32, i32
  }
  func.func @transform_7(%arg0: i32) -> (i32, i32) {
    %c0_i32 = arith.constant 0 : i32
    %c0_i32_0 = arith.constant 0 : i32
    %c0_i32_1 = arith.constant 0 : i32
    return %c0_i32, %c0_i32_0 : i32, i32
  }
  func.func @transform_8(%arg0: i32) -> (i32, i32) {
    %c0_i32 = arith.constant 0 : i32
    %c0_i32_0 = arith.constant 0 : i32
    %c0_i32_1 = arith.constant 0 : i32
    return %c0_i32, %c0_i32_0 : i32, i32
  }
  func.func @transform_9(%arg0: i32) -> (i32, i32) {
    %c0_i32 = arith.constant 0 : i32
    %c0_i32_0 = arith.constant 0 : i32
    return %arg0, %c0_i32 : i32, i32
  }
}

</mosaic_0001>

<llo_original>
// kernel: dqn_forward.1
$region0: #{dqn_forward.1}
  #allocation0 [shape = 'u32[]', space=smem, size = 0x4, offset = 0x4, fixed_abs, tag = 'smem constant byte address 0x4 - core index']
  #allocation1 [shape = 'u32[144,128]{1,0:T(1,128)}', space=vmem, size = 0x12000, scoped, tag = 'internal scratch']
  %s0 = inlined_call_operand.vmem [shape: f32[1,72,1], index: 0, kind: input, shape index: {}]
  %s1 = inlined_call_operand.hbm [shape: f32[1,512], index: 1, kind: input, shape index: {}]
  %s2 = inlined_call_operand.hbm [shape: f32[1,512], index: 2, kind: input, shape index: {}]
  %s3 = inlined_call_operand.hbm [shape: bf16[512,512], index: 3, kind: input, shape index: {}]
  %s4 = inlined_call_operand.hbm [shape: f32[1,512], index: 4, kind: input, shape index: {}]
  %s5 = inlined_call_operand.hbm [shape: bf16[4608,512], index: 5, kind: input, shape index: {}]
  %s6 = inlined_call_operand.hbm [shape: f32[1,512], index: 6, kind: input, shape index: {}]
  %s7 = inlined_call_operand.hbm [shape: bf16[512,128], index: 7, kind: input, shape index: {}]
  %s8 = inlined_call_operand.hbm [shape: f32[1,128], index: 8, kind: input, shape index: {}]
  %s9 = inlined_call_operand.vmem [shape: f32[8,128], index: 9, kind: output, shape index: {}]
  %s10 = sld [smem:[#allocation0]]
  $region78: #{dqn_forward.1} parent=0
    _
  %s12 = ssub.s32 1, %s10
  %s13 = scalar_select 0, %s12, %s10
  $region1: #{dqn_forward.1} parent=0
    #allocation2 [shape = 'u8[2048]{0}', space=vmem, size = 0x800, scoped, tag = 'input window, operand 1, single buffered']
    #allocation3 [shape = 's32[1]{0}', space=sflag, size = 0x4, scoped, tag = 'scoped memory for dqn_forward.1']
    #allocation4 [shape = 'u8[2048]{0}', space=vmem, size = 0x800, scoped, tag = 'input window, operand 2, single buffered']
    #allocation5 [shape = 's32[1]{0}', space=sflag, size = 0x4, scoped, tag = 'scoped memory for dqn_forward.1']
    #allocation6 [shape = 'u8[524288]{0}', space=vmem, size = 0x80000, scoped, tag = 'input window, operand 3, single buffered']
    #allocation7 [shape = 'u8[2048]{0}', space=vmem, size = 0x800, scoped, tag = 'input window, operand 4, single buffered']
    #allocation8 [shape = 's32[1]{0}', space=sflag, size = 0x4, scoped, tag = 'scoped memory for dqn_forward.1']
    #allocation9 [shape = 'u8[4718592]{0}', space=vmem, size = 0x480000, scoped, tag = 'input window, operand 5, single buffered']
    #allocation10 [shape = 'u8[2048]{0}', space=vmem, size = 0x800, scoped, tag = 'input window, operand 6, single buffered']
    #allocation11 [shape = 's32[1]{0}', space=sflag, size = 0x4, scoped, tag = 'scoped memory for dqn_forward.1']
    #allocation12 [shape = 'u8[131072]{0}', space=vmem, size = 0x20000, scoped, tag = 'input window, operand 7, single buffered']
    #allocation13 [shape = 'u8[512]{0}', space=vmem, size = 0x400, scoped, tag = 'input window, operand 8, single buffered']
    #allocation14 [shape = 's32[1]{0}', space=sflag, size = 0x4, scoped, tag = 'scoped memory for dqn_forward.1']
    %14 = vsyncpa [#allocation3], 0
    %15 = vsyncpa [#allocation5], 0
    %16 = vsyncpa [#allocation8], 0
    %17 = vsyncpa [#allocation11], 0
    %18 = vsyncpa [#allocation14], 0
    // Predicated region
    $region2: #{dqn_forward.1} parent=1 // pred_check
      _
    $region3: #{dqn_forward.1} parent=1 // pred_check_branch
      %20 = sbr.rel (0) target = $region5
    $region4: #{dqn_forward.1} parent=1 // pred_region
      _
    $region5: #{dqn_forward.1} parent=1 // pred_fallthru
      _
    // Predicated region
    $region6: #{dqn_forward.1} parent=1 // pred_check
      _
    $region7: #{dqn_forward.1} parent=1 // pred_check_branch
      %22 = sbr.rel (0) target = $region9
    $region8: #{dqn_forward.1} parent=1 // pred_region
      %s24 = ssub.s32 64, 64
      %25 = vsyncadd [#allocation3], %s24
      %s27 = sshll.u32 [#allocation2], 4
      %s28 = int_to_ptr.vmem [resolvable:$true] %s27
      %30 = dma.hbm_to_vmem [thread:$0]  %s1, 64, %s28, [#allocation3]
    $region9: #{dqn_forward.1} parent=1 // pred_fallthru
      _
    // Predicated region
    $region10: #{dqn_forward.1} parent=1 // pred_check
      _
    $region11: #{dqn_forward.1} parent=1 // pred_check_branch
      %32 = sbr.rel (0) target = $region13
    $region12: #{dqn_forward.1} parent=1 // pred_region
      %s34 = ssub.s32 64, 64
      %35 = vsyncadd [#allocation5], %s34
      %s37 = sshll.u32 [#allocation4], 4
      %s38 = int_to_ptr.vmem [resolvable:$true] %s37
      %40 = dma.hbm_to_vmem [thread:$0]  %s2, 64, %s38, [#allocation5]
    $region13: #{dqn_forward.1} parent=1 // pred_fallthru
      _
    // Predicated region
    $region14: #{dqn_forward.1} parent=1 // pred_check
      _
    $region15: #{dqn_forward.1} parent=1 // pred_check_branch
      %42 = sbr.rel (0) target = $region17
    $region16: #{dqn_forward.1} parent=1 // pred_region
      %s44 = ssub.s32 16384, 16384
      %45 = vsyncadd [#allocation5], %s44
      %s46 = sshll.u32 [#allocation6], 4
      %s47 = int_to_ptr.vmem [resolvable:$true] %s46
      %52 = dma.hbm_to_vmem [thread:$0]  %s3, 16384, %s47, [#allocation5], 256, 256, 16
    $region17: #{dqn_forward.1} parent=1 // pred_fallthru
      _
    // Predicated region
    $region18: #{dqn_forward.1} parent=1 // pred_check
      _
    $region19: #{dqn_forward.1} parent=1 // pred_check_branch
      %54 = sbr.rel (0) target = $region21
    $region20: #{dqn_forward.1} parent=1 // pred_region
      %s56 = ssub.s32 64, 64
      %57 = vsyncadd [#allocation8], %s56
      %s59 = sshll.u32 [#allocation7], 4
      %s60 = int_to_ptr.vmem [resolvable:$true] %s59
      %62 = dma.hbm_to_vmem [thread:$0]  %s4, 64, %s60, [#allocation8]
    $region21: #{dqn_forward.1} parent=1 // pred_fallthru
      _
    // Predicated region
    $region22: #{dqn_forward.1} parent=1 // pred_check
      _
    $region23: #{dqn_forward.1} parent=1 // pred_check_branch
      %64 = sbr.rel (0) target = $region25
    $region24: #{dqn_forward.1} parent=1 // pred_region
      %s66 = ssub.s32 147456, 147456
      %67 = vsyncadd [#allocation8], %s66
      %s68 = sshll.u32 [#allocation9], 4
      %s69 = int_to_ptr.vmem [resolvable:$true] %s68
      %74 = dma.hbm_to_vmem [thread:$0]  %s5, 147456, %s69, [#allocation8], 256, 256, 16
    $region25: #{dqn_forward.1} parent=1 // pred_fallthru
      _
    // Predicated region
    $region26: #{dqn_forward.1} parent=1 // pred_check
      _
    $region27: #{dqn_forward.1} parent=1 // pred_check_branch
      %76 = sbr.rel (0) target = $region29
    $region28: #{dqn_forward.1} parent=1 // pred_region
      %s78 = ssub.s32 64, 64
      %79 = vsyncadd [#allocation11], %s78
      %s81 = sshll.u32 [#allocation10], 4
      %s82 = int_to_ptr.vmem [resolvable:$true] %s81
      %84 = dma.hbm_to_vmem [thread:$0]  %s6, 64, %s82, [#allocation11]
    $region29: #{dqn_forward.1} parent=1 // pred_fallthru
      _
    // Predicated region
    $region30: #{dqn_forward.1} parent=1 // pred_check
      _
    $region31: #{dqn_forward.1} parent=1 // pred_check_branch
      %86 = sbr.rel (0) target = $region33
    $region32: #{dqn_forward.1} parent=1 // pred_region
      %s88 = ssub.s32 4096, 4096
      %89 = vsyncadd [#allocation11], %s88
      %s90 = sshll.u32 [#allocation12], 4
      %s91 = int_to_ptr.vmem [resolvable:$true] %s90
      %96 = dma.hbm_to_vmem [thread:$0]  %s7, 4096, %s91, [#allocation11], 64, 64, 4
    $region33: #{dqn_forward.1} parent=1 // pred_fallthru
      _
    // Predicated region
    $region34: #{dqn_forward.1} parent=1 // pred_check
      _
    $region35: #{dqn_forward.1} parent=1 // pred_check_branch
      %98 = sbr.rel (0) target = $region37
    $region36: #{dqn_forward.1} parent=1 // pred_region
      %s100 = ssub.s32 16, 16
      %101 = vsyncadd [#allocation14], %s100
      %s103 = sshll.u32 [#allocation13], 4
      %s104 = int_to_ptr.vmem [resolvable:$true] %s103
      %106 = dma.hbm_to_vmem [thread:$0]  %s8, 16, %s104, [#allocation14]
    $region37: #{dqn_forward.1} parent=1 // pred_fallthru
      _
    // Predicated region
    $region38: #{dqn_forward.1} parent=1 // pred_check
      _
    $region39: #{dqn_forward.1} parent=1 // pred_check_branch
      %108 = sbr.rel (0) target = $region41
    $region40: #{dqn_forward.1} parent=1 // pred_region
      %109 = dma.done [#allocation3], 64
    $region41: #{dqn_forward.1} parent=1 // pred_fallthru
      _
    // Predicated region
    $region42: #{dqn_forward.1} parent=1 // pred_check
      _
    $region43: #{dqn_forward.1} parent=1 // pred_check_branch
      %111 = sbr.rel (0) target = $region45
    $region44: #{dqn_forward.1} parent=1 // pred_region
      %112 = dma.done [#allocation5], 64
    $region45: #{dqn_forward.1} parent=1 // pred_fallthru
      _
    // Predicated region
    $region46: #{dqn_forward.1} parent=1 // pred_check
      _
    $region47: #{dqn_forward.1} parent=1 // pred_check_branch
      %114 = sbr.rel (0) target = $region49
    $region48: #{dqn_forward.1} parent=1 // pred_region
      %115 = dma.done [#allocation5], 16384
    $region49: #{dqn_forward.1} parent=1 // pred_fallthru
      _
    // Predicated region
    $region50: #{dqn_forward.1} parent=1 // pred_check
      _
    $region51: #{dqn_forward.1} parent=1 // pred_check_branch
      %117 = sbr.rel (0) target = $region53
    $region52: #{dqn_forward.1} parent=1 // pred_region
      %118 = dma.done [#allocation8], 64
    $region53: #{dqn_forward.1} parent=1 // pred_fallthru
      _
    // Predicated region
    $region54: #{dqn_forward.1} parent=1 // pred_check
      _
    $region55: #{dqn_forward.1} parent=1 // pred_check_branch
      %120 = sbr.rel (0) target = $region57
    $region56: #{dqn_forward.1} parent=1 // pred_region
      %121 = dma.done [#allocation8], 147456
    $region57: #{dqn_forward.1} parent=1 // pred_fallthru
      _
    // Predicated region
    $region58: #{dqn_forward.1} parent=1 // pred_check
      _
    $region59: #{dqn_forward.1} parent=1 // pred_check_branch
      %123 = sbr.rel (0) target = $region61
    $region60: #{dqn_forward.1} parent=1 // pred_region
      %124 = dma.done [#allocation11], 64
    $region61: #{dqn_forward.1} parent=1 // pred_fallthru
      _
    // Predicated region
    $region62: #{dqn_forward.1} parent=1 // pred_check
      _
    $region63: #{dqn_forward.1} parent=1 // pred_check_branch
      %126 = sbr.rel (0) target = $region65
    $region64: #{dqn_forward.1} parent=1 // pred_region
      %127 = dma.done [#allocation11], 4096
    $region65: #{dqn_forward.1} parent=1 // pred_fallthru
      _
    // Predicated region
    $region66: #{dqn_forward.1} parent=1 // pred_check
      _
    $region67: #{dqn_forward.1} parent=1 // pred_check_branch
      %129 = sbr.rel (0) target = $region69
    $region68: #{dqn_forward.1} parent=1 // pred_region
      %130 = dma.done [#allocation14], 16
    $region69: #{dqn_forward.1} parent=1 // pred_fallthru
      _
    %v132 = vld [vmem:[%s0] sm:$0xff]
    %v133 = vld [vmem:[%s0 + $0x8] sm:$0xff]
    %v134 = vld [vmem:[%s0 + $0x10] sm:$0xff]
    %v135 = vld [vmem:[%s0 + $0x18] sm:$0xff]
    %v136 = vld [vmem:[%s0 + $0x20] sm:$0xff]
    %v137 = vld [vmem:[%s0 + $0x28] sm:$0xff]
    %v138 = vld [vmem:[%s0 + $0x30] sm:$0xff]
    %v139 = vld [vmem:[%s0 + $0x38] sm:$0xff]
    %v140 = vld [vmem:[%s0 + $0x40] sm:$0xff]
    %v141 = vld [vmem:[#allocation2] sm:$0xf]
    %143 = vset.pattern.permute.xlu0 0
    %144 = vperm.xlu0 %143, %v132
    %v145 = vpop.permute.xlu0 %144
    %148 = vset.pattern.permute.xlu0 0
    %149 = vperm.xlu0 %148, %v133
    %v150 = vpop.permute.xlu0 %149
    %153 = vset.pattern.permute.xlu0 0
    %154 = vperm.xlu0 %153, %v134
    %v155 = vpop.permute.xlu0 %154
    %158 = vset.pattern.permute.xlu0 0
    %159 = vperm.xlu0 %158, %v135
    %v160 = vpop.permute.xlu0 %159
    %163 = vset.pattern.permute.xlu0 0
    %164 = vperm.xlu0 %163, %v136
    %v165 = vpop.permute.xlu0 %164
    %168 = vset.pattern.permute.xlu0 0
    %169 = vperm.xlu0 %168, %v137
    %v170 = vpop.permute.xlu0 %169
    %173 = vset.pattern.permute.xlu0 0
    %174 = vperm.xlu0 %173, %v138
    %v175 = vpop.permute.xlu0 %174
    %178 = vset.pattern.permute.xlu0 0
    %179 = vperm.xlu0 %178, %v139
    %v180 = vpop.permute.xlu0 %179
    %183 = vset.pattern.permute.xlu0 0
    %184 = vperm.xlu0 %183, %v140
    %v185 = vpop.permute.xlu0 %184
    %v188 = vlaneseq
    %v189 = vshrl.u32 %v188, 7
    %v190 = vsub.s32 0, %v189
    %v191 = vrot.slane %v141, %v190
    %v192 = vlaneseq
    %v193 = vshrl.u32 %v192, 7
    %v194 = vsub.s32 1, %v193
    %v195 = vrot.slane %v141, %v194
    %v196 = vlaneseq
    %v197 = vshrl.u32 %v196, 7
    %v198 = vsub.s32 2, %v197
    %v199 = vrot.slane %v141, %v198
    %v200 = vlaneseq
    %v201 = vshrl.u32 %v200, 7
    %v202 = vsub.s32 3, %v201
    %v203 = vrot.slane %v141, %v202
    %v208 = vmul.f32 %v145, %v191
    %v209 = vmul.f32 %v145, %v195
    %v210 = vmul.f32 %v145, %v199
    %v211 = vmul.f32 %v145, %v203
    %v212 = vmul.f32 %v150, %v191
    %v213 = vmul.f32 %v150, %v195
    %v214 = vmul.f32 %v150, %v199
    %v215 = vmul.f32 %v150, %v203
    %v216 = vmul.f32 %v155, %v191
    %v217 = vmul.f32 %v155, %v195
    %v218 = vmul.f32 %v155, %v199
    %v219 = vmul.f32 %v155, %v203
    %v220 = vmul.f32 %v160, %v191
    %v221 = vmul.f32 %v160, %v195
    %v222 = vmul.f32 %v160, %v199
    %v223 = vmul.f32 %v160, %v203
    %v224 = vmul.f32 %v165, %v191
    %v225 = vmul.f32 %v165, %v195
    %v226 = vmul.f32 %v165, %v199
    %v227 = vmul.f32 %v165, %v203
    %v228 = vmul.f32 %v170, %v191
    %v229 = vmul.f32 %v170, %v195
    %v230 = vmul.f32 %v170, %v199
    %v231 = vmul.f32 %v170, %v203
    %v232 = vmul.f32 %v175, %v191
    %v233 = vmul.f32 %v175, %v195
    %v234 = vmul.f32 %v175, %v199
    %v235 = vmul.f32 %v175, %v203
    %v236 = vmul.f32 %v180, %v191
    %v237 = vmul.f32 %v180, %v195
    %v238 = vmul.f32 %v180, %v199
    %v239 = vmul.f32 %v180, %v203
    %v240 = vmul.f32 %v185, %v191
    %v241 = vmul.f32 %v185, %v195
    %v242 = vmul.f32 %v185, %v199
    %v243 = vmul.f32 %v185, %v203
    %v244 = vld [vmem:[#allocation4] sm:$0xf]
    %v246 = vlaneseq
    %v247 = vshrl.u32 %v246, 7
    %v248 = vsub.s32 0, %v247
    %v249 = vrot.slane %v244, %v248
    %v250 = vlaneseq
    %v251 = vshrl.u32 %v250, 7
    %v252 = vsub.s32 1, %v251
    %v253 = vrot.slane %v244, %v252
    %v254 = vlaneseq
    %v255 = vshrl.u32 %v254, 7
    %v256 = vsub.s32 2, %v255
    %v257 = vrot.slane %v244, %v256
    %v258 = vlaneseq
    %v259 = vshrl.u32 %v258, 7
    %v260 = vsub.s32 3, %v259
    %v261 = vrot.slane %v244, %v260
    %v266 = vadd.f32 %v208, %v249
    %v267 = vadd.f32 %v209, %v253
    %v268 = vadd.f32 %v210, %v257
    %v269 = vadd.f32 %v211, %v261
    %v270 = vadd.f32 %v212, %v249
    %v271 = vadd.f32 %v213, %v253
    %v272 = vadd.f32 %v214, %v257
    %v273 = vadd.f32 %v215, %v261
    %v274 = vadd.f32 %v216, %v249
    %v275 = vadd.f32 %v217, %v253
    %v276 = vadd.f32 %v218, %v257
    %v277 = vadd.f32 %v219, %v261
    %v278 = vadd.f32 %v220, %v249
    %v279 = vadd.f32 %v221, %v253
    %v280 = vadd.f32 %v222, %v257
    %v281 = vadd.f32 %v223, %v261
    %v282 = vadd.f32 %v224, %v249
    %v283 = vadd.f32 %v225, %v253
    %v284 = vadd.f32 %v226, %v257
    %v285 = vadd.f32 %v227, %v261
    %v286 = vadd.f32 %v228, %v249
    %v287 = vadd.f32 %v229, %v253
    %v288 = vadd.f32 %v230, %v257
    %v289 = vadd.f32 %v231, %v261
    %v290 = vadd.f32 %v232, %v249
    %v291 = vadd.f32 %v233, %v253
    %v292 = vadd.f32 %v234, %v257
    %v293 = vadd.f32 %v235, %v261
    %v294 = vadd.f32 %v236, %v249
    %v295 = vadd.f32 %v237, %v253
    %v296 = vadd.f32 %v238, %v257
    %v297 = vadd.f32 %v239, %v261
    %v298 = vadd.f32 %v240, %v249
    %v299 = vadd.f32 %v241, %v253
    %v300 = vadd.f32 %v242, %v257
    %v301 = vadd.f32 %v243, %v261
    %v302 = vmax.f32 %v266, 0.0
    %v303 = vmax.f32 %v267, 0.0
    %v304 = vmax.f32 %v268, 0.0
    %v305 = vmax.f32 %v269, 0.0
    %v306 = vmax.f32 %v270, 0.0
    %v307 = vmax.f32 %v271, 0.0
    %v308 = vmax.f32 %v272, 0.0
    %v309 = vmax.f32 %v273, 0.0
    %v310 = vmax.f32 %v274, 0.0
    %v311 = vmax.f32 %v275, 0.0
    %v312 = vmax.f32 %v276, 0.0
    %v313 = vmax.f32 %v277, 0.0
    %v314 = vmax.f32 %v278, 0.0
    %v315 = vmax.f32 %v279, 0.0
    %v316 = vmax.f32 %v280, 0.0
    %v317 = vmax.f32 %v281, 0.0
    %v318 = vmax.f32 %v282, 0.0
    %v319 = vmax.f32 %v283, 0.0
    %v320 = vmax.f32 %v284, 0.0
    %v321 = vmax.f32 %v285, 0.0
    %v322 = vmax.f32 %v286, 0.0
    %v323 = vmax.f32 %v287, 0.0
    %v324 = vmax.f32 %v288, 0.0
    %v325 = vmax.f32 %v289, 0.0
    %v326 = vmax.f32 %v290, 0.0
    %v327 = vmax.f32 %v291, 0.0
    %v328 = vmax.f32 %v292, 0.0
    %v329 = vmax.f32 %v293, 0.0
    %v330 = vmax.f32 %v294, 0.0
    %v331 = vmax.f32 %v295, 0.0
    %v332 = vmax.f32 %v296, 0.0
    %v333 = vmax.f32 %v297, 0.0
    %v334 = vmax.f32 %v298, 0.0
    %v335 = vmax.f32 %v299, 0.0
    %v336 = vmax.f32 %v300, 0.0
    %v337 = vmax.f32 %v301, 0.0
    %v338 = vpack.c.bf16 %v306, %v302
    %v339 = vpack.c.bf16 %v307, %v303
    %v340 = vpack.c.bf16 %v308, %v304
    %v341 = vpack.c.bf16 %v309, %v305
    %v342 = vpack.c.bf16 %v314, %v310
    %v343 = vpack.c.bf16 %v315, %v311
    %v344 = vpack.c.bf16 %v316, %v312
    %v345 = vpack.c.bf16 %v317, %v313
    %v346 = vpack.c.bf16 %v322, %v318
    %v347 = vpack.c.bf16 %v323, %v319
    %v348 = vpack.c.bf16 %v324, %v320
    %v349 = vpack.c.bf16 %v325, %v321
    %v350 = vpack.c.bf16 %v330, %v326
    %v351 = vpack.c.bf16 %v331, %v327
    %v352 = vpack.c.bf16 %v332, %v328
    %v353 = vpack.c.bf16 %v333, %v329
    %v354 = vpack.c.bf16 %v334, %v334
    %v355 = vpack.c.bf16 %v335, %v335
    %v356 = vpack.c.bf16 %v336, %v336
    %v357 = vpack.c.bf16 %v337, %v337
    %v358 = vld [vmem:[#allocation6] sm:$0xff]
    %v359 = vld [vmem:[#allocation6 + $0x8] sm:$0xff]
    %v360 = vld [vmem:[#allocation6 + $0x10] sm:$0xff]
    %v361 = vld [vmem:[#allocation6 + $0x18] sm:$0xff]
    %v362 = vld [vmem:[#allocation6 + $0x20] sm:$0xff]
    %v363 = vld [vmem:[#allocation6 + $0x28] sm:$0xff]
    %v364 = vld [vmem:[#allocation6 + $0x30] sm:$0xff]
    %v365 = vld [vmem:[#allocation6 + $0x38] sm:$0xff]
    %v366 = vld [vmem:[#allocation6 + $0x40] sm:$0xff]
    %v367 = vld [vmem:[#allocation6 + $0x48] sm:$0xff]
    %v368 = vld [vmem:[#allocation6 + $0x50] sm:$0xff]
    %v369 = vld [vmem:[#allocation6 + $0x58] sm:$0xff]
    %v370 = vld [vmem:[#allocation6 + $0x60] sm:$0xff]
    %v371 = vld [vmem:[#allocation6 + $0x68] sm:$0xff]
    %v372 = vld [vmem:[#allocation6 + $0x70] sm:$0xff]
    %v373 = vld [vmem:[#allocation6 + $0x78] sm:$0xff]
    %v374 = vld [vmem:[#allocation6 + $0x80] sm:$0xff]
    %v375 = vld [vmem:[#allocation6 + $0x88] sm:$0xff]
    %v376 = vld [vmem:[#allocation6 + $0x90] sm:$0xff]
    %v377 = vld [vmem:[#allocation6 + $0x98] sm:$0xff]
    %v378 = vld [vmem:[#allocation6 + $0xa0] sm:$0xff]
    %v379 = vld [vmem:[#allocation6 + $0xa8] sm:$0xff]
    %v380 = vld [vmem:[#allocation6 + $0xb0] sm:$0xff]
    %v381 = vld [vmem:[#allocation6 + $0xb8] sm:$0xff]
    %v382 = vld [vmem:[#allocation6 + $0xc0] sm:$0xff]
    %v383 = vld [vmem:[#allocation6 + $0xc8] sm:$0xff]
    %v384 = vld [vmem:[#allocation6 + $0xd0] sm:$0xff]
    %v385 = vld [vmem:[#allocation6 + $0xd8] sm:$0xff]
    %v386 = vld [vmem:[#allocation6 + $0xe0] sm:$0xff]
    %v387 = vld [vmem:[#allocation6 + $0xe8] sm:$0xff]
    %v388 = vld [vmem:[#allocation6 + $0xf0] sm:$0xff]
    %v389 = vld [vmem:[#allocation6 + $0xf8] sm:$0xff]
    %v390 = vld [vmem:[#allocation6 + $0x100] sm:$0xff]
    %v391 = vld [vmem:[#allocation6 + $0x108] sm:$0xff]
    %v392 = vld [vmem:[#allocation6 + $0x110] sm:$0xff]
    %v393 = vld [vmem:[#allocation6 + $0x118] sm:$0xff]
    %v394 = vld [vmem:[#allocation6 + $0x120] sm:$0xff]
    %v395 = vld [vmem:[#allocation6 + $0x128] sm:$0xff]
    %v396 = vld [vmem:[#allocation6 + $0x130] sm:$0xff]
    %v397 = vld [vmem:[#allocation6 + $0x138] sm:$0xff]
    %v398 = vld [vmem:[#allocation6 + $0x140] sm:$0xff]
    %v399 = vld [vmem:[#allocation6 + $0x148] sm:$0xff]
    %v400 = vld [vmem:[#allocation6 + $0x150] sm:$0xff]
    %v401 = vld [vmem:[#allocation6 + $0x158] sm:$0xff]
    %v402 = vld [vmem:[#allocation6 + $0x160] sm:$0xff]
    %v403 = vld [vmem:[#allocation6 + $0x168] sm:$0xff]
    %v404 = vld [vmem:[#allocation6 + $0x170] sm:$0xff]
    %v405 = vld [vmem:[#allocation6 + $0x178] sm:$0xff]
    %v406 = vld [vmem:[#allocation6 + $0x180] sm:$0xff]
    %v407 = vld [vmem:[#allocation6 + $0x188] sm:$0xff]
    %v408 = vld [vmem:[#allocation6 + $0x190] sm:$0xff]
    %v409 = vld [vmem:[#allocation6 + $0x198] sm:$0xff]
    %v410 = vld [vmem:[#allocation6 + $0x1a0] sm:$0xff]
    %v411 = vld [vmem:[#allocation6 + $0x1a8] sm:$0xff]
    %v412 = vld [vmem:[#allocation6 + $0x1b0] sm:$0xff]
    %v413 = vld [vmem:[#allocation6 + $0x1b8] sm:$0xff]
    %v414 = vld [vmem:[#allocation6 + $0x1c0] sm:$0xff]
    %v415 = vld [vmem:[#allocation6 + $0x1c8] sm:$0xff]
    %v416 = vld [vmem:[#allocation6 + $0x1d0] sm:$0xff]
    %v417 = vld [vmem:[#allocation6 + $0x1d8] sm:$0xff]
    %v418 = vld [vmem:[#allocation6 + $0x1e0] sm:$0xff]
    %v419 = vld [vmem:[#allocation6 + $0x1e8] sm:$0xff]
    %v420 = vld [vmem:[#allocation6 + $0x1f0] sm:$0xff]
    %v421 = vld [vmem:[#allocation6 + $0x1f8] sm:$0xff]
    %v422 = vld [vmem:[#allocation6 + $0x200] sm:$0xff]
    %v423 = vld [vmem:[#allocation6 + $0x208] sm:$0xff]
    %v424 = vld [vmem:[#allocation6 + $0x210] sm:$0xff]
    %v425 = vld [vmem:[#allocation6 + $0x218] sm:$0xff]
    %v426 = vld [vmem:[#allocation6 + $0x220] sm:$0xff]
    %v427 = vld [vmem:[#allocation6 + $0x228] sm:$0xff]
    %v428 = vld [vmem:[#allocation6 + $0x230] sm:$0xff]
    %v429 = vld [vmem:[#allocation6 + $0x238] sm:$0xff]
    %v430 = vld [vmem:[#allocation6 + $0x240] sm:$0xff]
    %v431 = vld [vmem:[#allocation6 + $0x248] sm:$0xff]
    %v432 = vld [vmem:[#allocation6 + $0x250] sm:$0xff]
    %v433 = vld [vmem:[#allocation6 + $0x258] sm:$0xff]
    %v434 = vld [vmem:[#allocation6 + $0x260] sm:$0xff]
    %v435 = vld [vmem:[#allocation6 + $0x268] sm:$0xff]
    %v436 = vld [vmem:[#allocation6 + $0x270] sm:$0xff]
    %v437 = vld [vmem:[#allocation6 + $0x278] sm:$0xff]
    %v438 = vld [vmem:[#allocation6 + $0x280] sm:$0xff]
    %v439 = vld [vmem:[#allocation6 + $0x288] sm:$0xff]
    %v440 = vld [vmem:[#allocation6 + $0x290] sm:$0xff]
    %v441 = vld [vmem:[#allocation6 + $0x298] sm:$0xff]
    %v442 = vld [vmem:[#allocation6 + $0x2a0] sm:$0xff]
    %v443 = vld [vmem:[#allocation6 + $0x2a8] sm:$0xff]
    %v444 = vld [vmem:[#allocation6 + $0x2b0] sm:$0xff]
    %v445 = vld [vmem:[#allocation6 + $0x2b8] sm:$0xff]
    %v446 = vld [vmem:[#allocation6 + $0x2c0] sm:$0xff]
    %v447 = vld [vmem:[#allocation6 + $0x2c8] sm:$0xff]
    %v448 = vld [vmem:[#allocation6 + $0x2d0] sm:$0xff]
    %v449 = vld [vmem:[#allocation6 + $0x2d8] sm:$0xff]
    %v450 = vld [vmem:[#allocation6 + $0x2e0] sm:$0xff]
    %v451 = vld [vmem:[#allocation6 + $0x2e8] sm:$0xff]
    %v452 = vld [vmem:[#allocation6 + $0x2f0] sm:$0xff]
    %v453 = vld [vmem:[#allocation6 + $0x2f8] sm:$0xff]
    %v454 = vld [vmem:[#allocation6 + $0x300] sm:$0xff]
    %v455 = vld [vmem:[#allocation6 + $0x308] sm:$0xff]
    %v456 = vld [vmem:[#allocation6 + $0x310] sm:$0xff]
    %v457 = vld [vmem:[#allocation6 + $0x318] sm:$0xff]
    %v458 = vld [vmem:[#allocation6 + $0x320] sm:$0xff]
    %v459 = vld [vmem:[#allocation6 + $0x328] sm:$0xff]
    %v460 = vld [vmem:[#allocation6 + $0x330] sm:$0xff]
    %v461 = vld [vmem:[#allocation6 + $0x338] sm:$0xff]
    %v462 = vld [vmem:[#allocation6 + $0x340] sm:$0xff]
    %v463 = vld [vmem:[#allocation6 + $0x348] sm:$0xff]
    %v464 = vld [vmem:[#allocation6 + $0x350] sm:$0xff]
    %v465 = vld [vmem:[#allocation6 + $0x358] sm:$0xff]
    %v466 = vld [vmem:[#allocation6 + $0x360] sm:$0xff]
    %v467 = vld [vmem:[#allocation6 + $0x368] sm:$0xff]
    %v468 = vld [vmem:[#allocation6 + $0x370] sm:$0xff]
    %v469 = vld [vmem:[#allocation6 + $0x378] sm:$0xff]
    %v470 = vld [vmem:[#allocation6 + $0x380] sm:$0xff]
    %v471 = vld [vmem:[#allocation6 + $0x388] sm:$0xff]
    %v472 = vld [vmem:[#allocation6 + $0x390] sm:$0xff]
    %v473 = vld [vmem:[#allocation6 + $0x398] sm:$0xff]
    %v474 = vld [vmem:[#allocation6 + $0x3a0] sm:$0xff]
    %v475 = vld [vmem:[#allocation6 + $0x3a8] sm:$0xff]
    %v476 = vld [vmem:[#allocation6 + $0x3b0] sm:$0xff]
    %v477 = vld [vmem:[#allocation6 + $0x3b8] sm:$0xff]
    %v478 = vld [vmem:[#allocation6 + $0x3c0] sm:$0xff]
    %v479 = vld [vmem:[#allocation6 + $0x3c8] sm:$0xff]
    %v480 = vld [vmem:[#allocation6 + $0x3d0] sm:$0xff]
    %v481 = vld [vmem:[#allocation6 + $0x3d8] sm:$0xff]
    %v482 = vld [vmem:[#allocation6 + $0x3e0] sm:$0xff]
    %v483 = vld [vmem:[#allocation6 + $0x3e8] sm:$0xff]
    %v484 = vld [vmem:[#allocation6 + $0x3f0] sm:$0xff]
    %v485 = vld [vmem:[#allocation6 + $0x3f8] sm:$0xff]
    %v486 = vld [vmem:[#allocation7] sm:$0xf]
    %v488 = vlaneseq
    %v489 = vshrl.u32 %v488, 7
    %v490 = vsub.s32 0, %v489
    %v491 = vrot.slane %v486, %v490
    %v492 = vlaneseq
    %v493 = vshrl.u32 %v492, 7
    %v494 = vsub.s32 1, %v493
    %v495 = vrot.slane %v486, %v494
    %v496 = vlaneseq
    %v497 = vshrl.u32 %v496, 7
    %v498 = vsub.s32 2, %v497
    %v499 = vrot.slane %v486, %v498
    %v500 = vlaneseq
    %v501 = vshrl.u32 %v500, 7
    %v502 = vsub.s32 3, %v501
    %v503 = vrot.slane %v486, %v502
    %v636 = vunpack.c.l.b16 %v358
    %v637 = vunpack.c.h.b16 %v358
    %v638 = vunpack.c.l.b16 %v359
    %v639 = vunpack.c.h.b16 %v359
    %v640 = vunpack.c.l.b16 %v360
    %v641 = vunpack.c.h.b16 %v360
    %v642 = vunpack.c.l.b16 %v361
    %v643 = vunpack.c.h.b16 %v361
    %v644 = vunpack.c.l.b16 %v362
    %v645 = vunpack.c.h.b16 %v362
    %v646 = vunpack.c.l.b16 %v363
    %v647 = vunpack.c.h.b16 %v363
    %v648 = vunpack.c.l.b16 %v364
    %v649 = vunpack.c.h.b16 %v364
    %v650 = vunpack.c.l.b16 %v365
    %v651 = vunpack.c.h.b16 %v365
    %v652 = vunpack.c.l.b16 %v366
    %v653 = vunpack.c.h.b16 %v366
    %v654 = vunpack.c.l.b16 %v367
    %v655 = vunpack.c.h.b16 %v367
    %v656 = vunpack.c.l.b16 %v368
    %v657 = vunpack.c.h.b16 %v368
    %v658 = vunpack.c.l.b16 %v369
    %v659 = vunpack.c.h.b16 %v369
    %v660 = vunpack.c.l.b16 %v370
    %v661 = vunpack.c.h.b16 %v370
    %v662 = vunpack.c.l.b16 %v371
    %v663 = vunpack.c.h.b16 %v371
    %v664 = vunpack.c.l.b16 %v372
    %v665 = vunpack.c.h.b16 %v372
    %v666 = vunpack.c.l.b16 %v373
    %v667 = vunpack.c.h.b16 %v373
    %v668 = vunpack.c.l.b16 %v374
    %v669 = vunpack.c.h.b16 %v374
    %v670 = vunpack.c.l.b16 %v375
    %v671 = vunpack.c.h.b16 %v375
    %v672 = vunpack.c.l.b16 %v376
    %v673 = vunpack.c.h.b16 %v376
    %v674 = vunpack.c.l.b16 %v377
    %v675 = vunpack.c.h.b16 %v377
    %v676 = vunpack.c.l.b16 %v378
    %v677 = vunpack.c.h.b16 %v378
    %v678 = vunpack.c.l.b16 %v379
    %v679 = vunpack.c.h.b16 %v379
    %v680 = vunpack.c.l.b16 %v380
    %v681 = vunpack.c.h.b16 %v380
    %v682 = vunpack.c.l.b16 %v381
    %v683 = vunpack.c.h.b16 %v381
    %v684 = vunpack.c.l.b16 %v382
    %v685 = vunpack.c.h.b16 %v382
    %v686 = vunpack.c.l.b16 %v383
    %v687 = vunpack.c.h.b16 %v383
    %v688 = vunpack.c.l.b16 %v384
    %v689 = vunpack.c.h.b16 %v384
    %v690 = vunpack.c.l.b16 %v385
    %v691 = vunpack.c.h.b16 %v385
    %v692 = vunpack.c.l.b16 %v386
    %v693 = vunpack.c.h.b16 %v386
    %v694 = vunpack.c.l.b16 %v387
    %v695 = vunpack.c.h.b16 %v387
    %v696 = vunpack.c.l.b16 %v388
    %v697 = vunpack.c.h.b16 %v388
    %v698 = vunpack.c.l.b16 %v389
    %v699 = vunpack.c.h.b16 %v389
    %v700 = vunpack.c.l.b16 %v390
    %v701 = vunpack.c.h.b16 %v390
    %v702 = vunpack.c.l.b16 %v391
    %v703 = vunpack.c.h.b16 %v391
    %v704 = vunpack.c.l.b16 %v392
    %v705 = vunpack.c.h.b16 %v392
    %v706 = vunpack.c.l.b16 %v393
    %v707 = vunpack.c.h.b16 %v393
    %v708 = vunpack.c.l.b16 %v394
    %v709 = vunpack.c.h.b16 %v394
    %v710 = vunpack.c.l.b16 %v395
    %v711 = vunpack.c.h.b16 %v395
    %v712 = vunpack.c.l.b16 %v396
    %v713 = vunpack.c.h.b16 %v396
    %v714 = vunpack.c.l.b16 %v397
    %v715 = vunpack.c.h.b16 %v397
    %v716 = vunpack.c.l.b16 %v398
    %v717 = vunpack.c.h.b16 %v398
    %v718 = vunpack.c.l.b16 %v399
    %v719 = vunpack.c.h.b16 %v399
    %v720 = vunpack.c.l.b16 %v400
    %v721 = vunpack.c.h.b16 %v400
    %v722 = vunpack.c.l.b16 %v401
    %v723 = vunpack.c.h.b16 %v401
    %v724 = vunpack.c.l.b16 %v402
    %v725 = vunpack.c.h.b16 %v402
    %v726 = vunpack.c.l.b16 %v403
    %v727 = vunpack.c.h.b16 %v403
    %v728 = vunpack.c.l.b16 %v404
    %v729 = vunpack.c.h.b16 %v404
    %v730 = vunpack.c.l.b16 %v405
    %v731 = vunpack.c.h.b16 %v405
    %v732 = vunpack.c.l.b16 %v406
    %v733 = vunpack.c.h.b16 %v406
    %v734 = vunpack.c.l.b16 %v407
    %v735 = vunpack.c.h.b16 %v407
    %v736 = vunpack.c.l.b16 %v408
    %v737 = vunpack.c.h.b16 %v408
    %v738 = vunpack.c.l.b16 %v409
    %v739 = vunpack.c.h.b16 %v409
    %v740 = vunpack.c.l.b16 %v410
    %v741 = vunpack.c.h.b16 %v410
    %v742 = vunpack.c.l.b16 %v411
    %v743 = vunpack.c.h.b16 %v411
    %v744 = vunpack.c.l.b16 %v412
    %v745 = vunpack.c.h.b16 %v412
    %v746 = vunpack.c.l.b16 %v413
    %v747 = vunpack.c.h.b16 %v413
    %v748 = vunpack.c.l.b16 %v414
    %v749 = vunpack.c.h.b16 %v414
    %v750 = vunpack.c.l.b16 %v415
    %v751 = vunpack.c.h.b16 %v415
    %v752 = vunpack.c.l.b16 %v416
    %v753 = vunpack.c.h.b16 %v416
    %v754 = vunpack.c.l.b16 %v417
    %v755 = vunpack.c.h.b16 %v417
    %v756 = vunpack.c.l.b16 %v418
    %v757 = vunpack.c.h.b16 %v418
    %v758 = vunpack.c.l.b16 %v419
    %v759 = vunpack.c.h.b16 %v419
    %v760 = vunpack.c.l.b16 %v420
    %v761 = vunpack.c.h.b16 %v420
    %v762 = vunpack.c.l.b16 %v421
    %v763 = vunpack.c.h.b16 %v421
    %v764 = vunpack.c.l.b16 %v422
    %v765 = vunpack.c.h.b16 %v422
    %v766 = vunpack.c.l.b16 %v423
    %v767 = vunpack.c.h.b16 %v423
    %v768 = vunpack.c.l.b16 %v424
    %v769 = vunpack.c.h.b16 %v424
    %v770 = vunpack.c.l.b16 %v425
    %v771 = vunpack.c.h.b16 %v425
    %v772 = vunpack.c.l.b16 %v426
    %v773 = vunpack.c.h.b16 %v426
    %v774 = vunpack.c.l.b16 %v427
    %v775 = vunpack.c.h.b16 %v427
    %v776 = vunpack.c.l.b16 %v428
    %v777 = vunpack.c.h.b16 %v428
    %v778 = vunpack.c.l.b16 %v429
    %v779 = vunpack.c.h.b16 %v429
    %v780 = vunpack.c.l.b16 %v430
    %v781 = vunpack.c.h.b16 %v430
    %v782 = vunpack.c.l.b16 %v431
    %v783 = vunpack.c.h.b16 %v431
    %v784 = vunpack.c.l.b16 %v432
    %v785 = vunpack.c.h.b16 %v432
    %v786 = vunpack.c.l.b16 %v433
    %v787 = vunpack.c.h.b16 %v433
    %v788 = vunpack.c.l.b16 %v434
    %v789 = vunpack.c.h.b16 %v434
    %v790 = vunpack.c.l.b16 %v435
    %v791 = vunpack.c.h.b16 %v435
    %v792 = vunpack.c.l.b16 %v436
    %v793 = vunpack.c.h.b16 %v436
    %v794 = vunpack.c.l.b16 %v437
    %v795 = vunpack.c.h.b16 %v437
    %v796 = vunpack.c.l.b16 %v438
    %v797 = vunpack.c.h.b16 %v438
    %v798 = vunpack.c.l.b16 %v439
    %v799 = vunpack.c.h.b16 %v439
    %v800 = vunpack.c.l.b16 %v440
    %v801 = vunpack.c.h.b16 %v440
    %v802 = vunpack.c.l.b16 %v441
    %v803 = vunpack.c.h.b16 %v441
    %v804 = vunpack.c.l.b16 %v442
    %v805 = vunpack.c.h.b16 %v442
    %v806 = vunpack.c.l.b16 %v443
    %v807 = vunpack.c.h.b16 %v443
    %v808 = vunpack.c.l.b16 %v444
    %v809 = vunpack.c.h.b16 %v444
    %v810 = vunpack.c.l.b16 %v445
    %v811 = vunpack.c.h.b16 %v445
    %v812 = vunpack.c.l.b16 %v446
    %v813 = vunpack.c.h.b16 %v446
    %v814 = vunpack.c.l.b16 %v447
    %v815 = vunpack.c.h.b16 %v447
    %v816 = vunpack.c.l.b16 %v448
    %v817 = vunpack.c.h.b16 %v448
    %v818 = vunpack.c.l.b16 %v449
    %v819 = vunpack.c.h.b16 %v449
    %v820 = vunpack.c.l.b16 %v450
    %v821 = vunpack.c.h.b16 %v450
    %v822 = vunpack.c.l.b16 %v451
    %v823 = vunpack.c.h.b16 %v451
    %v824 = vunpack.c.l.b16 %v452
    %v825 = vunpack.c.h.b16 %v452
    %v826 = vunpack.c.l.b16 %v453
    %v827 = vunpack.c.h.b16 %v453
    %v828 = vunpack.c.l.b16 %v454
    %v829 = vunpack.c.h.b16 %v454
    %v830 = vunpack.c.l.b16 %v455
    %v831 = vunpack.c.h.b16 %v455
    %v832 = vunpack.c.l.b16 %v456
    %v833 = vunpack.c.h.b16 %v456
    %v834 = vunpack.c.l.b16 %v457
    %v835 = vunpack.c.h.b16 %v457
    %v836 = vunpack.c.l.b16 %v458
    %v837 = vunpack.c.h.b16 %v458
    %v838 = vunpack.c.l.b16 %v459
    %v839 = vunpack.c.h.b16 %v459
    %v840 = vunpack.c.l.b16 %v460
    %v841 = vunpack.c.h.b16 %v460
    %v842 = vunpack.c.l.b16 %v461
    %v843 = vunpack.c.h.b16 %v461
    %v844 = vunpack.c.l.b16 %v462
    %v845 = vunpack.c.h.b16 %v462
    %v846 = vunpack.c.l.b16 %v463
    %v847 = vunpack.c.h.b16 %v463
    %v848 = vunpack.c.l.b16 %v464
    %v849 = vunpack.c.h.b16 %v464
    %v850 = vunpack.c.l.b16 %v465
    %v851 = vunpack.c.h.b16 %v465
    %v852 = vunpack.c.l.b16 %v466
    %v853 = vunpack.c.h.b16 %v466
    %v854 = vunpack.c.l.b16 %v467
    %v855 = vunpack.c.h.b16 %v467
    %v856 = vunpack.c.l.b16 %v468
    %v857 = vunpack.c.h.b16 %v468
    %v858 = vunpack.c.l.b16 %v469
    %v859 = vunpack.c.h.b16 %v469
    %v860 = vunpack.c.l.b16 %v470
    %v861 = vunpack.c.h.b16 %v470
    %v862 = vunpack.c.l.b16 %v471
    %v863 = vunpack.c.h.b16 %v471
    %v864 = vunpack.c.l.b16 %v472
    %v865 = vunpack.c.h.b16 %v472
    %v866 = vunpack.c.l.b16 %v473
    %v867 = vunpack.c.h.b16 %v473
    %v868 = vunpack.c.l.b16 %v474
    %v869 = vunpack.c.h.b16 %v474
    %v870 = vunpack.c.l.b16 %v475
    %v871 = vunpack.c.h.b16 %v475
    %v872 = vunpack.c.l.b16 %v476
    %v873 = vunpack.c.h.b16 %v476
    %v874 = vunpack.c.l.b16 %v477
    %v875 = vunpack.c.h.b16 %v477
    %v876 = vunpack.c.l.b16 %v478
    %v877 = vunpack.c.h.b16 %v478
    %v878 = vunpack.c.l.b16 %v479
    %v879 = vunpack.c.h.b16 %v479
    %v880 = vunpack.c.l.b16 %v480
    %v881 = vunpack.c.h.b16 %v480
    %v882 = vunpack.c.l.b16 %v481
    %v883 = vunpack.c.h.b16 %v481
    %v884 = vunpack.c.l.b16 %v482
    %v885 = vunpack.c.h.b16 %v482
    %v886 = vunpack.c.l.b16 %v483
    %v887 = vunpack.c.h.b16 %v483
    %v888 = vunpack.c.l.b16 %v484
    %v889 = vunpack.c.h.b16 %v484
    %v890 = vunpack.c.l.b16 %v485
    %v891 = vunpack.c.h.b16 %v485
    %v892 = vpack.c.b16 %v640, %v636
    %v893 = vpack.c.b16 %v641, %v637
    %v894 = vpack.c.b16 %v642, %v638
    %v895 = vpack.c.b16 %v643, %v639
    %v896 = vpack.c.b16 %v648, %v644
    %v897 = vpack.c.b16 %v649, %v645
    %v898 = vpack.c.b16 %v650, %v646
    %v899 = vpack.c.b16 %v651, %v647
    %v900 = vpack.c.b16 %v656, %v652
    %v901 = vpack.c.b16 %v657, %v653
    %v902 = vpack.c.b16 %v658, %v654
    %v903 = vpack.c.b16 %v659, %v655
    %v904 = vpack.c.b16 %v664, %v660
    %v905 = vpack.c.b16 %v665, %v661
    %v906 = vpack.c.b16 %v666, %v662
    %v907 = vpack.c.b16 %v667, %v663
    %v908 = vpack.c.b16 %v672, %v668
    %v909 = vpack.c.b16 %v673, %v669
    %v910 = vpack.c.b16 %v674, %v670
    %v911 = vpack.c.b16 %v675, %v671
    %v912 = vpack.c.b16 %v680, %v676
    %v913 = vpack.c.b16 %v681, %v677
    %v914 = vpack.c.b16 %v682, %v678
    %v915 = vpack.c.b16 %v683, %v679
    %v916 = vpack.c.b16 %v688, %v684
    %v917 = vpack.c.b16 %v689, %v685
    %v918 = vpack.c.b16 %v690, %v686
    %v919 = vpack.c.b16 %v691, %v687
    %v920 = vpack.c.b16 %v696, %v692
    %v921 = vpack.c.b16 %v697, %v693
    %v922 = vpack.c.b16 %v698, %v694
    %v923 = vpack.c.b16 %v699, %v695
    %v924 = vpack.c.b16 %v704, %v700
    %v925 = vpack.c.b16 %v705, %v701
    %v926 = vpack.c.b16 %v706, %v702
    %v927 = vpack.c.b16 %v707, %v703
    %v928 = vpack.c.b16 %v712, %v708
    %v929 = vpack.c.b16 %v713, %v709
    %v930 = vpack.c.b16 %v714, %v710
    %v931 = vpack.c.b16 %v715, %v711
    %v932 = vpack.c.b16 %v720, %v716
    %v933 = vpack.c.b16 %v721, %v717
    %v934 = vpack.c.b16 %v722, %v718
    %v935 = vpack.c.b16 %v723, %v719
    %v936 = vpack.c.b16 %v728, %v724
    %v937 = vpack.c.b16 %v729, %v725
    %v938 = vpack.c.b16 %v730, %v726
    %v939 = vpack.c.b16 %v731, %v727
    %v940 = vpack.c.b16 %v736, %v732
    %v941 = vpack.c.b16 %v737, %v733
    %v942 = vpack.c.b16 %v738, %v734
    %v943 = vpack.c.b16 %v739, %v735
    %v944 = vpack.c.b16 %v744, %v740
    %v945 = vpack.c.b16 %v745, %v741
    %v946 = vpack.c.b16 %v746, %v742
    %v947 = vpack.c.b16 %v747, %v743
    %v948 = vpack.c.b16 %v752, %v748
    %v949 = vpack.c.b16 %v753, %v749
    %v950 = vpack.c.b16 %v754, %v750
    %v951 = vpack.c.b16 %v755, %v751
    %v952 = vpack.c.b16 %v760, %v756
    %v953 = vpack.c.b16 %v761, %v757
    %v954 = vpack.c.b16 %v762, %v758
    %v955 = vpack.c.b16 %v763, %v759
    %v956 = vpack.c.b16 %v768, %v764
    %v957 = vpack.c.b16 %v769, %v765
    %v958 = vpack.c.b16 %v770, %v766
    %v959 = vpack.c.b16 %v771, %v767
    %v960 = vpack.c.b16 %v776, %v772
    %v961 = vpack.c.b16 %v777, %v773
    %v962 = vpack.c.b16 %v778, %v774
    %v963 = vpack.c.b16 %v779, %v775
    %v964 = vpack.c.b16 %v784, %v780
    %v965 = vpack.c.b16 %v785, %v781
    %v966 = vpack.c.b16 %v786, %v782
    %v967 = vpack.c.b16 %v787, %v783
    %v968 = vpack.c.b16 %v792, %v788
    %v969 = vpack.c.b16 %v793, %v789
    %v970 = vpack.c.b16 %v794, %v790
    %v971 = vpack.c.b16 %v795, %v791
    %v972 = vpack.c.b16 %v800, %v796
    %v973 = vpack.c.b16 %v801, %v797
    %v974 = vpack.c.b16 %v802, %v798
    %v975 = vpack.c.b16 %v803, %v799
    %v976 = vpack.c.b16 %v808, %v804
    %v977 = vpack.c.b16 %v809, %v805
    %v978 = vpack.c.b16 %v810, %v806
    %v979 = vpack.c.b16 %v811, %v807
    %v980 = vpack.c.b16 %v816, %v812
    %v981 = vpack.c.b16 %v817, %v813
    %v982 = vpack.c.b16 %v818, %v814
    %v983 = vpack.c.b16 %v819, %v815
    %v984 = vpack.c.b16 %v824, %v820
    %v985 = vpack.c.b16 %v825, %v821
    %v986 = vpack.c.b16 %v826, %v822
    %v987 = vpack.c.b16 %v827, %v823
    %v988 = vpack.c.b16 %v832, %v828
    %v989 = vpack.c.b16 %v833, %v829
    %v990 = vpack.c.b16 %v834, %v830
    %v991 = vpack.c.b16 %v835, %v831
    %v992 = vpack.c.b16 %v840, %v836
    %v993 = vpack.c.b16 %v841, %v837
    %v994 = vpack.c.b16 %v842, %v838
    %v995 = vpack.c.b16 %v843, %v839
    %v996 = vpack.c.b16 %v848, %v844
    %v997 = vpack.c.b16 %v849, %v845
    %v998 = vpack.c.b16 %v850, %v846
    %v999 = vpack.c.b16 %v851, %v847
    %v1000 = vpack.c.b16 %v856, %v852
    %v1001 = vpack.c.b16 %v857, %v853
    %v1002 = vpack.c.b16 %v858, %v854
    %v1003 = vpack.c.b16 %v859, %v855
    %v1004 = vpack.c.b16 %v864, %v860
    %v1005 = vpack.c.b16 %v865, %v861
    %v1006 = vpack.c.b16 %v866, %v862
    %v1007 = vpack.c.b16 %v867, %v863
    %v1008 = vpack.c.b16 %v872, %v868
    %v1009 = vpack.c.b16 %v873, %v869
    %v1010 = vpack.c.b16 %v874, %v870
    %v1011 = vpack.c.b16 %v875, %v871
    %v1012 = vpack.c.b16 %v880, %v876
    %v1013 = vpack.c.b16 %v881, %v877
    %v1014 = vpack.c.b16 %v882, %v878
    %v1015 = vpack.c.b16 %v883, %v879
    %v1016 = vpack.c.b16 %v888, %v884
    %v1017 = vpack.c.b16 %v889, %v885
    %v1018 = vpack.c.b16 %v890, %v886
    %v1019 = vpack.c.b16 %v891, %v887
    %1148 = vmatprep.subr.bf16.mxu0 %v921
    %1149 = vmatpush1.bf16.msra.mxu0 %v920
    %1150 = vmatprep.subr.bf16.mxu0 %v917
    %1151 = vmatpush1.bf16.msra.mxu0 %v916
    %1152 = vmatprep.subr.bf16.mxu0 %v913
    %1153 = vmatpush1.bf16.msra.mxu0 %v912
    %1154 = vmatprep.subr.bf16.mxu0 %v909
    %1155 = vmatpush1.bf16.msra.mxu0 %v908
    %1156 = vmatprep.subr.bf16.mxu0 %v905
    %1157 = vmatpush1.bf16.msra.mxu0 %v904
    %1158 = vmatprep.subr.bf16.mxu0 %v901
    %1159 = vmatpush1.bf16.msra.mxu0 %v900
    %1160 = vmatprep.subr.bf16.mxu0 %v897
    %1161 = vmatpush1.bf16.msra.mxu0 %v896
    %1162 = vmatprep.subr.bf16.mxu0 %v893
    %1163 = vmatpush1.bf16.msra.mxu0 %v892
    %1164 = vmatprep.subr.bf16.mxu0 %v953
    %1165 = vmatpush2.bf16.msra.mxu0 %v952
    %1166 = vmatprep.subr.bf16.mxu0 %v949
    %1167 = vmatpush2.bf16.msra.mxu0 %v948
    %1168 = vmatprep.subr.bf16.mxu0 %v945
    %1169 = vmatpush2.bf16.msra.mxu0 %v944
    %1170 = vmatprep.subr.bf16.mxu0 %v941
    %1171 = vmatpush2.bf16.msra.mxu0 %v940
    %1172 = vmatprep.subr.bf16.mxu0 %v937
    %1173 = vmatpush2.bf16.msra.mxu0 %v936
    %1174 = vmatprep.subr.bf16.mxu0 %v933
    %1175 = vmatpush2.bf16.msra.mxu0 %v932
    %1176 = vmatprep.subr.bf16.mxu0 %v929
    %1177 = vmatpush2.bf16.msra.mxu0 %v928
    %1178 = vmatprep.subr.bf16.mxu0 %v925
    %1179 = vmatpush2.bf16.msra.mxu0 %v924
    %1180 = vmatprep.mubr.bf16.mxu0 %v339
    %1181 = vmatmul.mubr.bf16.gmra.mxu0 %v338
    %v1182 = vpop.f32.mrf.mxu0
    %v1183 = vadd.f32 %v491, %v1182
    %v1184 = vpop.f32.mrf.mxu0
    %v1185 = vadd.f32 %v495, %v1184
    %v1186 = vpop.f32.mrf.mxu0
    %v1187 = vadd.f32 %v491, %v1186
    %v1188 = vpop.f32.mrf.mxu0
    %v1189 = vadd.f32 %v495, %v1188
    %1190 = vmatprep.mubr.bf16.mxu0 %v343
    %1191 = vmatmul.mubr.bf16.gmra.mxu0 %v342
    %v1192 = vpop.f32.mrf.mxu0
    %v1193 = vadd.f32 %v491, %v1192
    %v1194 = vpop.f32.mrf.mxu0
    %v1195 = vadd.f32 %v495, %v1194
    %v1196 = vpop.f32.mrf.mxu0
    %v1197 = vadd.f32 %v491, %v1196
    %v1198 = vpop.f32.mrf.mxu0
    %v1199 = vadd.f32 %v495, %v1198
    %1200 = vmatprep.mubr.bf16.mxu0 %v347
    %1201 = vmatmul.mubr.bf16.gmra.mxu0 %v346
    %v1202 = vpop.f32.mrf.mxu0
    %v1203 = vadd.f32 %v491, %v1202
    %v1204 = vpop.f32.mrf.mxu0
    %v1205 = vadd.f32 %v495, %v1204
    %v1206 = vpop.f32.mrf.mxu0
    %v1207 = vadd.f32 %v491, %v1206
    %v1208 = vpop.f32.mrf.mxu0
    %v1209 = vadd.f32 %v495, %v1208
    %1210 = vmatprep.mubr.bf16.mxu0 %v351
    %1211 = vmatmul.mubr.bf16.gmra.mxu0 %v350
    %v1212 = vpop.f32.mrf.mxu0
    %v1213 = vadd.f32 %v491, %v1212
    %v1214 = vpop.f32.mrf.mxu0
    %v1215 = vadd.f32 %v495, %v1214
    %v1216 = vpop.f32.mrf.mxu0
    %v1217 = vadd.f32 %v491, %v1216
    %v1218 = vpop.f32.mrf.mxu0
    %v1219 = vadd.f32 %v495, %v1218
    %1220 = vmatprep.mubr.bf16.mxu0 %v355
    %1221 = vmatmul.mubr.bf16.gmra.mxu0 %v354
    %v1222 = vpop.f32.mrf.mxu0
    %v1223 = vadd.f32 %v491, %v1222
    %v1224 = vpop.f32.mrf.mxu0
    %v1225 = vadd.f32 %v495, %v1224
    %v1226 = vpop.f32.mrf.mxu0
    %v1227 = vpop.f32.mrf.mxu0
    %1228 = vdwg.mxu0
    %1229 = vmatprep.subr.bf16.mxu0 %v985
    %1230 = vmatpush1.bf16.msra.mxu0 %v984
    %1231 = vmatprep.subr.bf16.mxu0 %v981
    %1232 = vmatpush1.bf16.msra.mxu0 %v980
    %1233 = vmatprep.subr.bf16.mxu0 %v977
    %1234 = vmatpush1.bf16.msra.mxu0 %v976
    %1235 = vmatprep.subr.bf16.mxu0 %v973
    %1236 = vmatpush1.bf16.msra.mxu0 %v972
    %1237 = vmatprep.subr.bf16.mxu0 %v969
    %1238 = vmatpush1.bf16.msra.mxu0 %v968
    %1239 = vmatprep.subr.bf16.mxu0 %v965
    %1240 = vmatpush1.bf16.msra.mxu0 %v964
    %1241 = vmatprep.subr.bf16.mxu0 %v961
    %1242 = vmatpush1.bf16.msra.mxu0 %v960
    %1243 = vmatprep.subr.bf16.mxu0 %v957
    %1244 = vmatpush1.bf16.msra.mxu0 %v956
    %1245 = vmatprep.subr.bf16.mxu0 %v1017
    %1246 = vmatpush2.bf16.msra.mxu0 %v1016
    %1247 = vmatprep.subr.bf16.mxu0 %v1013
    %1248 = vmatpush2.bf16.msra.mxu0 %v1012
    %1249 = vmatprep.subr.bf16.mxu0 %v1009
    %1250 = vmatpush2.bf16.msra.mxu0 %v1008
    %1251 = vmatprep.subr.bf16.mxu0 %v1005
    %1252 = vmatpush2.bf16.msra.mxu0 %v1004
    %1253 = vmatprep.subr.bf16.mxu0 %v1001
    %1254 = vmatpush2.bf16.msra.mxu0 %v1000
    %1255 = vmatprep.subr.bf16.mxu0 %v997
    %1256 = vmatpush2.bf16.msra.mxu0 %v996
    %1257 = vmatprep.subr.bf16.mxu0 %v993
    %1258 = vmatpush2.bf16.msra.mxu0 %v992
    %1259 = vmatprep.subr.bf16.mxu0 %v989
    %1260 = vmatpush2.bf16.msra.mxu0 %v988
    %1261 = vmatprep.mubr.bf16.mxu0 %v341
    %1262 = vmatmul.mubr.bf16.gmra.mxu0 %v340
    %v1263 = vpop.f32.mrf.mxu0
    %v1264 = vadd.f32 %v1183, %v1263
    %v1265 = vpop.f32.mrf.mxu0
    %v1266 = vadd.f32 %v1185, %v1265
    %v1267 = vpop.f32.mrf.mxu0
    %v1268 = vadd.f32 %v1187, %v1267
    %v1269 = vpop.f32.mrf.mxu0
    %v1270 = vadd.f32 %v1189, %v1269
    %1271 = vmatprep.mubr.bf16.mxu0 %v345
    %1272 = vmatmul.mubr.bf16.gmra.mxu0 %v344
    %v1273 = vpop.f32.mrf.mxu0
    %v1274 = vadd.f32 %v1193, %v1273
    %v1275 = vpop.f32.mrf.mxu0
    %v1276 = vadd.f32 %v1195, %v1275
    %v1277 = vpop.f32.mrf.mxu0
    %v1278 = vadd.f32 %v1197, %v1277
    %v1279 = vpop.f32.mrf.mxu0
    %v1280 = vadd.f32 %v1199, %v1279
    %1281 = vmatprep.mubr.bf16.mxu0 %v349
    %1282 = vmatmul.mubr.bf16.gmra.mxu0 %v348
    %v1283 = vpop.f32.mrf.mxu0
    %v1284 = vadd.f32 %v1203, %v1283
    %v1285 = vpop.f32.mrf.mxu0
    %v1286 = vadd.f32 %v1205, %v1285
    %v1287 = vpop.f32.mrf.mxu0
    %v1288 = vadd.f32 %v1207, %v1287
    %v1289 = vpop.f32.mrf.mxu0
    %v1290 = vadd.f32 %v1209, %v1289
    %1291 = vmatprep.mubr.bf16.mxu0 %v353
    %1292 = vmatmul.mubr.bf16.gmra.mxu0 %v352
    %v1293 = vpop.f32.mrf.mxu0
    %v1294 = vadd.f32 %v1213, %v1293
    %v1295 = vpop.f32.mrf.mxu0
    %v1296 = vadd.f32 %v1215, %v1295
    %v1297 = vpop.f32.mrf.mxu0
    %v1298 = vadd.f32 %v1217, %v1297
    %v1299 = vpop.f32.mrf.mxu0
    %v1300 = vadd.f32 %v1219, %v1299
    %1301 = vmatprep.mubr.bf16.mxu0 %v357
    %1302 = vmatmul.mubr.bf16.gmra.mxu0 %v356
    %v1303 = vpop.f32.mrf.mxu0
    %v1304 = vadd.f32 %v1223, %v1303
    %v1305 = vpop.f32.mrf.mxu0
    %v1306 = vadd.f32 %v1225, %v1305
    %v1307 = vpop.f32.mrf.mxu0
    %v1308 = vpop.f32.mrf.mxu0
    %1309 = vdwg.mxu0
    %1310 = vmatprep.subr.bf16.mxu0 %v923
    %1311 = vmatpush1.bf16.msra.mxu0 %v922
    %1312 = vmatprep.subr.bf16.mxu0 %v919
    %1313 = vmatpush1.bf16.msra.mxu0 %v918
    %1314 = vmatprep.subr.bf16.mxu0 %v915
    %1315 = vmatpush1.bf16.msra.mxu0 %v914
    %1316 = vmatprep.subr.bf16.mxu0 %v911
    %1317 = vmatpush1.bf16.msra.mxu0 %v910
    %1318 = vmatprep.subr.bf16.mxu0 %v907
    %1319 = vmatpush1.bf16.msra.mxu0 %v906
    %1320 = vmatprep.subr.bf16.mxu0 %v903
    %1321 = vmatpush1.bf16.msra.mxu0 %v902
    %1322 = vmatprep.subr.bf16.mxu0 %v899
    %1323 = vmatpush1.bf16.msra.mxu0 %v898
    %1324 = vmatprep.subr.bf16.mxu0 %v895
    %1325 = vmatpush1.bf16.msra.mxu0 %v894
    %1326 = vmatprep.subr.bf16.mxu0 %v955
    %1327 = vmatpush2.bf16.msra.mxu0 %v954
    %1328 = vmatprep.subr.bf16.mxu0 %v951
    %1329 = vmatpush2.bf16.msra.mxu0 %v950
    %1330 = vmatprep.subr.bf16.mxu0 %v947
    %1331 = vmatpush2.bf16.msra.mxu0 %v946
    %1332 = vmatprep.subr.bf16.mxu0 %v943
    %1333 = vmatpush2.bf16.msra.mxu0 %v942
    %1334 = vmatprep.subr.bf16.mxu0 %v939
    %1335 = vmatpush2.bf16.msra.mxu0 %v938
    %1336 = vmatprep.subr.bf16.mxu0 %v935
    %1337 = vmatpush2.bf16.msra.mxu0 %v934
    %1338 = vmatprep.subr.bf16.mxu0 %v931
    %1339 = vmatpush2.bf16.msra.mxu0 %v930
    %1340 = vmatprep.subr.bf16.mxu0 %v927
    %1341 = vmatpush2.bf16.msra.mxu0 %v926
    %1342 = vmatprep.mubr.bf16.mxu0 %v339
    %1343 = vmatmul.mubr.bf16.gmra.mxu0 %v338
    %v1344 = vpop.f32.mrf.mxu0
    %v1345 = vadd.f32 %v499, %v1344
    %v1346 = vpop.f32.mrf.mxu0
    %v1347 = vadd.f32 %v503, %v1346
    %v1348 = vpop.f32.mrf.mxu0
    %v1349 = vadd.f32 %v499, %v1348
    %v1350 = vpop.f32.mrf.mxu0
    %v1351 = vadd.f32 %v503, %v1350
    %1352 = vmatprep.mubr.bf16.mxu0 %v343
    %1353 = vmatmul.mubr.bf16.gmra.mxu0 %v342
    %v1354 = vpop.f32.mrf.mxu0
    %v1355 = vadd.f32 %v499, %v1354
    %v1356 = vpop.f32.mrf.mxu0
    %v1357 = vadd.f32 %v503, %v1356
    %v1358 = vpop.f32.mrf.mxu0
    %v1359 = vadd.f32 %v499, %v1358
    %v1360 = vpop.f32.mrf.mxu0
    %v1361 = vadd.f32 %v503, %v1360
    %1362 = vmatprep.mubr.bf16.mxu0 %v347
    %1363 = vmatmul.mubr.bf16.gmra.mxu0 %v346
    %v1364 = vpop.f32.mrf.mxu0
    %v1365 = vadd.f32 %v499, %v1364
    %v1366 = vpop.f32.mrf.mxu0
    %v1367 = vadd.f32 %v503, %v1366
    %v1368 = vpop.f32.mrf.mxu0
    %v1369 = vadd.f32 %v499, %v1368
    %v1370 = vpop.f32.mrf.mxu0
    %v1371 = vadd.f32 %v503, %v1370
    %1372 = vmatprep.mubr.bf16.mxu0 %v351
    %1373 = vmatmul.mubr.bf16.gmra.mxu0 %v350
    %v1374 = vpop.f32.mrf.mxu0
    %v1375 = vadd.f32 %v499, %v1374
    %v1376 = vpop.f32.mrf.mxu0
    %v1377 = vadd.f32 %v503, %v1376
    %v1378 = vpop.f32.mrf.mxu0
    %v1379 = vadd.f32 %v499, %v1378
    %v1380 = vpop.f32.mrf.mxu0
    %v1381 = vadd.f32 %v503, %v1380
    %1382 = vmatprep.mubr.bf16.mxu0 %v355
    %1383 = vmatmul.mubr.bf16.gmra.mxu0 %v354
    %v1384 = vpop.f32.mrf.mxu0
    %v1385 = vadd.f32 %v499, %v1384
    %v1386 = vpop.f32.mrf.mxu0
    %v1387 = vadd.f32 %v503, %v1386
    %v1388 = vpop.f32.mrf.mxu0
    %v1389 = vpop.f32.mrf.mxu0
    %1390 = vdwg.mxu0
    %1391 = vmatprep.subr.bf16.mxu0 %v987
    %1392 = vmatpush1.bf16.msra.mxu0 %v986
    %1393 = vmatprep.subr.bf16.mxu0 %v983
    %1394 = vmatpush1.bf16.msra.mxu0 %v982
    %1395 = vmatprep.subr.bf16.mxu0 %v979
    %1396 = vmatpush1.bf16.msra.mxu0 %v978
    %1397 = vmatprep.subr.bf16.mxu0 %v975
    %1398 = vmatpush1.bf16.msra.mxu0 %v974
    %1399 = vmatprep.subr.bf16.mxu0 %v971
    %1400 = vmatpush1.bf16.msra.mxu0 %v970
    %1401 = vmatprep.subr.bf16.mxu0 %v967
    %1402 = vmatpush1.bf16.msra.mxu0 %v966
    %1403 = vmatprep.subr.bf16.mxu0 %v963
    %1404 = vmatpush1.bf16.msra.mxu0 %v962
    %1405 = vmatprep.subr.bf16.mxu0 %v959
    %1406 = vmatpush1.bf16.msra.mxu0 %v958
    %1407 = vmatprep.subr.bf16.mxu0 %v1019
    %1408 = vmatpush2.bf16.msra.mxu0 %v1018
    %1409 = vmatprep.subr.bf16.mxu0 %v1015
    %1410 = vmatpush2.bf16.msra.mxu0 %v1014
    %1411 = vmatprep.subr.bf16.mxu0 %v1011
    %1412 = vmatpush2.bf16.msra.mxu0 %v1010
    %1413 = vmatprep.subr.bf16.mxu0 %v1007
    %1414 = vmatpush2.bf16.msra.mxu0 %v1006
    %1415 = vmatprep.subr.bf16.mxu0 %v1003
    %1416 = vmatpush2.bf16.msra.mxu0 %v1002
    %1417 = vmatprep.subr.bf16.mxu0 %v999
    %1418 = vmatpush2.bf16.msra.mxu0 %v998
    %1419 = vmatprep.subr.bf16.mxu0 %v995
    %1420 = vmatpush2.bf16.msra.mxu0 %v994
    %1421 = vmatprep.subr.bf16.mxu0 %v991
    %1422 = vmatpush2.bf16.msra.mxu0 %v990
    %1423 = vmatprep.mubr.bf16.mxu0 %v341
    %1424 = vmatmul.mubr.bf16.gmra.mxu0 %v340
    %v1425 = vpop.f32.mrf.mxu0
    %v1426 = vadd.f32 %v1345, %v1425
    %v1427 = vpop.f32.mrf.mxu0
    %v1428 = vadd.f32 %v1347, %v1427
    %v1429 = vpop.f32.mrf.mxu0
    %v1430 = vadd.f32 %v1349, %v1429
    %v1431 = vpop.f32.mrf.mxu0
    %v1432 = vadd.f32 %v1351, %v1431
    %1433 = vmatprep.mubr.bf16.mxu0 %v345
    %1434 = vmatmul.mubr.bf16.gmra.mxu0 %v344
    %v1435 = vpop.f32.mrf.mxu0
    %v1436 = vadd.f32 %v1355, %v1435
    %v1437 = vpop.f32.mrf.mxu0
    %v1438 = vadd.f32 %v1357, %v1437
    %v1439 = vpop.f32.mrf.mxu0
    %v1440 = vadd.f32 %v1359, %v1439
    %v1441 = vpop.f32.mrf.mxu0
    %v1442 = vadd.f32 %v1361, %v1441
    %1443 = vmatprep.mubr.bf16.mxu0 %v349
    %1444 = vmatmul.mubr.bf16.gmra.mxu0 %v348
    %v1445 = vpop.f32.mrf.mxu0
    %v1446 = vadd.f32 %v1365, %v1445
    %v1447 = vpop.f32.mrf.mxu0
    %v1448 = vadd.f32 %v1367, %v1447
    %v1449 = vpop.f32.mrf.mxu0
    %v1450 = vadd.f32 %v1369, %v1449
    %v1451 = vpop.f32.mrf.mxu0
    %v1452 = vadd.f32 %v1371, %v1451
    %1453 = vmatprep.mubr.bf16.mxu0 %v353
    %1454 = vmatmul.mubr.bf16.gmra.mxu0 %v352
    %v1455 = vpop.f32.mrf.mxu0
    %v1456 = vadd.f32 %v1375, %v1455
    %v1457 = vpop.f32.mrf.mxu0
    %v1458 = vadd.f32 %v1377, %v1457
    %v1459 = vpop.f32.mrf.mxu0
    %v1460 = vadd.f32 %v1379, %v1459
    %v1461 = vpop.f32.mrf.mxu0
    %v1462 = vadd.f32 %v1381, %v1461
    %1463 = vmatprep.mubr.bf16.mxu0 %v357
    %1464 = vmatmul.mubr.bf16.gmra.mxu0 %v356
    %v1465 = vpop.f32.mrf.mxu0
    %v1466 = vadd.f32 %v1385, %v1465
    %v1467 = vpop.f32.mrf.mxu0
    %v1468 = vadd.f32 %v1387, %v1467
    %v1469 = vpop.f32.mrf.mxu0
    %v1470 = vpop.f32.mrf.mxu0
    %1471 = vdwg.mxu0
    %v1472 = vmax.f32 %v1264, 0.0
    %v1473 = vmax.f32 %v1266, 0.0
    %v1474 = vmax.f32 %v1426, 0.0
    %v1475 = vmax.f32 %v1428, 0.0
    %v1476 = vmax.f32 %v1268, 0.0
    %v1477 = vmax.f32 %v1270, 0.0
    %v1478 = vmax.f32 %v1430, 0.0
    %v1479 = vmax.f32 %v1432, 0.0
    %v1480 = vmax.f32 %v1274, 0.0
    %v1481 = vmax.f32 %v1276, 0.0
    %v1482 = vmax.f32 %v1436, 0.0
    %v1483 = vmax.f32 %v1438, 0.0
    %v1484 = vmax.f32 %v1278, 0.0
    %v1485 = vmax.f32 %v1280, 0.0
    %v1486 = vmax.f32 %v1440, 0.0
    %v1487 = vmax.f32 %v1442, 0.0
    %v1488 = vmax.f32 %v1284, 0.0
    %v1489 = vmax.f32 %v1286, 0.0
    %v1490 = vmax.f32 %v1446, 0.0
    %v1491 = vmax.f32 %v1448, 0.0
    %v1492 = vmax.f32 %v1288, 0.0
    %v1493 = vmax.f32 %v1290, 0.0
    %v1494 = vmax.f32 %v1450, 0.0
    %v1495 = vmax.f32 %v1452, 0.0
    %v1496 = vmax.f32 %v1294, 0.0
    %v1497 = vmax.f32 %v1296, 0.0
    %v1498 = vmax.f32 %v1456, 0.0
    %v1499 = vmax.f32 %v1458, 0.0
    %v1500 = vmax.f32 %v1298, 0.0
    %v1501 = vmax.f32 %v1300, 0.0
    %v1502 = vmax.f32 %v1460, 0.0
    %v1503 = vmax.f32 %v1462, 0.0
    %v1504 = vmax.f32 %v1304, 0.0
    %v1505 = vmax.f32 %v1306, 0.0
    %v1506 = vmax.f32 %v1466, 0.0
    %v1507 = vmax.f32 %v1468, 0.0
    %v1508 = vpack.c.bf16 %v1472, %v1472
    %v1509 = vpack.c.bf16 %v1473, %v1473
    %v1510 = vpack.c.bf16 %v1474, %v1474
    %v1511 = vpack.c.bf16 %v1475, %v1475
    %v1512 = vld [vmem:[#allocation9] sm:$0xff]
    %v1513 = vld [vmem:[#allocation9 + $0x8] sm:$0xff]
    %v1514 = vld [vmem:[#allocation9 + $0x10] sm:$0xff]
    %v1515 = vld [vmem:[#allocation9 + $0x18] sm:$0xff]
    %v1516 = vld [vmem:[#allocation9 + $0x20] sm:$0xff]
    %v1517 = vld [vmem:[#allocation9 + $0x28] sm:$0xff]
    %v1518 = vld [vmem:[#allocation9 + $0x30] sm:$0xff]
    %v1519 = vld [vmem:[#allocation9 + $0x38] sm:$0xff]
    %v1520 = vld [vmem:[#allocation9 + $0x40] sm:$0xff]
    %v1521 = vld [vmem:[#allocation9 + $0x48] sm:$0xff]
    %v1522 = vld [vmem:[#allocation9 + $0x50] sm:$0xff]
    %v1523 = vld [vmem:[#allocation9 + $0x58] sm:$0xff]
    %v1524 = vld [vmem:[#allocation9 + $0x60] sm:$0xff]
    %v1525 = vld [vmem:[#allocation9 + $0x68] sm:$0xff]
    %v1526 = vld [vmem:[#allocation9 + $0x70] sm:$0xff]
    %v1527 = vld [vmem:[#allocation9 + $0x78] sm:$0xff]
    %v1528 = vld [vmem:[#allocation9 + $0x80] sm:$0xff]
    %v1529 = vld [vmem:[#allocation9 + $0x88] sm:$0xff]
    %v1530 = vld [vmem:[#allocation9 + $0x90] sm:$0xff]
    %v1531 = vld [vmem:[#allocation9 + $0x98] sm:$0xff]
    %v1532 = vld [vmem:[#allocation9 + $0xa0] sm:$0xff]
    %v1533 = vld [vmem:[#allocation9 + $0xa8] sm:$0xff]
    %v1534 = vld [vmem:[#allocation9 + $0xb0] sm:$0xff]
    %v1535 = vld [vmem:[#allocation9 + $0xb8] sm:$0xff]
    %v1536 = vld [vmem:[#allocation9 + $0xc0] sm:$0xff]
    %v1537 = vld [vmem:[#allocation9 + $0xc8] sm:$0xff]
    %v1538 = vld [vmem:[#allocation9 + $0xd0] sm:$0xff]
    %v1539 = vld [vmem:[#allocation9 + $0xd8] sm:$0xff]
    %v1540 = vld [vmem:[#allocation9 + $0xe0] sm:$0xff]
    %v1541 = vld [vmem:[#allocation9 + $0xe8] sm:$0xff]
    %v1542 = vld [vmem:[#allocation9 + $0xf0] sm:$0xff]
    %v1543 = vld [vmem:[#allocation9 + $0xf8] sm:$0xff]
    %v1544 = vld [vmem:[#allocation9 + $0x100] sm:$0xff]
    %v1545 = vld [vmem:[#allocation9 + $0x108] sm:$0xff]
    %v1546 = vld [vmem:[#allocation9 + $0x110] sm:$0xff]
    %v1547 = vld [vmem:[#allocation9 + $0x118] sm:$0xff]
    %v1548 = vld [vmem:[#allocation9 + $0x120] sm:$0xff]
    %v1549 = vld [vmem:[#allocation9 + $0x128] sm:$0xff]
    %v1550 = vld [vmem:[#allocation9 + $0x130] sm:$0xff]
    %v1551 = vld [vmem:[#allocation9 + $0x138] sm:$0xff]
    %v1552 = vld [vmem:[#allocation9 + $0x140] sm:$0xff]
    %v1553 = vld [vmem:[#allocation9 + $0x148] sm:$0xff]
    %v1554 = vld [vmem:[#allocation9 + $0x150] sm:$0xff]
    %v1555 = vld [vmem:[#allocation9 + $0x158] sm:$0xff]
    %v1556 = vld [vmem:[#allocation9 + $0x160] sm:$0xff]
    %v1557 = vld [vmem:[#allocation9 + $0x168] sm:$0xff]
    %v1558 = vld [vmem:[#allocation9 + $0x170] sm:$0xff]
    %v1559 = vld [vmem:[#allocation9 + $0x178] sm:$0xff]
    %v1560 = vld [vmem:[#allocation9 + $0x180] sm:$0xff]
    %v1561 = vld [vmem:[#allocation9 + $0x188] sm:$0xff]
    %v1562 = vld [vmem:[#allocation9 + $0x190] sm:$0xff]
    %v1563 = vld [vmem:[#allocation9 + $0x198] sm:$0xff]
    %v1564 = vld [vmem:[#allocation9 + $0x1a0] sm:$0xff]
    %v1565 = vld [vmem:[#allocation9 + $0x1a8] sm:$0xff]
    %v1566 = vld [vmem:[#allocation9 + $0x1b0] sm:$0xff]
    %v1567 = vld [vmem:[#allocation9 + $0x1b8] sm:$0xff]
    %v1568 = vld [vmem:[#allocation9 + $0x1c0] sm:$0xff]
    %v1569 = vld [vmem:[#allocation9 + $0x1c8] sm:$0xff]
    %v1570 = vld [vmem:[#allocation9 + $0x1d0] sm:$0xff]
    %v1571 = vld [vmem:[#allocation9 + $0x1d8] sm:$0xff]
    %v1572 = vld [vmem:[#allocation9 + $0x1e0] sm:$0xff]
    %v1573 = vld [vmem:[#allocation9 + $0x1e8] sm:$0xff]
    %v1574 = vld [vmem:[#allocation9 + $0x1f0] sm:$0xff]
    %v1575 = vld [vmem:[#allocation9 + $0x1f8] sm:$0xff]
    %v1576 = vld [vmem:[#allocation9 + $0x200] sm:$0xff]
    %v1577 = vld [vmem:[#allocation9 + $0x208] sm:$0xff]
    %v1578 = vld [vmem:[#allocation9 + $0x210] sm:$0xff]
    %v1579 = vld [vmem:[#allocation9 + $0x218] sm:$0xff]
    %v1580 = vld [vmem:[#allocation9 + $0x220] sm:$0xff]
    %v1581 = vld [vmem:[#allocation9 + $0x228] sm:$0xff]
    %v1582 = vld [vmem:[#allocation9 + $0x230] sm:$0xff]
    %v1583 = vld [vmem:[#allocation9 + $0x238] sm:$0xff]
    %v1584 = vld [vmem:[#allocation9 + $0x240] sm:$0xff]
    %v1585 = vld [vmem:[#allocation9 + $0x248] sm:$0xff]
    %v1586 = vld [vmem:[#allocation9 + $0x250] sm:$0xff]
    %v1587 = vld [vmem:[#allocation9 + $0x258] sm:$0xff]
    %v1588 = vld [vmem:[#allocation9 + $0x260] sm:$0xff]
    %v1589 = vld [vmem:[#allocation9 + $0x268] sm:$0xff]
    %v1590 = vld [vmem:[#allocation9 + $0x270] sm:$0xff]
    %v1591 = vld [vmem:[#allocation9 + $0x278] sm:$0xff]
    %v1592 = vld [vmem:[#allocation9 + $0x280] sm:$0xff]
    %v1593 = vld [vmem:[#allocation9 + $0x288] sm:$0xff]
    %v1594 = vld [vmem:[#allocation9 + $0x290] sm:$0xff]
    %v1595 = vld [vmem:[#allocation9 + $0x298] sm:$0xff]
    %v1596 = vld [vmem:[#allocation9 + $0x2a0] sm:$0xff]
    %v1597 = vld [vmem:[#allocation9 + $0x2a8] sm:$0xff]
    %v1598 = vld [vmem:[#allocation9 + $0x2b0] sm:$0xff]
    %v1599 = vld [vmem:[#allocation9 + $0x2b8] sm:$0xff]
    %v1600 = vld [vmem:[#allocation9 + $0x2c0] sm:$0xff]
    %v1601 = vld [vmem:[#allocation9 + $0x2c8] sm:$0xff]
    %v1602 = vld [vmem:[#allocation9 + $0x2d0] sm:$0xff]
    %v1603 = vld [vmem:[#allocation9 + $0x2d8] sm:$0xff]
    %v1604 = vld [vmem:[#allocation9 + $0x2e0] sm:$0xff]
    %v1605 = vld [vmem:[#allocation9 + $0x2e8] sm:$0xff]
    %v1606 = vld [vmem:[#allocation9 + $0x2f0] sm:$0xff]
    %v1607 = vld [vmem:[#allocation9 + $0x2f8] sm:$0xff]
    %v1608 = vld [vmem:[#allocation9 + $0x300] sm:$0xff]
    %v1609 = vld [vmem:[#allocation9 + $0x308] sm:$0xff]
    %v1610 = vld [vmem:[#allocation9 + $0x310] sm:$0xff]
    %v1611 = vld [vmem:[#allocation9 + $0x318] sm:$0xff]
    %v1612 = vld [vmem:[#allocation9 + $0x320] sm:$0xff]
    %v1613 = vld [vmem:[#allocation9 + $0x328] sm:$0xff]
    %v1614 = vld [vmem:[#allocation9 + $0x330] sm:$0xff]
    %v1615 = vld [vmem:[#allocation9 + $0x338] sm:$0xff]
    %v1616 = vld [vmem:[#allocation9 + $0x340] sm:$0xff]
    %v1617 = vld [vmem:[#allocation9 + $0x348] sm:$0xff]
    %v1618 = vld [vmem:[#allocation9 + $0x350] sm:$0xff]
    %v1619 = vld [vmem:[#allocation9 + $0x358] sm:$0xff]
    %v1620 = vld [vmem:[#allocation9 + $0x360] sm:$0xff]
    %v1621 = vld [vmem:[#allocation9 + $0x368] sm:$0xff]
    %v1622 = vld [vmem:[#allocation9 + $0x370] sm:$0xff]
    %v1623 = vld [vmem:[#allocation9 + $0x378] sm:$0xff]
    %v1624 = vld [vmem:[#allocation9 + $0x380] sm:$0xff]
    %v1625 = vld [vmem:[#allocation9 + $0x388] sm:$0xff]
    %v1626 = vld [vmem:[#allocation9 + $0x390] sm:$0xff]
    %v1627 = vld [vmem:[#allocation9 + $0x398] sm:$0xff]
    %v1628 = vld [vmem:[#allocation9 + $0x3a0] sm:$0xff]
    %v1629 = vld [vmem:[#allocation9 + $0x3a8] sm:$0xff]
    %v1630 = vld [vmem:[#allocation9 + $0x3b0] sm:$0xff]
    %v1631 = vld [vmem:[#allocation9 + $0x3b8] sm:$0xff]
    %v1632 = vld [vmem:[#allocation9 + $0x3c0] sm:$0xff]
    %v1633 = vld [vmem:[#allocation9 + $0x3c8] sm:$0xff]
    %v1634 = vld [vmem:[#allocation9 + $0x3d0] sm:$0xff]
    %v1635 = vld [vmem:[#allocation9 + $0x3d8] sm:$0xff]
    %v1636 = vld [vmem:[#allocation9 + $0x3e0] sm:$0xff]
    %v1637 = vld [vmem:[#allocation9 + $0x3e8] sm:$0xff]
    %v1638 = vld [vmem:[#allocation9 + $0x3f0] sm:$0xff]
    %v1639 = vld [vmem:[#allocation9 + $0x3f8] sm:$0xff]
    %v1640 = vpack.c.bf16 %v1476, %v1476
    %v1641 = vpack.c.bf16 %v1477, %v1477
    %v1642 = vpack.c.bf16 %v1478, %v1478
    %v1643 = vpack.c.bf16 %v1479, %v1479
    %v1644 = vld [vmem:[#allocation9 + $0x400] sm:$0xff]
    %v1645 = vld [vmem:[#allocation9 + $0x408] sm:$0xff]
    %v1646 = vld [vmem:[#allocation9 + $0x410] sm:$0xff]
    %v1647 = vld [vmem:[#allocation9 + $0x418] sm:$0xff]
    %v1648 = vld [vmem:[#allocation9 + $0x420] sm:$0xff]
    %v1649 = vld [vmem:[#allocation9 + $0x428] sm:$0xff]
    %v1650 = vld [vmem:[#allocation9 + $0x430] sm:$0xff]
    %v1651 = vld [vmem:[#allocation9 + $0x438] sm:$0xff]
    %v1652 = vld [vmem:[#allocation9 + $0x440] sm:$0xff]
    %v1653 = vld [vmem:[#allocation9 + $0x448] sm:$0xff]
    %v1654 = vld [vmem:[#allocation9 + $0x450] sm:$0xff]
    %v1655 = vld [vmem:[#allocation9 + $0x458] sm:$0xff]
    %v1656 = vld [vmem:[#allocation9 + $0x460] sm:$0xff]
    %v1657 = vld [vmem:[#allocation9 + $0x468] sm:$0xff]
    %v1658 = vld [vmem:[#allocation9 + $0x470] sm:$0xff]
    %v1659 = vld [vmem:[#allocation9 + $0x478] sm:$0xff]
    %v1660 = vld [vmem:[#allocation9 + $0x480] sm:$0xff]
    %v1661 = vld [vmem:[#allocation9 + $0x488] sm:$0xff]
    %v1662 = vld [vmem:[#allocation9 + $0x490] sm:$0xff]
    %v1663 = vld [vmem:[#allocation9 + $0x498] sm:$0xff]
    %v1664 = vld [vmem:[#allocation9 + $0x4a0] sm:$0xff]
    %v1665 = vld [vmem:[#allocation9 + $0x4a8] sm:$0xff]
    %v1666 = vld [vmem:[#allocation9 + $0x4b0] sm:$0xff]
    %v1667 = vld [vmem:[#allocation9 + $0x4b8] sm:$0xff]
    %v1668 = vld [vmem:[#allocation9 + $0x4c0] sm:$0xff]
    %v1669 = vld [vmem:[#allocation9 + $0x4c8] sm:$0xff]
    %v1670 = vld [vmem:[#allocation9 + $0x4d0] sm:$0xff]
    %v1671 = vld [vmem:[#allocation9 + $0x4d8] sm:$0xff]
    %v1672 = vld [vmem:[#allocation9 + $0x4e0] sm:$0xff]
    %v1673 = vld [vmem:[#allocation9 + $0x4e8] sm:$0xff]
    %v1674 = vld [vmem:[#allocation9 + $0x4f0] sm:$0xff]
    %v1675 = vld [vmem:[#allocation9 + $0x4f8] sm:$0xff]
    %v1676 = vld [vmem:[#allocation9 + $0x500] sm:$0xff]
    %v1677 = vld [vmem:[#allocation9 + $0x508] sm:$0xff]
    %v1678 = vld [vmem:[#allocation9 + $0x510] sm:$0xff]
    %v1679 = vld [vmem:[#allocation9 + $0x518] sm:$0xff]
    %v1680 = vld [vmem:[#allocation9 + $0x520] sm:$0xff]
    %v1681 = vld [vmem:[#allocation9 + $0x528] sm:$0xff]
    %v1682 = vld [vmem:[#allocation9 + $0x530] sm:$0xff]
    %v1683 = vld [vmem:[#allocation9 + $0x538] sm:$0xff]
    %v1684 = vld [vmem:[#allocation9 + $0x540] sm:$0xff]
    %v1685 = vld [vmem:[#allocation9 + $0x548] sm:$0xff]
    %v1686 = vld [vmem:[#allocation9 + $0x550] sm:$0xff]
    %v1687 = vld [vmem:[#allocation9 + $0x558] sm:$0xff]
    %v1688 = vld [vmem:[#allocation9 + $0x560] sm:$0xff]
    %v1689 = vld [vmem:[#allocation9 + $0x568] sm:$0xff]
    %v1690 = vld [vmem:[#allocation9 + $0x570] sm:$0xff]
    %v1691 = vld [vmem:[#allocation9 + $0x578] sm:$0xff]
    %v1692 = vld [vmem:[#allocation9 + $0x580] sm:$0xff]
    %v1693 = vld [vmem:[#allocation9 + $0x588] sm:$0xff]
    %v1694 = vld [vmem:[#allocation9 + $0x590] sm:$0xff]
    %v1695 = vld [vmem:[#allocation9 + $0x598] sm:$0xff]
    %v1696 = vld [vmem:[#allocation9 + $0x5a0] sm:$0xff]
    %v1697 = vld [vmem:[#allocation9 + $0x5a8] sm:$0xff]
    %v1698 = vld [vmem:[#allocation9 + $0x5b0] sm:$0xff]
    %v1699 = vld [vmem:[#allocation9 + $0x5b8] sm:$0xff]
    %v1700 = vld [vmem:[#allocation9 + $0x5c0] sm:$0xff]
    %v1701 = vld [vmem:[#allocation9 + $0x5c8] sm:$0xff]
    %v1702 = vld [vmem:[#allocation9 + $0x5d0] sm:$0xff]
    %v1703 = vld [vmem:[#allocation9 + $0x5d8] sm:$0xff]
    %v1704 = vld [vmem:[#allocation9 + $0x5e0] sm:$0xff]
    %v1705 = vld [vmem:[#allocation9 + $0x5e8] sm:$0xff]
    %v1706 = vld [vmem:[#allocation9 + $0x5f0] sm:$0xff]
    %v1707 = vld [vmem:[#allocation9 + $0x5f8] sm:$0xff]
    %v1708 = vld [vmem:[#allocation9 + $0x600] sm:$0xff]
    %v1709 = vld [vmem:[#allocation9 + $0x608] sm:$0xff]
    %v1710 = vld [vmem:[#allocation9 + $0x610] sm:$0xff]
    %v1711 = vld [vmem:[#allocation9 + $0x618] sm:$0xff]
    %v1712 = vld [vmem:[#allocation9 + $0x620] sm:$0xff]
    %v1713 = vld [vmem:[#allocation9 + $0x628] sm:$0xff]
    %v1714 = vld [vmem:[#allocation9 + $0x630] sm:$0xff]
    %v1715 = vld [vmem:[#allocation9 + $0x638] sm:$0xff]
    %v1716 = vld [vmem:[#allocation9 + $0x640] sm:$0xff]
    %v1717 = vld [vmem:[#allocation9 + $0x648] sm:$0xff]
    %v1718 = vld [vmem:[#allocation9 + $0x650] sm:$0xff]
    %v1719 = vld [vmem:[#allocation9 + $0x658] sm:$0xff]
    %v1720 = vld [vmem:[#allocation9 + $0x660] sm:$0xff]
    %v1721 = vld [vmem:[#allocation9 + $0x668] sm:$0xff]
    %v1722 = vld [vmem:[#allocation9 + $0x670] sm:$0xff]
    %v1723 = vld [vmem:[#allocation9 + $0x678] sm:$0xff]
    %v1724 = vld [vmem:[#allocation9 + $0x680] sm:$0xff]
    %v1725 = vld [vmem:[#allocation9 + $0x688] sm:$0xff]
    %v1726 = vld [vmem:[#allocation9 + $0x690] sm:$0xff]
    %v1727 = vld [vmem:[#allocation9 + $0x698] sm:$0xff]
    %v1728 = vld [vmem:[#allocation9 + $0x6a0] sm:$0xff]
    %v1729 = vld [vmem:[#allocation9 + $0x6a8] sm:$0xff]
    %v1730 = vld [vmem:[#allocation9 + $0x6b0] sm:$0xff]
    %v1731 = vld [vmem:[#allocation9 + $0x6b8] sm:$0xff]
    %v1732 = vld [vmem:[#allocation9 + $0x6c0] sm:$0xff]
    %v1733 = vld [vmem:[#allocation9 + $0x6c8] sm:$0xff]
    %v1734 = vld [vmem:[#allocation9 + $0x6d0] sm:$0xff]
    %v1735 = vld [vmem:[#allocation9 + $0x6d8] sm:$0xff]
    %v1736 = vld [vmem:[#allocation9 + $0x6e0] sm:$0xff]
    %v1737 = vld [vmem:[#allocation9 + $0x6e8] sm:$0xff]
    %v1738 = vld [vmem:[#allocation9 + $0x6f0] sm:$0xff]
    %v1739 = vld [vmem:[#allocation9 + $0x6f8] sm:$0xff]
    %v1740 = vld [vmem:[#allocation9 + $0x700] sm:$0xff]
    %v1741 = vld [vmem:[#allocation9 + $0x708] sm:$0xff]
    %v1742 = vld [vmem:[#allocation9 + $0x710] sm:$0xff]
    %v1743 = vld [vmem:[#allocation9 + $0x718] sm:$0xff]
    %v1744 = vld [vmem:[#allocation9 + $0x720] sm:$0xff]
    %v1745 = vld [vmem:[#allocation9 + $0x728] sm:$0xff]
    %v1746 = vld [vmem:[#allocation9 + $0x730] sm:$0xff]
    %v1747 = vld [vmem:[#allocation9 + $0x738] sm:$0xff]
    %v1748 = vld [vmem:[#allocation9 + $0x740] sm:$0xff]
    %v1749 = vld [vmem:[#allocation9 + $0x748] sm:$0xff]
    %v1750 = vld [vmem:[#allocation9 + $0x750] sm:$0xff]
    %v1751 = vld [vmem:[#allocation9 + $0x758] sm:$0xff]
    %v1752 = vld [vmem:[#allocation9 + $0x760] sm:$0xff]
    %v1753 = vld [vmem:[#allocation9 + $0x768] sm:$0xff]
    %v1754 = vld [vmem:[#allocation9 + $0x770] sm:$0xff]
    %v1755 = vld [vmem:[#allocation9 + $0x778] sm:$0xff]
    %v1756 = vld [vmem:[#allocation9 + $0x780] sm:$0xff]
    %v1757 = vld [vmem:[#allocation9 + $0x788] sm:$0xff]
    %v1758 = vld [vmem:[#allocation9 + $0x790] sm:$0xff]
    %v1759 = vld [vmem:[#allocation9 + $0x798] sm:$0xff]
    %v1760 = vld [vmem:[#allocation9 + $0x7a0] sm:$0xff]
    %v1761 = vld [vmem:[#allocation9 + $0x7a8] sm:$0xff]
    %v1762 = vld [vmem:[#allocation9 + $0x7b0] sm:$0xff]
    %v1763 = vld [vmem:[#allocation9 + $0x7b8] sm:$0xff]
    %v1764 = vld [vmem:[#allocation9 + $0x7c0] sm:$0xff]
    %v1765 = vld [vmem:[#allocation9 + $0x7c8] sm:$0xff]
    %v1766 = vld [vmem:[#allocation9 + $0x7d0] sm:$0xff]
    %v1767 = vld [vmem:[#allocation9 + $0x7d8] sm:$0xff]
    %v1768 = vld [vmem:[#allocation9 + $0x7e0] sm:$0xff]
    %v1769 = vld [vmem:[#allocation9 + $0x7e8] sm:$0xff]
    %v1770 = vld [vmem:[#allocation9 + $0x7f0] sm:$0xff]
    %v1771 = vld [vmem:[#allocation9 + $0x7f8] sm:$0xff]
    %v1900 = vunpack.c.l.b16 %v1644
    %v1901 = vunpack.c.h.b16 %v1644
    %v1902 = vunpack.c.l.b16 %v1645
    %v1903 = vunpack.c.h.b16 %v1645
    %v1904 = vunpack.c.l.b16 %v1646
    %v1905 = vunpack.c.h.b16 %v1646
    %v1906 = vunpack.c.l.b16 %v1647
    %v1907 = vunpack.c.h.b16 %v1647
    %v1908 = vunpack.c.l.b16 %v1648
    %v1909 = vunpack.c.h.b16 %v1648
    %v1910 = vunpack.c.l.b16 %v1649
    %v1911 = vunpack.c.h.b16 %v1649
    %v1912 = vunpack.c.l.b16 %v1650
    %v1913 = vunpack.c.h.b16 %v1650
    %v1914 = vunpack.c.l.b16 %v1651
    %v1915 = vunpack.c.h.b16 %v1651
    %v1916 = vunpack.c.l.b16 %v1652
    %v1917 = vunpack.c.h.b16 %v1652
    %v1918 = vunpack.c.l.b16 %v1653
    %v1919 = vunpack.c.h.b16 %v1653
    %v1920 = vunpack.c.l.b16 %v1654
    %v1921 = vunpack.c.h.b16 %v1654
    %v1922 = vunpack.c.l.b16 %v1655
    %v1923 = vunpack.c.h.b16 %v1655
    %v1924 = vunpack.c.l.b16 %v1656
    %v1925 = vunpack.c.h.b16 %v1656
    %v1926 = vunpack.c.l.b16 %v1657
    %v1927 = vunpack.c.h.b16 %v1657
    %v1928 = vunpack.c.l.b16 %v1658
    %v1929 = vunpack.c.h.b16 %v1658
    %v1930 = vunpack.c.l.b16 %v1659
    %v1931 = vunpack.c.h.b16 %v1659
    %v1932 = vunpack.c.l.b16 %v1660
    %v1933 = vunpack.c.h.b16 %v1660
    %v1934 = vunpack.c.l.b16 %v1661
    %v1935 = vunpack.c.h.b16 %v1661
    %v1936 = vunpack.c.l.b16 %v1662
    %v1937 = vunpack.c.h.b16 %v1662
    %v1938 = vunpack.c.l.b16 %v1663
    %v1939 = vunpack.c.h.b16 %v1663
    %v1940 = vunpack.c.l.b16 %v1664
    %v1941 = vunpack.c.h.b16 %v1664
    %v1942 = vunpack.c.l.b16 %v1665
    %v1943 = vunpack.c.h.b16 %v1665
    %v1944 = vunpack.c.l.b16 %v1666
    %v1945 = vunpack.c.h.b16 %v1666
    %v1946 = vunpack.c.l.b16 %v1667
    %v1947 = vunpack.c.h.b16 %v1667
    %v1948 = vunpack.c.l.b16 %v1668
    %v1949 = vunpack.c.h.b16 %v1668
    %v1950 = vunpack.c.l.b16 %v1669
    %v1951 = vunpack.c.h.b16 %v1669
    %v1952 = vunpack.c.l.b16 %v1670
    %v1953 = vunpack.c.h.b16 %v1670
    %v1954 = vunpack.c.l.b16 %v1671
    %v1955 = vunpack.c.h.b16 %v1671
    %v1956 = vunpack.c.l.b16 %v1672
    %v1957 = vunpack.c.h.b16 %v1672
    %v1958 = vunpack.c.l.b16 %v1673
    %v1959 = vunpack.c.h.b16 %v1673
    %v1960 = vunpack.c.l.b16 %v1674
    %v1961 = vunpack.c.h.b16 %v1674
    %v1962 = vunpack.c.l.b16 %v1675
    %v1963 = vunpack.c.h.b16 %v1675
    %v1964 = vunpack.c.l.b16 %v1676
    %v1965 = vunpack.c.h.b16 %v1676
    %v1966 = vunpack.c.l.b16 %v1677
    %v1967 = vunpack.c.h.b16 %v1677
    %v1968 = vunpack.c.l.b16 %v1678
    %v1969 = vunpack.c.h.b16 %v1678
    %v1970 = vunpack.c.l.b16 %v1679
    %v1971 = vunpack.c.h.b16 %v1679
    %v1972 = vunpack.c.l.b16 %v1680
    %v1973 = vunpack.c.h.b16 %v1680
    %v1974 = vunpack.c.l.b16 %v1681
    %v1975 = vunpack.c.h.b16 %v1681
    %v1976 = vunpack.c.l.b16 %v1682
    %v1977 = vunpack.c.h.b16 %v1682
    %v1978 = vunpack.c.l.b16 %v1683
    %v1979 = vunpack.c.h.b16 %v1683
    %v1980 = vunpack.c.l.b16 %v1684
    %v1981 = vunpack.c.h.b16 %v1684
    %v1982 = vunpack.c.l.b16 %v1685
    %v1983 = vunpack.c.h.b16 %v1685
    %v1984 = vunpack.c.l.b16 %v1686
    %v1985 = vunpack.c.h.b16 %v1686
    %v1986 = vunpack.c.l.b16 %v1687
    %v1987 = vunpack.c.h.b16 %v1687
    %v1988 = vunpack.c.l.b16 %v1688
    %v1989 = vunpack.c.h.b16 %v1688
    %v1990 = vunpack.c.l.b16 %v1689
    %v1991 = vunpack.c.h.b16 %v1689
    %v1992 = vunpack.c.l.b16 %v1690
    %v1993 = vunpack.c.h.b16 %v1690
    %v1994 = vunpack.c.l.b16 %v1691
    %v1995 = vunpack.c.h.b16 %v1691
    %v1996 = vunpack.c.l.b16 %v1692
    %v1997 = vunpack.c.h.b16 %v1692
    %v1998 = vunpack.c.l.b16 %v1693
    %v1999 = vunpack.c.h.b16 %v1693
    %v2000 = vunpack.c.l.b16 %v1694
    %v2001 = vunpack.c.h.b16 %v1694
    %v2002 = vunpack.c.l.b16 %v1695
    %v2003 = vunpack.c.h.b16 %v1695
    %v2004 = vunpack.c.l.b16 %v1696
    %v2005 = vunpack.c.h.b16 %v1696
    %v2006 = vunpack.c.l.b16 %v1697
    %v2007 = vunpack.c.h.b16 %v1697
    %v2008 = vunpack.c.l.b16 %v1698
    %v2009 = vunpack.c.h.b16 %v1698
    %v2010 = vunpack.c.l.b16 %v1699
    %v2011 = vunpack.c.h.b16 %v1699
    %v2012 = vunpack.c.l.b16 %v1700
    %v2013 = vunpack.c.h.b16 %v1700
    %v2014 = vunpack.c.l.b16 %v1701
    %v2015 = vunpack.c.h.b16 %v1701
    %v2016 = vunpack.c.l.b16 %v1702
    %v2017 = vunpack.c.h.b16 %v1702
    %v2018 = vunpack.c.l.b16 %v1703
    %v2019 = vunpack.c.h.b16 %v1703
    %v2020 = vunpack.c.l.b16 %v1704
    %v2021 = vunpack.c.h.b16 %v1704
    %v2022 = vunpack.c.l.b16 %v1705
    %v2023 = vunpack.c.h.b16 %v1705
    %v2024 = vunpack.c.l.b16 %v1706
    %v2025 = vunpack.c.h.b16 %v1706
    %v2026 = vunpack.c.l.b16 %v1707
    %v2027 = vunpack.c.h.b16 %v1707
    %v2028 = vunpack.c.l.b16 %v1708
    %v2029 = vunpack.c.h.b16 %v1708
    %v2030 = vunpack.c.l.b16 %v1709
    %v2031 = vunpack.c.h.b16 %v1709
    %v2032 = vunpack.c.l.b16 %v1710
    %v2033 = vunpack.c.h.b16 %v1710
    %v2034 = vunpack.c.l.b16 %v1711
    %v2035 = vunpack.c.h.b16 %v1711
    %v2036 = vunpack.c.l.b16 %v1712
    %v2037 = vunpack.c.h.b16 %v1712
    %v2038 = vunpack.c.l.b16 %v1713
    %v2039 = vunpack.c.h.b16 %v1713
    %v2040 = vunpack.c.l.b16 %v1714
    %v2041 = vunpack.c.h.b16 %v1714
    %v2042 = vunpack.c.l.b16 %v1715
    %v2043 = vunpack.c.h.b16 %v1715
    %v2044 = vunpack.c.l.b16 %v1716
    %v2045 = vunpack.c.h.b16 %v1716
    %v2046 = vunpack.c.l.b16 %v1717
    %v2047 = vunpack.c.h.b16 %v1717
    %v2048 = vunpack.c.l.b16 %v1718
    %v2049 = vunpack.c.h.b16 %v1718
    %v2050 = vunpack.c.l.b16 %v1719
    %v2051 = vunpack.c.h.b16 %v1719
    %v2052 = vunpack.c.l.b16 %v1720
    %v2053 = vunpack.c.h.b16 %v1720
    %v2054 = vunpack.c.l.b16 %v1721
    %v2055 = vunpack.c.h.b16 %v1721
    %v2056 = vunpack.c.l.b16 %v1722
    %v2057 = vunpack.c.h.b16 %v1722
    %v2058 = vunpack.c.l.b16 %v1723
    %v2059 = vunpack.c.h.b16 %v1723
    %v2060 = vunpack.c.l.b16 %v1724
    %v2061 = vunpack.c.h.b16 %v1724
    %v2062 = vunpack.c.l.b16 %v1725
    %v2063 = vunpack.c.h.b16 %v1725
    %v2064 = vunpack.c.l.b16 %v1726
    %v2065 = vunpack.c.h.b16 %v1726
    %v2066 = vunpack.c.l.b16 %v1727
    %v2067 = vunpack.c.h.b16 %v1727
    %v2068 = vunpack.c.l.b16 %v1728
    %v2069 = vunpack.c.h.b16 %v1728
    %v2070 = vunpack.c.l.b16 %v1729
    %v2071 = vunpack.c.h.b16 %v1729
    %v2072 = vunpack.c.l.b16 %v1730
    %v2073 = vunpack.c.h.b16 %v1730
    %v2074 = vunpack.c.l.b16 %v1731
    %v2075 = vunpack.c.h.b16 %v1731
    %v2076 = vunpack.c.l.b16 %v1732
    %v2077 = vunpack.c.h.b16 %v1732
    %v2078 = vunpack.c.l.b16 %v1733
    %v2079 = vunpack.c.h.b16 %v1733
    %v2080 = vunpack.c.l.b16 %v1734
    %v2081 = vunpack.c.h.b16 %v1734
    %v2082 = vunpack.c.l.b16 %v1735
    %v2083 = vunpack.c.h.b16 %v1735
    %v2084 = vunpack.c.l.b16 %v1736
    %v2085 = vunpack.c.h.b16 %v1736
    %v2086 = vunpack.c.l.b16 %v1737
    %v2087 = vunpack.c.h.b16 %v1737
    %v2088 = vunpack.c.l.b16 %v1738
    %v2089 = vunpack.c.h.b16 %v1738
    %v2090 = vunpack.c.l.b16 %v1739
    %v2091 = vunpack.c.h.b16 %v1739
    %v2092 = vunpack.c.l.b16 %v1740
    %v2093 = vunpack.c.h.b16 %v1740
    %v2094 = vunpack.c.l.b16 %v1741
    %v2095 = vunpack.c.h.b16 %v1741
    %v2096 = vunpack.c.l.b16 %v1742
    %v2097 = vunpack.c.h.b16 %v1742
    %v2098 = vunpack.c.l.b16 %v1743
    %v2099 = vunpack.c.h.b16 %v1743
    %v2100 = vunpack.c.l.b16 %v1744
    %v2101 = vunpack.c.h.b16 %v1744
    %v2102 = vunpack.c.l.b16 %v1745
    %v2103 = vunpack.c.h.b16 %v1745
    %v2104 = vunpack.c.l.b16 %v1746
    %v2105 = vunpack.c.h.b16 %v1746
    %v2106 = vunpack.c.l.b16 %v1747
    %v2107 = vunpack.c.h.b16 %v1747
    %v2108 = vunpack.c.l.b16 %v1748
    %v2109 = vunpack.c.h.b16 %v1748
    %v2110 = vunpack.c.l.b16 %v1749
    %v2111 = vunpack.c.h.b16 %v1749
    %v2112 = vunpack.c.l.b16 %v1750
    %v2113 = vunpack.c.h.b16 %v1750
    %v2114 = vunpack.c.l.b16 %v1751
    %v2115 = vunpack.c.h.b16 %v1751
    %v2116 = vunpack.c.l.b16 %v1752
    %v2117 = vunpack.c.h.b16 %v1752
    %v2118 = vunpack.c.l.b16 %v1753
    %v2119 = vunpack.c.h.b16 %v1753
    %v2120 = vunpack.c.l.b16 %v1754
    %v2121 = vunpack.c.h.b16 %v1754
    %v2122 = vunpack.c.l.b16 %v1755
    %v2123 = vunpack.c.h.b16 %v1755
    %v2124 = vunpack.c.l.b16 %v1756
    %v2125 = vunpack.c.h.b16 %v1756
    %v2126 = vunpack.c.l.b16 %v1757
    %v2127 = vunpack.c.h.b16 %v1757
    %v2128 = vunpack.c.l.b16 %v1758
    %v2129 = vunpack.c.h.b16 %v1758
    %v2130 = vunpack.c.l.b16 %v1759
    %v2131 = vunpack.c.h.b16 %v1759
    %v2132 = vunpack.c.l.b16 %v1760
    %v2133 = vunpack.c.h.b16 %v1760
    %v2134 = vunpack.c.l.b16 %v1761
    %v2135 = vunpack.c.h.b16 %v1761
    %v2136 = vunpack.c.l.b16 %v1762
    %v2137 = vunpack.c.h.b16 %v1762
    %v2138 = vunpack.c.l.b16 %v1763
    %v2139 = vunpack.c.h.b16 %v1763
    %v2140 = vunpack.c.l.b16 %v1764
    %v2141 = vunpack.c.h.b16 %v1764
    %v2142 = vunpack.c.l.b16 %v1765
    %v2143 = vunpack.c.h.b16 %v1765
    %v2144 = vunpack.c.l.b16 %v1766
    %v2145 = vunpack.c.h.b16 %v1766
    %v2146 = vunpack.c.l.b16 %v1767
    %v2147 = vunpack.c.h.b16 %v1767
    %v2148 = vunpack.c.l.b16 %v1768
    %v2149 = vunpack.c.h.b16 %v1768
    %v2150 = vunpack.c.l.b16 %v1769
    %v2151 = vunpack.c.h.b16 %v1769
    %v2152 = vunpack.c.l.b16 %v1770
    %v2153 = vunpack.c.h.b16 %v1770
    %v2154 = vunpack.c.l.b16 %v1771
    %v2155 = vunpack.c.h.b16 %v1771
    %v2156 = vpack.c.b16 %v1904, %v1900
    %v2157 = vpack.c.b16 %v1905, %v1901
    %v2158 = vpack.c.b16 %v1906, %v1902
    %v2159 = vpack.c.b16 %v1907, %v1903
    %v2160 = vpack.c.b16 %v1912, %v1908
    %v2161 = vpack.c.b16 %v1913, %v1909
    %v2162 = vpack.c.b16 %v1914, %v1910
    %v2163 = vpack.c.b16 %v1915, %v1911
    %v2164 = vpack.c.b16 %v1920, %v1916
    %v2165 = vpack.c.b16 %v1921, %v1917
    %v2166 = vpack.c.b16 %v1922, %v1918
    %v2167 = vpack.c.b16 %v1923, %v1919
    %v2168 = vpack.c.b16 %v1928, %v1924
    %v2169 = vpack.c.b16 %v1929, %v1925
    %v2170 = vpack.c.b16 %v1930, %v1926
    %v2171 = vpack.c.b16 %v1931, %v1927
    %v2172 = vpack.c.b16 %v1936, %v1932
    %v2173 = vpack.c.b16 %v1937, %v1933
    %v2174 = vpack.c.b16 %v1938, %v1934
    %v2175 = vpack.c.b16 %v1939, %v1935
    %v2176 = vpack.c.b16 %v1944, %v1940
    %v2177 = vpack.c.b16 %v1945, %v1941
    %v2178 = vpack.c.b16 %v1946, %v1942
    %v2179 = vpack.c.b16 %v1947, %v1943
    %v2180 = vpack.c.b16 %v1952, %v1948
    %v2181 = vpack.c.b16 %v1953, %v1949
    %v2182 = vpack.c.b16 %v1954, %v1950
    %v2183 = vpack.c.b16 %v1955, %v1951
    %v2184 = vpack.c.b16 %v1960, %v1956
    %v2185 = vpack.c.b16 %v1961, %v1957
    %v2186 = vpack.c.b16 %v1962, %v1958
    %v2187 = vpack.c.b16 %v1963, %v1959
    %v2188 = vpack.c.b16 %v1968, %v1964
    %v2189 = vpack.c.b16 %v1969, %v1965
    %v2190 = vpack.c.b16 %v1970, %v1966
    %v2191 = vpack.c.b16 %v1971, %v1967
    %v2192 = vpack.c.b16 %v1976, %v1972
    %v2193 = vpack.c.b16 %v1977, %v1973
    %v2194 = vpack.c.b16 %v1978, %v1974
    %v2195 = vpack.c.b16 %v1979, %v1975
    %v2196 = vpack.c.b16 %v1984, %v1980
    %v2197 = vpack.c.b16 %v1985, %v1981
    %v2198 = vpack.c.b16 %v1986, %v1982
    %v2199 = vpack.c.b16 %v1987, %v1983
    %v2200 = vpack.c.b16 %v1992, %v1988
    %v2201 = vpack.c.b16 %v1993, %v1989
    %v2202 = vpack.c.b16 %v1994, %v1990
    %v2203 = vpack.c.b16 %v1995, %v1991
    %v2204 = vpack.c.b16 %v2000, %v1996
    %v2205 = vpack.c.b16 %v2001, %v1997
    %v2206 = vpack.c.b16 %v2002, %v1998
    %v2207 = vpack.c.b16 %v2003, %v1999
    %v2208 = vpack.c.b16 %v2008, %v2004
    %v2209 = vpack.c.b16 %v2009, %v2005
    %v2210 = vpack.c.b16 %v2010, %v2006
    %v2211 = vpack.c.b16 %v2011, %v2007
    %v2212 = vpack.c.b16 %v2016, %v2012
    %v2213 = vpack.c.b16 %v2017, %v2013
    %v2214 = vpack.c.b16 %v2018, %v2014
    %v2215 = vpack.c.b16 %v2019, %v2015
    %v2216 = vpack.c.b16 %v2024, %v2020
    %v2217 = vpack.c.b16 %v2025, %v2021
    %v2218 = vpack.c.b16 %v2026, %v2022
    %v2219 = vpack.c.b16 %v2027, %v2023
    %v2220 = vpack.c.b16 %v2032, %v2028
    %v2221 = vpack.c.b16 %v2033, %v2029
    %v2222 = vpack.c.b16 %v2034, %v2030
    %v2223 = vpack.c.b16 %v2035, %v2031
    %v2224 = vpack.c.b16 %v2040, %v2036
    %v2225 = vpack.c.b16 %v2041, %v2037
    %v2226 = vpack.c.b16 %v2042, %v2038
    %v2227 = vpack.c.b16 %v2043, %v2039
    %v2228 = vpack.c.b16 %v2048, %v2044
    %v2229 = vpack.c.b16 %v2049, %v2045
    %v2230 = vpack.c.b16 %v2050, %v2046
    %v2231 = vpack.c.b16 %v2051, %v2047
    %v2232 = vpack.c.b16 %v2056, %v2052
    %v2233 = vpack.c.b16 %v2057, %v2053
    %v2234 = vpack.c.b16 %v2058, %v2054
    %v2235 = vpack.c.b16 %v2059, %v2055
    %v2236 = vpack.c.b16 %v2064, %v2060
    %v2237 = vpack.c.b16 %v2065, %v2061
    %v2238 = vpack.c.b16 %v2066, %v2062
    %v2239 = vpack.c.b16 %v2067, %v2063
    %v2240 = vpack.c.b16 %v2072, %v2068
    %v2241 = vpack.c.b16 %v2073, %v2069
    %v2242 = vpack.c.b16 %v2074, %v2070
    %v2243 = vpack.c.b16 %v2075, %v2071
    %v2244 = vpack.c.b16 %v2080, %v2076
    %v2245 = vpack.c.b16 %v2081, %v2077
    %v2246 = vpack.c.b16 %v2082, %v2078
    %v2247 = vpack.c.b16 %v2083, %v2079
    %v2248 = vpack.c.b16 %v2088, %v2084
    %v2249 = vpack.c.b16 %v2089, %v2085
    %v2250 = vpack.c.b16 %v2090, %v2086
    %v2251 = vpack.c.b16 %v2091, %v2087
    %v2252 = vpack.c.b16 %v2096, %v2092
    %v2253 = vpack.c.b16 %v2097, %v2093
    %v2254 = vpack.c.b16 %v2098, %v2094
    %v2255 = vpack.c.b16 %v2099, %v2095
    %v2256 = vpack.c.b16 %v2104, %v2100
    %v2257 = vpack.c.b16 %v2105, %v2101
    %v2258 = vpack.c.b16 %v2106, %v2102
    %v2259 = vpack.c.b16 %v2107, %v2103
    %v2260 = vpack.c.b16 %v2112, %v2108
    %v2261 = vpack.c.b16 %v2113, %v2109
    %v2262 = vpack.c.b16 %v2114, %v2110
    %v2263 = vpack.c.b16 %v2115, %v2111
    %v2264 = vpack.c.b16 %v2120, %v2116
    %v2265 = vpack.c.b16 %v2121, %v2117
    %v2266 = vpack.c.b16 %v2122, %v2118
    %v2267 = vpack.c.b16 %v2123, %v2119
    %v2268 = vpack.c.b16 %v2128, %v2124
    %v2269 = vpack.c.b16 %v2129, %v2125
    %v2270 = vpack.c.b16 %v2130, %v2126
    %v2271 = vpack.c.b16 %v2131, %v2127
    %v2272 = vpack.c.b16 %v2136, %v2132
    %v2273 = vpack.c.b16 %v2137, %v2133
    %v2274 = vpack.c.b16 %v2138, %v2134
    %v2275 = vpack.c.b16 %v2139, %v2135
    %v2276 = vpack.c.b16 %v2144, %v2140
    %v2277 = vpack.c.b16 %v2145, %v2141
    %v2278 = vpack.c.b16 %v2146, %v2142
    %v2279 = vpack.c.b16 %v2147, %v2143
    %v2280 = vpack.c.b16 %v2152, %v2148
    %v2281 = vpack.c.b16 %v2153, %v2149
    %v2282 = vpack.c.b16 %v2154, %v2150
    %v2283 = vpack.c.b16 %v2155, %v2151
    %2412 = vmatprep.subr.bf16.mxu0 %v2185
    %2413 = vmatpush1.bf16.msra.mxu0 %v2184
    %2414 = vmatprep.subr.bf16.mxu0 %v2181
    %2415 = vmatpush1.bf16.msra.mxu0 %v2180
    %2416 = vmatprep.subr.bf16.mxu0 %v2177
    %2417 = vmatpush1.bf16.msra.mxu0 %v2176
    %2418 = vmatprep.subr.bf16.mxu0 %v2173
    %2419 = vmatpush1.bf16.msra.mxu0 %v2172
    %2420 = vmatprep.subr.bf16.mxu0 %v2169
    %2421 = vmatpush1.bf16.msra.mxu0 %v2168
    %2422 = vmatprep.subr.bf16.mxu0 %v2165
    %2423 = vmatpush1.bf16.msra.mxu0 %v2164
    %2424 = vmatprep.subr.bf16.mxu0 %v2161
    %2425 = vmatpush1.bf16.msra.mxu0 %v2160
    %2426 = vmatprep.subr.bf16.mxu0 %v2157
    %2427 = vmatpush1.bf16.msra.mxu0 %v2156
    %2428 = vmatprep.subr.bf16.mxu0 %v2217
    %2429 = vmatpush2.bf16.msra.mxu0 %v2216
    %2430 = vmatprep.subr.bf16.mxu0 %v2213
    %2431 = vmatpush2.bf16.msra.mxu0 %v2212
    %2432 = vmatprep.subr.bf16.mxu0 %v2209
    %2433 = vmatpush2.bf16.msra.mxu0 %v2208
    %2434 = vmatprep.subr.bf16.mxu0 %v2205
    %2435 = vmatpush2.bf16.msra.mxu0 %v2204
    %2436 = vmatprep.subr.bf16.mxu0 %v2201
    %2437 = vmatpush2.bf16.msra.mxu0 %v2200
    %2438 = vmatprep.subr.bf16.mxu0 %v2197
    %2439 = vmatpush2.bf16.msra.mxu0 %v2196
    %2440 = vmatprep.subr.bf16.mxu0 %v2193
    %2441 = vmatpush2.bf16.msra.mxu0 %v2192
    %2442 = vmatprep.subr.bf16.mxu0 %v2189
    %2443 = vmatpush2.bf16.msra.mxu0 %v2188
    %2444 = vmatprep.mubr.bf16.mxu0 %v1641
    %2445 = vmatmul.mubr.bf16.gmra.mxu0 %v1640
    %v2446 = vpop.f32.mrf.mxu0
    %v2447 = vadd.f32 0.0, %v2446
    %v2448 = vpop.f32.mrf.mxu0
    %v2449 = vadd.f32 0.0, %v2448
    %v2450 = vpop.f32.mrf.mxu0
    %v2451 = vpop.f32.mrf.mxu0
    %2452 = vdwg.mxu0
    %2453 = vmatprep.subr.bf16.mxu0 %v2249
    %2454 = vmatpush1.bf16.msra.mxu0 %v2248
    %2455 = vmatprep.subr.bf16.mxu0 %v2245
    %2456 = vmatpush1.bf16.msra.mxu0 %v2244
    %2457 = vmatprep.subr.bf16.mxu0 %v2241
    %2458 = vmatpush1.bf16.msra.mxu0 %v2240
    %2459 = vmatprep.subr.bf16.mxu0 %v2237
    %2460 = vmatpush1.bf16.msra.mxu0 %v2236
    %2461 = vmatprep.subr.bf16.mxu0 %v2233
    %2462 = vmatpush1.bf16.msra.mxu0 %v2232
    %2463 = vmatprep.subr.bf16.mxu0 %v2229
    %2464 = vmatpush1.bf16.msra.mxu0 %v2228
    %2465 = vmatprep.subr.bf16.mxu0 %v2225
    %2466 = vmatpush1.bf16.msra.mxu0 %v2224
    %2467 = vmatprep.subr.bf16.mxu0 %v2221
    %2468 = vmatpush1.bf16.msra.mxu0 %v2220
    %2469 = vmatprep.subr.bf16.mxu0 %v2281
    %2470 = vmatpush2.bf16.msra.mxu0 %v2280
    %2471 = vmatprep.subr.bf16.mxu0 %v2277
    %2472 = vmatpush2.bf16.msra.mxu0 %v2276
    %2473 = vmatprep.subr.bf16.mxu0 %v2273
    %2474 = vmatpush2.bf16.msra.mxu0 %v2272
    %2475 = vmatprep.subr.bf16.mxu0 %v2269
    %2476 = vmatpush2.bf16.msra.mxu0 %v2268
    %2477 = vmatprep.subr.bf16.mxu0 %v2265
    %2478 = vmatpush2.bf16.msra.mxu0 %v2264
    %2479 = vmatprep.subr.bf16.mxu0 %v2261
    %2480 = vmatpush2.bf16.msra.mxu0 %v2260
    %2481 = vmatprep.subr.bf16.mxu0 %v2257
    %2482 = vmatpush2.bf16.msra.mxu0 %v2256
    %2483 = vmatprep.subr.bf16.mxu0 %v2253
    %2484 = vmatpush2.bf16.msra.mxu0 %v2252
    %2485 = vmatprep.mubr.bf16.mxu0 %v1643
    %2486 = vmatmul.mubr.bf16.gmra.mxu0 %v1642
    %v2487 = vpop.f32.mrf.mxu0
    %v2488 = vadd.f32 %v2447, %v2487
    %v2489 = vpop.f32.mrf.mxu0
    %v2490 = vadd.f32 %v2449, %v2489
    %v2491 = vpop.f32.mrf.mxu0
    %v2492 = vpop.f32.mrf.mxu0
    %2493 = vdwg.mxu0
    %2494 = vmatprep.subr.bf16.mxu0 %v2187
    %2495 = vmatpush1.bf16.msra.mxu0 %v2186
    %2496 = vmatprep.subr.bf16.mxu0 %v2183
    %2497 = vmatpush1.bf16.msra.mxu0 %v2182
    %2498 = vmatprep.subr.bf16.mxu0 %v2179
    %2499 = vmatpush1.bf16.msra.mxu0 %v2178
    %2500 = vmatprep.subr.bf16.mxu0 %v2175
    %2501 = vmatpush1.bf16.msra.mxu0 %v2174
    %2502 = vmatprep.subr.bf16.mxu0 %v2171
    %2503 = vmatpush1.bf16.msra.mxu0 %v2170
    %2504 = vmatprep.subr.bf16.mxu0 %v2167
    %2505 = vmatpush1.bf16.msra.mxu0 %v2166
    %2506 = vmatprep.subr.bf16.mxu0 %v2163
    %2507 = vmatpush1.bf16.msra.mxu0 %v2162
    %2508 = vmatprep.subr.bf16.mxu0 %v2159
    %2509 = vmatpush1.bf16.msra.mxu0 %v2158
    %2510 = vmatprep.subr.bf16.mxu0 %v2219
    %2511 = vmatpush2.bf16.msra.mxu0 %v2218
    %2512 = vmatprep.subr.bf16.mxu0 %v2215
    %2513 = vmatpush2.bf16.msra.mxu0 %v2214
    %2514 = vmatprep.subr.bf16.mxu0 %v2211
    %2515 = vmatpush2.bf16.msra.mxu0 %v2210
    %2516 = vmatprep.subr.bf16.mxu0 %v2207
    %2517 = vmatpush2.bf16.msra.mxu0 %v2206
    %2518 = vmatprep.subr.bf16.mxu0 %v2203
    %2519 = vmatpush2.bf16.msra.mxu0 %v2202
    %2520 = vmatprep.subr.bf16.mxu0 %v2199
    %2521 = vmatpush2.bf16.msra.mxu0 %v2198
    %2522 = vmatprep.subr.bf16.mxu0 %v2195
    %2523 = vmatpush2.bf16.msra.mxu0 %v2194
    %2524 = vmatprep.subr.bf16.mxu0 %v2191
    %2525 = vmatpush2.bf16.msra.mxu0 %v2190
    %2526 = vmatprep.mubr.bf16.mxu0 %v1641
    %2527 = vmatmul.mubr.bf16.gmra.mxu0 %v1640
    %v2528 = vpop.f32.mrf.mxu0
    %v2529 = vadd.f32 0.0, %v2528
    %v2530 = vpop.f32.mrf.mxu0
    %v2531 = vadd.f32 0.0, %v2530
    %v2532 = vpop.f32.mrf.mxu0
    %v2533 = vpop.f32.mrf.mxu0
    %2534 = vdwg.mxu0
    %2535 = vmatprep.subr.bf16.mxu0 %v2251
    %2536 = vmatpush1.bf16.msra.mxu0 %v2250
    %2537 = vmatprep.subr.bf16.mxu0 %v2247
    %2538 = vmatpush1.bf16.msra.mxu0 %v2246
    %2539 = vmatprep.subr.bf16.mxu0 %v2243
    %2540 = vmatpush1.bf16.msra.mxu0 %v2242
    %2541 = vmatprep.subr.bf16.mxu0 %v2239
    %2542 = vmatpush1.bf16.msra.mxu0 %v2238
    %2543 = vmatprep.subr.bf16.mxu0 %v2235
    %2544 = vmatpush1.bf16.msra.mxu0 %v2234
    %2545 = vmatprep.subr.bf16.mxu0 %v2231
    %2546 = vmatpush1.bf16.msra.mxu0 %v2230
    %2547 = vmatprep.subr.bf16.mxu0 %v2227
    %2548 = vmatpush1.bf16.msra.mxu0 %v2226
    %2549 = vmatprep.subr.bf16.mxu0 %v2223
    %2550 = vmatpush1.bf16.msra.mxu0 %v2222
    %2551 = vmatprep.subr.bf16.mxu0 %v2283
    %2552 = vmatpush2.bf16.msra.mxu0 %v2282
    %2553 = vmatprep.subr.bf16.mxu0 %v2279
    %2554 = vmatpush2.bf16.msra.mxu0 %v2278
    %2555 = vmatprep.subr.bf16.mxu0 %v2275
    %2556 = vmatpush2.bf16.msra.mxu0 %v2274
    %2557 = vmatprep.subr.bf16.mxu0 %v2271
    %2558 = vmatpush2.bf16.msra.mxu0 %v2270
    %2559 = vmatprep.subr.bf16.mxu0 %v2267
    %2560 = vmatpush2.bf16.msra.mxu0 %v2266
    %2561 = vmatprep.subr.bf16.mxu0 %v2263
    %2562 = vmatpush2.bf16.msra.mxu0 %v2262
    %2563 = vmatprep.subr.bf16.mxu0 %v2259
    %2564 = vmatpush2.bf16.msra.mxu0 %v2258
    %2565 = vmatprep.subr.bf16.mxu0 %v2255
    %2566 = vmatpush2.bf16.msra.mxu0 %v2254
    %2567 = vmatprep.mubr.bf16.mxu0 %v1643
    %2568 = vmatmul.mubr.bf16.gmra.mxu0 %v1642
    %v2569 = vpop.f32.mrf.mxu0
    %v2570 = vadd.f32 %v2529, %v2569
    %v2571 = vpop.f32.mrf.mxu0
    %v2572 = vadd.f32 %v2531, %v2571
    %v2573 = vpop.f32.mrf.mxu0
    %v2574 = vpop.f32.mrf.mxu0
    %2575 = vdwg.mxu0
    %v2704 = vunpack.c.l.b16 %v1512
    %v2705 = vunpack.c.h.b16 %v1512
    %v2706 = vunpack.c.l.b16 %v1513
    %v2707 = vunpack.c.h.b16 %v1513
    %v2708 = vunpack.c.l.b16 %v1514
    %v2709 = vunpack.c.h.b16 %v1514
    %v2710 = vunpack.c.l.b16 %v1515
    %v2711 = vunpack.c.h.b16 %v1515
    %v2712 = vunpack.c.l.b16 %v1516
    %v2713 = vunpack.c.h.b16 %v1516
    %v2714 = vunpack.c.l.b16 %v1517
    %v2715 = vunpack.c.h.b16 %v1517
    %v2716 = vunpack.c.l.b16 %v1518
    %v2717 = vunpack.c.h.b16 %v1518
    %v2718 = vunpack.c.l.b16 %v1519
    %v2719 = vunpack.c.h.b16 %v1519
    %v2720 = vunpack.c.l.b16 %v1520
    %v2721 = vunpack.c.h.b16 %v1520
    %v2722 = vunpack.c.l.b16 %v1521
    %v2723 = vunpack.c.h.b16 %v1521
    %v2724 = vunpack.c.l.b16 %v1522
    %v2725 = vunpack.c.h.b16 %v1522
    %v2726 = vunpack.c.l.b16 %v1523
    %v2727 = vunpack.c.h.b16 %v1523
    %v2728 = vunpack.c.l.b16 %v1524
    %v2729 = vunpack.c.h.b16 %v1524
    %v2730 = vunpack.c.l.b16 %v1525
    %v2731 = vunpack.c.h.b16 %v1525
    %v2732 = vunpack.c.l.b16 %v1526
    %v2733 = vunpack.c.h.b16 %v1526
    %v2734 = vunpack.c.l.b16 %v1527
    %v2735 = vunpack.c.h.b16 %v1527
    %v2736 = vunpack.c.l.b16 %v1528
    %v2737 = vunpack.c.h.b16 %v1528
    %v2738 = vunpack.c.l.b16 %v1529
    %v2739 = vunpack.c.h.b16 %v1529
    %v2740 = vunpack.c.l.b16 %v1530
    %v2741 = vunpack.c.h.b16 %v1530
    %v2742 = vunpack.c.l.b16 %v1531
    %v2743 = vunpack.c.h.b16 %v1531
    %v2744 = vunpack.c.l.b16 %v1532
    %v2745 = vunpack.c.h.b16 %v1532
    %v2746 = vunpack.c.l.b16 %v1533
    %v2747 = vunpack.c.h.b16 %v1533
    %v2748 = vunpack.c.l.b16 %v1534
    %v2749 = vunpack.c.h.b16 %v1534
    %v2750 = vunpack.c.l.b16 %v1535
    %v2751 = vunpack.c.h.b16 %v1535
    %v2752 = vunpack.c.l.b16 %v1536
    %v2753 = vunpack.c.h.b16 %v1536
    %v2754 = vunpack.c.l.b16 %v1537
    %v2755 = vunpack.c.h.b16 %v1537
    %v2756 = vunpack.c.l.b16 %v1538
    %v2757 = vunpack.c.h.b16 %v1538
    %v2758 = vunpack.c.l.b16 %v1539
    %v2759 = vunpack.c.h.b16 %v1539
    %v2760 = vunpack.c.l.b16 %v1540
    %v2761 = vunpack.c.h.b16 %v1540
    %v2762 = vunpack.c.l.b16 %v1541
    %v2763 = vunpack.c.h.b16 %v1541
    %v2764 = vunpack.c.l.b16 %v1542
    %v2765 = vunpack.c.h.b16 %v1542
    %v2766 = vunpack.c.l.b16 %v1543
    %v2767 = vunpack.c.h.b16 %v1543
    %v2768 = vunpack.c.l.b16 %v1544
    %v2769 = vunpack.c.h.b16 %v1544
    %v2770 = vunpack.c.l.b16 %v1545
    %v2771 = vunpack.c.h.b16 %v1545
    %v2772 = vunpack.c.l.b16 %v1546
    %v2773 = vunpack.c.h.b16 %v1546
    %v2774 = vunpack.c.l.b16 %v1547
    %v2775 = vunpack.c.h.b16 %v1547
    %v2776 = vunpack.c.l.b16 %v1548
    %v2777 = vunpack.c.h.b16 %v1548
    %v2778 = vunpack.c.l.b16 %v1549
    %v2779 = vunpack.c.h.b16 %v1549
    %v2780 = vunpack.c.l.b16 %v1550
    %v2781 = vunpack.c.h.b16 %v1550
    %v2782 = vunpack.c.l.b16 %v1551
    %v2783 = vunpack.c.h.b16 %v1551
    %v2784 = vunpack.c.l.b16 %v1552
    %v2785 = vunpack.c.h.b16 %v1552
    %v2786 = vunpack.c.l.b16 %v1553
    %v2787 = vunpack.c.h.b16 %v1553
    %v2788 = vunpack.c.l.b16 %v1554
    %v2789 = vunpack.c.h.b16 %v1554
    %v2790 = vunpack.c.l.b16 %v1555
    %v2791 = vunpack.c.h.b16 %v1555
    %v2792 = vunpack.c.l.b16 %v1556
    %v2793 = vunpack.c.h.b16 %v1556
    %v2794 = vunpack.c.l.b16 %v1557
    %v2795 = vunpack.c.h.b16 %v1557
    %v2796 = vunpack.c.l.b16 %v1558
    %v2797 = vunpack.c.h.b16 %v1558
    %v2798 = vunpack.c.l.b16 %v1559
    %v2799 = vunpack.c.h.b16 %v1559
    %v2800 = vunpack.c.l.b16 %v1560
    %v2801 = vunpack.c.h.b16 %v1560
    %v2802 = vunpack.c.l.b16 %v1561
    %v2803 = vunpack.c.h.b16 %v1561
    %v2804 = vunpack.c.l.b16 %v1562
    %v2805 = vunpack.c.h.b16 %v1562
    %v2806 = vunpack.c.l.b16 %v1563
    %v2807 = vunpack.c.h.b16 %v1563
    %v2808 = vunpack.c.l.b16 %v1564
    %v2809 = vunpack.c.h.b16 %v1564
    %v2810 = vunpack.c.l.b16 %v1565
    %v2811 = vunpack.c.h.b16 %v1565
    %v2812 = vunpack.c.l.b16 %v1566
    %v2813 = vunpack.c.h.b16 %v1566
    %v2814 = vunpack.c.l.b16 %v1567
    %v2815 = vunpack.c.h.b16 %v1567
    %v2816 = vunpack.c.l.b16 %v1568
    %v2817 = vunpack.c.h.b16 %v1568
    %v2818 = vunpack.c.l.b16 %v1569
    %v2819 = vunpack.c.h.b16 %v1569
    %v2820 = vunpack.c.l.b16 %v1570
    %v2821 = vunpack.c.h.b16 %v1570
    %v2822 = vunpack.c.l.b16 %v1571
    %v2823 = vunpack.c.h.b16 %v1571
    %v2824 = vunpack.c.l.b16 %v1572
    %v2825 = vunpack.c.h.b16 %v1572
    %v2826 = vunpack.c.l.b16 %v1573
    %v2827 = vunpack.c.h.b16 %v1573
    %v2828 = vunpack.c.l.b16 %v1574
    %v2829 = vunpack.c.h.b16 %v1574
    %v2830 = vunpack.c.l.b16 %v1575
    %v2831 = vunpack.c.h.b16 %v1575
    %v2832 = vunpack.c.l.b16 %v1576
    %v2833 = vunpack.c.h.b16 %v1576
    %v2834 = vunpack.c.l.b16 %v1577
    %v2835 = vunpack.c.h.b16 %v1577
    %v2836 = vunpack.c.l.b16 %v1578
    %v2837 = vunpack.c.h.b16 %v1578
    %v2838 = vunpack.c.l.b16 %v1579
    %v2839 = vunpack.c.h.b16 %v1579
    %v2840 = vunpack.c.l.b16 %v1580
    %v2841 = vunpack.c.h.b16 %v1580
    %v2842 = vunpack.c.l.b16 %v1581
    %v2843 = vunpack.c.h.b16 %v1581
    %v2844 = vunpack.c.l.b16 %v1582
    %v2845 = vunpack.c.h.b16 %v1582
    %v2846 = vunpack.c.l.b16 %v1583
    %v2847 = vunpack.c.h.b16 %v1583
    %v2848 = vunpack.c.l.b16 %v1584
    %v2849 = vunpack.c.h.b16 %v1584
    %v2850 = vunpack.c.l.b16 %v1585
    %v2851 = vunpack.c.h.b16 %v1585
    %v2852 = vunpack.c.l.b16 %v1586
    %v2853 = vunpack.c.h.b16 %v1586
    %v2854 = vunpack.c.l.b16 %v1587
    %v2855 = vunpack.c.h.b16 %v1587
    %v2856 = vunpack.c.l.b16 %v1588
    %v2857 = vunpack.c.h.b16 %v1588
    %v2858 = vunpack.c.l.b16 %v1589
    %v2859 = vunpack.c.h.b16 %v1589
    %v2860 = vunpack.c.l.b16 %v1590
    %v2861 = vunpack.c.h.b16 %v1590
    %v2862 = vunpack.c.l.b16 %v1591
    %v2863 = vunpack.c.h.b16 %v1591
    %v2864 = vunpack.c.l.b16 %v1592
    %v2865 = vunpack.c.h.b16 %v1592
    %v2866 = vunpack.c.l.b16 %v1593
    %v2867 = vunpack.c.h.b16 %v1593
    %v2868 = vunpack.c.l.b16 %v1594
    %v2869 = vunpack.c.h.b16 %v1594
    %v2870 = vunpack.c.l.b16 %v1595
    %v2871 = vunpack.c.h.b16 %v1595
    %v2872 = vunpack.c.l.b16 %v1596
    %v2873 = vunpack.c.h.b16 %v1596
    %v2874 = vunpack.c.l.b16 %v1597
    %v2875 = vunpack.c.h.b16 %v1597
    %v2876 = vunpack.c.l.b16 %v1598
    %v2877 = vunpack.c.h.b16 %v1598
    %v2878 = vunpack.c.l.b16 %v1599
    %v2879 = vunpack.c.h.b16 %v1599
    %v2880 = vunpack.c.l.b16 %v1600
    %v2881 = vunpack.c.h.b16 %v1600
    %v2882 = vunpack.c.l.b16 %v1601
    %v2883 = vunpack.c.h.b16 %v1601
    %v2884 = vunpack.c.l.b16 %v1602
    %v2885 = vunpack.c.h.b16 %v1602
    %v2886 = vunpack.c.l.b16 %v1603
    %v2887 = vunpack.c.h.b16 %v1603
    %v2888 = vunpack.c.l.b16 %v1604
    %v2889 = vunpack.c.h.b16 %v1604
    %v2890 = vunpack.c.l.b16 %v1605
    %v2891 = vunpack.c.h.b16 %v1605
    %v2892 = vunpack.c.l.b16 %v1606
    %v2893 = vunpack.c.h.b16 %v1606
    %v2894 = vunpack.c.l.b16 %v1607
    %v2895 = vunpack.c.h.b16 %v1607
    %v2896 = vunpack.c.l.b16 %v1608
    %v2897 = vunpack.c.h.b16 %v1608
    %v2898 = vunpack.c.l.b16 %v1609
    %v2899 = vunpack.c.h.b16 %v1609
    %v2900 = vunpack.c.l.b16 %v1610
    %v2901 = vunpack.c.h.b16 %v1610
    %v2902 = vunpack.c.l.b16 %v1611
    %v2903 = vunpack.c.h.b16 %v1611
    %v2904 = vunpack.c.l.b16 %v1612
    %v2905 = vunpack.c.h.b16 %v1612
    %v2906 = vunpack.c.l.b16 %v1613
    %v2907 = vunpack.c.h.b16 %v1613
    %v2908 = vunpack.c.l.b16 %v1614
    %v2909 = vunpack.c.h.b16 %v1614
    %v2910 = vunpack.c.l.b16 %v1615
    %v2911 = vunpack.c.h.b16 %v1615
    %v2912 = vunpack.c.l.b16 %v1616
    %v2913 = vunpack.c.h.b16 %v1616
    %v2914 = vunpack.c.l.b16 %v1617
    %v2915 = vunpack.c.h.b16 %v1617
    %v2916 = vunpack.c.l.b16 %v1618
    %v2917 = vunpack.c.h.b16 %v1618
    %v2918 = vunpack.c.l.b16 %v1619
    %v2919 = vunpack.c.h.b16 %v1619
    %v2920 = vunpack.c.l.b16 %v1620
    %v2921 = vunpack.c.h.b16 %v1620
    %v2922 = vunpack.c.l.b16 %v1621
    %v2923 = vunpack.c.h.b16 %v1621
    %v2924 = vunpack.c.l.b16 %v1622
    %v2925 = vunpack.c.h.b16 %v1622
    %v2926 = vunpack.c.l.b16 %v1623
    %v2927 = vunpack.c.h.b16 %v1623
    %v2928 = vunpack.c.l.b16 %v1624
    %v2929 = vunpack.c.h.b16 %v1624
    %v2930 = vunpack.c.l.b16 %v1625
    %v2931 = vunpack.c.h.b16 %v1625
    %v2932 = vunpack.c.l.b16 %v1626
    %v2933 = vunpack.c.h.b16 %v1626
    %v2934 = vunpack.c.l.b16 %v1627
    %v2935 = vunpack.c.h.b16 %v1627
    %v2936 = vunpack.c.l.b16 %v1628
    %v2937 = vunpack.c.h.b16 %v1628
    %v2938 = vunpack.c.l.b16 %v1629
    %v2939 = vunpack.c.h.b16 %v1629
    %v2940 = vunpack.c.l.b16 %v1630
    %v2941 = vunpack.c.h.b16 %v1630
    %v2942 = vunpack.c.l.b16 %v1631
    %v2943 = vunpack.c.h.b16 %v1631
    %v2944 = vunpack.c.l.b16 %v1632
    %v2945 = vunpack.c.h.b16 %v1632
    %v2946 = vunpack.c.l.b16 %v1633
    %v2947 = vunpack.c.h.b16 %v1633
    %v2948 = vunpack.c.l.b16 %v1634
    %v2949 = vunpack.c.h.b16 %v1634
    %v2950 = vunpack.c.l.b16 %v1635
    %v2951 = vunpack.c.h.b16 %v1635
    %v2952 = vunpack.c.l.b16 %v1636
    %v2953 = vunpack.c.h.b16 %v1636
    %v2954 = vunpack.c.l.b16 %v1637
    %v2955 = vunpack.c.h.b16 %v1637
    %v2956 = vunpack.c.l.b16 %v1638
    %v2957 = vunpack.c.h.b16 %v1638
    %v2958 = vunpack.c.l.b16 %v1639
    %v2959 = vunpack.c.h.b16 %v1639
    %v2960 = vpack.c.b16 %v2708, %v2704
    %v2961 = vpack.c.b16 %v2709, %v2705
    %v2962 = vpack.c.b16 %v2710, %v2706
    %v2963 = vpack.c.b16 %v2711, %v2707
    %v2964 = vpack.c.b16 %v2716, %v2712
    %v2965 = vpack.c.b16 %v2717, %v2713
    %v2966 = vpack.c.b16 %v2718, %v2714
    %v2967 = vpack.c.b16 %v2719, %v2715
    %v2968 = vpack.c.b16 %v2724, %v2720
    %v2969 = vpack.c.b16 %v2725, %v2721
    %v2970 = vpack.c.b16 %v2726, %v2722
    %v2971 = vpack.c.b16 %v2727, %v2723
    %v2972 = vpack.c.b16 %v2732, %v2728
    %v2973 = vpack.c.b16 %v2733, %v2729
    %v2974 = vpack.c.b16 %v2734, %v2730
    %v2975 = vpack.c.b16 %v2735, %v2731
    %v2976 = vpack.c.b16 %v2740, %v2736
    %v2977 = vpack.c.b16 %v2741, %v2737
    %v2978 = vpack.c.b16 %v2742, %v2738
    %v2979 = vpack.c.b16 %v2743, %v2739
    %v2980 = vpack.c.b16 %v2748, %v2744
    %v2981 = vpack.c.b16 %v2749, %v2745
    %v2982 = vpack.c.b16 %v2750, %v2746
    %v2983 = vpack.c.b16 %v2751, %v2747
    %v2984 = vpack.c.b16 %v2756, %v2752
    %v2985 = vpack.c.b16 %v2757, %v2753
    %v2986 = vpack.c.b16 %v2758, %v2754
    %v2987 = vpack.c.b16 %v2759, %v2755
    %v2988 = vpack.c.b16 %v2764, %v2760
    %v2989 = vpack.c.b16 %v2765, %v2761
    %v2990 = vpack.c.b16 %v2766, %v2762
    %v2991 = vpack.c.b16 %v2767, %v2763
    %v2992 = vpack.c.b16 %v2772, %v2768
    %v2993 = vpack.c.b16 %v2773, %v2769
    %v2994 = vpack.c.b16 %v2774, %v2770
    %v2995 = vpack.c.b16 %v2775, %v2771
    %v2996 = vpack.c.b16 %v2780, %v2776
    %v2997 = vpack.c.b16 %v2781, %v2777
    %v2998 = vpack.c.b16 %v2782, %v2778
    %v2999 = vpack.c.b16 %v2783, %v2779
    %v3000 = vpack.c.b16 %v2788, %v2784
    %v3001 = vpack.c.b16 %v2789, %v2785
    %v3002 = vpack.c.b16 %v2790, %v2786
    %v3003 = vpack.c.b16 %v2791, %v2787
    %v3004 = vpack.c.b16 %v2796, %v2792
    %v3005 = vpack.c.b16 %v2797, %v2793
    %v3006 = vpack.c.b16 %v2798, %v2794
    %v3007 = vpack.c.b16 %v2799, %v2795
    %v3008 = vpack.c.b16 %v2804, %v2800
    %v3009 = vpack.c.b16 %v2805, %v2801
    %v3010 = vpack.c.b16 %v2806, %v2802
    %v3011 = vpack.c.b16 %v2807, %v2803
    %v3012 = vpack.c.b16 %v2812, %v2808
    %v3013 = vpack.c.b16 %v2813, %v2809
    %v3014 = vpack.c.b16 %v2814, %v2810
    %v3015 = vpack.c.b16 %v2815, %v2811
    %v3016 = vpack.c.b16 %v2820, %v2816
    %v3017 = vpack.c.b16 %v2821, %v2817
    %v3018 = vpack.c.b16 %v2822, %v2818
    %v3019 = vpack.c.b16 %v2823, %v2819
    %v3020 = vpack.c.b16 %v2828, %v2824
    %v3021 = vpack.c.b16 %v2829, %v2825
    %v3022 = vpack.c.b16 %v2830, %v2826
    %v3023 = vpack.c.b16 %v2831, %v2827
    %v3024 = vpack.c.b16 %v2836, %v2832
    %v3025 = vpack.c.b16 %v2837, %v2833
    %v3026 = vpack.c.b16 %v2838, %v2834
    %v3027 = vpack.c.b16 %v2839, %v2835
    %v3028 = vpack.c.b16 %v2844, %v2840
    %v3029 = vpack.c.b16 %v2845, %v2841
    %v3030 = vpack.c.b16 %v2846, %v2842
    %v3031 = vpack.c.b16 %v2847, %v2843
    %v3032 = vpack.c.b16 %v2852, %v2848
    %v3033 = vpack.c.b16 %v2853, %v2849
    %v3034 = vpack.c.b16 %v2854, %v2850
    %v3035 = vpack.c.b16 %v2855, %v2851
    %v3036 = vpack.c.b16 %v2860, %v2856
    %v3037 = vpack.c.b16 %v2861, %v2857
    %v3038 = vpack.c.b16 %v2862, %v2858
    %v3039 = vpack.c.b16 %v2863, %v2859
    %v3040 = vpack.c.b16 %v2868, %v2864
    %v3041 = vpack.c.b16 %v2869, %v2865
    %v3042 = vpack.c.b16 %v2870, %v2866
    %v3043 = vpack.c.b16 %v2871, %v2867
    %v3044 = vpack.c.b16 %v2876, %v2872
    %v3045 = vpack.c.b16 %v2877, %v2873
    %v3046 = vpack.c.b16 %v2878, %v2874
    %v3047 = vpack.c.b16 %v2879, %v2875
    %v3048 = vpack.c.b16 %v2884, %v2880
    %v3049 = vpack.c.b16 %v2885, %v2881
    %v3050 = vpack.c.b16 %v2886, %v2882
    %v3051 = vpack.c.b16 %v2887, %v2883
    %v3052 = vpack.c.b16 %v2892, %v2888
    %v3053 = vpack.c.b16 %v2893, %v2889
    %v3054 = vpack.c.b16 %v2894, %v2890
    %v3055 = vpack.c.b16 %v2895, %v2891
    %v3056 = vpack.c.b16 %v2900, %v2896
    %v3057 = vpack.c.b16 %v2901, %v2897
    %v3058 = vpack.c.b16 %v2902, %v2898
    %v3059 = vpack.c.b16 %v2903, %v2899
    %v3060 = vpack.c.b16 %v2908, %v2904
    %v3061 = vpack.c.b16 %v2909, %v2905
    %v3062 = vpack.c.b16 %v2910, %v2906
    %v3063 = vpack.c.b16 %v2911, %v2907
    %v3064 = vpack.c.b16 %v2916, %v2912
    %v3065 = vpack.c.b16 %v2917, %v2913
    %v3066 = vpack.c.b16 %v2918, %v2914
    %v3067 = vpack.c.b16 %v2919, %v2915
    %v3068 = vpack.c.b16 %v2924, %v2920
    %v3069 = vpack.c.b16 %v2925, %v2921
    %v3070 = vpack.c.b16 %v2926, %v2922
    %v3071 = vpack.c.b16 %v2927, %v2923
    %v3072 = vpack.c.b16 %v2932, %v2928
    %v3073 = vpack.c.b16 %v2933, %v2929
    %v3074 = vpack.c.b16 %v2934, %v2930
    %v3075 = vpack.c.b16 %v2935, %v2931
    %v3076 = vpack.c.b16 %v2940, %v2936
    %v3077 = vpack.c.b16 %v2941, %v2937
    %v3078 = vpack.c.b16 %v2942, %v2938
    %v3079 = vpack.c.b16 %v2943, %v2939
    %v3080 = vpack.c.b16 %v2948, %v2944
    %v3081 = vpack.c.b16 %v2949, %v2945
    %v3082 = vpack.c.b16 %v2950, %v2946
    %v3083 = vpack.c.b16 %v2951, %v2947
    %v3084 = vpack.c.b16 %v2956, %v2952
    %v3085 = vpack.c.b16 %v2957, %v2953
    %v3086 = vpack.c.b16 %v2958, %v2954
    %v3087 = vpack.c.b16 %v2959, %v2955
    %3216 = vmatprep.subr.bf16.mxu0 %v2989
    %3217 = vmatpush1.bf16.msra.mxu0 %v2988
    %3218 = vmatprep.subr.bf16.mxu0 %v2985
    %3219 = vmatpush1.bf16.msra.mxu0 %v2984
    %3220 = vmatprep.subr.bf16.mxu0 %v2981
    %3221 = vmatpush1.bf16.msra.mxu0 %v2980
    %3222 = vmatprep.subr.bf16.mxu0 %v2977
    %3223 = vmatpush1.bf16.msra.mxu0 %v2976
    %3224 = vmatprep.subr.bf16.mxu0 %v2973
    %3225 = vmatpush1.bf16.msra.mxu0 %v2972
    %3226 = vmatprep.subr.bf16.mxu0 %v2969
    %3227 = vmatpush1.bf16.msra.mxu0 %v2968
    %3228 = vmatprep.subr.bf16.mxu0 %v2965
    %3229 = vmatpush1.bf16.msra.mxu0 %v2964
    %3230 = vmatprep.subr.bf16.mxu0 %v2961
    %3231 = vmatpush1.bf16.msra.mxu0 %v2960
    %3232 = vmatprep.subr.bf16.mxu0 %v3021
    %3233 = vmatpush2.bf16.msra.mxu0 %v3020
    %3234 = vmatprep.subr.bf16.mxu0 %v3017
    %3235 = vmatpush2.bf16.msra.mxu0 %v3016
    %3236 = vmatprep.subr.bf16.mxu0 %v3013
    %3237 = vmatpush2.bf16.msra.mxu0 %v3012
    %3238 = vmatprep.subr.bf16.mxu0 %v3009
    %3239 = vmatpush2.bf16.msra.mxu0 %v3008
    %3240 = vmatprep.subr.bf16.mxu0 %v3005
    %3241 = vmatpush2.bf16.msra.mxu0 %v3004
    %3242 = vmatprep.subr.bf16.mxu0 %v3001
    %3243 = vmatpush2.bf16.msra.mxu0 %v3000
    %3244 = vmatprep.subr.bf16.mxu0 %v2997
    %3245 = vmatpush2.bf16.msra.mxu0 %v2996
    %3246 = vmatprep.subr.bf16.mxu0 %v2993
    %3247 = vmatpush2.bf16.msra.mxu0 %v2992
    %3248 = vmatprep.mubr.bf16.mxu0 %v1509
    %3249 = vmatmul.mubr.bf16.gmra.mxu0 %v1508
    %v3250 = vpop.f32.mrf.mxu0
    %v3251 = vadd.f32 %v2488, %v3250
    %v3252 = vpop.f32.mrf.mxu0
    %v3253 = vadd.f32 %v2490, %v3252
    %v3254 = vpop.f32.mrf.mxu0
    %v3255 = vpop.f32.mrf.mxu0
    %3256 = vdwg.mxu0
    %3257 = vmatprep.subr.bf16.mxu0 %v3053
    %3258 = vmatpush1.bf16.msra.mxu0 %v3052
    %3259 = vmatprep.subr.bf16.mxu0 %v3049
    %3260 = vmatpush1.bf16.msra.mxu0 %v3048
    %3261 = vmatprep.subr.bf16.mxu0 %v3045
    %3262 = vmatpush1.bf16.msra.mxu0 %v3044
    %3263 = vmatprep.subr.bf16.mxu0 %v3041
    %3264 = vmatpush1.bf16.msra.mxu0 %v3040
    %3265 = vmatprep.subr.bf16.mxu0 %v3037
    %3266 = vmatpush1.bf16.msra.mxu0 %v3036
    %3267 = vmatprep.subr.bf16.mxu0 %v3033
    %3268 = vmatpush1.bf16.msra.mxu0 %v3032
    %3269 = vmatprep.subr.bf16.mxu0 %v3029
    %3270 = vmatpush1.bf16.msra.mxu0 %v3028
    %3271 = vmatprep.subr.bf16.mxu0 %v3025
    %3272 = vmatpush1.bf16.msra.mxu0 %v3024
    %3273 = vmatprep.subr.bf16.mxu0 %v3085
    %3274 = vmatpush2.bf16.msra.mxu0 %v3084
    %3275 = vmatprep.subr.bf16.mxu0 %v3081
    %3276 = vmatpush2.bf16.msra.mxu0 %v3080
    %3277 = vmatprep.subr.bf16.mxu0 %v3077
    %3278 = vmatpush2.bf16.msra.mxu0 %v3076
    %3279 = vmatprep.subr.bf16.mxu0 %v3073
    %3280 = vmatpush2.bf16.msra.mxu0 %v3072
    %3281 = vmatprep.subr.bf16.mxu0 %v3069
    %3282 = vmatpush2.bf16.msra.mxu0 %v3068
    %3283 = vmatprep.subr.bf16.mxu0 %v3065
    %3284 = vmatpush2.bf16.msra.mxu0 %v3064
    %3285 = vmatprep.subr.bf16.mxu0 %v3061
    %3286 = vmatpush2.bf16.msra.mxu0 %v3060
    %3287 = vmatprep.subr.bf16.mxu0 %v3057
    %3288 = vmatpush2.bf16.msra.mxu0 %v3056
    %3289 = vmatprep.mubr.bf16.mxu0 %v1511
    %3290 = vmatmul.mubr.bf16.gmra.mxu0 %v1510
    %v3291 = vpop.f32.mrf.mxu0
    %v3292 = vadd.f32 %v3251, %v3291
    %v3293 = vpop.f32.mrf.mxu0
    %v3294 = vadd.f32 %v3253, %v3293
    %v3295 = vpop.f32.mrf.mxu0
    %v3296 = vpop.f32.mrf.mxu0
    %3297 = vdwg.mxu0
    %3298 = vmatprep.subr.bf16.mxu0 %v2991
    %3299 = vmatpush1.bf16.msra.mxu0 %v2990
    %3300 = vmatprep.subr.bf16.mxu0 %v2987
    %3301 = vmatpush1.bf16.msra.mxu0 %v2986
    %3302 = vmatprep.subr.bf16.mxu0 %v2983
    %3303 = vmatpush1.bf16.msra.mxu0 %v2982
    %3304 = vmatprep.subr.bf16.mxu0 %v2979
    %3305 = vmatpush1.bf16.msra.mxu0 %v2978
    %3306 = vmatprep.subr.bf16.mxu0 %v2975
    %3307 = vmatpush1.bf16.msra.mxu0 %v2974
    %3308 = vmatprep.subr.bf16.mxu0 %v2971
    %3309 = vmatpush1.bf16.msra.mxu0 %v2970
    %3310 = vmatprep.subr.bf16.mxu0 %v2967
    %3311 = vmatpush1.bf16.msra.mxu0 %v2966
    %3312 = vmatprep.subr.bf16.mxu0 %v2963
    %3313 = vmatpush1.bf16.msra.mxu0 %v2962
    %3314 = vmatprep.subr.bf16.mxu0 %v3023
    %3315 = vmatpush2.bf16.msra.mxu0 %v3022
    %3316 = vmatprep.subr.bf16.mxu0 %v3019
    %3317 = vmatpush2.bf16.msra.mxu0 %v3018
    %3318 = vmatprep.subr.bf16.mxu0 %v3015
    %3319 = vmatpush2.bf16.msra.mxu0 %v3014
    %3320 = vmatprep.subr.bf16.mxu0 %v3011
    %3321 = vmatpush2.bf16.msra.mxu0 %v3010
    %3322 = vmatprep.subr.bf16.mxu0 %v3007
    %3323 = vmatpush2.bf16.msra.mxu0 %v3006
    %3324 = vmatprep.subr.bf16.mxu0 %v3003
    %3325 = vmatpush2.bf16.msra.mxu0 %v3002
    %3326 = vmatprep.subr.bf16.mxu0 %v2999
    %3327 = vmatpush2.bf16.msra.mxu0 %v2998
    %3328 = vmatprep.subr.bf16.mxu0 %v2995
    %3329 = vmatpush2.bf16.msra.mxu0 %v2994
    %3330 = vmatprep.mubr.bf16.mxu0 %v1509
    %3331 = vmatmul.mubr.bf16.gmra.mxu0 %v1508
    %v3332 = vpop.f32.mrf.mxu0
    %v3333 = vadd.f32 %v2570, %v3332
    %v3334 = vpop.f32.mrf.mxu0
    %v3335 = vadd.f32 %v2572, %v3334
    %v3336 = vpop.f32.mrf.mxu0
    %v3337 = vpop.f32.mrf.mxu0
    %3338 = vdwg.mxu0
    %3339 = vmatprep.subr.bf16.mxu0 %v3055
    %3340 = vmatpush1.bf16.msra.mxu0 %v3054
    %3341 = vmatprep.subr.bf16.mxu0 %v3051
    %3342 = vmatpush1.bf16.msra.mxu0 %v3050
    %3343 = vmatprep.subr.bf16.mxu0 %v3047
    %3344 = vmatpush1.bf16.msra.mxu0 %v3046
    %3345 = vmatprep.subr.bf16.mxu0 %v3043
    %3346 = vmatpush1.bf16.msra.mxu0 %v3042
    %3347 = vmatprep.subr.bf16.mxu0 %v3039
    %3348 = vmatpush1.bf16.msra.mxu0 %v3038
    %3349 = vmatprep.subr.bf16.mxu0 %v3035
    %3350 = vmatpush1.bf16.msra.mxu0 %v3034
    %3351 = vmatprep.subr.bf16.mxu0 %v3031
    %3352 = vmatpush1.bf16.msra.mxu0 %v3030
    %3353 = vmatprep.subr.bf16.mxu0 %v3027
    %3354 = vmatpush1.bf16.msra.mxu0 %v3026
    %3355 = vmatprep.subr.bf16.mxu0 %v3087
    %3356 = vmatpush2.bf16.msra.mxu0 %v3086
    %3357 = vmatprep.subr.bf16.mxu0 %v3083
    %3358 = vmatpush2.bf16.msra.mxu0 %v3082
    %3359 = vmatprep.subr.bf16.mxu0 %v3079
    %3360 = vmatpush2.bf16.msra.mxu0 %v3078
    %3361 = vmatprep.subr.bf16.mxu0 %v3075
    %3362 = vmatpush2.bf16.msra.mxu0 %v3074
    %3363 = vmatprep.subr.bf16.mxu0 %v3071
    %3364 = vmatpush2.bf16.msra.mxu0 %v3070
    %3365 = vmatprep.subr.bf16.mxu0 %v3067
    %3366 = vmatpush2.bf16.msra.mxu0 %v3066
    %3367 = vmatprep.subr.bf16.mxu0 %v3063
    %3368 = vmatpush2.bf16.msra.mxu0 %v3062
    %3369 = vmatprep.subr.bf16.mxu0 %v3059
    %3370 = vmatpush2.bf16.msra.mxu0 %v3058
    %3371 = vmatprep.mubr.bf16.mxu0 %v1511
    %3372 = vmatmul.mubr.bf16.gmra.mxu0 %v1510
    %v3373 = vpop.f32.mrf.mxu0
    %v3374 = vadd.f32 %v3333, %v3373
    %v3375 = vpop.f32.mrf.mxu0
    %v3376 = vadd.f32 %v3335, %v3375
    %v3377 = vpop.f32.mrf.mxu0
    %v3378 = vpop.f32.mrf.mxu0
    %3379 = vdwg.mxu0
    %v3380 = vpack.c.bf16 %v1480, %v1480
    %v3381 = vpack.c.bf16 %v1481, %v1481
    %v3382 = vpack.c.bf16 %v1482, %v1482
    %v3383 = vpack.c.bf16 %v1483, %v1483
    %v3384 = vld [vmem:[#allocation9 + $0x800] sm:$0xff]
    %v3385 = vld [vmem:[#allocation9 + $0x808] sm:$0xff]
    %v3386 = vld [vmem:[#allocation9 + $0x810] sm:$0xff]
    %v3387 = vld [vmem:[#allocation9 + $0x818] sm:$0xff]
    %v3388 = vld [vmem:[#allocation9 + $0x820] sm:$0xff]
    %v3389 = vld [vmem:[#allocation9 + $0x828] sm:$0xff]
    %v3390 = vld [vmem:[#allocation9 + $0x830] sm:$0xff]
    %v3391 = vld [vmem:[#allocation9 + $0x838] sm:$0xff]
    %v3392 = vld [vmem:[#allocation9 + $0x840] sm:$0xff]
    %v3393 = vld [vmem:[#allocation9 + $0x848] sm:$0xff]
    %v3394 = vld [vmem:[#allocation9 + $0x850] sm:$0xff]
    %v3395 = vld [vmem:[#allocation9 + $0x858] sm:$0xff]
    %v3396 = vld [vmem:[#allocation9 + $0x860] sm:$0xff]
    %v3397 = vld [vmem:[#allocation9 + $0x868] sm:$0xff]
    %v3398 = vld [vmem:[#allocation9 + $0x870] sm:$0xff]
    %v3399 = vld [vmem:[#allocation9 + $0x878] sm:$0xff]
    %v3400 = vld [vmem:[#allocation9 + $0x880] sm:$0xff]
    %v3401 = vld [vmem:[#allocation9 + $0x888] sm:$0xff]
    %v3402 = vld [vmem:[#allocation9 + $0x890] sm:$0xff]
    %v3403 = vld [vmem:[#allocation9 + $0x898] sm:$0xff]
    %v3404 = vld [vmem:[#allocation9 + $0x8a0] sm:$0xff]
    %v3405 = vld [vmem:[#allocation9 + $0x8a8] sm:$0xff]
    %v3406 = vld [vmem:[#allocation9 + $0x8b0] sm:$0xff]
    %v3407 = vld [vmem:[#allocation9 + $0x8b8] sm:$0xff]
    %v3408 = vld [vmem:[#allocation9 + $0x8c0] sm:$0xff]
    %v3409 = vld [vmem:[#allocation9 + $0x8c8] sm:$0xff]
    %v3410 = vld [vmem:[#allocation9 + $0x8d0] sm:$0xff]
    %v3411 = vld [vmem:[#allocation9 + $0x8d8] sm:$0xff]
    %v3412 = vld [vmem:[#allocation9 + $0x8e0] sm:$0xff]
    %v3413 = vld [vmem:[#allocation9 + $0x8e8] sm:$0xff]
    %v3414 = vld [vmem:[#allocation9 + $0x8f0] sm:$0xff]
    %v3415 = vld [vmem:[#allocation9 + $0x8f8] sm:$0xff]
    %v3416 = vld [vmem:[#allocation9 + $0x900] sm:$0xff]
    %v3417 = vld [vmem:[#allocation9 + $0x908] sm:$0xff]
    %v3418 = vld [vmem:[#allocation9 + $0x910] sm:$0xff]
    %v3419 = vld [vmem:[#allocation9 + $0x918] sm:$0xff]
    %v3420 = vld [vmem:[#allocation9 + $0x920] sm:$0xff]
    %v3421 = vld [vmem:[#allocation9 + $0x928] sm:$0xff]
    %v3422 = vld [vmem:[#allocation9 + $0x930] sm:$0xff]
    %v3423 = vld [vmem:[#allocation9 + $0x938] sm:$0xff]
    %v3424 = vld [vmem:[#allocation9 + $0x940] sm:$0xff]
    %v3425 = vld [vmem:[#allocation9 + $0x948] sm:$0xff]
    %v3426 = vld [vmem:[#allocation9 + $0x950] sm:$0xff]
    %v3427 = vld [vmem:[#allocation9 + $0x958] sm:$0xff]
    %v3428 = vld [vmem:[#allocation9 + $0x960] sm:$0xff]
    %v3429 = vld [vmem:[#allocation9 + $0x968] sm:$0xff]
    %v3430 = vld [vmem:[#allocation9 + $0x970] sm:$0xff]
    %v3431 = vld [vmem:[#allocation9 + $0x978] sm:$0xff]
    %v3432 = vld [vmem:[#allocation9 + $0x980] sm:$0xff]
    %v3433 = vld [vmem:[#allocation9 + $0x988] sm:$0xff]
    %v3434 = vld [vmem:[#allocation9 + $0x990] sm:$0xff]
    %v3435 = vld [vmem:[#allocation9 + $0x998] sm:$0xff]
    %v3436 = vld [vmem:[#allocation9 + $0x9a0] sm:$0xff]
    %v3437 = vld [vmem:[#allocation9 + $0x9a8] sm:$0xff]
    %v3438 = vld [vmem:[#allocation9 + $0x9b0] sm:$0xff]
    %v3439 = vld [vmem:[#allocation9 + $0x9b8] sm:$0xff]
    %v3440 = vld [vmem:[#allocation9 + $0x9c0] sm:$0xff]
    %v3441 = vld [vmem:[#allocation9 + $0x9c8] sm:$0xff]
    %v3442 = vld [vmem:[#allocation9 + $0x9d0] sm:$0xff]
    %v3443 = vld [vmem:[#allocation9 + $0x9d8] sm:$0xff]
    %v3444 = vld [vmem:[#allocation9 + $0x9e0] sm:$0xff]
    %v3445 = vld [vmem:[#allocation9 + $0x9e8] sm:$0xff]
    %v3446 = vld [vmem:[#allocation9 + $0x9f0] sm:$0xff]
    %v3447 = vld [vmem:[#allocation9 + $0x9f8] sm:$0xff]
    %v3448 = vld [vmem:[#allocation9 + $0xa00] sm:$0xff]
    %v3449 = vld [vmem:[#allocation9 + $0xa08] sm:$0xff]
    %v3450 = vld [vmem:[#allocation9 + $0xa10] sm:$0xff]
    %v3451 = vld [vmem:[#allocation9 + $0xa18] sm:$0xff]
    %v3452 = vld [vmem:[#allocation9 + $0xa20] sm:$0xff]
    %v3453 = vld [vmem:[#allocation9 + $0xa28] sm:$0xff]
    %v3454 = vld [vmem:[#allocation9 + $0xa30] sm:$0xff]
    %v3455 = vld [vmem:[#allocation9 + $0xa38] sm:$0xff]
    %v3456 = vld [vmem:[#allocation9 + $0xa40] sm:$0xff]
    %v3457 = vld [vmem:[#allocation9 + $0xa48] sm:$0xff]
    %v3458 = vld [vmem:[#allocation9 + $0xa50] sm:$0xff]
    %v3459 = vld [vmem:[#allocation9 + $0xa58] sm:$0xff]
    %v3460 = vld [vmem:[#allocation9 + $0xa60] sm:$0xff]
    %v3461 = vld [vmem:[#allocation9 + $0xa68] sm:$0xff]
    %v3462 = vld [vmem:[#allocation9 + $0xa70] sm:$0xff]
    %v3463 = vld [vmem:[#allocation9 + $0xa78] sm:$0xff]
    %v3464 = vld [vmem:[#allocation9 + $0xa80] sm:$0xff]
    %v3465 = vld [vmem:[#allocation9 + $0xa88] sm:$0xff]
    %v3466 = vld [vmem:[#allocation9 + $0xa90] sm:$0xff]
    %v3467 = vld [vmem:[#allocation9 + $0xa98] sm:$0xff]
    %v3468 = vld [vmem:[#allocation9 + $0xaa0] sm:$0xff]
    %v3469 = vld [vmem:[#allocation9 + $0xaa8] sm:$0xff]
    %v3470 = vld [vmem:[#allocation9 + $0xab0] sm:$0xff]
    %v3471 = vld [vmem:[#allocation9 + $0xab8] sm:$0xff]
    %v3472 = vld [vmem:[#allocation9 + $0xac0] sm:$0xff]
    %v3473 = vld [vmem:[#allocation9 + $0xac8] sm:$0xff]
    %v3474 = vld [vmem:[#allocation9 + $0xad0] sm:$0xff]
    %v3475 = vld [vmem:[#allocation9 + $0xad8] sm:$0xff]
    %v3476 = vld [vmem:[#allocation9 + $0xae0] sm:$0xff]
    %v3477 = vld [vmem:[#allocation9 + $0xae8] sm:$0xff]
    %v3478 = vld [vmem:[#allocation9 + $0xaf0] sm:$0xff]
    %v3479 = vld [vmem:[#allocation9 + $0xaf8] sm:$0xff]
    %v3480 = vld [vmem:[#allocation9 + $0xb00] sm:$0xff]
    %v3481 = vld [vmem:[#allocation9 + $0xb08] sm:$0xff]
    %v3482 = vld [vmem:[#allocation9 + $0xb10] sm:$0xff]
    %v3483 = vld [vmem:[#allocation9 + $0xb18] sm:$0xff]
    %v3484 = vld [vmem:[#allocation9 + $0xb20] sm:$0xff]
    %v3485 = vld [vmem:[#allocation9 + $0xb28] sm:$0xff]
    %v3486 = vld [vmem:[#allocation9 + $0xb30] sm:$0xff]
    %v3487 = vld [vmem:[#allocation9 + $0xb38] sm:$0xff]
    %v3488 = vld [vmem:[#allocation9 + $0xb40] sm:$0xff]
    %v3489 = vld [vmem:[#allocation9 + $0xb48] sm:$0xff]
    %v3490 = vld [vmem:[#allocation9 + $0xb50] sm:$0xff]
    %v3491 = vld [vmem:[#allocation9 + $0xb58] sm:$0xff]
    %v3492 = vld [vmem:[#allocation9 + $0xb60] sm:$0xff]
    %v3493 = vld [vmem:[#allocation9 + $0xb68] sm:$0xff]
    %v3494 = vld [vmem:[#allocation9 + $0xb70] sm:$0xff]
    %v3495 = vld [vmem:[#allocation9 + $0xb78] sm:$0xff]
    %v3496 = vld [vmem:[#allocation9 + $0xb80] sm:$0xff]
    %v3497 = vld [vmem:[#allocation9 + $0xb88] sm:$0xff]
    %v3498 = vld [vmem:[#allocation9 + $0xb90] sm:$0xff]
    %v3499 = vld [vmem:[#allocation9 + $0xb98] sm:$0xff]
    %v3500 = vld [vmem:[#allocation9 + $0xba0] sm:$0xff]
    %v3501 = vld [vmem:[#allocation9 + $0xba8] sm:$0xff]
    %v3502 = vld [vmem:[#allocation9 + $0xbb0] sm:$0xff]
    %v3503 = vld [vmem:[#allocation9 + $0xbb8] sm:$0xff]
    %v3504 = vld [vmem:[#allocation9 + $0xbc0] sm:$0xff]
    %v3505 = vld [vmem:[#allocation9 + $0xbc8] sm:$0xff]
    %v3506 = vld [vmem:[#allocation9 + $0xbd0] sm:$0xff]
    %v3507 = vld [vmem:[#allocation9 + $0xbd8] sm:$0xff]
    %v3508 = vld [vmem:[#allocation9 + $0xbe0] sm:$0xff]
    %v3509 = vld [vmem:[#allocation9 + $0xbe8] sm:$0xff]
    %v3510 = vld [vmem:[#allocation9 + $0xbf0] sm:$0xff]
    %v3511 = vld [vmem:[#allocation9 + $0xbf8] sm:$0xff]
    %v3640 = vunpack.c.l.b16 %v3384
    %v3641 = vunpack.c.h.b16 %v3384
    %v3642 = vunpack.c.l.b16 %v3385
    %v3643 = vunpack.c.h.b16 %v3385
    %v3644 = vunpack.c.l.b16 %v3386
    %v3645 = vunpack.c.h.b16 %v3386
    %v3646 = vunpack.c.l.b16 %v3387
    %v3647 = vunpack.c.h.b16 %v3387
    %v3648 = vunpack.c.l.b16 %v3388
    %v3649 = vunpack.c.h.b16 %v3388
    %v3650 = vunpack.c.l.b16 %v3389
    %v3651 = vunpack.c.h.b16 %v3389
    %v3652 = vunpack.c.l.b16 %v3390
    %v3653 = vunpack.c.h.b16 %v3390
    %v3654 = vunpack.c.l.b16 %v3391
    %v3655 = vunpack.c.h.b16 %v3391
    %v3656 = vunpack.c.l.b16 %v3392
    %v3657 = vunpack.c.h.b16 %v3392
    %v3658 = vunpack.c.l.b16 %v3393
    %v3659 = vunpack.c.h.b16 %v3393
    %v3660 = vunpack.c.l.b16 %v3394
    %v3661 = vunpack.c.h.b16 %v3394
    %v3662 = vunpack.c.l.b16 %v3395
    %v3663 = vunpack.c.h.b16 %v3395
    %v3664 = vunpack.c.l.b16 %v3396
    %v3665 = vunpack.c.h.b16 %v3396
    %v3666 = vunpack.c.l.b16 %v3397
    %v3667 = vunpack.c.h.b16 %v3397
    %v3668 = vunpack.c.l.b16 %v3398
    %v3669 = vunpack.c.h.b16 %v3398
    %v3670 = vunpack.c.l.b16 %v3399
    %v3671 = vunpack.c.h.b16 %v3399
    %v3672 = vunpack.c.l.b16 %v3400
    %v3673 = vunpack.c.h.b16 %v3400
    %v3674 = vunpack.c.l.b16 %v3401
    %v3675 = vunpack.c.h.b16 %v3401
    %v3676 = vunpack.c.l.b16 %v3402
    %v3677 = vunpack.c.h.b16 %v3402
    %v3678 = vunpack.c.l.b16 %v3403
    %v3679 = vunpack.c.h.b16 %v3403
    %v3680 = vunpack.c.l.b16 %v3404
    %v3681 = vunpack.c.h.b16 %v3404
    %v3682 = vunpack.c.l.b16 %v3405
    %v3683 = vunpack.c.h.b16 %v3405
    %v3684 = vunpack.c.l.b16 %v3406
    %v3685 = vunpack.c.h.b16 %v3406
    %v3686 = vunpack.c.l.b16 %v3407
    %v3687 = vunpack.c.h.b16 %v3407
    %v3688 = vunpack.c.l.b16 %v3408
    %v3689 = vunpack.c.h.b16 %v3408
    %v3690 = vunpack.c.l.b16 %v3409
    %v3691 = vunpack.c.h.b16 %v3409
    %v3692 = vunpack.c.l.b16 %v3410
    %v3693 = vunpack.c.h.b16 %v3410
    %v3694 = vunpack.c.l.b16 %v3411
    %v3695 = vunpack.c.h.b16 %v3411
    %v3696 = vunpack.c.l.b16 %v3412
    %v3697 = vunpack.c.h.b16 %v3412
    %v3698 = vunpack.c.l.b16 %v3413
    %v3699 = vunpack.c.h.b16 %v3413
    %v3700 = vunpack.c.l.b16 %v3414
    %v3701 = vunpack.c.h.b16 %v3414
    %v3702 = vunpack.c.l.b16 %v3415
    %v3703 = vunpack.c.h.b16 %v3415
    %v3704 = vunpack.c.l.b16 %v3416
    %v3705 = vunpack.c.h.b16 %v3416
    %v3706 = vunpack.c.l.b16 %v3417
    %v3707 = vunpack.c.h.b16 %v3417
    %v3708 = vunpack.c.l.b16 %v3418
    %v3709 = vunpack.c.h.b16 %v3418
    %v3710 = vunpack.c.l.b16 %v3419
    %v3711 = vunpack.c.h.b16 %v3419
    %v3712 = vunpack.c.l.b16 %v3420
    %v3713 = vunpack.c.h.b16 %v3420
    %v3714 = vunpack.c.l.b16 %v3421
    %v3715 = vunpack.c.h.b16 %v3421
    %v3716 = vunpack.c.l.b16 %v3422
    %v3717 = vunpack.c.h.b16 %v3422
    %v3718 = vunpack.c.l.b16 %v3423
    %v3719 = vunpack.c.h.b16 %v3423
    %v3720 = vunpack.c.l.b16 %v3424
    %v3721 = vunpack.c.h.b16 %v3424
    %v3722 = vunpack.c.l.b16 %v3425
    %v3723 = vunpack.c.h.b16 %v3425
    %v3724 = vunpack.c.l.b16 %v3426
    %v3725 = vunpack.c.h.b16 %v3426
    %v3726 = vunpack.c.l.b16 %v3427
    %v3727 = vunpack.c.h.b16 %v3427
    %v3728 = vunpack.c.l.b16 %v3428
    %v3729 = vunpack.c.h.b16 %v3428
    %v3730 = vunpack.c.l.b16 %v3429
    %v3731 = vunpack.c.h.b16 %v3429
    %v3732 = vunpack.c.l.b16 %v3430
    %v3733 = vunpack.c.h.b16 %v3430
    %v3734 = vunpack.c.l.b16 %v3431
    %v3735 = vunpack.c.h.b16 %v3431
    %v3736 = vunpack.c.l.b16 %v3432
    %v3737 = vunpack.c.h.b16 %v3432
    %v3738 = vunpack.c.l.b16 %v3433
    %v3739 = vunpack.c.h.b16 %v3433
    %v3740 = vunpack.c.l.b16 %v3434
    %v3741 = vunpack.c.h.b16 %v3434
    %v3742 = vunpack.c.l.b16 %v3435
    %v3743 = vunpack.c.h.b16 %v3435
    %v3744 = vunpack.c.l.b16 %v3436
    %v3745 = vunpack.c.h.b16 %v3436
    %v3746 = vunpack.c.l.b16 %v3437
    %v3747 = vunpack.c.h.b16 %v3437
    %v3748 = vunpack.c.l.b16 %v3438
    %v3749 = vunpack.c.h.b16 %v3438
    %v3750 = vunpack.c.l.b16 %v3439
    %v3751 = vunpack.c.h.b16 %v3439
    %v3752 = vunpack.c.l.b16 %v3440
    %v3753 = vunpack.c.h.b16 %v3440
    %v3754 = vunpack.c.l.b16 %v3441
    %v3755 = vunpack.c.h.b16 %v3441
    %v3756 = vunpack.c.l.b16 %v3442
    %v3757 = vunpack.c.h.b16 %v3442
    %v3758 = vunpack.c.l.b16 %v3443
    %v3759 = vunpack.c.h.b16 %v3443
    %v3760 = vunpack.c.l.b16 %v3444
    %v3761 = vunpack.c.h.b16 %v3444
    %v3762 = vunpack.c.l.b16 %v3445
    %v3763 = vunpack.c.h.b16 %v3445
    %v3764 = vunpack.c.l.b16 %v3446
    %v3765 = vunpack.c.h.b16 %v3446
    %v3766 = vunpack.c.l.b16 %v3447
    %v3767 = vunpack.c.h.b16 %v3447
    %v3768 = vunpack.c.l.b16 %v3448
    %v3769 = vunpack.c.h.b16 %v3448
    %v3770 = vunpack.c.l.b16 %v3449
    %v3771 = vunpack.c.h.b16 %v3449
    %v3772 = vunpack.c.l.b16 %v3450
    %v3773 = vunpack.c.h.b16 %v3450
    %v3774 = vunpack.c.l.b16 %v3451
    %v3775 = vunpack.c.h.b16 %v3451
    %v3776 = vunpack.c.l.b16 %v3452
    %v3777 = vunpack.c.h.b16 %v3452
    %v3778 = vunpack.c.l.b16 %v3453
    %v3779 = vunpack.c.h.b16 %v3453
    %v3780 = vunpack.c.l.b16 %v3454
    %v3781 = vunpack.c.h.b16 %v3454
    %v3782 = vunpack.c.l.b16 %v3455
    %v3783 = vunpack.c.h.b16 %v3455
    %v3784 = vunpack.c.l.b16 %v3456
    %v3785 = vunpack.c.h.b16 %v3456
    %v3786 = vunpack.c.l.b16 %v3457
    %v3787 = vunpack.c.h.b16 %v3457
    %v3788 = vunpack.c.l.b16 %v3458
    %v3789 = vunpack.c.h.b16 %v3458
    %v3790 = vunpack.c.l.b16 %v3459
    %v3791 = vunpack.c.h.b16 %v3459
    %v3792 = vunpack.c.l.b16 %v3460
    %v3793 = vunpack.c.h.b16 %v3460
    %v3794 = vunpack.c.l.b16 %v3461
    %v3795 = vunpack.c.h.b16 %v3461
    %v3796 = vunpack.c.l.b16 %v3462
    %v3797 = vunpack.c.h.b16 %v3462
    %v3798 = vunpack.c.l.b16 %v3463
    %v3799 = vunpack.c.h.b16 %v3463
    %v3800 = vunpack.c.l.b16 %v3464
    %v3801 = vunpack.c.h.b16 %v3464
    %v3802 = vunpack.c.l.b16 %v3465
    %v3803 = vunpack.c.h.b16 %v3465
    %v3804 = vunpack.c.l.b16 %v3466
    %v3805 = vunpack.c.h.b16 %v3466
    %v3806 = vunpack.c.l.b16 %v3467
    %v3807 = vunpack.c.h.b16 %v3467
    %v3808 = vunpack.c.l.b16 %v3468
    %v3809 = vunpack.c.h.b16 %v3468
    %v3810 = vunpack.c.l.b16 %v3469
    %v3811 = vunpack.c.h.b16 %v3469
    %v3812 = vunpack.c.l.b16 %v3470
    %v3813 = vunpack.c.h.b16 %v3470
    %v3814 = vunpack.c.l.b16 %v3471
    %v3815 = vunpack.c.h.b16 %v3471
    %v3816 = vunpack.c.l.b16 %v3472
    %v3817 = vunpack.c.h.b16 %v3472
    %v3818 = vunpack.c.l.b16 %v3473
    %v3819 = vunpack.c.h.b16 %v3473
    %v3820 = vunpack.c.l.b16 %v3474
    %v3821 = vunpack.c.h.b16 %v3474
    %v3822 = vunpack.c.l.b16 %v3475
    %v3823 = vunpack.c.h.b16 %v3475
    %v3824 = vunpack.c.l.b16 %v3476
    %v3825 = vunpack.c.h.b16 %v3476
    %v3826 = vunpack.c.l.b16 %v3477
    %v3827 = vunpack.c.h.b16 %v3477
    %v3828 = vunpack.c.l.b16 %v3478
    %v3829 = vunpack.c.h.b16 %v3478
    %v3830 = vunpack.c.l.b16 %v3479
    %v3831 = vunpack.c.h.b16 %v3479
    %v3832 = vunpack.c.l.b16 %v3480
    %v3833 = vunpack.c.h.b16 %v3480
    %v3834 = vunpack.c.l.b16 %v3481
    %v3835 = vunpack.c.h.b16 %v3481
    %v3836 = vunpack.c.l.b16 %v3482
    %v3837 = vunpack.c.h.b16 %v3482
    %v3838 = vunpack.c.l.b16 %v3483
    %v3839 = vunpack.c.h.b16 %v3483
    %v3840 = vunpack.c.l.b16 %v3484
    %v3841 = vunpack.c.h.b16 %v3484
    %v3842 = vunpack.c.l.b16 %v3485
    %v3843 = vunpack.c.h.b16 %v3485
    %v3844 = vunpack.c.l.b16 %v3486
    %v3845 = vunpack.c.h.b16 %v3486
    %v3846 = vunpack.c.l.b16 %v3487
    %v3847 = vunpack.c.h.b16 %v3487
    %v3848 = vunpack.c.l.b16 %v3488
    %v3849 = vunpack.c.h.b16 %v3488
    %v3850 = vunpack.c.l.b16 %v3489
    %v3851 = vunpack.c.h.b16 %v3489
    %v3852 = vunpack.c.l.b16 %v3490
    %v3853 = vunpack.c.h.b16 %v3490
    %v3854 = vunpack.c.l.b16 %v3491
    %v3855 = vunpack.c.h.b16 %v3491
    %v3856 = vunpack.c.l.b16 %v3492
    %v3857 = vunpack.c.h.b16 %v3492
    %v3858 = vunpack.c.l.b16 %v3493
    %v3859 = vunpack.c.h.b16 %v3493
    %v3860 = vunpack.c.l.b16 %v3494
    %v3861 = vunpack.c.h.b16 %v3494
    %v3862 = vunpack.c.l.b16 %v3495
    %v3863 = vunpack.c.h.b16 %v3495
    %v3864 = vunpack.c.l.b16 %v3496
    %v3865 = vunpack.c.h.b16 %v3496
    %v3866 = vunpack.c.l.b16 %v3497
    %v3867 = vunpack.c.h.b16 %v3497
    %v3868 = vunpack.c.l.b16 %v3498
    %v3869 = vunpack.c.h.b16 %v3498
    %v3870 = vunpack.c.l.b16 %v3499
    %v3871 = vunpack.c.h.b16 %v3499
    %v3872 = vunpack.c.l.b16 %v3500
    %v3873 = vunpack.c.h.b16 %v3500
    %v3874 = vunpack.c.l.b16 %v3501
    %v3875 = vunpack.c.h.b16 %v3501
    %v3876 = vunpack.c.l.b16 %v3502
    %v3877 = vunpack.c.h.b16 %v3502
    %v3878 = vunpack.c.l.b16 %v3503
    %v3879 = vunpack.c.h.b16 %v3503
    %v3880 = vunpack.c.l.b16 %v3504
    %v3881 = vunpack.c.h.b16 %v3504
    %v3882 = vunpack.c.l.b16 %v3505
    %v3883 = vunpack.c.h.b16 %v3505
    %v3884 = vunpack.c.l.b16 %v3506
    %v3885 = vunpack.c.h.b16 %v3506
    %v3886 = vunpack.c.l.b16 %v3507
    %v3887 = vunpack.c.h.b16 %v3507
    %v3888 = vunpack.c.l.b16 %v3508
    %v3889 = vunpack.c.h.b16 %v3508
    %v3890 = vunpack.c.l.b16 %v3509
    %v3891 = vunpack.c.h.b16 %v3509
    %v3892 = vunpack.c.l.b16 %v3510
    %v3893 = vunpack.c.h.b16 %v3510
    %v3894 = vunpack.c.l.b16 %v3511
    %v3895 = vunpack.c.h.b16 %v3511
    %v3896 = vpack.c.b16 %v3644, %v3640
    %v3897 = vpack.c.b16 %v3645, %v3641
    %v3898 = vpack.c.b16 %v3646, %v3642
    %v3899 = vpack.c.b16 %v3647, %v3643
    %v3900 = vpack.c.b16 %v3652, %v3648
    %v3901 = vpack.c.b16 %v3653, %v3649
    %v3902 = vpack.c.b16 %v3654, %v3650
    %v3903 = vpack.c.b16 %v3655, %v3651
    %v3904 = vpack.c.b16 %v3660, %v3656
    %v3905 = vpack.c.b16 %v3661, %v3657
    %v3906 = vpack.c.b16 %v3662, %v3658
    %v3907 = vpack.c.b16 %v3663, %v3659
    %v3908 = vpack.c.b16 %v3668, %v3664
    %v3909 = vpack.c.b16 %v3669, %v3665
    %v3910 = vpack.c.b16 %v3670, %v3666
    %v3911 = vpack.c.b16 %v3671, %v3667
    %v3912 = vpack.c.b16 %v3676, %v3672
    %v3913 = vpack.c.b16 %v3677, %v3673
    %v3914 = vpack.c.b16 %v3678, %v3674
    %v3915 = vpack.c.b16 %v3679, %v3675
    %v3916 = vpack.c.b16 %v3684, %v3680
    %v3917 = vpack.c.b16 %v3685, %v3681
    %v3918 = vpack.c.b16 %v3686, %v3682
    %v3919 = vpack.c.b16 %v3687, %v3683
    %v3920 = vpack.c.b16 %v3692, %v3688
    %v3921 = vpack.c.b16 %v3693, %v3689
    %v3922 = vpack.c.b16 %v3694, %v3690
    %v3923 = vpack.c.b16 %v3695, %v3691
    %v3924 = vpack.c.b16 %v3700, %v3696
    %v3925 = vpack.c.b16 %v3701, %v3697
    %v3926 = vpack.c.b16 %v3702, %v3698
    %v3927 = vpack.c.b16 %v3703, %v3699
    %v3928 = vpack.c.b16 %v3708, %v3704
    %v3929 = vpack.c.b16 %v3709, %v3705
    %v3930 = vpack.c.b16 %v3710, %v3706
    %v3931 = vpack.c.b16 %v3711, %v3707
    %v3932 = vpack.c.b16 %v3716, %v3712
    %v3933 = vpack.c.b16 %v3717, %v3713
    %v3934 = vpack.c.b16 %v3718, %v3714
    %v3935 = vpack.c.b16 %v3719, %v3715
    %v3936 = vpack.c.b16 %v3724, %v3720
    %v3937 = vpack.c.b16 %v3725, %v3721
    %v3938 = vpack.c.b16 %v3726, %v3722
    %v3939 = vpack.c.b16 %v3727, %v3723
    %v3940 = vpack.c.b16 %v3732, %v3728
    %v3941 = vpack.c.b16 %v3733, %v3729
    %v3942 = vpack.c.b16 %v3734, %v3730
    %v3943 = vpack.c.b16 %v3735, %v3731
    %v3944 = vpack.c.b16 %v3740, %v3736
    %v3945 = vpack.c.b16 %v3741, %v3737
    %v3946 = vpack.c.b16 %v3742, %v3738
    %v3947 = vpack.c.b16 %v3743, %v3739
    %v3948 = vpack.c.b16 %v3748, %v3744
    %v3949 = vpack.c.b16 %v3749, %v3745
    %v3950 = vpack.c.b16 %v3750, %v3746
    %v3951 = vpack.c.b16 %v3751, %v3747
    %v3952 = vpack.c.b16 %v3756, %v3752
    %v3953 = vpack.c.b16 %v3757, %v3753
    %v3954 = vpack.c.b16 %v3758, %v3754
    %v3955 = vpack.c.b16 %v3759, %v3755
    %v3956 = vpack.c.b16 %v3764, %v3760
    %v3957 = vpack.c.b16 %v3765, %v3761
    %v3958 = vpack.c.b16 %v3766, %v3762
    %v3959 = vpack.c.b16 %v3767, %v3763
    %v3960 = vpack.c.b16 %v3772, %v3768
    %v3961 = vpack.c.b16 %v3773, %v3769
    %v3962 = vpack.c.b16 %v3774, %v3770
    %v3963 = vpack.c.b16 %v3775, %v3771
    %v3964 = vpack.c.b16 %v3780, %v3776
    %v3965 = vpack.c.b16 %v3781, %v3777
    %v3966 = vpack.c.b16 %v3782, %v3778
    %v3967 = vpack.c.b16 %v3783, %v3779
    %v3968 = vpack.c.b16 %v3788, %v3784
    %v3969 = vpack.c.b16 %v3789, %v3785
    %v3970 = vpack.c.b16 %v3790, %v3786
    %v3971 = vpack.c.b16 %v3791, %v3787
    %v3972 = vpack.c.b16 %v3796, %v3792
    %v3973 = vpack.c.b16 %v3797, %v3793
    %v3974 = vpack.c.b16 %v3798, %v3794
    %v3975 = vpack.c.b16 %v3799, %v3795
    %v3976 = vpack.c.b16 %v3804, %v3800
    %v3977 = vpack.c.b16 %v3805, %v3801
    %v3978 = vpack.c.b16 %v3806, %v3802
    %v3979 = vpack.c.b16 %v3807, %v3803
    %v3980 = vpack.c.b16 %v3812, %v3808
    %v3981 = vpack.c.b16 %v3813, %v3809
    %v3982 = vpack.c.b16 %v3814, %v3810
    %v3983 = vpack.c.b16 %v3815, %v3811
    %v3984 = vpack.c.b16 %v3820, %v3816
    %v3985 = vpack.c.b16 %v3821, %v3817
    %v3986 = vpack.c.b16 %v3822, %v3818
    %v3987 = vpack.c.b16 %v3823, %v3819
    %v3988 = vpack.c.b16 %v3828, %v3824
    %v3989 = vpack.c.b16 %v3829, %v3825
    %v3990 = vpack.c.b16 %v3830, %v3826
    %v3991 = vpack.c.b16 %v3831, %v3827
    %v3992 = vpack.c.b16 %v3836, %v3832
    %v3993 = vpack.c.b16 %v3837, %v3833
    %v3994 = vpack.c.b16 %v3838, %v3834
    %v3995 = vpack.c.b16 %v3839, %v3835
    %v3996 = vpack.c.b16 %v3844, %v3840
    %v3997 = vpack.c.b16 %v3845, %v3841
    %v3998 = vpack.c.b16 %v3846, %v3842
    %v3999 = vpack.c.b16 %v3847, %v3843
    %v4000 = vpack.c.b16 %v3852, %v3848
    %v4001 = vpack.c.b16 %v3853, %v3849
    %v4002 = vpack.c.b16 %v3854, %v3850
    %v4003 = vpack.c.b16 %v3855, %v3851
    %v4004 = vpack.c.b16 %v3860, %v3856
    %v4005 = vpack.c.b16 %v3861, %v3857
    %v4006 = vpack.c.b16 %v3862, %v3858
    %v4007 = vpack.c.b16 %v3863, %v3859
    %v4008 = vpack.c.b16 %v3868, %v3864
    %v4009 = vpack.c.b16 %v3869, %v3865
    %v4010 = vpack.c.b16 %v3870, %v3866
    %v4011 = vpack.c.b16 %v3871, %v3867
    %v4012 = vpack.c.b16 %v3876, %v3872
    %v4013 = vpack.c.b16 %v3877, %v3873
    %v4014 = vpack.c.b16 %v3878, %v3874
    %v4015 = vpack.c.b16 %v3879, %v3875
    %v4016 = vpack.c.b16 %v3884, %v3880
    %v4017 = vpack.c.b16 %v3885, %v3881
    %v4018 = vpack.c.b16 %v3886, %v3882
    %v4019 = vpack.c.b16 %v3887, %v3883
    %v4020 = vpack.c.b16 %v3892, %v3888
    %v4021 = vpack.c.b16 %v3893, %v3889
    %v4022 = vpack.c.b16 %v3894, %v3890
    %v4023 = vpack.c.b16 %v3895, %v3891
    %4152 = vmatprep.subr.bf16.mxu0 %v3925
    %4153 = vmatpush1.bf16.msra.mxu0 %v3924
    %4154 = vmatprep.subr.bf16.mxu0 %v3921
    %4155 = vmatpush1.bf16.msra.mxu0 %v3920
    %4156 = vmatprep.subr.bf16.mxu0 %v3917
    %4157 = vmatpush1.bf16.msra.mxu0 %v3916
    %4158 = vmatprep.subr.bf16.mxu0 %v3913
    %4159 = vmatpush1.bf16.msra.mxu0 %v3912
    %4160 = vmatprep.subr.bf16.mxu0 %v3909
    %4161 = vmatpush1.bf16.msra.mxu0 %v3908
    %4162 = vmatprep.subr.bf16.mxu0 %v3905
    %4163 = vmatpush1.bf16.msra.mxu0 %v3904
    %4164 = vmatprep.subr.bf16.mxu0 %v3901
    %4165 = vmatpush1.bf16.msra.mxu0 %v3900
    %4166 = vmatprep.subr.bf16.mxu0 %v3897
    %4167 = vmatpush1.bf16.msra.mxu0 %v3896
    %4168 = vmatprep.subr.bf16.mxu0 %v3957
    %4169 = vmatpush2.bf16.msra.mxu0 %v3956
    %4170 = vmatprep.subr.bf16.mxu0 %v3953
    %4171 = vmatpush2.bf16.msra.mxu0 %v3952
    %4172 = vmatprep.subr.bf16.mxu0 %v3949
    %4173 = vmatpush2.bf16.msra.mxu0 %v3948
    %4174 = vmatprep.subr.bf16.mxu0 %v3945
    %4175 = vmatpush2.bf16.msra.mxu0 %v3944
    %4176 = vmatprep.subr.bf16.mxu0 %v3941
    %4177 = vmatpush2.bf16.msra.mxu0 %v3940
    %4178 = vmatprep.subr.bf16.mxu0 %v3937
    %4179 = vmatpush2.bf16.msra.mxu0 %v3936
    %4180 = vmatprep.subr.bf16.mxu0 %v3933
    %4181 = vmatpush2.bf16.msra.mxu0 %v3932
    %4182 = vmatprep.subr.bf16.mxu0 %v3929
    %4183 = vmatpush2.bf16.msra.mxu0 %v3928
    %4184 = vmatprep.mubr.bf16.mxu0 %v3381
    %4185 = vmatmul.mubr.bf16.gmra.mxu0 %v3380
    %v4186 = vpop.f32.mrf.mxu0
    %v4187 = vadd.f32 0.0, %v4186
    %v4188 = vpop.f32.mrf.mxu0
    %v4189 = vadd.f32 0.0, %v4188
    %v4190 = vpop.f32.mrf.mxu0
    %v4191 = vpop.f32.mrf.mxu0
    %4192 = vdwg.mxu0
    %4193 = vmatprep.subr.bf16.mxu0 %v3989
    %4194 = vmatpush1.bf16.msra.mxu0 %v3988
    %4195 = vmatprep.subr.bf16.mxu0 %v3985
    %4196 = vmatpush1.bf16.msra.mxu0 %v3984
    %4197 = vmatprep.subr.bf16.mxu0 %v3981
    %4198 = vmatpush1.bf16.msra.mxu0 %v3980
    %4199 = vmatprep.subr.bf16.mxu0 %v3977
    %4200 = vmatpush1.bf16.msra.mxu0 %v3976
    %4201 = vmatprep.subr.bf16.mxu0 %v3973
    %4202 = vmatpush1.bf16.msra.mxu0 %v3972
    %4203 = vmatprep.subr.bf16.mxu0 %v3969
    %4204 = vmatpush1.bf16.msra.mxu0 %v3968
    %4205 = vmatprep.subr.bf16.mxu0 %v3965
    %4206 = vmatpush1.bf16.msra.mxu0 %v3964
    %4207 = vmatprep.subr.bf16.mxu0 %v3961
    %4208 = vmatpush1.bf16.msra.mxu0 %v3960
    %4209 = vmatprep.subr.bf16.mxu0 %v4021
    %4210 = vmatpush2.bf16.msra.mxu0 %v4020
    %4211 = vmatprep.subr.bf16.mxu0 %v4017
    %4212 = vmatpush2.bf16.msra.mxu0 %v4016
    %4213 = vmatprep.subr.bf16.mxu0 %v4013
    %4214 = vmatpush2.bf16.msra.mxu0 %v4012
    %4215 = vmatprep.subr.bf16.mxu0 %v4009
    %4216 = vmatpush2.bf16.msra.mxu0 %v4008
    %4217 = vmatprep.subr.bf16.mxu0 %v4005
    %4218 = vmatpush2.bf16.msra.mxu0 %v4004
    %4219 = vmatprep.subr.bf16.mxu0 %v4001
    %4220 = vmatpush2.bf16.msra.mxu0 %v4000
    %4221 = vmatprep.subr.bf16.mxu0 %v3997
    %4222 = vmatpush2.bf16.msra.mxu0 %v3996
    %4223 = vmatprep.subr.bf16.mxu0 %v3993
    %4224 = vmatpush2.bf16.msra.mxu0 %v3992
    %4225 = vmatprep.mubr.bf16.mxu0 %v3383
    %4226 = vmatmul.mubr.bf16.gmra.mxu0 %v3382
    %v4227 = vpop.f32.mrf.mxu0
    %v4228 = vadd.f32 %v4187, %v4227
    %v4229 = vpop.f32.mrf.mxu0
    %v4230 = vadd.f32 %v4189, %v4229
    %v4231 = vpop.f32.mrf.mxu0
    %v4232 = vpop.f32.mrf.mxu0
    %4233 = vdwg.mxu0
    %4234 = vmatprep.subr.bf16.mxu0 %v3927
    %4235 = vmatpush1.bf16.msra.mxu0 %v3926
    %4236 = vmatprep.subr.bf16.mxu0 %v3923
    %4237 = vmatpush1.bf16.msra.mxu0 %v3922
    %4238 = vmatprep.subr.bf16.mxu0 %v3919
    %4239 = vmatpush1.bf16.msra.mxu0 %v3918
    %4240 = vmatprep.subr.bf16.mxu0 %v3915
    %4241 = vmatpush1.bf16.msra.mxu0 %v3914
    %4242 = vmatprep.subr.bf16.mxu0 %v3911
    %4243 = vmatpush1.bf16.msra.mxu0 %v3910
    %4244 = vmatprep.subr.bf16.mxu0 %v3907
    %4245 = vmatpush1.bf16.msra.mxu0 %v3906
    %4246 = vmatprep.subr.bf16.mxu0 %v3903
    %4247 = vmatpush1.bf16.msra.mxu0 %v3902
    %4248 = vmatprep.subr.bf16.mxu0 %v3899
    %4249 = vmatpush1.bf16.msra.mxu0 %v3898
    %4250 = vmatprep.subr.bf16.mxu0 %v3959
    %4251 = vmatpush2.bf16.msra.mxu0 %v3958
    %4252 = vmatprep.subr.bf16.mxu0 %v3955
    %4253 = vmatpush2.bf16.msra.mxu0 %v3954
    %4254 = vmatprep.subr.bf16.mxu0 %v3951
    %4255 = vmatpush2.bf16.msra.mxu0 %v3950
    %4256 = vmatprep.subr.bf16.mxu0 %v3947
    %4257 = vmatpush2.bf16.msra.mxu0 %v3946
    %4258 = vmatprep.subr.bf16.mxu0 %v3943
    %4259 = vmatpush2.bf16.msra.mxu0 %v3942
    %4260 = vmatprep.subr.bf16.mxu0 %v3939
    %4261 = vmatpush2.bf16.msra.mxu0 %v3938
    %4262 = vmatprep.subr.bf16.mxu0 %v3935
    %4263 = vmatpush2.bf16.msra.mxu0 %v3934
    %4264 = vmatprep.subr.bf16.mxu0 %v3931
    %4265 = vmatpush2.bf16.msra.mxu0 %v3930
    %4266 = vmatprep.mubr.bf16.mxu0 %v3381
    %4267 = vmatmul.mubr.bf16.gmra.mxu0 %v3380
    %v4268 = vpop.f32.mrf.mxu0
    %v4269 = vadd.f32 0.0, %v4268
    %v4270 = vpop.f32.mrf.mxu0
    %v4271 = vadd.f32 0.0, %v4270
    %v4272 = vpop.f32.mrf.mxu0
    %v4273 = vpop.f32.mrf.mxu0
    %4274 = vdwg.mxu0
    %4275 = vmatprep.subr.bf16.mxu0 %v3991
    %4276 = vmatpush1.bf16.msra.mxu0 %v3990
    %4277 = vmatprep.subr.bf16.mxu0 %v3987
    %4278 = vmatpush1.bf16.msra.mxu0 %v3986
    %4279 = vmatprep.subr.bf16.mxu0 %v3983
    %4280 = vmatpush1.bf16.msra.mxu0 %v3982
    %4281 = vmatprep.subr.bf16.mxu0 %v3979
    %4282 = vmatpush1.bf16.msra.mxu0 %v3978
    %4283 = vmatprep.subr.bf16.mxu0 %v3975
    %4284 = vmatpush1.bf16.msra.mxu0 %v3974
    %4285 = vmatprep.subr.bf16.mxu0 %v3971
    %4286 = vmatpush1.bf16.msra.mxu0 %v3970
    %4287 = vmatprep.subr.bf16.mxu0 %v3967
    %4288 = vmatpush1.bf16.msra.mxu0 %v3966
    %4289 = vmatprep.subr.bf16.mxu0 %v3963
    %4290 = vmatpush1.bf16.msra.mxu0 %v3962
    %4291 = vmatprep.subr.bf16.mxu0 %v4023
    %4292 = vmatpush2.bf16.msra.mxu0 %v4022
    %4293 = vmatprep.subr.bf16.mxu0 %v4019
    %4294 = vmatpush2.bf16.msra.mxu0 %v4018
    %4295 = vmatprep.subr.bf16.mxu0 %v4015
    %4296 = vmatpush2.bf16.msra.mxu0 %v4014
    %4297 = vmatprep.subr.bf16.mxu0 %v4011
    %4298 = vmatpush2.bf16.msra.mxu0 %v4010
    %4299 = vmatprep.subr.bf16.mxu0 %v4007
    %4300 = vmatpush2.bf16.msra.mxu0 %v4006
    %4301 = vmatprep.subr.bf16.mxu0 %v4003
    %4302 = vmatpush2.bf16.msra.mxu0 %v4002
    %4303 = vmatprep.subr.bf16.mxu0 %v3999
    %4304 = vmatpush2.bf16.msra.mxu0 %v3998
    %4305 = vmatprep.subr.bf16.mxu0 %v3995
    %4306 = vmatpush2.bf16.msra.mxu0 %v3994
    %4307 = vmatprep.mubr.bf16.mxu0 %v3383
    %4308 = vmatmul.mubr.bf16.gmra.mxu0 %v3382
    %v4309 = vpop.f32.mrf.mxu0
    %v4310 = vadd.f32 %v4269, %v4309
    %v4311 = vpop.f32.mrf.mxu0
    %v4312 = vadd.f32 %v4271, %v4311
    %v4313 = vpop.f32.mrf.mxu0
    %v4314 = vpop.f32.mrf.mxu0
    %4315 = vdwg.mxu0
    %v4316 = vadd.f32 %v3292, %v4228
    %v4317 = vadd.f32 %v3294, %v4230
    %v4318 = vadd.f32 %v3374, %v4310
    %v4319 = vadd.f32 %v3376, %v4312
    %v4320 = vpack.c.bf16 %v1484, %v1484
    %v4321 = vpack.c.bf16 %v1485, %v1485
    %v4322 = vpack.c.bf16 %v1486, %v1486
    %v4323 = vpack.c.bf16 %v1487, %v1487
    %v4324 = vld [vmem:[#allocation9 + $0xc00] sm:$0xff]
    %v4325 = vld [vmem:[#allocation9 + $0xc08] sm:$0xff]
    %v4326 = vld [vmem:[#allocation9 + $0xc10] sm:$0xff]
    %v4327 = vld [vmem:[#allocation9 + $0xc18] sm:$0xff]
    %v4328 = vld [vmem:[#allocation9 + $0xc20] sm:$0xff]
    %v4329 = vld [vmem:[#allocation9 + $0xc28] sm:$0xff]
    %v4330 = vld [vmem:[#allocation9 + $0xc30] sm:$0xff]
    %v4331 = vld [vmem:[#allocation9 + $0xc38] sm:$0xff]
    %v4332 = vld [vmem:[#allocation9 + $0xc40] sm:$0xff]
    %v4333 = vld [vmem:[#allocation9 + $0xc48] sm:$0xff]
    %v4334 = vld [vmem:[#allocation9 + $0xc50] sm:$0xff]
    %v4335 = vld [vmem:[#allocation9 + $0xc58] sm:$0xff]
    %v4336 = vld [vmem:[#allocation9 + $0xc60] sm:$0xff]
    %v4337 = vld [vmem:[#allocation9 + $0xc68] sm:$0xff]
    %v4338 = vld [vmem:[#allocation9 + $0xc70] sm:$0xff]
    %v4339 = vld [vmem:[#allocation9 + $0xc78] sm:$0xff]
    %v4340 = vld [vmem:[#allocation9 + $0xc80] sm:$0xff]
    %v4341 = vld [vmem:[#allocation9 + $0xc88] sm:$0xff]
    %v4342 = vld [vmem:[#allocation9 + $0xc90] sm:$0xff]
    %v4343 = vld [vmem:[#allocation9 + $0xc98] sm:$0xff]
    %v4344 = vld [vmem:[#allocation9 + $0xca0] sm:$0xff]
    %v4345 = vld [vmem:[#allocation9 + $0xca8] sm:$0xff]
    %v4346 = vld [vmem:[#allocation9 + $0xcb0] sm:$0xff]
    %v4347 = vld [vmem:[#allocation9 + $0xcb8] sm:$0xff]
    %v4348 = vld [vmem:[#allocation9 + $0xcc0] sm:$0xff]
    %v4349 = vld [vmem:[#allocation9 + $0xcc8] sm:$0xff]
    %v4350 = vld [vmem:[#allocation9 + $0xcd0] sm:$0xff]
    %v4351 = vld [vmem:[#allocation9 + $0xcd8] sm:$0xff]
    %v4352 = vld [vmem:[#allocation9 + $0xce0] sm:$0xff]
    %v4353 = vld [vmem:[#allocation9 + $0xce8] sm:$0xff]
    %v4354 = vld [vmem:[#allocation9 + $0xcf0] sm:$0xff]
    %v4355 = vld [vmem:[#allocation9 + $0xcf8] sm:$0xff]
    %v4356 = vld [vmem:[#allocation9 + $0xd00] sm:$0xff]
    %v4357 = vld [vmem:[#allocation9 + $0xd08] sm:$0xff]
    %v4358 = vld [vmem:[#allocation9 + $0xd10] sm:$0xff]
    %v4359 = vld [vmem:[#allocation9 + $0xd18] sm:$0xff]
    %v4360 = vld [vmem:[#allocation9 + $0xd20] sm:$0xff]
    %v4361 = vld [vmem:[#allocation9 + $0xd28] sm:$0xff]
    %v4362 = vld [vmem:[#allocation9 + $0xd30] sm:$0xff]
    %v4363 = vld [vmem:[#allocation9 + $0xd38] sm:$0xff]
    %v4364 = vld [vmem:[#allocation9 + $0xd40] sm:$0xff]
    %v4365 = vld [vmem:[#allocation9 + $0xd48] sm:$0xff]
    %v4366 = vld [vmem:[#allocation9 + $0xd50] sm:$0xff]
    %v4367 = vld [vmem:[#allocation9 + $0xd58] sm:$0xff]
    %v4368 = vld [vmem:[#allocation9 + $0xd60] sm:$0xff]
    %v4369 = vld [vmem:[#allocation9 + $0xd68] sm:$0xff]
    %v4370 = vld [vmem:[#allocation9 + $0xd70] sm:$0xff]
    %v4371 = vld [vmem:[#allocation9 + $0xd78] sm:$0xff]
    %v4372 = vld [vmem:[#allocation9 + $0xd80] sm:$0xff]
    %v4373 = vld [vmem:[#allocation9 + $0xd88] sm:$0xff]
    %v4374 = vld [vmem:[#allocation9 + $0xd90] sm:$0xff]
    %v4375 = vld [vmem:[#allocation9 + $0xd98] sm:$0xff]
    %v4376 = vld [vmem:[#allocation9 + $0xda0] sm:$0xff]
    %v4377 = vld [vmem:[#allocation9 + $0xda8] sm:$0xff]
    %v4378 = vld [vmem:[#allocation9 + $0xdb0] sm:$0xff]
    %v4379 = vld [vmem:[#allocation9 + $0xdb8] sm:$0xff]
    %v4380 = vld [vmem:[#allocation9 + $0xdc0] sm:$0xff]
    %v4381 = vld [vmem:[#allocation9 + $0xdc8] sm:$0xff]
    %v4382 = vld [vmem:[#allocation9 + $0xdd0] sm:$0xff]
    %v4383 = vld [vmem:[#allocation9 + $0xdd8] sm:$0xff]
    %v4384 = vld [vmem:[#allocation9 + $0xde0] sm:$0xff]
    %v4385 = vld [vmem:[#allocation9 + $0xde8] sm:$0xff]
    %v4386 = vld [vmem:[#allocation9 + $0xdf0] sm:$0xff]
    %v4387 = vld [vmem:[#allocation9 + $0xdf8] sm:$0xff]
    %v4388 = vld [vmem:[#allocation9 + $0xe00] sm:$0xff]
    %v4389 = vld [vmem:[#allocation9 + $0xe08] sm:$0xff]
    %v4390 = vld [vmem:[#allocation9 + $0xe10] sm:$0xff]
    %v4391 = vld [vmem:[#allocation9 + $0xe18] sm:$0xff]
    %v4392 = vld [vmem:[#allocation9 + $0xe20] sm:$0xff]
    %v4393 = vld [vmem:[#allocation9 + $0xe28] sm:$0xff]
    %v4394 = vld [vmem:[#allocation9 + $0xe30] sm:$0xff]
    %v4395 = vld [vmem:[#allocation9 + $0xe38] sm:$0xff]
    %v4396 = vld [vmem:[#allocation9 + $0xe40] sm:$0xff]
    %v4397 = vld [vmem:[#allocation9 + $0xe48] sm:$0xff]
    %v4398 = vld [vmem:[#allocation9 + $0xe50] sm:$0xff]
    %v4399 = vld [vmem:[#allocation9 + $0xe58] sm:$0xff]
    %v4400 = vld [vmem:[#allocation9 + $0xe60] sm:$0xff]
    %v4401 = vld [vmem:[#allocation9 + $0xe68] sm:$0xff]
    %v4402 = vld [vmem:[#allocation9 + $0xe70] sm:$0xff]
    %v4403 = vld [vmem:[#allocation9 + $0xe78] sm:$0xff]
    %v4404 = vld [vmem:[#allocation9 + $0xe80] sm:$0xff]
    %v4405 = vld [vmem:[#allocation9 + $0xe88] sm:$0xff]
    %v4406 = vld [vmem:[#allocation9 + $0xe90] sm:$0xff]
    %v4407 = vld [vmem:[#allocation9 + $0xe98] sm:$0xff]
    %v4408 = vld [vmem:[#allocation9 + $0xea0] sm:$0xff]
    %v4409 = vld [vmem:[#allocation9 + $0xea8] sm:$0xff]
    %v4410 = vld [vmem:[#allocation9 + $0xeb0] sm:$0xff]
    %v4411 = vld [vmem:[#allocation9 + $0xeb8] sm:$0xff]
    %v4412 = vld [vmem:[#allocation9 + $0xec0] sm:$0xff]
    %v4413 = vld [vmem:[#allocation9 + $0xec8] sm:$0xff]
    %v4414 = vld [vmem:[#allocation9 + $0xed0] sm:$0xff]
    %v4415 = vld [vmem:[#allocation9 + $0xed8] sm:$0xff]
    %v4416 = vld [vmem:[#allocation9 + $0xee0] sm:$0xff]
    %v4417 = vld [vmem:[#allocation9 + $0xee8] sm:$0xff]
    %v4418 = vld [vmem:[#allocation9 + $0xef0] sm:$0xff]
    %v4419 = vld [vmem:[#allocation9 + $0xef8] sm:$0xff]
    %v4420 = vld [vmem:[#allocation9 + $0xf00] sm:$0xff]
    %v4421 = vld [vmem:[#allocation9 + $0xf08] sm:$0xff]
    %v4422 = vld [vmem:[#allocation9 + $0xf10] sm:$0xff]
    %v4423 = vld [vmem:[#allocation9 + $0xf18] sm:$0xff]
    %v4424 = vld [vmem:[#allocation9 + $0xf20] sm:$0xff]
    %v4425 = vld [vmem:[#allocation9 + $0xf28] sm:$0xff]
    %v4426 = vld [vmem:[#allocation9 + $0xf30] sm:$0xff]
    %v4427 = vld [vmem:[#allocation9 + $0xf38] sm:$0xff]
    %v4428 = vld [vmem:[#allocation9 + $0xf40] sm:$0xff]
    %v4429 = vld [vmem:[#allocation9 + $0xf48] sm:$0xff]
    %v4430 = vld [vmem:[#allocation9 + $0xf50] sm:$0xff]
    %v4431 = vld [vmem:[#allocation9 + $0xf58] sm:$0xff]
    %v4432 = vld [vmem:[#allocation9 + $0xf60] sm:$0xff]
    %v4433 = vld [vmem:[#allocation9 + $0xf68] sm:$0xff]
    %v4434 = vld [vmem:[#allocation9 + $0xf70] sm:$0xff]
    %v4435 = vld [vmem:[#allocation9 + $0xf78] sm:$0xff]
    %v4436 = vld [vmem:[#allocation9 + $0xf80] sm:$0xff]
    %v4437 = vld [vmem:[#allocation9 + $0xf88] sm:$0xff]
    %v4438 = vld [vmem:[#allocation9 + $0xf90] sm:$0xff]
    %v4439 = vld [vmem:[#allocation9 + $0xf98] sm:$0xff]
    %v4440 = vld [vmem:[#allocation9 + $0xfa0] sm:$0xff]
    %v4441 = vld [vmem:[#allocation9 + $0xfa8] sm:$0xff]
    %v4442 = vld [vmem:[#allocation9 + $0xfb0] sm:$0xff]
    %v4443 = vld [vmem:[#allocation9 + $0xfb8] sm:$0xff]
    %v4444 = vld [vmem:[#allocation9 + $0xfc0] sm:$0xff]
    %v4445 = vld [vmem:[#allocation9 + $0xfc8] sm:$0xff]
    %v4446 = vld [vmem:[#allocation9 + $0xfd0] sm:$0xff]
    %v4447 = vld [vmem:[#allocation9 + $0xfd8] sm:$0xff]
    %v4448 = vld [vmem:[#allocation9 + $0xfe0] sm:$0xff]
    %v4449 = vld [vmem:[#allocation9 + $0xfe8] sm:$0xff]
    %v4450 = vld [vmem:[#allocation9 + $0xff0] sm:$0xff]
    %v4451 = vld [vmem:[#allocation9 + $0xff8] sm:$0xff]
    %v4580 = vunpack.c.l.b16 %v4324
    %v4581 = vunpack.c.h.b16 %v4324
    %v4582 = vunpack.c.l.b16 %v4325
    %v4583 = vunpack.c.h.b16 %v4325
    %v4584 = vunpack.c.l.b16 %v4326
    %v4585 = vunpack.c.h.b16 %v4326
    %v4586 = vunpack.c.l.b16 %v4327
    %v4587 = vunpack.c.h.b16 %v4327
    %v4588 = vunpack.c.l.b16 %v4328
    %v4589 = vunpack.c.h.b16 %v4328
    %v4590 = vunpack.c.l.b16 %v4329
    %v4591 = vunpack.c.h.b16 %v4329
    %v4592 = vunpack.c.l.b16 %v4330
    %v4593 = vunpack.c.h.b16 %v4330
    %v4594 = vunpack.c.l.b16 %v4331
    %v4595 = vunpack.c.h.b16 %v4331
    %v4596 = vunpack.c.l.b16 %v4332
    %v4597 = vunpack.c.h.b16 %v4332
    %v4598 = vunpack.c.l.b16 %v4333
    %v4599 = vunpack.c.h.b16 %v4333
    %v4600 = vunpack.c.l.b16 %v4334
    %v4601 = vunpack.c.h.b16 %v4334
    %v4602 = vunpack.c.l.b16 %v4335
    %v4603 = vunpack.c.h.b16 %v4335
    %v4604 = vunpack.c.l.b16 %v4336
    %v4605 = vunpack.c.h.b16 %v4336
    %v4606 = vunpack.c.l.b16 %v4337
    %v4607 = vunpack.c.h.b16 %v4337
    %v4608 = vunpack.c.l.b16 %v4338
    %v4609 = vunpack.c.h.b16 %v4338
    %v4610 = vunpack.c.l.b16 %v4339
    %v4611 = vunpack.c.h.b16 %v4339
    %v4612 = vunpack.c.l.b16 %v4340
    %v4613 = vunpack.c.h.b16 %v4340
    %v4614 = vunpack.c.l.b16 %v4341
    %v4615 = vunpack.c.h.b16 %v4341
    %v4616 = vunpack.c.l.b16 %v4342
    %v4617 = vunpack.c.h.b16 %v4342
    %v4618 = vunpack.c.l.b16 %v4343
    %v4619 = vunpack.c.h.b16 %v4343
    %v4620 = vunpack.c.l.b16 %v4344
    %v4621 = vunpack.c.h.b16 %v4344
    %v4622 = vunpack.c.l.b16 %v4345
    %v4623 = vunpack.c.h.b16 %v4345
    %v4624 = vunpack.c.l.b16 %v4346
    %v4625 = vunpack.c.h.b16 %v4346
    %v4626 = vunpack.c.l.b16 %v4347
    %v4627 = vunpack.c.h.b16 %v4347
    %v4628 = vunpack.c.l.b16 %v4348
    %v4629 = vunpack.c.h.b16 %v4348
    %v4630 = vunpack.c.l.b16 %v4349
    %v4631 = vunpack.c.h.b16 %v4349
    %v4632 = vunpack.c.l.b16 %v4350
    %v4633 = vunpack.c.h.b16 %v4350
    %v4634 = vunpack.c.l.b16 %v4351
    %v4635 = vunpack.c.h.b16 %v4351
    %v4636 = vunpack.c.l.b16 %v4352
    %v4637 = vunpack.c.h.b16 %v4352
    %v4638 = vunpack.c.l.b16 %v4353
    %v4639 = vunpack.c.h.b16 %v4353
    %v4640 = vunpack.c.l.b16 %v4354
    %v4641 = vunpack.c.h.b16 %v4354
    %v4642 = vunpack.c.l.b16 %v4355
    %v4643 = vunpack.c.h.b16 %v4355
    %v4644 = vunpack.c.l.b16 %v4356
    %v4645 = vunpack.c.h.b16 %v4356
    %v4646 = vunpack.c.l.b16 %v4357
    %v4647 = vunpack.c.h.b16 %v4357
    %v4648 = vunpack.c.l.b16 %v4358
    %v4649 = vunpack.c.h.b16 %v4358
    %v4650 = vunpack.c.l.b16 %v4359
    %v4651 = vunpack.c.h.b16 %v4359
    %v4652 = vunpack.c.l.b16 %v4360
    %v4653 = vunpack.c.h.b16 %v4360
    %v4654 = vunpack.c.l.b16 %v4361
    %v4655 = vunpack.c.h.b16 %v4361
    %v4656 = vunpack.c.l.b16 %v4362
    %v4657 = vunpack.c.h.b16 %v4362
    %v4658 = vunpack.c.l.b16 %v4363
    %v4659 = vunpack.c.h.b16 %v4363
    %v4660 = vunpack.c.l.b16 %v4364
    %v4661 = vunpack.c.h.b16 %v4364
    %v4662 = vunpack.c.l.b16 %v4365
    %v4663 = vunpack.c.h.b16 %v4365
    %v4664 = vunpack.c.l.b16 %v4366
    %v4665 = vunpack.c.h.b16 %v4366
    %v4666 = vunpack.c.l.b16 %v4367
    %v4667 = vunpack.c.h.b16 %v4367
    %v4668 = vunpack.c.l.b16 %v4368
    %v4669 = vunpack.c.h.b16 %v4368
    %v4670 = vunpack.c.l.b16 %v4369
    %v4671 = vunpack.c.h.b16 %v4369
    %v4672 = vunpack.c.l.b16 %v4370
    %v4673 = vunpack.c.h.b16 %v4370
    %v4674 = vunpack.c.l.b16 %v4371
    %v4675 = vunpack.c.h.b16 %v4371
    %v4676 = vunpack.c.l.b16 %v4372
    %v4677 = vunpack.c.h.b16 %v4372
    %v4678 = vunpack.c.l.b16 %v4373
    %v4679 = vunpack.c.h.b16 %v4373
    %v4680 = vunpack.c.l.b16 %v4374
    %v4681 = vunpack.c.h.b16 %v4374
    %v4682 = vunpack.c.l.b16 %v4375
    %v4683 = vunpack.c.h.b16 %v4375
    %v4684 = vunpack.c.l.b16 %v4376
    %v4685 = vunpack.c.h.b16 %v4376
    %v4686 = vunpack.c.l.b16 %v4377
    %v4687 = vunpack.c.h.b16 %v4377
    %v4688 = vunpack.c.l.b16 %v4378
    %v4689 = vunpack.c.h.b16 %v4378
    %v4690 = vunpack.c.l.b16 %v4379
    %v4691 = vunpack.c.h.b16 %v4379
    %v4692 = vunpack.c.l.b16 %v4380
    %v4693 = vunpack.c.h.b16 %v4380
    %v4694 = vunpack.c.l.b16 %v4381
    %v4695 = vunpack.c.h.b16 %v4381
    %v4696 = vunpack.c.l.b16 %v4382
    %v4697 = vunpack.c.h.b16 %v4382
    %v4698 = vunpack.c.l.b16 %v4383
    %v4699 = vunpack.c.h.b16 %v4383
    %v4700 = vunpack.c.l.b16 %v4384
    %v4701 = vunpack.c.h.b16 %v4384
    %v4702 = vunpack.c.l.b16 %v4385
    %v4703 = vunpack.c.h.b16 %v4385
    %v4704 = vunpack.c.l.b16 %v4386
    %v4705 = vunpack.c.h.b16 %v4386
    %v4706 = vunpack.c.l.b16 %v4387
    %v4707 = vunpack.c.h.b16 %v4387
    %v4708 = vunpack.c.l.b16 %v4388
    %v4709 = vunpack.c.h.b16 %v4388
    %v4710 = vunpack.c.l.b16 %v4389
    %v4711 = vunpack.c.h.b16 %v4389
    %v4712 = vunpack.c.l.b16 %v4390
    %v4713 = vunpack.c.h.b16 %v4390
    %v4714 = vunpack.c.l.b16 %v4391
    %v4715 = vunpack.c.h.b16 %v4391
    %v4716 = vunpack.c.l.b16 %v4392
    %v4717 = vunpack.c.h.b16 %v4392
    %v4718 = vunpack.c.l.b16 %v4393
    %v4719 = vunpack.c.h.b16 %v4393
    %v4720 = vunpack.c.l.b16 %v4394
    %v4721 = vunpack.c.h.b16 %v4394
    %v4722 = vunpack.c.l.b16 %v4395
    %v4723 = vunpack.c.h.b16 %v4395
    %v4724 = vunpack.c.l.b16 %v4396
    %v4725 = vunpack.c.h.b16 %v4396
    %v4726 = vunpack.c.l.b16 %v4397
    %v4727 = vunpack.c.h.b16 %v4397
    %v4728 = vunpack.c.l.b16 %v4398
    %v4729 = vunpack.c.h.b16 %v4398
    %v4730 = vunpack.c.l.b16 %v4399
    %v4731 = vunpack.c.h.b16 %v4399
    %v4732 = vunpack.c.l.b16 %v4400
    %v4733 = vunpack.c.h.b16 %v4400
    %v4734 = vunpack.c.l.b16 %v4401
    %v4735 = vunpack.c.h.b16 %v4401
    %v4736 = vunpack.c.l.b16 %v4402
    %v4737 = vunpack.c.h.b16 %v4402
    %v4738 = vunpack.c.l.b16 %v4403
    %v4739 = vunpack.c.h.b16 %v4403
    %v4740 = vunpack.c.l.b16 %v4404
    %v4741 = vunpack.c.h.b16 %v4404
    %v4742 = vunpack.c.l.b16 %v4405
    %v4743 = vunpack.c.h.b16 %v4405
    %v4744 = vunpack.c.l.b16 %v4406
    %v4745 = vunpack.c.h.b16 %v4406
    %v4746 = vunpack.c.l.b16 %v4407
    %v4747 = vunpack.c.h.b16 %v4407
    %v4748 = vunpack.c.l.b16 %v4408
    %v4749 = vunpack.c.h.b16 %v4408
    %v4750 = vunpack.c.l.b16 %v4409
    %v4751 = vunpack.c.h.b16 %v4409
    %v4752 = vunpack.c.l.b16 %v4410
    %v4753 = vunpack.c.h.b16 %v4410
    %v4754 = vunpack.c.l.b16 %v4411
    %v4755 = vunpack.c.h.b16 %v4411
    %v4756 = vunpack.c.l.b16 %v4412
    %v4757 = vunpack.c.h.b16 %v4412
    %v4758 = vunpack.c.l.b16 %v4413
    %v4759 = vunpack.c.h.b16 %v4413
    %v4760 = vunpack.c.l.b16 %v4414
    %v4761 = vunpack.c.h.b16 %v4414
    %v4762 = vunpack.c.l.b16 %v4415
    %v4763 = vunpack.c.h.b16 %v4415
    %v4764 = vunpack.c.l.b16 %v4416
    %v4765 = vunpack.c.h.b16 %v4416
    %v4766 = vunpack.c.l.b16 %v4417
    %v4767 = vunpack.c.h.b16 %v4417
    %v4768 = vunpack.c.l.b16 %v4418
    %v4769 = vunpack.c.h.b16 %v4418
    %v4770 = vunpack.c.l.b16 %v4419
    %v4771 = vunpack.c.h.b16 %v4419
    %v4772 = vunpack.c.l.b16 %v4420
    %v4773 = vunpack.c.h.b16 %v4420
    %v4774 = vunpack.c.l.b16 %v4421
    %v4775 = vunpack.c.h.b16 %v4421
    %v4776 = vunpack.c.l.b16 %v4422
    %v4777 = vunpack.c.h.b16 %v4422
    %v4778 = vunpack.c.l.b16 %v4423
    %v4779 = vunpack.c.h.b16 %v4423
    %v4780 = vunpack.c.l.b16 %v4424
    %v4781 = vunpack.c.h.b16 %v4424
    %v4782 = vunpack.c.l.b16 %v4425
    %v4783 = vunpack.c.h.b16 %v4425
    %v4784 = vunpack.c.l.b16 %v4426
    %v4785 = vunpack.c.h.b16 %v4426
    %v4786 = vunpack.c.l.b16 %v4427
    %v4787 = vunpack.c.h.b16 %v4427
    %v4788 = vunpack.c.l.b16 %v4428
    %v4789 = vunpack.c.h.b16 %v4428
    %v4790 = vunpack.c.l.b16 %v4429
    %v4791 = vunpack.c.h.b16 %v4429
    %v4792 = vunpack.c.l.b16 %v4430
    %v4793 = vunpack.c.h.b16 %v4430
    %v4794 = vunpack.c.l.b16 %v4431
    %v4795 = vunpack.c.h.b16 %v4431
    %v4796 = vunpack.c.l.b16 %v4432
    %v4797 = vunpack.c.h.b16 %v4432
    %v4798 = vunpack.c.l.b16 %v4433
    %v4799 = vunpack.c.h.b16 %v4433
    %v4800 = vunpack.c.l.b16 %v4434
    %v4801 = vunpack.c.h.b16 %v4434
    %v4802 = vunpack.c.l.b16 %v4435
    %v4803 = vunpack.c.h.b16 %v4435
    %v4804 = vunpack.c.l.b16 %v4436
    %v4805 = vunpack.c.h.b16 %v4436
    %v4806 = vunpack.c.l.b16 %v4437
    %v4807 = vunpack.c.h.b16 %v4437
    %v4808 = vunpack.c.l.b16 %v4438
    %v4809 = vunpack.c.h.b16 %v4438
    %v4810 = vunpack.c.l.b16 %v4439
    %v4811 = vunpack.c.h.b16 %v4439
    %v4812 = vunpack.c.l.b16 %v4440
    %v4813 = vunpack.c.h.b16 %v4440
    %v4814 = vunpack.c.l.b16 %v4441
    %v4815 = vunpack.c.h.b16 %v4441
    %v4816 = vunpack.c.l.b16 %v4442
    %v4817 = vunpack.c.h.b16 %v4442
    %v4818 = vunpack.c.l.b16 %v4443
    %v4819 = vunpack.c.h.b16 %v4443
    %v4820 = vunpack.c.l.b16 %v4444
    %v4821 = vunpack.c.h.b16 %v4444
    %v4822 = vunpack.c.l.b16 %v4445
    %v4823 = vunpack.c.h.b16 %v4445
    %v4824 = vunpack.c.l.b16 %v4446
    %v4825 = vunpack.c.h.b16 %v4446
    %v4826 = vunpack.c.l.b16 %v4447
    %v4827 = vunpack.c.h.b16 %v4447
    %v4828 = vunpack.c.l.b16 %v4448
    %v4829 = vunpack.c.h.b16 %v4448
    %v4830 = vunpack.c.l.b16 %v4449
    %v4831 = vunpack.c.h.b16 %v4449
    %v4832 = vunpack.c.l.b16 %v4450
    %v4833 = vunpack.c.h.b16 %v4450
    %v4834 = vunpack.c.l.b16 %v4451
    %v4835 = vunpack.c.h.b16 %v4451
    %v4836 = vpack.c.b16 %v4584, %v4580
    %v4837 = vpack.c.b16 %v4585, %v4581
    %v4838 = vpack.c.b16 %v4586, %v4582
    %v4839 = vpack.c.b16 %v4587, %v4583
    %v4840 = vpack.c.b16 %v4592, %v4588
    %v4841 = vpack.c.b16 %v4593, %v4589
    %v4842 = vpack.c.b16 %v4594, %v4590
    %v4843 = vpack.c.b16 %v4595, %v4591
    %v4844 = vpack.c.b16 %v4600, %v4596
    %v4845 = vpack.c.b16 %v4601, %v4597
    %v4846 = vpack.c.b16 %v4602, %v4598
    %v4847 = vpack.c.b16 %v4603, %v4599
    %v4848 = vpack.c.b16 %v4608, %v4604
    %v4849 = vpack.c.b16 %v4609, %v4605
    %v4850 = vpack.c.b16 %v4610, %v4606
    %v4851 = vpack.c.b16 %v4611, %v4607
    %v4852 = vpack.c.b16 %v4616, %v4612
    %v4853 = vpack.c.b16 %v4617, %v4613
    %v4854 = vpack.c.b16 %v4618, %v4614
    %v4855 = vpack.c.b16 %v4619, %v4615
    %v4856 = vpack.c.b16 %v4624, %v4620
    %v4857 = vpack.c.b16 %v4625, %v4621
    %v4858 = vpack.c.b16 %v4626, %v4622
    %v4859 = vpack.c.b16 %v4627, %v4623
    %v4860 = vpack.c.b16 %v4632, %v4628
    %v4861 = vpack.c.b16 %v4633, %v4629
    %v4862 = vpack.c.b16 %v4634, %v4630
    %v4863 = vpack.c.b16 %v4635, %v4631
    %v4864 = vpack.c.b16 %v4640, %v4636
    %v4865 = vpack.c.b16 %v4641, %v4637
    %v4866 = vpack.c.b16 %v4642, %v4638
    %v4867 = vpack.c.b16 %v4643, %v4639
    %v4868 = vpack.c.b16 %v4648, %v4644
    %v4869 = vpack.c.b16 %v4649, %v4645
    %v4870 = vpack.c.b16 %v4650, %v4646
    %v4871 = vpack.c.b16 %v4651, %v4647
    %v4872 = vpack.c.b16 %v4656, %v4652
    %v4873 = vpack.c.b16 %v4657, %v4653
    %v4874 = vpack.c.b16 %v4658, %v4654
    %v4875 = vpack.c.b16 %v4659, %v4655
    %v4876 = vpack.c.b16 %v4664, %v4660
    %v4877 = vpack.c.b16 %v4665, %v4661
    %v4878 = vpack.c.b16 %v4666, %v4662
    %v4879 = vpack.c.b16 %v4667, %v4663
    %v4880 = vpack.c.b16 %v4672, %v4668
    %v4881 = vpack.c.b16 %v4673, %v4669
    %v4882 = vpack.c.b16 %v4674, %v4670
    %v4883 = vpack.c.b16 %v4675, %v4671
    %v4884 = vpack.c.b16 %v4680, %v4676
    %v4885 = vpack.c.b16 %v4681, %v4677
    %v4886 = vpack.c.b16 %v4682, %v4678
    %v4887 = vpack.c.b16 %v4683, %v4679
    %v4888 = vpack.c.b16 %v4688, %v4684
    %v4889 = vpack.c.b16 %v4689, %v4685
    %v4890 = vpack.c.b16 %v4690, %v4686
    %v4891 = vpack.c.b16 %v4691, %v4687
    %v4892 = vpack.c.b16 %v4696, %v4692
    %v4893 = vpack.c.b16 %v4697, %v4693
    %v4894 = vpack.c.b16 %v4698, %v4694
    %v4895 = vpack.c.b16 %v4699, %v4695
    %v4896 = vpack.c.b16 %v4704, %v4700
    %v4897 = vpack.c.b16 %v4705, %v4701
    %v4898 = vpack.c.b16 %v4706, %v4702
    %v4899 = vpack.c.b16 %v4707, %v4703
    %v4900 = vpack.c.b16 %v4712, %v4708
    %v4901 = vpack.c.b16 %v4713, %v4709
    %v4902 = vpack.c.b16 %v4714, %v4710
    %v4903 = vpack.c.b16 %v4715, %v4711
    %v4904 = vpack.c.b16 %v4720, %v4716
    %v4905 = vpack.c.b16 %v4721, %v4717
    %v4906 = vpack.c.b16 %v4722, %v4718
    %v4907 = vpack.c.b16 %v4723, %v4719
    %v4908 = vpack.c.b16 %v4728, %v4724
    %v4909 = vpack.c.b16 %v4729, %v4725
    %v4910 = vpack.c.b16 %v4730, %v4726
    %v4911 = vpack.c.b16 %v4731, %v4727
    %v4912 = vpack.c.b16 %v4736, %v4732
    %v4913 = vpack.c.b16 %v4737, %v4733
    %v4914 = vpack.c.b16 %v4738, %v4734
    %v4915 = vpack.c.b16 %v4739, %v4735
    %v4916 = vpack.c.b16 %v4744, %v4740
    %v4917 = vpack.c.b16 %v4745, %v4741
    %v4918 = vpack.c.b16 %v4746, %v4742
    %v4919 = vpack.c.b16 %v4747, %v4743
    %v4920 = vpack.c.b16 %v4752, %v4748
    %v4921 = vpack.c.b16 %v4753, %v4749
    %v4922 = vpack.c.b16 %v4754, %v4750
    %v4923 = vpack.c.b16 %v4755, %v4751
    %v4924 = vpack.c.b16 %v4760, %v4756
    %v4925 = vpack.c.b16 %v4761, %v4757
    %v4926 = vpack.c.b16 %v4762, %v4758
    %v4927 = vpack.c.b16 %v4763, %v4759
    %v4928 = vpack.c.b16 %v4768, %v4764
    %v4929 = vpack.c.b16 %v4769, %v4765
    %v4930 = vpack.c.b16 %v4770, %v4766
    %v4931 = vpack.c.b16 %v4771, %v4767
    %v4932 = vpack.c.b16 %v4776, %v4772
    %v4933 = vpack.c.b16 %v4777, %v4773
    %v4934 = vpack.c.b16 %v4778, %v4774
    %v4935 = vpack.c.b16 %v4779, %v4775
    %v4936 = vpack.c.b16 %v4784, %v4780
    %v4937 = vpack.c.b16 %v4785, %v4781
    %v4938 = vpack.c.b16 %v4786, %v4782
    %v4939 = vpack.c.b16 %v4787, %v4783
    %v4940 = vpack.c.b16 %v4792, %v4788
    %v4941 = vpack.c.b16 %v4793, %v4789
    %v4942 = vpack.c.b16 %v4794, %v4790
    %v4943 = vpack.c.b16 %v4795, %v4791
    %v4944 = vpack.c.b16 %v4800, %v4796
    %v4945 = vpack.c.b16 %v4801, %v4797
    %v4946 = vpack.c.b16 %v4802, %v4798
    %v4947 = vpack.c.b16 %v4803, %v4799
    %v4948 = vpack.c.b16 %v4808, %v4804
    %v4949 = vpack.c.b16 %v4809, %v4805
    %v4950 = vpack.c.b16 %v4810, %v4806
    %v4951 = vpack.c.b16 %v4811, %v4807
    %v4952 = vpack.c.b16 %v4816, %v4812
    %v4953 = vpack.c.b16 %v4817, %v4813
    %v4954 = vpack.c.b16 %v4818, %v4814
    %v4955 = vpack.c.b16 %v4819, %v4815
    %v4956 = vpack.c.b16 %v4824, %v4820
    %v4957 = vpack.c.b16 %v4825, %v4821
    %v4958 = vpack.c.b16 %v4826, %v4822
    %v4959 = vpack.c.b16 %v4827, %v4823
    %v4960 = vpack.c.b16 %v4832, %v4828
    %v4961 = vpack.c.b16 %v4833, %v4829
    %v4962 = vpack.c.b16 %v4834, %v4830
    %v4963 = vpack.c.b16 %v4835, %v4831
    %5092 = vmatprep.subr.bf16.mxu0 %v4865
    %5093 = vmatpush1.bf16.msra.mxu0 %v4864
    %5094 = vmatprep.subr.bf16.mxu0 %v4861
    %5095 = vmatpush1.bf16.msra.mxu0 %v4860
    %5096 = vmatprep.subr.bf16.mxu0 %v4857
    %5097 = vmatpush1.bf16.msra.mxu0 %v4856
    %5098 = vmatprep.subr.bf16.mxu0 %v4853
    %5099 = vmatpush1.bf16.msra.mxu0 %v4852
    %5100 = vmatprep.subr.bf16.mxu0 %v4849
    %5101 = vmatpush1.bf16.msra.mxu0 %v4848
    %5102 = vmatprep.subr.bf16.mxu0 %v4845
    %5103 = vmatpush1.bf16.msra.mxu0 %v4844
    %5104 = vmatprep.subr.bf16.mxu0 %v4841
    %5105 = vmatpush1.bf16.msra.mxu0 %v4840
    %5106 = vmatprep.subr.bf16.mxu0 %v4837
    %5107 = vmatpush1.bf16.msra.mxu0 %v4836
    %5108 = vmatprep.subr.bf16.mxu0 %v4897
    %5109 = vmatpush2.bf16.msra.mxu0 %v4896
    %5110 = vmatprep.subr.bf16.mxu0 %v4893
    %5111 = vmatpush2.bf16.msra.mxu0 %v4892
    %5112 = vmatprep.subr.bf16.mxu0 %v4889
    %5113 = vmatpush2.bf16.msra.mxu0 %v4888
    %5114 = vmatprep.subr.bf16.mxu0 %v4885
    %5115 = vmatpush2.bf16.msra.mxu0 %v4884
    %5116 = vmatprep.subr.bf16.mxu0 %v4881
    %5117 = vmatpush2.bf16.msra.mxu0 %v4880
    %5118 = vmatprep.subr.bf16.mxu0 %v4877
    %5119 = vmatpush2.bf16.msra.mxu0 %v4876
    %5120 = vmatprep.subr.bf16.mxu0 %v4873
    %5121 = vmatpush2.bf16.msra.mxu0 %v4872
    %5122 = vmatprep.subr.bf16.mxu0 %v4869
    %5123 = vmatpush2.bf16.msra.mxu0 %v4868
    %5124 = vmatprep.mubr.bf16.mxu0 %v4321
    %5125 = vmatmul.mubr.bf16.gmra.mxu0 %v4320
    %v5126 = vpop.f32.mrf.mxu0
    %v5127 = vadd.f32 0.0, %v5126
    %v5128 = vpop.f32.mrf.mxu0
    %v5129 = vadd.f32 0.0, %v5128
    %v5130 = vpop.f32.mrf.mxu0
    %v5131 = vpop.f32.mrf.mxu0
    %5132 = vdwg.mxu0
    %5133 = vmatprep.subr.bf16.mxu0 %v4929
    %5134 = vmatpush1.bf16.msra.mxu0 %v4928
    %5135 = vmatprep.subr.bf16.mxu0 %v4925
    %5136 = vmatpush1.bf16.msra.mxu0 %v4924
    %5137 = vmatprep.subr.bf16.mxu0 %v4921
    %5138 = vmatpush1.bf16.msra.mxu0 %v4920
    %5139 = vmatprep.subr.bf16.mxu0 %v4917
    %5140 = vmatpush1.bf16.msra.mxu0 %v4916
    %5141 = vmatprep.subr.bf16.mxu0 %v4913
    %5142 = vmatpush1.bf16.msra.mxu0 %v4912
    %5143 = vmatprep.subr.bf16.mxu0 %v4909
    %5144 = vmatpush1.bf16.msra.mxu0 %v4908
    %5145 = vmatprep.subr.bf16.mxu0 %v4905
    %5146 = vmatpush1.bf16.msra.mxu0 %v4904
    %5147 = vmatprep.subr.bf16.mxu0 %v4901
    %5148 = vmatpush1.bf16.msra.mxu0 %v4900
    %5149 = vmatprep.subr.bf16.mxu0 %v4961
    %5150 = vmatpush2.bf16.msra.mxu0 %v4960
    %5151 = vmatprep.subr.bf16.mxu0 %v4957
    %5152 = vmatpush2.bf16.msra.mxu0 %v4956
    %5153 = vmatprep.subr.bf16.mxu0 %v4953
    %5154 = vmatpush2.bf16.msra.mxu0 %v4952
    %5155 = vmatprep.subr.bf16.mxu0 %v4949
    %5156 = vmatpush2.bf16.msra.mxu0 %v4948
    %5157 = vmatprep.subr.bf16.mxu0 %v4945
    %5158 = vmatpush2.bf16.msra.mxu0 %v4944
    %5159 = vmatprep.subr.bf16.mxu0 %v4941
    %5160 = vmatpush2.bf16.msra.mxu0 %v4940
    %5161 = vmatprep.subr.bf16.mxu0 %v4937
    %5162 = vmatpush2.bf16.msra.mxu0 %v4936
    %5163 = vmatprep.subr.bf16.mxu0 %v4933
    %5164 = vmatpush2.bf16.msra.mxu0 %v4932
    %5165 = vmatprep.mubr.bf16.mxu0 %v4323
    %5166 = vmatmul.mubr.bf16.gmra.mxu0 %v4322
    %v5167 = vpop.f32.mrf.mxu0
    %v5168 = vadd.f32 %v5127, %v5167
    %v5169 = vpop.f32.mrf.mxu0
    %v5170 = vadd.f32 %v5129, %v5169
    %v5171 = vpop.f32.mrf.mxu0
    %v5172 = vpop.f32.mrf.mxu0
    %5173 = vdwg.mxu0
    %5174 = vmatprep.subr.bf16.mxu0 %v4867
    %5175 = vmatpush1.bf16.msra.mxu0 %v4866
    %5176 = vmatprep.subr.bf16.mxu0 %v4863
    %5177 = vmatpush1.bf16.msra.mxu0 %v4862
    %5178 = vmatprep.subr.bf16.mxu0 %v4859
    %5179 = vmatpush1.bf16.msra.mxu0 %v4858
    %5180 = vmatprep.subr.bf16.mxu0 %v4855
    %5181 = vmatpush1.bf16.msra.mxu0 %v4854
    %5182 = vmatprep.subr.bf16.mxu0 %v4851
    %5183 = vmatpush1.bf16.msra.mxu0 %v4850
    %5184 = vmatprep.subr.bf16.mxu0 %v4847
    %5185 = vmatpush1.bf16.msra.mxu0 %v4846
    %5186 = vmatprep.subr.bf16.mxu0 %v4843
    %5187 = vmatpush1.bf16.msra.mxu0 %v4842
    %5188 = vmatprep.subr.bf16.mxu0 %v4839
    %5189 = vmatpush1.bf16.msra.mxu0 %v4838
    %5190 = vmatprep.subr.bf16.mxu0 %v4899
    %5191 = vmatpush2.bf16.msra.mxu0 %v4898
    %5192 = vmatprep.subr.bf16.mxu0 %v4895
    %5193 = vmatpush2.bf16.msra.mxu0 %v4894
    %5194 = vmatprep.subr.bf16.mxu0 %v4891
    %5195 = vmatpush2.bf16.msra.mxu0 %v4890
    %5196 = vmatprep.subr.bf16.mxu0 %v4887
    %5197 = vmatpush2.bf16.msra.mxu0 %v4886
    %5198 = vmatprep.subr.bf16.mxu0 %v4883
    %5199 = vmatpush2.bf16.msra.mxu0 %v4882
    %5200 = vmatprep.subr.bf16.mxu0 %v4879
    %5201 = vmatpush2.bf16.msra.mxu0 %v4878
    %5202 = vmatprep.subr.bf16.mxu0 %v4875
    %5203 = vmatpush2.bf16.msra.mxu0 %v4874
    %5204 = vmatprep.subr.bf16.mxu0 %v4871
    %5205 = vmatpush2.bf16.msra.mxu0 %v4870
    %5206 = vmatprep.mubr.bf16.mxu0 %v4321
    %5207 = vmatmul.mubr.bf16.gmra.mxu0 %v4320
    %v5208 = vpop.f32.mrf.mxu0
    %v5209 = vadd.f32 0.0, %v5208
    %v5210 = vpop.f32.mrf.mxu0
    %v5211 = vadd.f32 0.0, %v5210
    %v5212 = vpop.f32.mrf.mxu0
    %v5213 = vpop.f32.mrf.mxu0
    %5214 = vdwg.mxu0
    %5215 = vmatprep.subr.bf16.mxu0 %v4931
    %5216 = vmatpush1.bf16.msra.mxu0 %v4930
    %5217 = vmatprep.subr.bf16.mxu0 %v4927
    %5218 = vmatpush1.bf16.msra.mxu0 %v4926
    %5219 = vmatprep.subr.bf16.mxu0 %v4923
    %5220 = vmatpush1.bf16.msra.mxu0 %v4922
    %5221 = vmatprep.subr.bf16.mxu0 %v4919
    %5222 = vmatpush1.bf16.msra.mxu0 %v4918
    %5223 = vmatprep.subr.bf16.mxu0 %v4915
    %5224 = vmatpush1.bf16.msra.mxu0 %v4914
    %5225 = vmatprep.subr.bf16.mxu0 %v4911
    %5226 = vmatpush1.bf16.msra.mxu0 %v4910
    %5227 = vmatprep.subr.bf16.mxu0 %v4907
    %5228 = vmatpush1.bf16.msra.mxu0 %v4906
    %5229 = vmatprep.subr.bf16.mxu0 %v4903
    %5230 = vmatpush1.bf16.msra.mxu0 %v4902
    %5231 = vmatprep.subr.bf16.mxu0 %v4963
    %5232 = vmatpush2.bf16.msra.mxu0 %v4962
    %5233 = vmatprep.subr.bf16.mxu0 %v4959
    %5234 = vmatpush2.bf16.msra.mxu0 %v4958
    %5235 = vmatprep.subr.bf16.mxu0 %v4955
    %5236 = vmatpush2.bf16.msra.mxu0 %v4954
    %5237 = vmatprep.subr.bf16.mxu0 %v4951
    %5238 = vmatpush2.bf16.msra.mxu0 %v4950
    %5239 = vmatprep.subr.bf16.mxu0 %v4947
    %5240 = vmatpush2.bf16.msra.mxu0 %v4946
    %5241 = vmatprep.subr.bf16.mxu0 %v4943
    %5242 = vmatpush2.bf16.msra.mxu0 %v4942
    %5243 = vmatprep.subr.bf16.mxu0 %v4939
    %5244 = vmatpush2.bf16.msra.mxu0 %v4938
    %5245 = vmatprep.subr.bf16.mxu0 %v4935
    %5246 = vmatpush2.bf16.msra.mxu0 %v4934
    %5247 = vmatprep.mubr.bf16.mxu0 %v4323
    %5248 = vmatmul.mubr.bf16.gmra.mxu0 %v4322
    %v5249 = vpop.f32.mrf.mxu0
    %v5250 = vadd.f32 %v5209, %v5249
    %v5251 = vpop.f32.mrf.mxu0
    %v5252 = vadd.f32 %v5211, %v5251
    %v5253 = vpop.f32.mrf.mxu0
    %v5254 = vpop.f32.mrf.mxu0
    %5255 = vdwg.mxu0
    %v5256 = vadd.f32 %v4316, %v5168
    %v5257 = vadd.f32 %v4317, %v5170
    %v5258 = vadd.f32 %v4318, %v5250
    %v5259 = vadd.f32 %v4319, %v5252
    %v5260 = vpack.c.bf16 %v1488, %v1488
    %v5261 = vpack.c.bf16 %v1489, %v1489
    %v5262 = vpack.c.bf16 %v1490, %v1490
    %v5263 = vpack.c.bf16 %v1491, %v1491
    %v5264 = vld [vmem:[#allocation9 + $0x1000] sm:$0xff]
    %v5265 = vld [vmem:[#allocation9 + $0x1008] sm:$0xff]
    %v5266 = vld [vmem:[#allocation9 + $0x1010] sm:$0xff]
    %v5267 = vld [vmem:[#allocation9 + $0x1018] sm:$0xff]
    %v5268 = vld [vmem:[#allocation9 + $0x1020] sm:$0xff]
    %v5269 = vld [vmem:[#allocation9 + $0x1028] sm:$0xff]
    %v5270 = vld [vmem:[#allocation9 + $0x1030] sm:$0xff]
    %v5271 = vld [vmem:[#allocation9 + $0x1038] sm:$0xff]
    %v5272 = vld [vmem:[#allocation9 + $0x1040] sm:$0xff]
    %v5273 = vld [vmem:[#allocation9 + $0x1048] sm:$0xff]
    %v5274 = vld [vmem:[#allocation9 + $0x1050] sm:$0xff]
    %v5275 = vld [vmem:[#allocation9 + $0x1058] sm:$0xff]
    %v5276 = vld [vmem:[#allocation9 + $0x1060] sm:$0xff]
    %v5277 = vld [vmem:[#allocation9 + $0x1068] sm:$0xff]
    %v5278 = vld [vmem:[#allocation9 + $0x1070] sm:$0xff]
    %v5279 = vld [vmem:[#allocation9 + $0x1078] sm:$0xff]
    %v5280 = vld [vmem:[#allocation9 + $0x1080] sm:$0xff]
    %v5281 = vld [vmem:[#allocation9 + $0x1088] sm:$0xff]
    %v5282 = vld [vmem:[#allocation9 + $0x1090] sm:$0xff]
    %v5283 = vld [vmem:[#allocation9 + $0x1098] sm:$0xff]
    %v5284 = vld [vmem:[#allocation9 + $0x10a0] sm:$0xff]
    %v5285 = vld [vmem:[#allocation9 + $0x10a8] sm:$0xff]
    %v5286 = vld [vmem:[#allocation9 + $0x10b0] sm:$0xff]
    %v5287 = vld [vmem:[#allocation9 + $0x10b8] sm:$0xff]
    %v5288 = vld [vmem:[#allocation9 + $0x10c0] sm:$0xff]
    %v5289 = vld [vmem:[#allocation9 + $0x10c8] sm:$0xff]
    %v5290 = vld [vmem:[#allocation9 + $0x10d0] sm:$0xff]
    %v5291 = vld [vmem:[#allocation9 + $0x10d8] sm:$0xff]
    %v5292 = vld [vmem:[#allocation9 + $0x10e0] sm:$0xff]
    %v5293 = vld [vmem:[#allocation9 + $0x10e8] sm:$0xff]
    %v5294 = vld [vmem:[#allocation9 + $0x10f0] sm:$0xff]
    %v5295 = vld [vmem:[#allocation9 + $0x10f8] sm:$0xff]
    %v5296 = vld [vmem:[#allocation9 + $0x1100] sm:$0xff]
    %v5297 = vld [vmem:[#allocation9 + $0x1108] sm:$0xff]
    %v5298 = vld [vmem:[#allocation9 + $0x1110] sm:$0xff]
    %v5299 = vld [vmem:[#allocation9 + $0x1118] sm:$0xff]
    %v5300 = vld [vmem:[#allocation9 + $0x1120] sm:$0xff]
    %v5301 = vld [vmem:[#allocation9 + $0x1128] sm:$0xff]
    %v5302 = vld [vmem:[#allocation9 + $0x1130] sm:$0xff]
    %v5303 = vld [vmem:[#allocation9 + $0x1138] sm:$0xff]
    %v5304 = vld [vmem:[#allocation9 + $0x1140] sm:$0xff]
    %v5305 = vld [vmem:[#allocation9 + $0x1148] sm:$0xff]
    %v5306 = vld [vmem:[#allocation9 + $0x1150] sm:$0xff]
    %v5307 = vld [vmem:[#allocation9 + $0x1158] sm:$0xff]
    %v5308 = vld [vmem:[#allocation9 + $0x1160] sm:$0xff]
    %v5309 = vld [vmem:[#allocation9 + $0x1168] sm:$0xff]
    %v5310 = vld [vmem:[#allocation9 + $0x1170] sm:$0xff]
    %v5311 = vld [vmem:[#allocation9 + $0x1178] sm:$0xff]
    %v5312 = vld [vmem:[#allocation9 + $0x1180] sm:$0xff]
    %v5313 = vld [vmem:[#allocation9 + $0x1188] sm:$0xff]
    %v5314 = vld [vmem:[#allocation9 + $0x1190] sm:$0xff]
    %v5315 = vld [vmem:[#allocation9 + $0x1198] sm:$0xff]
    %v5316 = vld [vmem:[#allocation9 + $0x11a0] sm:$0xff]
    %v5317 = vld [vmem:[#allocation9 + $0x11a8] sm:$0xff]
    %v5318 = vld [vmem:[#allocation9 + $0x11b0] sm:$0xff]
    %v5319 = vld [vmem:[#allocation9 + $0x11b8] sm:$0xff]
    %v5320 = vld [vmem:[#allocation9 + $0x11c0] sm:$0xff]
    %v5321 = vld [vmem:[#allocation9 + $0x11c8] sm:$0xff]
    %v5322 = vld [vmem:[#allocation9 + $0x11d0] sm:$0xff]
    %v5323 = vld [vmem:[#allocation9 + $0x11d8] sm:$0xff]
    %v5324 = vld [vmem:[#allocation9 + $0x11e0] sm:$0xff]
    %v5325 = vld [vmem:[#allocation9 + $0x11e8] sm:$0xff]
    %v5326 = vld [vmem:[#allocation9 + $0x11f0] sm:$0xff]
    %v5327 = vld [vmem:[#allocation9 + $0x11f8] sm:$0xff]
    %v5328 = vld [vmem:[#allocation9 + $0x1200] sm:$0xff]
    %v5329 = vld [vmem:[#allocation9 + $0x1208] sm:$0xff]
    %v5330 = vld [vmem:[#allocation9 + $0x1210] sm:$0xff]
    %v5331 = vld [vmem:[#allocation9 + $0x1218] sm:$0xff]
    %v5332 = vld [vmem:[#allocation9 + $0x1220] sm:$0xff]
    %v5333 = vld [vmem:[#allocation9 + $0x1228] sm:$0xff]
    %v5334 = vld [vmem:[#allocation9 + $0x1230] sm:$0xff]
    %v5335 = vld [vmem:[#allocation9 + $0x1238] sm:$0xff]
    %v5336 = vld [vmem:[#allocation9 + $0x1240] sm:$0xff]
    %v5337 = vld [vmem:[#allocation9 + $0x1248] sm:$0xff]
    %v5338 = vld [vmem:[#allocation9 + $0x1250] sm:$0xff]
    %v5339 = vld [vmem:[#allocation9 + $0x1258] sm:$0xff]
    %v5340 = vld [vmem:[#allocation9 + $0x1260] sm:$0xff]
    %v5341 = vld [vmem:[#allocation9 + $0x1268] sm:$0xff]
    %v5342 = vld [vmem:[#allocation9 + $0x1270] sm:$0xff]
    %v5343 = vld [vmem:[#allocation9 + $0x1278] sm:$0xff]
    %v5344 = vld [vmem:[#allocation9 + $0x1280] sm:$0xff]
    %v5345 = vld [vmem:[#allocation9 + $0x1288] sm:$0xff]
    %v5346 = vld [vmem:[#allocation9 + $0x1290] sm:$0xff]
    %v5347 = vld [vmem:[#allocation9 + $0x1298] sm:$0xff]
    %v5348 = vld [vmem:[#allocation9 + $0x12a0] sm:$0xff]
    %v5349 = vld [vmem:[#allocation9 + $0x12a8] sm:$0xff]
    %v5350 = vld [vmem:[#allocation9 + $0x12b0] sm:$0xff]
    %v5351 = vld [vmem:[#allocation9 + $0x12b8] sm:$0xff]
    %v5352 = vld [vmem:[#allocation9 + $0x12c0] sm:$0xff]
    %v5353 = vld [vmem:[#allocation9 + $0x12c8] sm:$0xff]
    %v5354 = vld [vmem:[#allocation9 + $0x12d0] sm:$0xff]
    %v5355 = vld [vmem:[#allocation9 + $0x12d8] sm:$0xff]
    %v5356 = vld [vmem:[#allocation9 + $0x12e0] sm:$0xff]
    %v5357 = vld [vmem:[#allocation9 + $0x12e8] sm:$0xff]
    %v5358 = vld [vmem:[#allocation9 + $0x12f0] sm:$0xff]
    %v5359 = vld [vmem:[#allocation9 + $0x12f8] sm:$0xff]
    %v5360 = vld [vmem:[#allocation9 + $0x1300] sm:$0xff]
    %v5361 = vld [vmem:[#allocation9 + $0x1308] sm:$0xff]
    %v5362 = vld [vmem:[#allocation9 + $0x1310] sm:$0xff]
    %v5363 = vld [vmem:[#allocation9 + $0x1318] sm:$0xff]
    %v5364 = vld [vmem:[#allocation9 + $0x1320] sm:$0xff]
    %v5365 = vld [vmem:[#allocation9 + $0x1328] sm:$0xff]
    %v5366 = vld [vmem:[#allocation9 + $0x1330] sm:$0xff]
    %v5367 = vld [vmem:[#allocation9 + $0x1338] sm:$0xff]
    %v5368 = vld [vmem:[#allocation9 + $0x1340] sm:$0xff]
    %v5369 = vld [vmem:[#allocation9 + $0x1348] sm:$0xff]
    %v5370 = vld [vmem:[#allocation9 + $0x1350] sm:$0xff]
    %v5371 = vld [vmem:[#allocation9 + $0x1358] sm:$0xff]
    %v5372 = vld [vmem:[#allocation9 + $0x1360] sm:$0xff]
    %v5373 = vld [vmem:[#allocation9 + $0x1368] sm:$0xff]
    %v5374 = vld [vmem:[#allocation9 + $0x1370] sm:$0xff]
    %v5375 = vld [vmem:[#allocation9 + $0x1378] sm:$0xff]
    %v5376 = vld [vmem:[#allocation9 + $0x1380] sm:$0xff]
    %v5377 = vld [vmem:[#allocation9 + $0x1388] sm:$0xff]
    %v5378 = vld [vmem:[#allocation9 + $0x1390] sm:$0xff]
    %v5379 = vld [vmem:[#allocation9 + $0x1398] sm:$0xff]
    %v5380 = vld [vmem:[#allocation9 + $0x13a0] sm:$0xff]
    %v5381 = vld [vmem:[#allocation9 + $0x13a8] sm:$0xff]
    %v5382 = vld [vmem:[#allocation9 + $0x13b0] sm:$0xff]
    %v5383 = vld [vmem:[#allocation9 + $0x13b8] sm:$0xff]
    %v5384 = vld [vmem:[#allocation9 + $0x13c0] sm:$0xff]
    %v5385 = vld [vmem:[#allocation9 + $0x13c8] sm:$0xff]
    %v5386 = vld [vmem:[#allocation9 + $0x13d0] sm:$0xff]
    %v5387 = vld [vmem:[#allocation9 + $0x13d8] sm:$0xff]
    %v5388 = vld [vmem:[#allocation9 + $0x13e0] sm:$0xff]
    %v5389 = vld [vmem:[#allocation9 + $0x13e8] sm:$0xff]
    %v5390 = vld [vmem:[#allocation9 + $0x13f0] sm:$0xff]
    %v5391 = vld [vmem:[#allocation9 + $0x13f8] sm:$0xff]
    %v5520 = vunpack.c.l.b16 %v5264
    %v5521 = vunpack.c.h.b16 %v5264
    %v5522 = vunpack.c.l.b16 %v5265
    %v5523 = vunpack.c.h.b16 %v5265
    %v5524 = vunpack.c.l.b16 %v5266
    %v5525 = vunpack.c.h.b16 %v5266
    %v5526 = vunpack.c.l.b16 %v5267
    %v5527 = vunpack.c.h.b16 %v5267
    %v5528 = vunpack.c.l.b16 %v5268
    %v5529 = vunpack.c.h.b16 %v5268
    %v5530 = vunpack.c.l.b16 %v5269
    %v5531 = vunpack.c.h.b16 %v5269
    %v5532 = vunpack.c.l.b16 %v5270
    %v5533 = vunpack.c.h.b16 %v5270
    %v5534 = vunpack.c.l.b16 %v5271
    %v5535 = vunpack.c.h.b16 %v5271
    %v5536 = vunpack.c.l.b16 %v5272
    %v5537 = vunpack.c.h.b16 %v5272
    %v5538 = vunpack.c.l.b16 %v5273
    %v5539 = vunpack.c.h.b16 %v5273
    %v5540 = vunpack.c.l.b16 %v5274
    %v5541 = vunpack.c.h.b16 %v5274
    %v5542 = vunpack.c.l.b16 %v5275
    %v5543 = vunpack.c.h.b16 %v5275
    %v5544 = vunpack.c.l.b16 %v5276
    %v5545 = vunpack.c.h.b16 %v5276
    %v5546 = vunpack.c.l.b16 %v5277
    %v5547 = vunpack.c.h.b16 %v5277
    %v5548 = vunpack.c.l.b16 %v5278
    %v5549 = vunpack.c.h.b16 %v5278
    %v5550 = vunpack.c.l.b16 %v5279
    %v5551 = vunpack.c.h.b16 %v5279
    %v5552 = vunpack.c.l.b16 %v5280
    %v5553 = vunpack.c.h.b16 %v5280
    %v5554 = vunpack.c.l.b16 %v5281
    %v5555 = vunpack.c.h.b16 %v5281
    %v5556 = vunpack.c.l.b16 %v5282
    %v5557 = vunpack.c.h.b16 %v5282
    %v5558 = vunpack.c.l.b16 %v5283
    %v5559 = vunpack.c.h.b16 %v5283
    %v5560 = vunpack.c.l.b16 %v5284
    %v5561 = vunpack.c.h.b16 %v5284
    %v5562 = vunpack.c.l.b16 %v5285
    %v5563 = vunpack.c.h.b16 %v5285
    %v5564 = vunpack.c.l.b16 %v5286
    %v5565 = vunpack.c.h.b16 %v5286
    %v5566 = vunpack.c.l.b16 %v5287
    %v5567 = vunpack.c.h.b16 %v5287
    %v5568 = vunpack.c.l.b16 %v5288
    %v5569 = vunpack.c.h.b16 %v5288
    %v5570 = vunpack.c.l.b16 %v5289
    %v5571 = vunpack.c.h.b16 %v5289
    %v5572 = vunpack.c.l.b16 %v5290
    %v5573 = vunpack.c.h.b16 %v5290
    %v5574 = vunpack.c.l.b16 %v5291
    %v5575 = vunpack.c.h.b16 %v5291
    %v5576 = vunpack.c.l.b16 %v5292
    %v5577 = vunpack.c.h.b16 %v5292
    %v5578 = vunpack.c.l.b16 %v5293
    %v5579 = vunpack.c.h.b16 %v5293
    %v5580 = vunpack.c.l.b16 %v5294
    %v5581 = vunpack.c.h.b16 %v5294
    %v5582 = vunpack.c.l.b16 %v5295
    %v5583 = vunpack.c.h.b16 %v5295
    %v5584 = vunpack.c.l.b16 %v5296
    %v5585 = vunpack.c.h.b16 %v5296
    %v5586 = vunpack.c.l.b16 %v5297
    %v5587 = vunpack.c.h.b16 %v5297
    %v5588 = vunpack.c.l.b16 %v5298
    %v5589 = vunpack.c.h.b16 %v5298
    %v5590 = vunpack.c.l.b16 %v5299
    %v5591 = vunpack.c.h.b16 %v5299
    %v5592 = vunpack.c.l.b16 %v5300
    %v5593 = vunpack.c.h.b16 %v5300
    %v5594 = vunpack.c.l.b16 %v5301
    %v5595 = vunpack.c.h.b16 %v5301
    %v5596 = vunpack.c.l.b16 %v5302
    %v5597 = vunpack.c.h.b16 %v5302
    %v5598 = vunpack.c.l.b16 %v5303
    %v5599 = vunpack.c.h.b16 %v5303
    %v5600 = vunpack.c.l.b16 %v5304
    %v5601 = vunpack.c.h.b16 %v5304
    %v5602 = vunpack.c.l.b16 %v5305
    %v5603 = vunpack.c.h.b16 %v5305
    %v5604 = vunpack.c.l.b16 %v5306
    %v5605 = vunpack.c.h.b16 %v5306
    %v5606 = vunpack.c.l.b16 %v5307
    %v5607 = vunpack.c.h.b16 %v5307
    %v5608 = vunpack.c.l.b16 %v5308
    %v5609 = vunpack.c.h.b16 %v5308
    %v5610 = vunpack.c.l.b16 %v5309
    %v5611 = vunpack.c.h.b16 %v5309
    %v5612 = vunpack.c.l.b16 %v5310
    %v5613 = vunpack.c.h.b16 %v5310
    %v5614 = vunpack.c.l.b16 %v5311
    %v5615 = vunpack.c.h.b16 %v5311
    %v5616 = vunpack.c.l.b16 %v5312
    %v5617 = vunpack.c.h.b16 %v5312
    %v5618 = vunpack.c.l.b16 %v5313
    %v5619 = vunpack.c.h.b16 %v5313
    %v5620 = vunpack.c.l.b16 %v5314
    %v5621 = vunpack.c.h.b16 %v5314
    %v5622 = vunpack.c.l.b16 %v5315
    %v5623 = vunpack.c.h.b16 %v5315
    %v5624 = vunpack.c.l.b16 %v5316
    %v5625 = vunpack.c.h.b16 %v5316
    %v5626 = vunpack.c.l.b16 %v5317
    %v5627 = vunpack.c.h.b16 %v5317
    %v5628 = vunpack.c.l.b16 %v5318
    %v5629 = vunpack.c.h.b16 %v5318
    %v5630 = vunpack.c.l.b16 %v5319
    %v5631 = vunpack.c.h.b16 %v5319
    %v5632 = vunpack.c.l.b16 %v5320
    %v5633 = vunpack.c.h.b16 %v5320
    %v5634 = vunpack.c.l.b16 %v5321
    %v5635 = vunpack.c.h.b16 %v5321
    %v5636 = vunpack.c.l.b16 %v5322
    %v5637 = vunpack.c.h.b16 %v5322
    %v5638 = vunpack.c.l.b16 %v5323
    %v5639 = vunpack.c.h.b16 %v5323
    %v5640 = vunpack.c.l.b16 %v5324
    %v5641 = vunpack.c.h.b16 %v5324
    %v5642 = vunpack.c.l.b16 %v5325
    %v5643 = vunpack.c.h.b16 %v5325
    %v5644 = vunpack.c.l.b16 %v5326
    %v5645 = vunpack.c.h.b16 %v5326
    %v5646 = vunpack.c.l.b16 %v5327
    %v5647 = vunpack.c.h.b16 %v5327
    %v5648 = vunpack.c.l.b16 %v5328
    %v5649 = vunpack.c.h.b16 %v5328
    %v5650 = vunpack.c.l.b16 %v5329
    %v5651 = vunpack.c.h.b16 %v5329
    %v5652 = vunpack.c.l.b16 %v5330
    %v5653 = vunpack.c.h.b16 %v5330
    %v5654 = vunpack.c.l.b16 %v5331
    %v5655 = vunpack.c.h.b16 %v5331
    %v5656 = vunpack.c.l.b16 %v5332
    %v5657 = vunpack.c.h.b16 %v5332
    %v5658 = vunpack.c.l.b16 %v5333
    %v5659 = vunpack.c.h.b16 %v5333
    %v5660 = vunpack.c.l.b16 %v5334
    %v5661 = vunpack.c.h.b16 %v5334
    %v5662 = vunpack.c.l.b16 %v5335
    %v5663 = vunpack.c.h.b16 %v5335
    %v5664 = vunpack.c.l.b16 %v5336
    %v5665 = vunpack.c.h.b16 %v5336
    %v5666 = vunpack.c.l.b16 %v5337
    %v5667 = vunpack.c.h.b16 %v5337
    %v5668 = vunpack.c.l.b16 %v5338
    %v5669 = vunpack.c.h.b16 %v5338
    %v5670 = vunpack.c.l.b16 %v5339
    %v5671 = vunpack.c.h.b16 %v5339
    %v5672 = vunpack.c.l.b16 %v5340
    %v5673 = vunpack.c.h.b16 %v5340
    %v5674 = vunpack.c.l.b16 %v5341
    %v5675 = vunpack.c.h.b16 %v5341
    %v5676 = vunpack.c.l.b16 %v5342
    %v5677 = vunpack.c.h.b16 %v5342
    %v5678 = vunpack.c.l.b16 %v5343
    %v5679 = vunpack.c.h.b16 %v5343
    %v5680 = vunpack.c.l.b16 %v5344
    %v5681 = vunpack.c.h.b16 %v5344
    %v5682 = vunpack.c.l.b16 %v5345
    %v5683 = vunpack.c.h.b16 %v5345
    %v5684 = vunpack.c.l.b16 %v5346
    %v5685 = vunpack.c.h.b16 %v5346
    %v5686 = vunpack.c.l.b16 %v5347
    %v5687 = vunpack.c.h.b16 %v5347
    %v5688 = vunpack.c.l.b16 %v5348
    %v5689 = vunpack.c.h.b16 %v5348
    %v5690 = vunpack.c.l.b16 %v5349
    %v5691 = vunpack.c.h.b16 %v5349
    %v5692 = vunpack.c.l.b16 %v5350
    %v5693 = vunpack.c.h.b16 %v5350
    %v5694 = vunpack.c.l.b16 %v5351
    %v5695 = vunpack.c.h.b16 %v5351
    %v5696 = vunpack.c.l.b16 %v5352
    %v5697 = vunpack.c.h.b16 %v5352
    %v5698 = vunpack.c.l.b16 %v5353
    %v5699 = vunpack.c.h.b16 %v5353
    %v5700 = vunpack.c.l.b16 %v5354
    %v5701 = vunpack.c.h.b16 %v5354
    %v5702 = vunpack.c.l.b16 %v5355
    %v5703 = vunpack.c.h.b16 %v5355
    %v5704 = vunpack.c.l.b16 %v5356
    %v5705 = vunpack.c.h.b16 %v5356
    %v5706 = vunpack.c.l.b16 %v5357
    %v5707 = vunpack.c.h.b16 %v5357
    %v5708 = vunpack.c.l.b16 %v5358
    %v5709 = vunpack.c.h.b16 %v5358
    %v5710 = vunpack.c.l.b16 %v5359
    %v5711 = vunpack.c.h.b16 %v5359
    %v5712 = vunpack.c.l.b16 %v5360
    %v5713 = vunpack.c.h.b16 %v5360
    %v5714 = vunpack.c.l.b16 %v5361
    %v5715 = vunpack.c.h.b16 %v5361
    %v5716 = vunpack.c.l.b16 %v5362
    %v5717 = vunpack.c.h.b16 %v5362
    %v5718 = vunpack.c.l.b16 %v5363
    %v5719 = vunpack.c.h.b16 %v5363
    %v5720 = vunpack.c.l.b16 %v5364
    %v5721 = vunpack.c.h.b16 %v5364
    %v5722 = vunpack.c.l.b16 %v5365
    %v5723 = vunpack.c.h.b16 %v5365
    %v5724 = vunpack.c.l.b16 %v5366
    %v5725 = vunpack.c.h.b16 %v5366
    %v5726 = vunpack.c.l.b16 %v5367
    %v5727 = vunpack.c.h.b16 %v5367
    %v5728 = vunpack.c.l.b16 %v5368
    %v5729 = vunpack.c.h.b16 %v5368
    %v5730 = vunpack.c.l.b16 %v5369
    %v5731 = vunpack.c.h.b16 %v5369
    %v5732 = vunpack.c.l.b16 %v5370
    %v5733 = vunpack.c.h.b16 %v5370
    %v5734 = vunpack.c.l.b16 %v5371
    %v5735 = vunpack.c.h.b16 %v5371
    %v5736 = vunpack.c.l.b16 %v5372
    %v5737 = vunpack.c.h.b16 %v5372
    %v5738 = vunpack.c.l.b16 %v5373
    %v5739 = vunpack.c.h.b16 %v5373
    %v5740 = vunpack.c.l.b16 %v5374
    %v5741 = vunpack.c.h.b16 %v5374
    %v5742 = vunpack.c.l.b16 %v5375
    %v5743 = vunpack.c.h.b16 %v5375
    %v5744 = vunpack.c.l.b16 %v5376
    %v5745 = vunpack.c.h.b16 %v5376
    %v5746 = vunpack.c.l.b16 %v5377
    %v5747 = vunpack.c.h.b16 %v5377
    %v5748 = vunpack.c.l.b16 %v5378
    %v5749 = vunpack.c.h.b16 %v5378
    %v5750 = vunpack.c.l.b16 %v5379
    %v5751 = vunpack.c.h.b16 %v5379
    %v5752 = vunpack.c.l.b16 %v5380
    %v5753 = vunpack.c.h.b16 %v5380
    %v5754 = vunpack.c.l.b16 %v5381
    %v5755 = vunpack.c.h.b16 %v5381
    %v5756 = vunpack.c.l.b16 %v5382
    %v5757 = vunpack.c.h.b16 %v5382
    %v5758 = vunpack.c.l.b16 %v5383
    %v5759 = vunpack.c.h.b16 %v5383
    %v5760 = vunpack.c.l.b16 %v5384
    %v5761 = vunpack.c.h.b16 %v5384
    %v5762 = vunpack.c.l.b16 %v5385
    %v5763 = vunpack.c.h.b16 %v5385
    %v5764 = vunpack.c.l.b16 %v5386
    %v5765 = vunpack.c.h.b16 %v5386
    %v5766 = vunpack.c.l.b16 %v5387
    %v5767 = vunpack.c.h.b16 %v5387
    %v5768 = vunpack.c.l.b16 %v5388
    %v5769 = vunpack.c.h.b16 %v5388
    %v5770 = vunpack.c.l.b16 %v5389
    %v5771 = vunpack.c.h.b16 %v5389
    %v5772 = vunpack.c.l.b16 %v5390
    %v5773 = vunpack.c.h.b16 %v5390
    %v5774 = vunpack.c.l.b16 %v5391
    %v5775 = vunpack.c.h.b16 %v5391
    %v5776 = vpack.c.b16 %v5524, %v5520
    %v5777 = vpack.c.b16 %v5525, %v5521
    %v5778 = vpack.c.b16 %v5526, %v5522
    %v5779 = vpack.c.b16 %v5527, %v5523
    %v5780 = vpack.c.b16 %v5532, %v5528
    %v5781 = vpack.c.b16 %v5533, %v5529
    %v5782 = vpack.c.b16 %v5534, %v5530
    %v5783 = vpack.c.b16 %v5535, %v5531
    %v5784 = vpack.c.b16 %v5540, %v5536
    %v5785 = vpack.c.b16 %v5541, %v5537
    %v5786 = vpack.c.b16 %v5542, %v5538
    %v5787 = vpack.c.b16 %v5543, %v5539
    %v5788 = vpack.c.b16 %v5548, %v5544
    %v5789 = vpack.c.b16 %v5549, %v5545
    %v5790 = vpack.c.b16 %v5550, %v5546
    %v5791 = vpack.c.b16 %v5551, %v5547
    %v5792 = vpack.c.b16 %v5556, %v5552
    %v5793 = vpack.c.b16 %v5557, %v5553
    %v5794 = vpack.c.b16 %v5558, %v5554
    %v5795 = vpack.c.b16 %v5559, %v5555
    %v5796 = vpack.c.b16 %v5564, %v5560
    %v5797 = vpack.c.b16 %v5565, %v5561
    %v5798 = vpack.c.b16 %v5566, %v5562
    %v5799 = vpack.c.b16 %v5567, %v5563
    %v5800 = vpack.c.b16 %v5572, %v5568
    %v5801 = vpack.c.b16 %v5573, %v5569
    %v5802 = vpack.c.b16 %v5574, %v5570
    %v5803 = vpack.c.b16 %v5575, %v5571
    %v5804 = vpack.c.b16 %v5580, %v5576
    %v5805 = vpack.c.b16 %v5581, %v5577
    %v5806 = vpack.c.b16 %v5582, %v5578
    %v5807 = vpack.c.b16 %v5583, %v5579
    %v5808 = vpack.c.b16 %v5588, %v5584
    %v5809 = vpack.c.b16 %v5589, %v5585
    %v5810 = vpack.c.b16 %v5590, %v5586
    %v5811 = vpack.c.b16 %v5591, %v5587
    %v5812 = vpack.c.b16 %v5596, %v5592
    %v5813 = vpack.c.b16 %v5597, %v5593
    %v5814 = vpack.c.b16 %v5598, %v5594
    %v5815 = vpack.c.b16 %v5599, %v5595
    %v5816 = vpack.c.b16 %v5604, %v5600
    %v5817 = vpack.c.b16 %v5605, %v5601
    %v5818 = vpack.c.b16 %v5606, %v5602
    %v5819 = vpack.c.b16 %v5607, %v5603
    %v5820 = vpack.c.b16 %v5612, %v5608
    %v5821 = vpack.c.b16 %v5613, %v5609
    %v5822 = vpack.c.b16 %v5614, %v5610
    %v5823 = vpack.c.b16 %v5615, %v5611
    %v5824 = vpack.c.b16 %v5620, %v5616
    %v5825 = vpack.c.b16 %v5621, %v5617
    %v5826 = vpack.c.b16 %v5622, %v5618
    %v5827 = vpack.c.b16 %v5623, %v5619
    %v5828 = vpack.c.b16 %v5628, %v5624
    %v5829 = vpack.c.b16 %v5629, %v5625
    %v5830 = vpack.c.b16 %v5630, %v5626
    %v5831 = vpack.c.b16 %v5631, %v5627
    %v5832 = vpack.c.b16 %v5636, %v5632
    %v5833 = vpack.c.b16 %v5637, %v5633
    %v5834 = vpack.c.b16 %v5638, %v5634
    %v5835 = vpack.c.b16 %v5639, %v5635
    %v5836 = vpack.c.b16 %v5644, %v5640
    %v5837 = vpack.c.b16 %v5645, %v5641
    %v5838 = vpack.c.b16 %v5646, %v5642
    %v5839 = vpack.c.b16 %v5647, %v5643
    %v5840 = vpack.c.b16 %v5652, %v5648
    %v5841 = vpack.c.b16 %v5653, %v5649
    %v5842 = vpack.c.b16 %v5654, %v5650
    %v5843 = vpack.c.b16 %v5655, %v5651
    %v5844 = vpack.c.b16 %v5660, %v5656
    %v5845 = vpack.c.b16 %v5661, %v5657
    %v5846 = vpack.c.b16 %v5662, %v5658
    %v5847 = vpack.c.b16 %v5663, %v5659
    %v5848 = vpack.c.b16 %v5668, %v5664
    %v5849 = vpack.c.b16 %v5669, %v5665
    %v5850 = vpack.c.b16 %v5670, %v5666
    %v5851 = vpack.c.b16 %v5671, %v5667
    %v5852 = vpack.c.b16 %v5676, %v5672
    %v5853 = vpack.c.b16 %v5677, %v5673
    %v5854 = vpack.c.b16 %v5678, %v5674
    %v5855 = vpack.c.b16 %v5679, %v5675
    %v5856 = vpack.c.b16 %v5684, %v5680
    %v5857 = vpack.c.b16 %v5685, %v5681
    %v5858 = vpack.c.b16 %v5686, %v5682
    %v5859 = vpack.c.b16 %v5687, %v5683
    %v5860 = vpack.c.b16 %v5692, %v5688
    %v5861 = vpack.c.b16 %v5693, %v5689
    %v5862 = vpack.c.b16 %v5694, %v5690
    %v5863 = vpack.c.b16 %v5695, %v5691
    %v5864 = vpack.c.b16 %v5700, %v5696
    %v5865 = vpack.c.b16 %v5701, %v5697
    %v5866 = vpack.c.b16 %v5702, %v5698
    %v5867 = vpack.c.b16 %v5703, %v5699
    %v5868 = vpack.c.b16 %v5708, %v5704
    %v5869 = vpack.c.b16 %v5709, %v5705
    %v5870 = vpack.c.b16 %v5710, %v5706
    %v5871 = vpack.c.b16 %v5711, %v5707
    %v5872 = vpack.c.b16 %v5716, %v5712
    %v5873 = vpack.c.b16 %v5717, %v5713
    %v5874 = vpack.c.b16 %v5718, %v5714
    %v5875 = vpack.c.b16 %v5719, %v5715
    %v5876 = vpack.c.b16 %v5724, %v5720
    %v5877 = vpack.c.b16 %v5725, %v5721
    %v5878 = vpack.c.b16 %v5726, %v5722
    %v5879 = vpack.c.b16 %v5727, %v5723
    %v5880 = vpack.c.b16 %v5732, %v5728
    %v5881 = vpack.c.b16 %v5733, %v5729
    %v5882 = vpack.c.b16 %v5734, %v5730
    %v5883 = vpack.c.b16 %v5735, %v5731
    %v5884 = vpack.c.b16 %v5740, %v5736
    %v5885 = vpack.c.b16 %v5741, %v5737
    %v5886 = vpack.c.b16 %v5742, %v5738
    %v5887 = vpack.c.b16 %v5743, %v5739
    %v5888 = vpack.c.b16 %v5748, %v5744
    %v5889 = vpack.c.b16 %v5749, %v5745
    %v5890 = vpack.c.b16 %v5750, %v5746
    %v5891 = vpack.c.b16 %v5751, %v5747
    %v5892 = vpack.c.b16 %v5756, %v5752
    %v5893 = vpack.c.b16 %v5757, %v5753
    %v5894 = vpack.c.b16 %v5758, %v5754
    %v5895 = vpack.c.b16 %v5759, %v5755
    %v5896 = vpack.c.b16 %v5764, %v5760
    %v5897 = vpack.c.b16 %v5765, %v5761
    %v5898 = vpack.c.b16 %v5766, %v5762
    %v5899 = vpack.c.b16 %v5767, %v5763
    %v5900 = vpack.c.b16 %v5772, %v5768
    %v5901 = vpack.c.b16 %v5773, %v5769
    %v5902 = vpack.c.b16 %v5774, %v5770
    %v5903 = vpack.c.b16 %v5775, %v5771
    %6032 = vmatprep.subr.bf16.mxu0 %v5805
    %6033 = vmatpush1.bf16.msra.mxu0 %v5804
    %6034 = vmatprep.subr.bf16.mxu0 %v5801
    %6035 = vmatpush1.bf16.msra.mxu0 %v5800
    %6036 = vmatprep.subr.bf16.mxu0 %v5797
    %6037 = vmatpush1.bf16.msra.mxu0 %v5796
    %6038 = vmatprep.subr.bf16.mxu0 %v5793
    %6039 = vmatpush1.bf16.msra.mxu0 %v5792
    %6040 = vmatprep.subr.bf16.mxu0 %v5789
    %6041 = vmatpush1.bf16.msra.mxu0 %v5788
    %6042 = vmatprep.subr.bf16.mxu0 %v5785
    %6043 = vmatpush1.bf16.msra.mxu0 %v5784
    %6044 = vmatprep.subr.bf16.mxu0 %v5781
    %6045 = vmatpush1.bf16.msra.mxu0 %v5780
    %6046 = vmatprep.subr.bf16.mxu0 %v5777
    %6047 = vmatpush1.bf16.msra.mxu0 %v5776
    %6048 = vmatprep.subr.bf16.mxu0 %v5837
    %6049 = vmatpush2.bf16.msra.mxu0 %v5836
    %6050 = vmatprep.subr.bf16.mxu0 %v5833
    %6051 = vmatpush2.bf16.msra.mxu0 %v5832
    %6052 = vmatprep.subr.bf16.mxu0 %v5829
    %6053 = vmatpush2.bf16.msra.mxu0 %v5828
    %6054 = vmatprep.subr.bf16.mxu0 %v5825
    %6055 = vmatpush2.bf16.msra.mxu0 %v5824
    %6056 = vmatprep.subr.bf16.mxu0 %v5821
    %6057 = vmatpush2.bf16.msra.mxu0 %v5820
    %6058 = vmatprep.subr.bf16.mxu0 %v5817
    %6059 = vmatpush2.bf16.msra.mxu0 %v5816
    %6060 = vmatprep.subr.bf16.mxu0 %v5813
    %6061 = vmatpush2.bf16.msra.mxu0 %v5812
    %6062 = vmatprep.subr.bf16.mxu0 %v5809
    %6063 = vmatpush2.bf16.msra.mxu0 %v5808
    %6064 = vmatprep.mubr.bf16.mxu0 %v5261
    %6065 = vmatmul.mubr.bf16.gmra.mxu0 %v5260
    %v6066 = vpop.f32.mrf.mxu0
    %v6067 = vadd.f32 0.0, %v6066
    %v6068 = vpop.f32.mrf.mxu0
    %v6069 = vadd.f32 0.0, %v6068
    %v6070 = vpop.f32.mrf.mxu0
    %v6071 = vpop.f32.mrf.mxu0
    %6072 = vdwg.mxu0
    %6073 = vmatprep.subr.bf16.mxu0 %v5869
    %6074 = vmatpush1.bf16.msra.mxu0 %v5868
    %6075 = vmatprep.subr.bf16.mxu0 %v5865
    %6076 = vmatpush1.bf16.msra.mxu0 %v5864
    %6077 = vmatprep.subr.bf16.mxu0 %v5861
    %6078 = vmatpush1.bf16.msra.mxu0 %v5860
    %6079 = vmatprep.subr.bf16.mxu0 %v5857
    %6080 = vmatpush1.bf16.msra.mxu0 %v5856
    %6081 = vmatprep.subr.bf16.mxu0 %v5853
    %6082 = vmatpush1.bf16.msra.mxu0 %v5852
    %6083 = vmatprep.subr.bf16.mxu0 %v5849
    %6084 = vmatpush1.bf16.msra.mxu0 %v5848
    %6085 = vmatprep.subr.bf16.mxu0 %v5845
    %6086 = vmatpush1.bf16.msra.mxu0 %v5844
    %6087 = vmatprep.subr.bf16.mxu0 %v5841
    %6088 = vmatpush1.bf16.msra.mxu0 %v5840
    %6089 = vmatprep.subr.bf16.mxu0 %v5901
    %6090 = vmatpush2.bf16.msra.mxu0 %v5900
    %6091 = vmatprep.subr.bf16.mxu0 %v5897
    %6092 = vmatpush2.bf16.msra.mxu0 %v5896
    %6093 = vmatprep.subr.bf16.mxu0 %v5893
    %6094 = vmatpush2.bf16.msra.mxu0 %v5892
    %6095 = vmatprep.subr.bf16.mxu0 %v5889
    %6096 = vmatpush2.bf16.msra.mxu0 %v5888
    %6097 = vmatprep.subr.bf16.mxu0 %v5885
    %6098 = vmatpush2.bf16.msra.mxu0 %v5884
    %6099 = vmatprep.subr.bf16.mxu0 %v5881
    %6100 = vmatpush2.bf16.msra.mxu0 %v5880
    %6101 = vmatprep.subr.bf16.mxu0 %v5877
    %6102 = vmatpush2.bf16.msra.mxu0 %v5876
    %6103 = vmatprep.subr.bf16.mxu0 %v5873
    %6104 = vmatpush2.bf16.msra.mxu0 %v5872
    %6105 = vmatprep.mubr.bf16.mxu0 %v5263
    %6106 = vmatmul.mubr.bf16.gmra.mxu0 %v5262
    %v6107 = vpop.f32.mrf.mxu0
    %v6108 = vadd.f32 %v6067, %v6107
    %v6109 = vpop.f32.mrf.mxu0
    %v6110 = vadd.f32 %v6069, %v6109
    %v6111 = vpop.f32.mrf.mxu0
    %v6112 = vpop.f32.mrf.mxu0
    %6113 = vdwg.mxu0
    %6114 = vmatprep.subr.bf16.mxu0 %v5807
    %6115 = vmatpush1.bf16.msra.mxu0 %v5806
    %6116 = vmatprep.subr.bf16.mxu0 %v5803
    %6117 = vmatpush1.bf16.msra.mxu0 %v5802
    %6118 = vmatprep.subr.bf16.mxu0 %v5799
    %6119 = vmatpush1.bf16.msra.mxu0 %v5798
    %6120 = vmatprep.subr.bf16.mxu0 %v5795
    %6121 = vmatpush1.bf16.msra.mxu0 %v5794
    %6122 = vmatprep.subr.bf16.mxu0 %v5791
    %6123 = vmatpush1.bf16.msra.mxu0 %v5790
    %6124 = vmatprep.subr.bf16.mxu0 %v5787
    %6125 = vmatpush1.bf16.msra.mxu0 %v5786
    %6126 = vmatprep.subr.bf16.mxu0 %v5783
    %6127 = vmatpush1.bf16.msra.mxu0 %v5782
    %6128 = vmatprep.subr.bf16.mxu0 %v5779
    %6129 = vmatpush1.bf16.msra.mxu0 %v5778
    %6130 = vmatprep.subr.bf16.mxu0 %v5839
    %6131 = vmatpush2.bf16.msra.mxu0 %v5838
    %6132 = vmatprep.subr.bf16.mxu0 %v5835
    %6133 = vmatpush2.bf16.msra.mxu0 %v5834
    %6134 = vmatprep.subr.bf16.mxu0 %v5831
    %6135 = vmatpush2.bf16.msra.mxu0 %v5830
    %6136 = vmatprep.subr.bf16.mxu0 %v5827
    %6137 = vmatpush2.bf16.msra.mxu0 %v5826
    %6138 = vmatprep.subr.bf16.mxu0 %v5823
    %6139 = vmatpush2.bf16.msra.mxu0 %v5822
    %6140 = vmatprep.subr.bf16.mxu0 %v5819
    %6141 = vmatpush2.bf16.msra.mxu0 %v5818
    %6142 = vmatprep.subr.bf16.mxu0 %v5815
    %6143 = vmatpush2.bf16.msra.mxu0 %v5814
    %6144 = vmatprep.subr.bf16.mxu0 %v5811
    %6145 = vmatpush2.bf16.msra.mxu0 %v5810
    %6146 = vmatprep.mubr.bf16.mxu0 %v5261
    %6147 = vmatmul.mubr.bf16.gmra.mxu0 %v5260
    %v6148 = vpop.f32.mrf.mxu0
    %v6149 = vadd.f32 0.0, %v6148
    %v6150 = vpop.f32.mrf.mxu0
    %v6151 = vadd.f32 0.0, %v6150
    %v6152 = vpop.f32.mrf.mxu0
    %v6153 = vpop.f32.mrf.mxu0
    %6154 = vdwg.mxu0
    %6155 = vmatprep.subr.bf16.mxu0 %v5871
    %6156 = vmatpush1.bf16.msra.mxu0 %v5870
    %6157 = vmatprep.subr.bf16.mxu0 %v5867
    %6158 = vmatpush1.bf16.msra.mxu0 %v5866
    %6159 = vmatprep.subr.bf16.mxu0 %v5863
    %6160 = vmatpush1.bf16.msra.mxu0 %v5862
    %6161 = vmatprep.subr.bf16.mxu0 %v5859
    %6162 = vmatpush1.bf16.msra.mxu0 %v5858
    %6163 = vmatprep.subr.bf16.mxu0 %v5855
    %6164 = vmatpush1.bf16.msra.mxu0 %v5854
    %6165 = vmatprep.subr.bf16.mxu0 %v5851
    %6166 = vmatpush1.bf16.msra.mxu0 %v5850
    %6167 = vmatprep.subr.bf16.mxu0 %v5847
    %6168 = vmatpush1.bf16.msra.mxu0 %v5846
    %6169 = vmatprep.subr.bf16.mxu0 %v5843
    %6170 = vmatpush1.bf16.msra.mxu0 %v5842
    %6171 = vmatprep.subr.bf16.mxu0 %v5903
    %6172 = vmatpush2.bf16.msra.mxu0 %v5902
    %6173 = vmatprep.subr.bf16.mxu0 %v5899
    %6174 = vmatpush2.bf16.msra.mxu0 %v5898
    %6175 = vmatprep.subr.bf16.mxu0 %v5895
    %6176 = vmatpush2.bf16.msra.mxu0 %v5894
    %6177 = vmatprep.subr.bf16.mxu0 %v5891
    %6178 = vmatpush2.bf16.msra.mxu0 %v5890
    %6179 = vmatprep.subr.bf16.mxu0 %v5887
    %6180 = vmatpush2.bf16.msra.mxu0 %v5886
    %6181 = vmatprep.subr.bf16.mxu0 %v5883
    %6182 = vmatpush2.bf16.msra.mxu0 %v5882
    %6183 = vmatprep.subr.bf16.mxu0 %v5879
    %6184 = vmatpush2.bf16.msra.mxu0 %v5878
    %6185 = vmatprep.subr.bf16.mxu0 %v5875
    %6186 = vmatpush2.bf16.msra.mxu0 %v5874
    %6187 = vmatprep.mubr.bf16.mxu0 %v5263
    %6188 = vmatmul.mubr.bf16.gmra.mxu0 %v5262
    %v6189 = vpop.f32.mrf.mxu0
    %v6190 = vadd.f32 %v6149, %v6189
    %v6191 = vpop.f32.mrf.mxu0
    %v6192 = vadd.f32 %v6151, %v6191
    %v6193 = vpop.f32.mrf.mxu0
    %v6194 = vpop.f32.mrf.mxu0
    %6195 = vdwg.mxu0
    %v6196 = vadd.f32 %v5256, %v6108
    %v6197 = vadd.f32 %v5257, %v6110
    %v6198 = vadd.f32 %v5258, %v6190
    %v6199 = vadd.f32 %v5259, %v6192
    %v6200 = vpack.c.bf16 %v1492, %v1492
    %v6201 = vpack.c.bf16 %v1493, %v1493
    %v6202 = vpack.c.bf16 %v1494, %v1494
    %v6203 = vpack.c.bf16 %v1495, %v1495
    %v6204 = vld [vmem:[#allocation9 + $0x1400] sm:$0xff]
    %v6205 = vld [vmem:[#allocation9 + $0x1408] sm:$0xff]
    %v6206 = vld [vmem:[#allocation9 + $0x1410] sm:$0xff]
    %v6207 = vld [vmem:[#allocation9 + $0x1418] sm:$0xff]
    %v6208 = vld [vmem:[#allocation9 + $0x1420] sm:$0xff]
    %v6209 = vld [vmem:[#allocation9 + $0x1428] sm:$0xff]
    %v6210 = vld [vmem:[#allocation9 + $0x1430] sm:$0xff]
    %v6211 = vld [vmem:[#allocation9 + $0x1438] sm:$0xff]
    %v6212 = vld [vmem:[#allocation9 + $0x1440] sm:$0xff]
    %v6213 = vld [vmem:[#allocation9 + $0x1448] sm:$0xff]
    %v6214 = vld [vmem:[#allocation9 + $0x1450] sm:$0xff]
    %v6215 = vld [vmem:[#allocation9 + $0x1458] sm:$0xff]
    %v6216 = vld [vmem:[#allocation9 + $0x1460] sm:$0xff]
    %v6217 = vld [vmem:[#allocation9 + $0x1468] sm:$0xff]
    %v6218 = vld [vmem:[#allocation9 + $0x1470] sm:$0xff]
    %v6219 = vld [vmem:[#allocation9 + $0x1478] sm:$0xff]
    %v6220 = vld [vmem:[#allocation9 + $0x1480] sm:$0xff]
    %v6221 = vld [vmem:[#allocation9 + $0x1488] sm:$0xff]
    %v6222 = vld [vmem:[#allocation9 + $0x1490] sm:$0xff]
    %v6223 = vld [vmem:[#allocation9 + $0x1498] sm:$0xff]
    %v6224 = vld [vmem:[#allocation9 + $0x14a0] sm:$0xff]
    %v6225 = vld [vmem:[#allocation9 + $0x14a8] sm:$0xff]
    %v6226 = vld [vmem:[#allocation9 + $0x14b0] sm:$0xff]
    %v6227 = vld [vmem:[#allocation9 + $0x14b8] sm:$0xff]
    %v6228 = vld [vmem:[#allocation9 + $0x14c0] sm:$0xff]
    %v6229 = vld [vmem:[#allocation9 + $0x14c8] sm:$0xff]
    %v6230 = vld [vmem:[#allocation9 + $0x14d0] sm:$0xff]
    %v6231 = vld [vmem:[#allocation9 + $0x14d8] sm:$0xff]
    %v6232 = vld [vmem:[#allocation9 + $0x14e0] sm:$0xff]
    %v6233 = vld [vmem:[#allocation9 + $0x14e8] sm:$0xff]
    %v6234 = vld [vmem:[#allocation9 + $0x14f0] sm:$0xff]
    %v6235 = vld [vmem:[#allocation9 + $0x14f8] sm:$0xff]
    %v6236 = vld [vmem:[#allocation9 + $0x1500] sm:$0xff]
    %v6237 = vld [vmem:[#allocation9 + $0x1508] sm:$0xff]
    %v6238 = vld [vmem:[#allocation9 + $0x1510] sm:$0xff]
    %v6239 = vld [vmem:[#allocation9 + $0x1518] sm:$0xff]
    %v6240 = vld [vmem:[#allocation9 + $0x1520] sm:$0xff]
    %v6241 = vld [vmem:[#allocation9 + $0x1528] sm:$0xff]
    %v6242 = vld [vmem:[#allocation9 + $0x1530] sm:$0xff]
    %v6243 = vld [vmem:[#allocation9 + $0x1538] sm:$0xff]
    %v6244 = vld [vmem:[#allocation9 + $0x1540] sm:$0xff]
    %v6245 = vld [vmem:[#allocation9 + $0x1548] sm:$0xff]
    %v6246 = vld [vmem:[#allocation9 + $0x1550] sm:$0xff]
    %v6247 = vld [vmem:[#allocation9 + $0x1558] sm:$0xff]
    %v6248 = vld [vmem:[#allocation9 + $0x1560] sm:$0xff]
    %v6249 = vld [vmem:[#allocation9 + $0x1568] sm:$0xff]
    %v6250 = vld [vmem:[#allocation9 + $0x1570] sm:$0xff]
    %v6251 = vld [vmem:[#allocation9 + $0x1578] sm:$0xff]
    %v6252 = vld [vmem:[#allocation9 + $0x1580] sm:$0xff]
    %v6253 = vld [vmem:[#allocation9 + $0x1588] sm:$0xff]
    %v6254 = vld [vmem:[#allocation9 + $0x1590] sm:$0xff]
    %v6255 = vld [vmem:[#allocation9 + $0x1598] sm:$0xff]
    %v6256 = vld [vmem:[#allocation9 + $0x15a0] sm:$0xff]
    %v6257 = vld [vmem:[#allocation9 + $0x15a8] sm:$0xff]
    %v6258 = vld [vmem:[#allocation9 + $0x15b0] sm:$0xff]
    %v6259 = vld [vmem:[#allocation9 + $0x15b8] sm:$0xff]
    %v6260 = vld [vmem:[#allocation9 + $0x15c0] sm:$0xff]
    %v6261 = vld [vmem:[#allocation9 + $0x15c8] sm:$0xff]
    %v6262 = vld [vmem:[#allocation9 + $0x15d0] sm:$0xff]
    %v6263 = vld [vmem:[#allocation9 + $0x15d8] sm:$0xff]
    %v6264 = vld [vmem:[#allocation9 + $0x15e0] sm:$0xff]
    %v6265 = vld [vmem:[#allocation9 + $0x15e8] sm:$0xff]
    %v6266 = vld [vmem:[#allocation9 + $0x15f0] sm:$0xff]
    %v6267 = vld [vmem:[#allocation9 + $0x15f8] sm:$0xff]
    %v6268 = vld [vmem:[#allocation9 + $0x1600] sm:$0xff]
    %v6269 = vld [vmem:[#allocation9 + $0x1608] sm:$0xff]
    %v6270 = vld [vmem:[#allocation9 + $0x1610] sm:$0xff]
    %v6271 = vld [vmem:[#allocation9 + $0x1618] sm:$0xff]
    %v6272 = vld [vmem:[#allocation9 + $0x1620] sm:$0xff]
    %v6273 = vld [vmem:[#allocation9 + $0x1628] sm:$0xff]
    %v6274 = vld [vmem:[#allocation9 + $0x1630] sm:$0xff]
    %v6275 = vld [vmem:[#allocation9 + $0x1638] sm:$0xff]
    %v6276 = vld [vmem:[#allocation9 + $0x1640] sm:$0xff]
    %v6277 = vld [vmem:[#allocation9 + $0x1648] sm:$0xff]
    %v6278 = vld [vmem:[#allocation9 + $0x1650] sm:$0xff]
    %v6279 = vld [vmem:[#allocation9 + $0x1658] sm:$0xff]
    %v6280 = vld [vmem:[#allocation9 + $0x1660] sm:$0xff]
    %v6281 = vld [vmem:[#allocation9 + $0x1668] sm:$0xff]
    %v6282 = vld [vmem:[#allocation9 + $0x1670] sm:$0xff]
    %v6283 = vld [vmem:[#allocation9 + $0x1678] sm:$0xff]
    %v6284 = vld [vmem:[#allocation9 + $0x1680] sm:$0xff]
    %v6285 = vld [vmem:[#allocation9 + $0x1688] sm:$0xff]
    %v6286 = vld [vmem:[#allocation9 + $0x1690] sm:$0xff]
    %v6287 = vld [vmem:[#allocation9 + $0x1698] sm:$0xff]
    %v6288 = vld [vmem:[#allocation9 + $0x16a0] sm:$0xff]
    %v6289 = vld [vmem:[#allocation9 + $0x16a8] sm:$0xff]
    %v6290 = vld [vmem:[#allocation9 + $0x16b0] sm:$0xff]
    %v6291 = vld [vmem:[#allocation9 + $0x16b8] sm:$0xff]
    %v6292 = vld [vmem:[#allocation9 + $0x16c0] sm:$0xff]
    %v6293 = vld [vmem:[#allocation9 + $0x16c8] sm:$0xff]
    %v6294 = vld [vmem:[#allocation9 + $0x16d0] sm:$0xff]
    %v6295 = vld [vmem:[#allocation9 + $0x16d8] sm:$0xff]
    %v6296 = vld [vmem:[#allocation9 + $0x16e0] sm:$0xff]
    %v6297 = vld [vmem:[#allocation9 + $0x16e8] sm:$0xff]
    %v6298 = vld [vmem:[#allocation9 + $0x16f0] sm:$0xff]
    %v6299 = vld [vmem:[#allocation9 + $0x16f8] sm:$0xff]
    %v6300 = vld [vmem:[#allocation9 + $0x1700] sm:$0xff]
    %v6301 = vld [vmem:[#allocation9 + $0x1708] sm:$0xff]
    %v6302 = vld [vmem:[#allocation9 + $0x1710] sm:$0xff]
    %v6303 = vld [vmem:[#allocation9 + $0x1718] sm:$0xff]
    %v6304 = vld [vmem:[#allocation9 + $0x1720] sm:$0xff]
    %v6305 = vld [vmem:[#allocation9 + $0x1728] sm:$0xff]
    %v6306 = vld [vmem:[#allocation9 + $0x1730] sm:$0xff]
    %v6307 = vld [vmem:[#allocation9 + $0x1738] sm:$0xff]
    %v6308 = vld [vmem:[#allocation9 + $0x1740] sm:$0xff]
    %v6309 = vld [vmem:[#allocation9 + $0x1748] sm:$0xff]
    %v6310 = vld [vmem:[#allocation9 + $0x1750] sm:$0xff]
    %v6311 = vld [vmem:[#allocation9 + $0x1758] sm:$0xff]
    %v6312 = vld [vmem:[#allocation9 + $0x1760] sm:$0xff]
    %v6313 = vld [vmem:[#allocation9 + $0x1768] sm:$0xff]
    %v6314 = vld [vmem:[#allocation9 + $0x1770] sm:$0xff]
    %v6315 = vld [vmem:[#allocation9 + $0x1778] sm:$0xff]
    %v6316 = vld [vmem:[#allocation9 + $0x1780] sm:$0xff]
    %v6317 = vld [vmem:[#allocation9 + $0x1788] sm:$0xff]
    %v6318 = vld [vmem:[#allocation9 + $0x1790] sm:$0xff]
    %v6319 = vld [vmem:[#allocation9 + $0x1798] sm:$0xff]
    %v6320 = vld [vmem:[#allocation9 + $0x17a0] sm:$0xff]
    %v6321 = vld [vmem:[#allocation9 + $0x17a8] sm:$0xff]
    %v6322 = vld [vmem:[#allocation9 + $0x17b0] sm:$0xff]
    %v6323 = vld [vmem:[#allocation9 + $0x17b8] sm:$0xff]
    %v6324 = vld [vmem:[#allocation9 + $0x17c0] sm:$0xff]
    %v6325 = vld [vmem:[#allocation9 + $0x17c8] sm:$0xff]
    %v6326 = vld [vmem:[#allocation9 + $0x17d0] sm:$0xff]
    %v6327 = vld [vmem:[#allocation9 + $0x17d8] sm:$0xff]
    %v6328 = vld [vmem:[#allocation9 + $0x17e0] sm:$0xff]
    %v6329 = vld [vmem:[#allocation9 + $0x17e8] sm:$0xff]
    %v6330 = vld [vmem:[#allocation9 + $0x17f0] sm:$0xff]
    %v6331 = vld [vmem:[#allocation9 + $0x17f8] sm:$0xff]
    %v6460 = vunpack.c.l.b16 %v6204
    %v6461 = vunpack.c.h.b16 %v6204
    %v6462 = vunpack.c.l.b16 %v6205
    %v6463 = vunpack.c.h.b16 %v6205
    %v6464 = vunpack.c.l.b16 %v6206
    %v6465 = vunpack.c.h.b16 %v6206
    %v6466 = vunpack.c.l.b16 %v6207
    %v6467 = vunpack.c.h.b16 %v6207
    %v6468 = vunpack.c.l.b16 %v6208
    %v6469 = vunpack.c.h.b16 %v6208
    %v6470 = vunpack.c.l.b16 %v6209
    %v6471 = vunpack.c.h.b16 %v6209
    %v6472 = vunpack.c.l.b16 %v6210
    %v6473 = vunpack.c.h.b16 %v6210
    %v6474 = vunpack.c.l.b16 %v6211
    %v6475 = vunpack.c.h.b16 %v6211
    %v6476 = vunpack.c.l.b16 %v6212
    %v6477 = vunpack.c.h.b16 %v6212
    %v6478 = vunpack.c.l.b16 %v6213
    %v6479 = vunpack.c.h.b16 %v6213
    %v6480 = vunpack.c.l.b16 %v6214
    %v6481 = vunpack.c.h.b16 %v6214
    %v6482 = vunpack.c.l.b16 %v6215
    %v6483 = vunpack.c.h.b16 %v6215
    %v6484 = vunpack.c.l.b16 %v6216
    %v6485 = vunpack.c.h.b16 %v6216
    %v6486 = vunpack.c.l.b16 %v6217
    %v6487 = vunpack.c.h.b16 %v6217
    %v6488 = vunpack.c.l.b16 %v6218
    %v6489 = vunpack.c.h.b16 %v6218
    %v6490 = vunpack.c.l.b16 %v6219
    %v6491 = vunpack.c.h.b16 %v6219
    %v6492 = vunpack.c.l.b16 %v6220
    %v6493 = vunpack.c.h.b16 %v6220
    %v6494 = vunpack.c.l.b16 %v6221
    %v6495 = vunpack.c.h.b16 %v6221
    %v6496 = vunpack.c.l.b16 %v6222
    %v6497 = vunpack.c.h.b16 %v6222
    %v6498 = vunpack.c.l.b16 %v6223
    %v6499 = vunpack.c.h.b16 %v6223
    %v6500 = vunpack.c.l.b16 %v6224
    %v6501 = vunpack.c.h.b16 %v6224
    %v6502 = vunpack.c.l.b16 %v6225
    %v6503 = vunpack.c.h.b16 %v6225
    %v6504 = vunpack.c.l.b16 %v6226
    %v6505 = vunpack.c.h.b16 %v6226
    %v6506 = vunpack.c.l.b16 %v6227
    %v6507 = vunpack.c.h.b16 %v6227
    %v6508 = vunpack.c.l.b16 %v6228
    %v6509 = vunpack.c.h.b16 %v6228
    %v6510 = vunpack.c.l.b16 %v6229
    %v6511 = vunpack.c.h.b16 %v6229
    %v6512 = vunpack.c.l.b16 %v6230
    %v6513 = vunpack.c.h.b16 %v6230
    %v6514 = vunpack.c.l.b16 %v6231
    %v6515 = vunpack.c.h.b16 %v6231
    %v6516 = vunpack.c.l.b16 %v6232
    %v6517 = vunpack.c.h.b16 %v6232
    %v6518 = vunpack.c.l.b16 %v6233
    %v6519 = vunpack.c.h.b16 %v6233
    %v6520 = vunpack.c.l.b16 %v6234
    %v6521 = vunpack.c.h.b16 %v6234
    %v6522 = vunpack.c.l.b16 %v6235
    %v6523 = vunpack.c.h.b16 %v6235
    %v6524 = vunpack.c.l.b16 %v6236
    %v6525 = vunpack.c.h.b16 %v6236
    %v6526 = vunpack.c.l.b16 %v6237
    %v6527 = vunpack.c.h.b16 %v6237
    %v6528 = vunpack.c.l.b16 %v6238
    %v6529 = vunpack.c.h.b16 %v6238
    %v6530 = vunpack.c.l.b16 %v6239
    %v6531 = vunpack.c.h.b16 %v6239
    %v6532 = vunpack.c.l.b16 %v6240
    %v6533 = vunpack.c.h.b16 %v6240
    %v6534 = vunpack.c.l.b16 %v6241
    %v6535 = vunpack.c.h.b16 %v6241
    %v6536 = vunpack.c.l.b16 %v6242
    %v6537 = vunpack.c.h.b16 %v6242
    %v6538 = vunpack.c.l.b16 %v6243
    %v6539 = vunpack.c.h.b16 %v6243
    %v6540 = vunpack.c.l.b16 %v6244
    %v6541 = vunpack.c.h.b16 %v6244
    %v6542 = vunpack.c.l.b16 %v6245
    %v6543 = vunpack.c.h.b16 %v6245
    %v6544 = vunpack.c.l.b16 %v6246
    %v6545 = vunpack.c.h.b16 %v6246
    %v6546 = vunpack.c.l.b16 %v6247
    %v6547 = vunpack.c.h.b16 %v6247
    %v6548 = vunpack.c.l.b16 %v6248
    %v6549 = vunpack.c.h.b16 %v6248
    %v6550 = vunpack.c.l.b16 %v6249
    %v6551 = vunpack.c.h.b16 %v6249
    %v6552 = vunpack.c.l.b16 %v6250
    %v6553 = vunpack.c.h.b16 %v6250
    %v6554 = vunpack.c.l.b16 %v6251
    %v6555 = vunpack.c.h.b16 %v6251
    %v6556 = vunpack.c.l.b16 %v6252
    %v6557 = vunpack.c.h.b16 %v6252
    %v6558 = vunpack.c.l.b16 %v6253
    %v6559 = vunpack.c.h.b16 %v6253
    %v6560 = vunpack.c.l.b16 %v6254
    %v6561 = vunpack.c.h.b16 %v6254
    %v6562 = vunpack.c.l.b16 %v6255
    %v6563 = vunpack.c.h.b16 %v6255
    %v6564 = vunpack.c.l.b16 %v6256
    %v6565 = vunpack.c.h.b16 %v6256
    %v6566 = vunpack.c.l.b16 %v6257
    %v6567 = vunpack.c.h.b16 %v6257
    %v6568 = vunpack.c.l.b16 %v6258
    %v6569 = vunpack.c.h.b16 %v6258
    %v6570 = vunpack.c.l.b16 %v6259
    %v6571 = vunpack.c.h.b16 %v6259
    %v6572 = vunpack.c.l.b16 %v6260
    %v6573 = vunpack.c.h.b16 %v6260
    %v6574 = vunpack.c.l.b16 %v6261
    %v6575 = vunpack.c.h.b16 %v6261
    %v6576 = vunpack.c.l.b16 %v6262
    %v6577 = vunpack.c.h.b16 %v6262
    %v6578 = vunpack.c.l.b16 %v6263
    %v6579 = vunpack.c.h.b16 %v6263
    %v6580 = vunpack.c.l.b16 %v6264
    %v6581 = vunpack.c.h.b16 %v6264
    %v6582 = vunpack.c.l.b16 %v6265
    %v6583 = vunpack.c.h.b16 %v6265
    %v6584 = vunpack.c.l.b16 %v6266
    %v6585 = vunpack.c.h.b16 %v6266
    %v6586 = vunpack.c.l.b16 %v6267
    %v6587 = vunpack.c.h.b16 %v6267
    %v6588 = vunpack.c.l.b16 %v6268
    %v6589 = vunpack.c.h.b16 %v6268
    %v6590 = vunpack.c.l.b16 %v6269
    %v6591 = vunpack.c.h.b16 %v6269
    %v6592 = vunpack.c.l.b16 %v6270
    %v6593 = vunpack.c.h.b16 %v6270
    %v6594 = vunpack.c.l.b16 %v6271
    %v6595 = vunpack.c.h.b16 %v6271
    %v6596 = vunpack.c.l.b16 %v6272
    %v6597 = vunpack.c.h.b16 %v6272
    %v6598 = vunpack.c.l.b16 %v6273
    %v6599 = vunpack.c.h.b16 %v6273
    %v6600 = vunpack.c.l.b16 %v6274
    %v6601 = vunpack.c.h.b16 %v6274
    %v6602 = vunpack.c.l.b16 %v6275
    %v6603 = vunpack.c.h.b16 %v6275
    %v6604 = vunpack.c.l.b16 %v6276
    %v6605 = vunpack.c.h.b16 %v6276
    %v6606 = vunpack.c.l.b16 %v6277
    %v6607 = vunpack.c.h.b16 %v6277
    %v6608 = vunpack.c.l.b16 %v6278
    %v6609 = vunpack.c.h.b16 %v6278
    %v6610 = vunpack.c.l.b16 %v6279
    %v6611 = vunpack.c.h.b16 %v6279
    %v6612 = vunpack.c.l.b16 %v6280
    %v6613 = vunpack.c.h.b16 %v6280
    %v6614 = vunpack.c.l.b16 %v6281
    %v6615 = vunpack.c.h.b16 %v6281
    %v6616 = vunpack.c.l.b16 %v6282
    %v6617 = vunpack.c.h.b16 %v6282
    %v6618 = vunpack.c.l.b16 %v6283
    %v6619 = vunpack.c.h.b16 %v6283
    %v6620 = vunpack.c.l.b16 %v6284
    %v6621 = vunpack.c.h.b16 %v6284
    %v6622 = vunpack.c.l.b16 %v6285
    %v6623 = vunpack.c.h.b16 %v6285
    %v6624 = vunpack.c.l.b16 %v6286
    %v6625 = vunpack.c.h.b16 %v6286
    %v6626 = vunpack.c.l.b16 %v6287
    %v6627 = vunpack.c.h.b16 %v6287
    %v6628 = vunpack.c.l.b16 %v6288
    %v6629 = vunpack.c.h.b16 %v6288
    %v6630 = vunpack.c.l.b16 %v6289
    %v6631 = vunpack.c.h.b16 %v6289
    %v6632 = vunpack.c.l.b16 %v6290
    %v6633 = vunpack.c.h.b16 %v6290
    %v6634 = vunpack.c.l.b16 %v6291
    %v6635 = vunpack.c.h.b16 %v6291
    %v6636 = vunpack.c.l.b16 %v6292
    %v6637 = vunpack.c.h.b16 %v6292
    %v6638 = vunpack.c.l.b16 %v6293
    %v6639 = vunpack.c.h.b16 %v6293
    %v6640 = vunpack.c.l.b16 %v6294
    %v6641 = vunpack.c.h.b16 %v6294
    %v6642 = vunpack.c.l.b16 %v6295
    %v6643 = vunpack.c.h.b16 %v6295
    %v6644 = vunpack.c.l.b16 %v6296
    %v6645 = vunpack.c.h.b16 %v6296
    %v6646 = vunpack.c.l.b16 %v6297
    %v6647 = vunpack.c.h.b16 %v6297
    %v6648 = vunpack.c.l.b16 %v6298
    %v6649 = vunpack.c.h.b16 %v6298
    %v6650 = vunpack.c.l.b16 %v6299
    %v6651 = vunpack.c.h.b16 %v6299
    %v6652 = vunpack.c.l.b16 %v6300
    %v6653 = vunpack.c.h.b16 %v6300
    %v6654 = vunpack.c.l.b16 %v6301
    %v6655 = vunpack.c.h.b16 %v6301
    %v6656 = vunpack.c.l.b16 %v6302
    %v6657 = vunpack.c.h.b16 %v6302
    %v6658 = vunpack.c.l.b16 %v6303
    %v6659 = vunpack.c.h.b16 %v6303
    %v6660 = vunpack.c.l.b16 %v6304
    %v6661 = vunpack.c.h.b16 %v6304
    %v6662 = vunpack.c.l.b16 %v6305
    %v6663 = vunpack.c.h.b16 %v6305
    %v6664 = vunpack.c.l.b16 %v6306
    %v6665 = vunpack.c.h.b16 %v6306
    %v6666 = vunpack.c.l.b16 %v6307
    %v6667 = vunpack.c.h.b16 %v6307
    %v6668 = vunpack.c.l.b16 %v6308
    %v6669 = vunpack.c.h.b16 %v6308
    %v6670 = vunpack.c.l.b16 %v6309
    %v6671 = vunpack.c.h.b16 %v6309
    %v6672 = vunpack.c.l.b16 %v6310
    %v6673 = vunpack.c.h.b16 %v6310
    %v6674 = vunpack.c.l.b16 %v6311
    %v6675 = vunpack.c.h.b16 %v6311
    %v6676 = vunpack.c.l.b16 %v6312
    %v6677 = vunpack.c.h.b16 %v6312
    %v6678 = vunpack.c.l.b16 %v6313
    %v6679 = vunpack.c.h.b16 %v6313
    %v6680 = vunpack.c.l.b16 %v6314
    %v6681 = vunpack.c.h.b16 %v6314
    %v6682 = vunpack.c.l.b16 %v6315
    %v6683 = vunpack.c.h.b16 %v6315
    %v6684 = vunpack.c.l.b16 %v6316
    %v6685 = vunpack.c.h.b16 %v6316
    %v6686 = vunpack.c.l.b16 %v6317
    %v6687 = vunpack.c.h.b16 %v6317
    %v6688 = vunpack.c.l.b16 %v6318
    %v6689 = vunpack.c.h.b16 %v6318
    %v6690 = vunpack.c.l.b16 %v6319
    %v6691 = vunpack.c.h.b16 %v6319
    %v6692 = vunpack.c.l.b16 %v6320
    %v6693 = vunpack.c.h.b16 %v6320
    %v6694 = vunpack.c.l.b16 %v6321
    %v6695 = vunpack.c.h.b16 %v6321
    %v6696 = vunpack.c.l.b16 %v6322
    %v6697 = vunpack.c.h.b16 %v6322
    %v6698 = vunpack.c.l.b16 %v6323
    %v6699 = vunpack.c.h.b16 %v6323
    %v6700 = vunpack.c.l.b16 %v6324
    %v6701 = vunpack.c.h.b16 %v6324
    %v6702 = vunpack.c.l.b16 %v6325
    %v6703 = vunpack.c.h.b16 %v6325
    %v6704 = vunpack.c.l.b16 %v6326
    %v6705 = vunpack.c.h.b16 %v6326
    %v6706 = vunpack.c.l.b16 %v6327
    %v6707 = vunpack.c.h.b16 %v6327
    %v6708 = vunpack.c.l.b16 %v6328
    %v6709 = vunpack.c.h.b16 %v6328
    %v6710 = vunpack.c.l.b16 %v6329
    %v6711 = vunpack.c.h.b16 %v6329
    %v6712 = vunpack.c.l.b16 %v6330
    %v6713 = vunpack.c.h.b16 %v6330
    %v6714 = vunpack.c.l.b16 %v6331
    %v6715 = vunpack.c.h.b16 %v6331
    %v6716 = vpack.c.b16 %v6464, %v6460
    %v6717 = vpack.c.b16 %v6465, %v6461
    %v6718 = vpack.c.b16 %v6466, %v6462
    %v6719 = vpack.c.b16 %v6467, %v6463
    %v6720 = vpack.c.b16 %v6472, %v6468
    %v6721 = vpack.c.b16 %v6473, %v6469
    %v6722 = vpack.c.b16 %v6474, %v6470
    %v6723 = vpack.c.b16 %v6475, %v6471
    %v6724 = vpack.c.b16 %v6480, %v6476
    %v6725 = vpack.c.b16 %v6481, %v6477
    %v6726 = vpack.c.b16 %v6482, %v6478
    %v6727 = vpack.c.b16 %v6483, %v6479
    %v6728 = vpack.c.b16 %v6488, %v6484
    %v6729 = vpack.c.b16 %v6489, %v6485
    %v6730 = vpack.c.b16 %v6490, %v6486
    %v6731 = vpack.c.b16 %v6491, %v6487
    %v6732 = vpack.c.b16 %v6496, %v6492
    %v6733 = vpack.c.b16 %v6497, %v6493
    %v6734 = vpack.c.b16 %v6498, %v6494
    %v6735 = vpack.c.b16 %v6499, %v6495
    %v6736 = vpack.c.b16 %v6504, %v6500
    %v6737 = vpack.c.b16 %v6505, %v6501
    %v6738 = vpack.c.b16 %v6506, %v6502
    %v6739 = vpack.c.b16 %v6507, %v6503
    %v6740 = vpack.c.b16 %v6512, %v6508
    %v6741 = vpack.c.b16 %v6513, %v6509
    %v6742 = vpack.c.b16 %v6514, %v6510
    %v6743 = vpack.c.b16 %v6515, %v6511
    %v6744 = vpack.c.b16 %v6520, %v6516
    %v6745 = vpack.c.b16 %v6521, %v6517
    %v6746 = vpack.c.b16 %v6522, %v6518
    %v6747 = vpack.c.b16 %v6523, %v6519
    %v6748 = vpack.c.b16 %v6528, %v6524
    %v6749 = vpack.c.b16 %v6529, %v6525
    %v6750 = vpack.c.b16 %v6530, %v6526
    %v6751 = vpack.c.b16 %v6531, %v6527
    %v6752 = vpack.c.b16 %v6536, %v6532
    %v6753 = vpack.c.b16 %v6537, %v6533
    %v6754 = vpack.c.b16 %v6538, %v6534
    %v6755 = vpack.c.b16 %v6539, %v6535
    %v6756 = vpack.c.b16 %v6544, %v6540
    %v6757 = vpack.c.b16 %v6545, %v6541
    %v6758 = vpack.c.b16 %v6546, %v6542
    %v6759 = vpack.c.b16 %v6547, %v6543
    %v6760 = vpack.c.b16 %v6552, %v6548
    %v6761 = vpack.c.b16 %v6553, %v6549
    %v6762 = vpack.c.b16 %v6554, %v6550
    %v6763 = vpack.c.b16 %v6555, %v6551
    %v6764 = vpack.c.b16 %v6560, %v6556
    %v6765 = vpack.c.b16 %v6561, %v6557
    %v6766 = vpack.c.b16 %v6562, %v6558
    %v6767 = vpack.c.b16 %v6563, %v6559
    %v6768 = vpack.c.b16 %v6568, %v6564
    %v6769 = vpack.c.b16 %v6569, %v6565
    %v6770 = vpack.c.b16 %v6570, %v6566
    %v6771 = vpack.c.b16 %v6571, %v6567
    %v6772 = vpack.c.b16 %v6576, %v6572
    %v6773 = vpack.c.b16 %v6577, %v6573
    %v6774 = vpack.c.b16 %v6578, %v6574
    %v6775 = vpack.c.b16 %v6579, %v6575
    %v6776 = vpack.c.b16 %v6584, %v6580
    %v6777 = vpack.c.b16 %v6585, %v6581
    %v6778 = vpack.c.b16 %v6586, %v6582
    %v6779 = vpack.c.b16 %v6587, %v6583
    %v6780 = vpack.c.b16 %v6592, %v6588
    %v6781 = vpack.c.b16 %v6593, %v6589
    %v6782 = vpack.c.b16 %v6594, %v6590
    %v6783 = vpack.c.b16 %v6595, %v6591
    %v6784 = vpack.c.b16 %v6600, %v6596
    %v6785 = vpack.c.b16 %v6601, %v6597
    %v6786 = vpack.c.b16 %v6602, %v6598
    %v6787 = vpack.c.b16 %v6603, %v6599
    %v6788 = vpack.c.b16 %v6608, %v6604
    %v6789 = vpack.c.b16 %v6609, %v6605
    %v6790 = vpack.c.b16 %v6610, %v6606
    %v6791 = vpack.c.b16 %v6611, %v6607
    %v6792 = vpack.c.b16 %v6616, %v6612
    %v6793 = vpack.c.b16 %v6617, %v6613
    %v6794 = vpack.c.b16 %v6618, %v6614
    %v6795 = vpack.c.b16 %v6619, %v6615
    %v6796 = vpack.c.b16 %v6624, %v6620
    %v6797 = vpack.c.b16 %v6625, %v6621
    %v6798 = vpack.c.b16 %v6626, %v6622
    %v6799 = vpack.c.b16 %v6627, %v6623
    %v6800 = vpack.c.b16 %v6632, %v6628
    %v6801 = vpack.c.b16 %v6633, %v6629
    %v6802 = vpack.c.b16 %v6634, %v6630
    %v6803 = vpack.c.b16 %v6635, %v6631
    %v6804 = vpack.c.b16 %v6640, %v6636
    %v6805 = vpack.c.b16 %v6641, %v6637
    %v6806 = vpack.c.b16 %v6642, %v6638
    %v6807 = vpack.c.b16 %v6643, %v6639
    %v6808 = vpack.c.b16 %v6648, %v6644
    %v6809 = vpack.c.b16 %v6649, %v6645
    %v6810 = vpack.c.b16 %v6650, %v6646
    %v6811 = vpack.c.b16 %v6651, %v6647
    %v6812 = vpack.c.b16 %v6656, %v6652
    %v6813 = vpack.c.b16 %v6657, %v6653
    %v6814 = vpack.c.b16 %v6658, %v6654
    %v6815 = vpack.c.b16 %v6659, %v6655
    %v6816 = vpack.c.b16 %v6664, %v6660
    %v6817 = vpack.c.b16 %v6665, %v6661
    %v6818 = vpack.c.b16 %v6666, %v6662
    %v6819 = vpack.c.b16 %v6667, %v6663
    %v6820 = vpack.c.b16 %v6672, %v6668
    %v6821 = vpack.c.b16 %v6673, %v6669
    %v6822 = vpack.c.b16 %v6674, %v6670
    %v6823 = vpack.c.b16 %v6675, %v6671
    %v6824 = vpack.c.b16 %v6680, %v6676
    %v6825 = vpack.c.b16 %v6681, %v6677
    %v6826 = vpack.c.b16 %v6682, %v6678
    %v6827 = vpack.c.b16 %v6683, %v6679
    %v6828 = vpack.c.b16 %v6688, %v6684
    %v6829 = vpack.c.b16 %v6689, %v6685
    %v6830 = vpack.c.b16 %v6690, %v6686
    %v6831 = vpack.c.b16 %v6691, %v6687
    %v6832 = vpack.c.b16 %v6696, %v6692
    %v6833 = vpack.c.b16 %v6697, %v6693
    %v6834 = vpack.c.b16 %v6698, %v6694
    %v6835 = vpack.c.b16 %v6699, %v6695
    %v6836 = vpack.c.b16 %v6704, %v6700
    %v6837 = vpack.c.b16 %v6705, %v6701
    %v6838 = vpack.c.b16 %v6706, %v6702
    %v6839 = vpack.c.b16 %v6707, %v6703
    %v6840 = vpack.c.b16 %v6712, %v6708
    %v6841 = vpack.c.b16 %v6713, %v6709
    %v6842 = vpack.c.b16 %v6714, %v6710
    %v6843 = vpack.c.b16 %v6715, %v6711
    %6972 = vmatprep.subr.bf16.mxu0 %v6745
    %6973 = vmatpush1.bf16.msra.mxu0 %v6744
    %6974 = vmatprep.subr.bf16.mxu0 %v6741
    %6975 = vmatpush1.bf16.msra.mxu0 %v6740
    %6976 = vmatprep.subr.bf16.mxu0 %v6737
    %6977 = vmatpush1.bf16.msra.mxu0 %v6736
    %6978 = vmatprep.subr.bf16.mxu0 %v6733
    %6979 = vmatpush1.bf16.msra.mxu0 %v6732
    %6980 = vmatprep.subr.bf16.mxu0 %v6729
    %6981 = vmatpush1.bf16.msra.mxu0 %v6728
    %6982 = vmatprep.subr.bf16.mxu0 %v6725
    %6983 = vmatpush1.bf16.msra.mxu0 %v6724
    %6984 = vmatprep.subr.bf16.mxu0 %v6721
    %6985 = vmatpush1.bf16.msra.mxu0 %v6720
    %6986 = vmatprep.subr.bf16.mxu0 %v6717
    %6987 = vmatpush1.bf16.msra.mxu0 %v6716
    %6988 = vmatprep.subr.bf16.mxu0 %v6777
    %6989 = vmatpush2.bf16.msra.mxu0 %v6776
    %6990 = vmatprep.subr.bf16.mxu0 %v6773
    %6991 = vmatpush2.bf16.msra.mxu0 %v6772
    %6992 = vmatprep.subr.bf16.mxu0 %v6769
    %6993 = vmatpush2.bf16.msra.mxu0 %v6768
    %6994 = vmatprep.subr.bf16.mxu0 %v6765
    %6995 = vmatpush2.bf16.msra.mxu0 %v6764
    %6996 = vmatprep.subr.bf16.mxu0 %v6761
    %6997 = vmatpush2.bf16.msra.mxu0 %v6760
    %6998 = vmatprep.subr.bf16.mxu0 %v6757
    %6999 = vmatpush2.bf16.msra.mxu0 %v6756
    %7000 = vmatprep.subr.bf16.mxu0 %v6753
    %7001 = vmatpush2.bf16.msra.mxu0 %v6752
    %7002 = vmatprep.subr.bf16.mxu0 %v6749
    %7003 = vmatpush2.bf16.msra.mxu0 %v6748
    %7004 = vmatprep.mubr.bf16.mxu0 %v6201
    %7005 = vmatmul.mubr.bf16.gmra.mxu0 %v6200
    %v7006 = vpop.f32.mrf.mxu0
    %v7007 = vadd.f32 0.0, %v7006
    %v7008 = vpop.f32.mrf.mxu0
    %v7009 = vadd.f32 0.0, %v7008
    %v7010 = vpop.f32.mrf.mxu0
    %v7011 = vpop.f32.mrf.mxu0
    %7012 = vdwg.mxu0
    %7013 = vmatprep.subr.bf16.mxu0 %v6809
    %7014 = vmatpush1.bf16.msra.mxu0 %v6808
    %7015 = vmatprep.subr.bf16.mxu0 %v6805
    %7016 = vmatpush1.bf16.msra.mxu0 %v6804
    %7017 = vmatprep.subr.bf16.mxu0 %v6801
    %7018 = vmatpush1.bf16.msra.mxu0 %v6800
    %7019 = vmatprep.subr.bf16.mxu0 %v6797
    %7020 = vmatpush1.bf16.msra.mxu0 %v6796
    %7021 = vmatprep.subr.bf16.mxu0 %v6793
    %7022 = vmatpush1.bf16.msra.mxu0 %v6792
    %7023 = vmatprep.subr.bf16.mxu0 %v6789
    %7024 = vmatpush1.bf16.msra.mxu0 %v6788
    %7025 = vmatprep.subr.bf16.mxu0 %v6785
    %7026 = vmatpush1.bf16.msra.mxu0 %v6784
    %7027 = vmatprep.subr.bf16.mxu0 %v6781
    %7028 = vmatpush1.bf16.msra.mxu0 %v6780
    %7029 = vmatprep.subr.bf16.mxu0 %v6841
    %7030 = vmatpush2.bf16.msra.mxu0 %v6840
    %7031 = vmatprep.subr.bf16.mxu0 %v6837
    %7032 = vmatpush2.bf16.msra.mxu0 %v6836
    %7033 = vmatprep.subr.bf16.mxu0 %v6833
    %7034 = vmatpush2.bf16.msra.mxu0 %v6832
    %7035 = vmatprep.subr.bf16.mxu0 %v6829
    %7036 = vmatpush2.bf16.msra.mxu0 %v6828
    %7037 = vmatprep.subr.bf16.mxu0 %v6825
    %7038 = vmatpush2.bf16.msra.mxu0 %v6824
    %7039 = vmatprep.subr.bf16.mxu0 %v6821
    %7040 = vmatpush2.bf16.msra.mxu0 %v6820
    %7041 = vmatprep.subr.bf16.mxu0 %v6817
    %7042 = vmatpush2.bf16.msra.mxu0 %v6816
    %7043 = vmatprep.subr.bf16.mxu0 %v6813
    %7044 = vmatpush2.bf16.msra.mxu0 %v6812
    %7045 = vmatprep.mubr.bf16.mxu0 %v6203
    %7046 = vmatmul.mubr.bf16.gmra.mxu0 %v6202
    %v7047 = vpop.f32.mrf.mxu0
    %v7048 = vadd.f32 %v7007, %v7047
    %v7049 = vpop.f32.mrf.mxu0
    %v7050 = vadd.f32 %v7009, %v7049
    %v7051 = vpop.f32.mrf.mxu0
    %v7052 = vpop.f32.mrf.mxu0
    %7053 = vdwg.mxu0
    %7054 = vmatprep.subr.bf16.mxu0 %v6747
    %7055 = vmatpush1.bf16.msra.mxu0 %v6746
    %7056 = vmatprep.subr.bf16.mxu0 %v6743
    %7057 = vmatpush1.bf16.msra.mxu0 %v6742
    %7058 = vmatprep.subr.bf16.mxu0 %v6739
    %7059 = vmatpush1.bf16.msra.mxu0 %v6738
    %7060 = vmatprep.subr.bf16.mxu0 %v6735
    %7061 = vmatpush1.bf16.msra.mxu0 %v6734
    %7062 = vmatprep.subr.bf16.mxu0 %v6731
    %7063 = vmatpush1.bf16.msra.mxu0 %v6730
    %7064 = vmatprep.subr.bf16.mxu0 %v6727
    %7065 = vmatpush1.bf16.msra.mxu0 %v6726
    %7066 = vmatprep.subr.bf16.mxu0 %v6723
    %7067 = vmatpush1.bf16.msra.mxu0 %v6722
    %7068 = vmatprep.subr.bf16.mxu0 %v6719
    %7069 = vmatpush1.bf16.msra.mxu0 %v6718
    %7070 = vmatprep.subr.bf16.mxu0 %v6779
    %7071 = vmatpush2.bf16.msra.mxu0 %v6778
    %7072 = vmatprep.subr.bf16.mxu0 %v6775
    %7073 = vmatpush2.bf16.msra.mxu0 %v6774
    %7074 = vmatprep.subr.bf16.mxu0 %v6771
    %7075 = vmatpush2.bf16.msra.mxu0 %v6770
    %7076 = vmatprep.subr.bf16.mxu0 %v6767
    %7077 = vmatpush2.bf16.msra.mxu0 %v6766
    %7078 = vmatprep.subr.bf16.mxu0 %v6763
    %7079 = vmatpush2.bf16.msra.mxu0 %v6762
    %7080 = vmatprep.subr.bf16.mxu0 %v6759
    %7081 = vmatpush2.bf16.msra.mxu0 %v6758
    %7082 = vmatprep.subr.bf16.mxu0 %v6755
    %7083 = vmatpush2.bf16.msra.mxu0 %v6754
    %7084 = vmatprep.subr.bf16.mxu0 %v6751
    %7085 = vmatpush2.bf16.msra.mxu0 %v6750
    %7086 = vmatprep.mubr.bf16.mxu0 %v6201
    %7087 = vmatmul.mubr.bf16.gmra.mxu0 %v6200
    %v7088 = vpop.f32.mrf.mxu0
    %v7089 = vadd.f32 0.0, %v7088
    %v7090 = vpop.f32.mrf.mxu0
    %v7091 = vadd.f32 0.0, %v7090
    %v7092 = vpop.f32.mrf.mxu0
    %v7093 = vpop.f32.mrf.mxu0
    %7094 = vdwg.mxu0
    %7095 = vmatprep.subr.bf16.mxu0 %v6811
    %7096 = vmatpush1.bf16.msra.mxu0 %v6810
    %7097 = vmatprep.subr.bf16.mxu0 %v6807
    %7098 = vmatpush1.bf16.msra.mxu0 %v6806
    %7099 = vmatprep.subr.bf16.mxu0 %v6803
    %7100 = vmatpush1.bf16.msra.mxu0 %v6802
    %7101 = vmatprep.subr.bf16.mxu0 %v6799
    %7102 = vmatpush1.bf16.msra.mxu0 %v6798
    %7103 = vmatprep.subr.bf16.mxu0 %v6795
    %7104 = vmatpush1.bf16.msra.mxu0 %v6794
    %7105 = vmatprep.subr.bf16.mxu0 %v6791
    %7106 = vmatpush1.bf16.msra.mxu0 %v6790
    %7107 = vmatprep.subr.bf16.mxu0 %v6787
    %7108 = vmatpush1.bf16.msra.mxu0 %v6786
    %7109 = vmatprep.subr.bf16.mxu0 %v6783
    %7110 = vmatpush1.bf16.msra.mxu0 %v6782
    %7111 = vmatprep.subr.bf16.mxu0 %v6843
    %7112 = vmatpush2.bf16.msra.mxu0 %v6842
    %7113 = vmatprep.subr.bf16.mxu0 %v6839
    %7114 = vmatpush2.bf16.msra.mxu0 %v6838
    %7115 = vmatprep.subr.bf16.mxu0 %v6835
    %7116 = vmatpush2.bf16.msra.mxu0 %v6834
    %7117 = vmatprep.subr.bf16.mxu0 %v6831
    %7118 = vmatpush2.bf16.msra.mxu0 %v6830
    %7119 = vmatprep.subr.bf16.mxu0 %v6827
    %7120 = vmatpush2.bf16.msra.mxu0 %v6826
    %7121 = vmatprep.subr.bf16.mxu0 %v6823
    %7122 = vmatpush2.bf16.msra.mxu0 %v6822
    %7123 = vmatprep.subr.bf16.mxu0 %v6819
    %7124 = vmatpush2.bf16.msra.mxu0 %v6818
    %7125 = vmatprep.subr.bf16.mxu0 %v6815
    %7126 = vmatpush2.bf16.msra.mxu0 %v6814
    %7127 = vmatprep.mubr.bf16.mxu0 %v6203
    %7128 = vmatmul.mubr.bf16.gmra.mxu0 %v6202
    %v7129 = vpop.f32.mrf.mxu0
    %v7130 = vadd.f32 %v7089, %v7129
    %v7131 = vpop.f32.mrf.mxu0
    %v7132 = vadd.f32 %v7091, %v7131
    %v7133 = vpop.f32.mrf.mxu0
    %v7134 = vpop.f32.mrf.mxu0
    %7135 = vdwg.mxu0
    %v7136 = vadd.f32 %v6196, %v7048
    %v7137 = vadd.f32 %v6197, %v7050
    %v7138 = vadd.f32 %v6198, %v7130
    %v7139 = vadd.f32 %v6199, %v7132
    %v7140 = vpack.c.bf16 %v1496, %v1496
    %v7141 = vpack.c.bf16 %v1497, %v1497
    %v7142 = vpack.c.bf16 %v1498, %v1498
    %v7143 = vpack.c.bf16 %v1499, %v1499
    %v7144 = vld [vmem:[#allocation9 + $0x1800] sm:$0xff]
    %v7145 = vld [vmem:[#allocation9 + $0x1808] sm:$0xff]
    %v7146 = vld [vmem:[#allocation9 + $0x1810] sm:$0xff]
    %v7147 = vld [vmem:[#allocation9 + $0x1818] sm:$0xff]
    %v7148 = vld [vmem:[#allocation9 + $0x1820] sm:$0xff]
    %v7149 = vld [vmem:[#allocation9 + $0x1828] sm:$0xff]
    %v7150 = vld [vmem:[#allocation9 + $0x1830] sm:$0xff]
    %v7151 = vld [vmem:[#allocation9 + $0x1838] sm:$0xff]
    %v7152 = vld [vmem:[#allocation9 + $0x1840] sm:$0xff]
    %v7153 = vld [vmem:[#allocation9 + $0x1848] sm:$0xff]
    %v7154 = vld [vmem:[#allocation9 + $0x1850] sm:$0xff]
    %v7155 = vld [vmem:[#allocation9 + $0x1858] sm:$0xff]
    %v7156 = vld [vmem:[#allocation9 + $0x1860] sm:$0xff]
    %v7157 = vld [vmem:[#allocation9 + $0x1868] sm:$0xff]
    %v7158 = vld [vmem:[#allocation9 + $0x1870] sm:$0xff]
    %v7159 = vld [vmem:[#allocation9 + $0x1878] sm:$0xff]
    %v7160 = vld [vmem:[#allocation9 + $0x1880] sm:$0xff]
    %v7161 = vld [vmem:[#allocation9 + $0x1888] sm:$0xff]
    %v7162 = vld [vmem:[#allocation9 + $0x1890] sm:$0xff]
    %v7163 = vld [vmem:[#allocation9 + $0x1898] sm:$0xff]
    %v7164 = vld [vmem:[#allocation9 + $0x18a0] sm:$0xff]
    %v7165 = vld [vmem:[#allocation9 + $0x18a8] sm:$0xff]
    %v7166 = vld [vmem:[#allocation9 + $0x18b0] sm:$0xff]
    %v7167 = vld [vmem:[#allocation9 + $0x18b8] sm:$0xff]
    %v7168 = vld [vmem:[#allocation9 + $0x18c0] sm:$0xff]
    %v7169 = vld [vmem:[#allocation9 + $0x18c8] sm:$0xff]
    %v7170 = vld [vmem:[#allocation9 + $0x18d0] sm:$0xff]
    %v7171 = vld [vmem:[#allocation9 + $0x18d8] sm:$0xff]
    %v7172 = vld [vmem:[#allocation9 + $0x18e0] sm:$0xff]
    %v7173 = vld [vmem:[#allocation9 + $0x18e8] sm:$0xff]
    %v7174 = vld [vmem:[#allocation9 + $0x18f0] sm:$0xff]
    %v7175 = vld [vmem:[#allocation9 + $0x18f8] sm:$0xff]
    %v7176 = vld [vmem:[#allocation9 + $0x1900] sm:$0xff]
    %v7177 = vld [vmem:[#allocation9 + $0x1908] sm:$0xff]
    %v7178 = vld [vmem:[#allocation9 + $0x1910] sm:$0xff]
    %v7179 = vld [vmem:[#allocation9 + $0x1918] sm:$0xff]
    %v7180 = vld [vmem:[#allocation9 + $0x1920] sm:$0xff]
    %v7181 = vld [vmem:[#allocation9 + $0x1928] sm:$0xff]
    %v7182 = vld [vmem:[#allocation9 + $0x1930] sm:$0xff]
    %v7183 = vld [vmem:[#allocation9 + $0x1938] sm:$0xff]
    %v7184 = vld [vmem:[#allocation9 + $0x1940] sm:$0xff]
    %v7185 = vld [vmem:[#allocation9 + $0x1948] sm:$0xff]
    %v7186 = vld [vmem:[#allocation9 + $0x1950] sm:$0xff]
    %v7187 = vld [vmem:[#allocation9 + $0x1958] sm:$0xff]
    %v7188 = vld [vmem:[#allocation9 + $0x1960] sm:$0xff]
    %v7189 = vld [vmem:[#allocation9 + $0x1968] sm:$0xff]
    %v7190 = vld [vmem:[#allocation9 + $0x1970] sm:$0xff]
    %v7191 = vld [vmem:[#allocation9 + $0x1978] sm:$0xff]
    %v7192 = vld [vmem:[#allocation9 + $0x1980] sm:$0xff]
    %v7193 = vld [vmem:[#allocation9 + $0x1988] sm:$0xff]
    %v7194 = vld [vmem:[#allocation9 + $0x1990] sm:$0xff]
    %v7195 = vld [vmem:[#allocation9 + $0x1998] sm:$0xff]
    %v7196 = vld [vmem:[#allocation9 + $0x19a0] sm:$0xff]
    %v7197 = vld [vmem:[#allocation9 + $0x19a8] sm:$0xff]
    %v7198 = vld [vmem:[#allocation9 + $0x19b0] sm:$0xff]
    %v7199 = vld [vmem:[#allocation9 + $0x19b8] sm:$0xff]
    %v7200 = vld [vmem:[#allocation9 + $0x19c0] sm:$0xff]
    %v7201 = vld [vmem:[#allocation9 + $0x19c8] sm:$0xff]
    %v7202 = vld [vmem:[#allocation9 + $0x19d0] sm:$0xff]
    %v7203 = vld [vmem:[#allocation9 + $0x19d8] sm:$0xff]
    %v7204 = vld [vmem:[#allocation9 + $0x19e0] sm:$0xff]
    %v7205 = vld [vmem:[#allocation9 + $0x19e8] sm:$0xff]
    %v7206 = vld [vmem:[#allocation9 + $0x19f0] sm:$0xff]
    %v7207 = vld [vmem:[#allocation9 + $0x19f8] sm:$0xff]
    %v7208 = vld [vmem:[#allocation9 + $0x1a00] sm:$0xff]
    %v7209 = vld [vmem:[#allocation9 + $0x1a08] sm:$0xff]
    %v7210 = vld [vmem:[#allocation9 + $0x1a10] sm:$0xff]
    %v7211 = vld [vmem:[#allocation9 + $0x1a18] sm:$0xff]
    %v7212 = vld [vmem:[#allocation9 + $0x1a20] sm:$0xff]
    %v7213 = vld [vmem:[#allocation9 + $0x1a28] sm:$0xff]
    %v7214 = vld [vmem:[#allocation9 + $0x1a30] sm:$0xff]
    %v7215 = vld [vmem:[#allocation9 + $0x1a38] sm:$0xff]
    %v7216 = vld [vmem:[#allocation9 + $0x1a40] sm:$0xff]
    %v7217 = vld [vmem:[#allocation9 + $0x1a48] sm:$0xff]
    %v7218 = vld [vmem:[#allocation9 + $0x1a50] sm:$0xff]
    %v7219 = vld [vmem:[#allocation9 + $0x1a58] sm:$0xff]
    %v7220 = vld [vmem:[#allocation9 + $0x1a60] sm:$0xff]
    %v7221 = vld [vmem:[#allocation9 + $0x1a68] sm:$0xff]
    %v7222 = vld [vmem:[#allocation9 + $0x1a70] sm:$0xff]
    %v7223 = vld [vmem:[#allocation9 + $0x1a78] sm:$0xff]
    %v7224 = vld [vmem:[#allocation9 + $0x1a80] sm:$0xff]
    %v7225 = vld [vmem:[#allocation9 + $0x1a88] sm:$0xff]
    %v7226 = vld [vmem:[#allocation9 + $0x1a90] sm:$0xff]
    %v7227 = vld [vmem:[#allocation9 + $0x1a98] sm:$0xff]
    %v7228 = vld [vmem:[#allocation9 + $0x1aa0] sm:$0xff]
    %v7229 = vld [vmem:[#allocation9 + $0x1aa8] sm:$0xff]
    %v7230 = vld [vmem:[#allocation9 + $0x1ab0] sm:$0xff]
    %v7231 = vld [vmem:[#allocation9 + $0x1ab8] sm:$0xff]
    %v7232 = vld [vmem:[#allocation9 + $0x1ac0] sm:$0xff]
    %v7233 = vld [vmem:[#allocation9 + $0x1ac8] sm:$0xff]
    %v7234 = vld [vmem:[#allocation9 + $0x1ad0] sm:$0xff]
    %v7235 = vld [vmem:[#allocation9 + $0x1ad8] sm:$0xff]
    %v7236 = vld [vmem:[#allocation9 + $0x1ae0] sm:$0xff]
    %v7237 = vld [vmem:[#allocation9 + $0x1ae8] sm:$0xff]
    %v7238 = vld [vmem:[#allocation9 + $0x1af0] sm:$0xff]
    %v7239 = vld [vmem:[#allocation9 + $0x1af8] sm:$0xff]
    %v7240 = vld [vmem:[#allocation9 + $0x1b00] sm:$0xff]
    %v7241 = vld [vmem:[#allocation9 + $0x1b08] sm:$0xff]
    %v7242 = vld [vmem:[#allocation9 + $0x1b10] sm:$0xff]
    %v7243 = vld [vmem:[#allocation9 + $0x1b18] sm:$0xff]
    %v7244 = vld [vmem:[#allocation9 + $0x1b20] sm:$0xff]
    %v7245 = vld [vmem:[#allocation9 + $0x1b28] sm:$0xff]
    %v7246 = vld [vmem:[#allocation9 + $0x1b30] sm:$0xff]
    %v7247 = vld [vmem:[#allocation9 + $0x1b38] sm:$0xff]
    %v7248 = vld [vmem:[#allocation9 + $0x1b40] sm:$0xff]
    %v7249 = vld [vmem:[#allocation9 + $0x1b48] sm:$0xff]
    %v7250 = vld [vmem:[#allocation9 + $0x1b50] sm:$0xff]
    %v7251 = vld [vmem:[#allocation9 + $0x1b58] sm:$0xff]
    %v7252 = vld [vmem:[#allocation9 + $0x1b60] sm:$0xff]
    %v7253 = vld [vmem:[#allocation9 + $0x1b68] sm:$0xff]
    %v7254 = vld [vmem:[#allocation9 + $0x1b70] sm:$0xff]
    %v7255 = vld [vmem:[#allocation9 + $0x1b78] sm:$0xff]
    %v7256 = vld [vmem:[#allocation9 + $0x1b80] sm:$0xff]
    %v7257 = vld [vmem:[#allocation9 + $0x1b88] sm:$0xff]
    %v7258 = vld [vmem:[#allocation9 + $0x1b90] sm:$0xff]
    %v7259 = vld [vmem:[#allocation9 + $0x1b98] sm:$0xff]
    %v7260 = vld [vmem:[#allocation9 + $0x1ba0] sm:$0xff]
    %v7261 = vld [vmem:[#allocation9 + $0x1ba8] sm:$0xff]
    %v7262 = vld [vmem:[#allocation9 + $0x1bb0] sm:$0xff]
    %v7263 = vld [vmem:[#allocation9 + $0x1bb8] sm:$0xff]
    %v7264 = vld [vmem:[#allocation9 + $0x1bc0] sm:$0xff]
    %v7265 = vld [vmem:[#allocation9 + $0x1bc8] sm:$0xff]
    %v7266 = vld [vmem:[#allocation9 + $0x1bd0] sm:$0xff]
    %v7267 = vld [vmem:[#allocation9 + $0x1bd8] sm:$0xff]
    %v7268 = vld [vmem:[#allocation9 + $0x1be0] sm:$0xff]
    %v7269 = vld [vmem:[#allocation9 + $0x1be8] sm:$0xff]
    %v7270 = vld [vmem:[#allocation9 + $0x1bf0] sm:$0xff]
    %v7271 = vld [vmem:[#allocation9 + $0x1bf8] sm:$0xff]
    %v7400 = vunpack.c.l.b16 %v7144
    %v7401 = vunpack.c.h.b16 %v7144
    %v7402 = vunpack.c.l.b16 %v7145
    %v7403 = vunpack.c.h.b16 %v7145
    %v7404 = vunpack.c.l.b16 %v7146
    %v7405 = vunpack.c.h.b16 %v7146
    %v7406 = vunpack.c.l.b16 %v7147
    %v7407 = vunpack.c.h.b16 %v7147
    %v7408 = vunpack.c.l.b16 %v7148
    %v7409 = vunpack.c.h.b16 %v7148
    %v7410 = vunpack.c.l.b16 %v7149
    %v7411 = vunpack.c.h.b16 %v7149
    %v7412 = vunpack.c.l.b16 %v7150
    %v7413 = vunpack.c.h.b16 %v7150
    %v7414 = vunpack.c.l.b16 %v7151
    %v7415 = vunpack.c.h.b16 %v7151
    %v7416 = vunpack.c.l.b16 %v7152
    %v7417 = vunpack.c.h.b16 %v7152
    %v7418 = vunpack.c.l.b16 %v7153
    %v7419 = vunpack.c.h.b16 %v7153
    %v7420 = vunpack.c.l.b16 %v7154
    %v7421 = vunpack.c.h.b16 %v7154
    %v7422 = vunpack.c.l.b16 %v7155
    %v7423 = vunpack.c.h.b16 %v7155
    %v7424 = vunpack.c.l.b16 %v7156
    %v7425 = vunpack.c.h.b16 %v7156
    %v7426 = vunpack.c.l.b16 %v7157
    %v7427 = vunpack.c.h.b16 %v7157
    %v7428 = vunpack.c.l.b16 %v7158
    %v7429 = vunpack.c.h.b16 %v7158
    %v7430 = vunpack.c.l.b16 %v7159
    %v7431 = vunpack.c.h.b16 %v7159
    %v7432 = vunpack.c.l.b16 %v7160
    %v7433 = vunpack.c.h.b16 %v7160
    %v7434 = vunpack.c.l.b16 %v7161
    %v7435 = vunpack.c.h.b16 %v7161
    %v7436 = vunpack.c.l.b16 %v7162
    %v7437 = vunpack.c.h.b16 %v7162
    %v7438 = vunpack.c.l.b16 %v7163
    %v7439 = vunpack.c.h.b16 %v7163
    %v7440 = vunpack.c.l.b16 %v7164
    %v7441 = vunpack.c.h.b16 %v7164
    %v7442 = vunpack.c.l.b16 %v7165
    %v7443 = vunpack.c.h.b16 %v7165
    %v7444 = vunpack.c.l.b16 %v7166
    %v7445 = vunpack.c.h.b16 %v7166
    %v7446 = vunpack.c.l.b16 %v7167
    %v7447 = vunpack.c.h.b16 %v7167
    %v7448 = vunpack.c.l.b16 %v7168
    %v7449 = vunpack.c.h.b16 %v7168
    %v7450 = vunpack.c.l.b16 %v7169
    %v7451 = vunpack.c.h.b16 %v7169
    %v7452 = vunpack.c.l.b16 %v7170
    %v7453 = vunpack.c.h.b16 %v7170
    %v7454 = vunpack.c.l.b16 %v7171
    %v7455 = vunpack.c.h.b16 %v7171
    %v7456 = vunpack.c.l.b16 %v7172
    %v7457 = vunpack.c.h.b16 %v7172
    %v7458 = vunpack.c.l.b16 %v7173
    %v7459 = vunpack.c.h.b16 %v7173
    %v7460 = vunpack.c.l.b16 %v7174
    %v7461 = vunpack.c.h.b16 %v7174
    %v7462 = vunpack.c.l.b16 %v7175
    %v7463 = vunpack.c.h.b16 %v7175
    %v7464 = vunpack.c.l.b16 %v7176
    %v7465 = vunpack.c.h.b16 %v7176
    %v7466 = vunpack.c.l.b16 %v7177
    %v7467 = vunpack.c.h.b16 %v7177
    %v7468 = vunpack.c.l.b16 %v7178
    %v7469 = vunpack.c.h.b16 %v7178
    %v7470 = vunpack.c.l.b16 %v7179
    %v7471 = vunpack.c.h.b16 %v7179
    %v7472 = vunpack.c.l.b16 %v7180
    %v7473 = vunpack.c.h.b16 %v7180
    %v7474 = vunpack.c.l.b16 %v7181
    %v7475 = vunpack.c.h.b16 %v7181
    %v7476 = vunpack.c.l.b16 %v7182
    %v7477 = vunpack.c.h.b16 %v7182
    %v7478 = vunpack.c.l.b16 %v7183
    %v7479 = vunpack.c.h.b16 %v7183
    %v7480 = vunpack.c.l.b16 %v7184
    %v7481 = vunpack.c.h.b16 %v7184
    %v7482 = vunpack.c.l.b16 %v7185
    %v7483 = vunpack.c.h.b16 %v7185
    %v7484 = vunpack.c.l.b16 %v7186
    %v7485 = vunpack.c.h.b16 %v7186
    %v7486 = vunpack.c.l.b16 %v7187
    %v7487 = vunpack.c.h.b16 %v7187
    %v7488 = vunpack.c.l.b16 %v7188
    %v7489 = vunpack.c.h.b16 %v7188
    %v7490 = vunpack.c.l.b16 %v7189
    %v7491 = vunpack.c.h.b16 %v7189
    %v7492 = vunpack.c.l.b16 %v7190
    %v7493 = vunpack.c.h.b16 %v7190
    %v7494 = vunpack.c.l.b16 %v7191
    %v7495 = vunpack.c.h.b16 %v7191
    %v7496 = vunpack.c.l.b16 %v7192
    %v7497 = vunpack.c.h.b16 %v7192
    %v7498 = vunpack.c.l.b16 %v7193
    %v7499 = vunpack.c.h.b16 %v7193
    %v7500 = vunpack.c.l.b16 %v7194
    %v7501 = vunpack.c.h.b16 %v7194
    %v7502 = vunpack.c.l.b16 %v7195
    %v7503 = vunpack.c.h.b16 %v7195
    %v7504 = vunpack.c.l.b16 %v7196
    %v7505 = vunpack.c.h.b16 %v7196
    %v7506 = vunpack.c.l.b16 %v7197
    %v7507 = vunpack.c.h.b16 %v7197
    %v7508 = vunpack.c.l.b16 %v7198
    %v7509 = vunpack.c.h.b16 %v7198
    %v7510 = vunpack.c.l.b16 %v7199
    %v7511 = vunpack.c.h.b16 %v7199
    %v7512 = vunpack.c.l.b16 %v7200
    %v7513 = vunpack.c.h.b16 %v7200
    %v7514 = vunpack.c.l.b16 %v7201
    %v7515 = vunpack.c.h.b16 %v7201
    %v7516 = vunpack.c.l.b16 %v7202
    %v7517 = vunpack.c.h.b16 %v7202
    %v7518 = vunpack.c.l.b16 %v7203
    %v7519 = vunpack.c.h.b16 %v7203
    %v7520 = vunpack.c.l.b16 %v7204
    %v7521 = vunpack.c.h.b16 %v7204
    %v7522 = vunpack.c.l.b16 %v7205
    %v7523 = vunpack.c.h.b16 %v7205
    %v7524 = vunpack.c.l.b16 %v7206
    %v7525 = vunpack.c.h.b16 %v7206
    %v7526 = vunpack.c.l.b16 %v7207
    %v7527 = vunpack.c.h.b16 %v7207
    %v7528 = vunpack.c.l.b16 %v7208
    %v7529 = vunpack.c.h.b16 %v7208
    %v7530 = vunpack.c.l.b16 %v7209
    %v7531 = vunpack.c.h.b16 %v7209
    %v7532 = vunpack.c.l.b16 %v7210
    %v7533 = vunpack.c.h.b16 %v7210
    %v7534 = vunpack.c.l.b16 %v7211
    %v7535 = vunpack.c.h.b16 %v7211
    %v7536 = vunpack.c.l.b16 %v7212
    %v7537 = vunpack.c.h.b16 %v7212
    %v7538 = vunpack.c.l.b16 %v7213
    %v7539 = vunpack.c.h.b16 %v7213
    %v7540 = vunpack.c.l.b16 %v7214
    %v7541 = vunpack.c.h.b16 %v7214
    %v7542 = vunpack.c.l.b16 %v7215
    %v7543 = vunpack.c.h.b16 %v7215
    %v7544 = vunpack.c.l.b16 %v7216
    %v7545 = vunpack.c.h.b16 %v7216
    %v7546 = vunpack.c.l.b16 %v7217
    %v7547 = vunpack.c.h.b16 %v7217
    %v7548 = vunpack.c.l.b16 %v7218
    %v7549 = vunpack.c.h.b16 %v7218
    %v7550 = vunpack.c.l.b16 %v7219
    %v7551 = vunpack.c.h.b16 %v7219
    %v7552 = vunpack.c.l.b16 %v7220
    %v7553 = vunpack.c.h.b16 %v7220
    %v7554 = vunpack.c.l.b16 %v7221
    %v7555 = vunpack.c.h.b16 %v7221
    %v7556 = vunpack.c.l.b16 %v7222
    %v7557 = vunpack.c.h.b16 %v7222
    %v7558 = vunpack.c.l.b16 %v7223
    %v7559 = vunpack.c.h.b16 %v7223
    %v7560 = vunpack.c.l.b16 %v7224
    %v7561 = vunpack.c.h.b16 %v7224
    %v7562 = vunpack.c.l.b16 %v7225
    %v7563 = vunpack.c.h.b16 %v7225
    %v7564 = vunpack.c.l.b16 %v7226
    %v7565 = vunpack.c.h.b16 %v7226
    %v7566 = vunpack.c.l.b16 %v7227
    %v7567 = vunpack.c.h.b16 %v7227
    %v7568 = vunpack.c.l.b16 %v7228
    %v7569 = vunpack.c.h.b16 %v7228
    %v7570 = vunpack.c.l.b16 %v7229
    %v7571 = vunpack.c.h.b16 %v7229
    %v7572 = vunpack.c.l.b16 %v7230
    %v7573 = vunpack.c.h.b16 %v7230
    %v7574 = vunpack.c.l.b16 %v7231
    %v7575 = vunpack.c.h.b16 %v7231
    %v7576 = vunpack.c.l.b16 %v7232
    %v7577 = vunpack.c.h.b16 %v7232
    %v7578 = vunpack.c.l.b16 %v7233
    %v7579 = vunpack.c.h.b16 %v7233
    %v7580 = vunpack.c.l.b16 %v7234
    %v7581 = vunpack.c.h.b16 %v7234
    %v7582 = vunpack.c.l.b16 %v7235
    %v7583 = vunpack.c.h.b16 %v7235
    %v7584 = vunpack.c.l.b16 %v7236
    %v7585 = vunpack.c.h.b16 %v7236
    %v7586 = vunpack.c.l.b16 %v7237
    %v7587 = vunpack.c.h.b16 %v7237
    %v7588 = vunpack.c.l.b16 %v7238
    %v7589 = vunpack.c.h.b16 %v7238
    %v7590 = vunpack.c.l.b16 %v7239
    %v7591 = vunpack.c.h.b16 %v7239
    %v7592 = vunpack.c.l.b16 %v7240
    %v7593 = vunpack.c.h.b16 %v7240
    %v7594 = vunpack.c.l.b16 %v7241
    %v7595 = vunpack.c.h.b16 %v7241
    %v7596 = vunpack.c.l.b16 %v7242
    %v7597 = vunpack.c.h.b16 %v7242
    %v7598 = vunpack.c.l.b16 %v7243
    %v7599 = vunpack.c.h.b16 %v7243
    %v7600 = vunpack.c.l.b16 %v7244
    %v7601 = vunpack.c.h.b16 %v7244
    %v7602 = vunpack.c.l.b16 %v7245
    %v7603 = vunpack.c.h.b16 %v7245
    %v7604 = vunpack.c.l.b16 %v7246
    %v7605 = vunpack.c.h.b16 %v7246
    %v7606 = vunpack.c.l.b16 %v7247
    %v7607 = vunpack.c.h.b16 %v7247
    %v7608 = vunpack.c.l.b16 %v7248
    %v7609 = vunpack.c.h.b16 %v7248
    %v7610 = vunpack.c.l.b16 %v7249
    %v7611 = vunpack.c.h.b16 %v7249
    %v7612 = vunpack.c.l.b16 %v7250
    %v7613 = vunpack.c.h.b16 %v7250
    %v7614 = vunpack.c.l.b16 %v7251
    %v7615 = vunpack.c.h.b16 %v7251
    %v7616 = vunpack.c.l.b16 %v7252
    %v7617 = vunpack.c.h.b16 %v7252
    %v7618 = vunpack.c.l.b16 %v7253
    %v7619 = vunpack.c.h.b16 %v7253
    %v7620 = vunpack.c.l.b16 %v7254
    %v7621 = vunpack.c.h.b16 %v7254
    %v7622 = vunpack.c.l.b16 %v7255
    %v7623 = vunpack.c.h.b16 %v7255
    %v7624 = vunpack.c.l.b16 %v7256
    %v7625 = vunpack.c.h.b16 %v7256
    %v7626 = vunpack.c.l.b16 %v7257
    %v7627 = vunpack.c.h.b16 %v7257
    %v7628 = vunpack.c.l.b16 %v7258
    %v7629 = vunpack.c.h.b16 %v7258
    %v7630 = vunpack.c.l.b16 %v7259
    %v7631 = vunpack.c.h.b16 %v7259
    %v7632 = vunpack.c.l.b16 %v7260
    %v7633 = vunpack.c.h.b16 %v7260
    %v7634 = vunpack.c.l.b16 %v7261
    %v7635 = vunpack.c.h.b16 %v7261
    %v7636 = vunpack.c.l.b16 %v7262
    %v7637 = vunpack.c.h.b16 %v7262
    %v7638 = vunpack.c.l.b16 %v7263
    %v7639 = vunpack.c.h.b16 %v7263
    %v7640 = vunpack.c.l.b16 %v7264
    %v7641 = vunpack.c.h.b16 %v7264
    %v7642 = vunpack.c.l.b16 %v7265
    %v7643 = vunpack.c.h.b16 %v7265
    %v7644 = vunpack.c.l.b16 %v7266
    %v7645 = vunpack.c.h.b16 %v7266
    %v7646 = vunpack.c.l.b16 %v7267
    %v7647 = vunpack.c.h.b16 %v7267
    %v7648 = vunpack.c.l.b16 %v7268
    %v7649 = vunpack.c.h.b16 %v7268
    %v7650 = vunpack.c.l.b16 %v7269
    %v7651 = vunpack.c.h.b16 %v7269
    %v7652 = vunpack.c.l.b16 %v7270
    %v7653 = vunpack.c.h.b16 %v7270
    %v7654 = vunpack.c.l.b16 %v7271
    %v7655 = vunpack.c.h.b16 %v7271
    %v7656 = vpack.c.b16 %v7404, %v7400
    %v7657 = vpack.c.b16 %v7405, %v7401
    %v7658 = vpack.c.b16 %v7406, %v7402
    %v7659 = vpack.c.b16 %v7407, %v7403
    %v7660 = vpack.c.b16 %v7412, %v7408
    %v7661 = vpack.c.b16 %v7413, %v7409
    %v7662 = vpack.c.b16 %v7414, %v7410
    %v7663 = vpack.c.b16 %v7415, %v7411
    %v7664 = vpack.c.b16 %v7420, %v7416
    %v7665 = vpack.c.b16 %v7421, %v7417
    %v7666 = vpack.c.b16 %v7422, %v7418
    %v7667 = vpack.c.b16 %v7423, %v7419
    %v7668 = vpack.c.b16 %v7428, %v7424
    %v7669 = vpack.c.b16 %v7429, %v7425
    %v7670 = vpack.c.b16 %v7430, %v7426
    %v7671 = vpack.c.b16 %v7431, %v7427
    %v7672 = vpack.c.b16 %v7436, %v7432
    %v7673 = vpack.c.b16 %v7437, %v7433
    %v7674 = vpack.c.b16 %v7438, %v7434
    %v7675 = vpack.c.b16 %v7439, %v7435
    %v7676 = vpack.c.b16 %v7444, %v7440
    %v7677 = vpack.c.b16 %v7445, %v7441
    %v7678 = vpack.c.b16 %v7446, %v7442
    %v7679 = vpack.c.b16 %v7447, %v7443
    %v7680 = vpack.c.b16 %v7452, %v7448
    %v7681 = vpack.c.b16 %v7453, %v7449
    %v7682 = vpack.c.b16 %v7454, %v7450
    %v7683 = vpack.c.b16 %v7455, %v7451
    %v7684 = vpack.c.b16 %v7460, %v7456
    %v7685 = vpack.c.b16 %v7461, %v7457
    %v7686 = vpack.c.b16 %v7462, %v7458
    %v7687 = vpack.c.b16 %v7463, %v7459
    %v7688 = vpack.c.b16 %v7468, %v7464
    %v7689 = vpack.c.b16 %v7469, %v7465
    %v7690 = vpack.c.b16 %v7470, %v7466
    %v7691 = vpack.c.b16 %v7471, %v7467
    %v7692 = vpack.c.b16 %v7476, %v7472
    %v7693 = vpack.c.b16 %v7477, %v7473
    %v7694 = vpack.c.b16 %v7478, %v7474
    %v7695 = vpack.c.b16 %v7479, %v7475
    %v7696 = vpack.c.b16 %v7484, %v7480
    %v7697 = vpack.c.b16 %v7485, %v7481
    %v7698 = vpack.c.b16 %v7486, %v7482
    %v7699 = vpack.c.b16 %v7487, %v7483
    %v7700 = vpack.c.b16 %v7492, %v7488
    %v7701 = vpack.c.b16 %v7493, %v7489
    %v7702 = vpack.c.b16 %v7494, %v7490
    %v7703 = vpack.c.b16 %v7495, %v7491
    %v7704 = vpack.c.b16 %v7500, %v7496
    %v7705 = vpack.c.b16 %v7501, %v7497
    %v7706 = vpack.c.b16 %v7502, %v7498
    %v7707 = vpack.c.b16 %v7503, %v7499
    %v7708 = vpack.c.b16 %v7508, %v7504
    %v7709 = vpack.c.b16 %v7509, %v7505
    %v7710 = vpack.c.b16 %v7510, %v7506
    %v7711 = vpack.c.b16 %v7511, %v7507
    %v7712 = vpack.c.b16 %v7516, %v7512
    %v7713 = vpack.c.b16 %v7517, %v7513
    %v7714 = vpack.c.b16 %v7518, %v7514
    %v7715 = vpack.c.b16 %v7519, %v7515
    %v7716 = vpack.c.b16 %v7524, %v7520
    %v7717 = vpack.c.b16 %v7525, %v7521
    %v7718 = vpack.c.b16 %v7526, %v7522
    %v7719 = vpack.c.b16 %v7527, %v7523
    %v7720 = vpack.c.b16 %v7532, %v7528
    %v7721 = vpack.c.b16 %v7533, %v7529
    %v7722 = vpack.c.b16 %v7534, %v7530
    %v7723 = vpack.c.b16 %v7535, %v7531
    %v7724 = vpack.c.b16 %v7540, %v7536
    %v7725 = vpack.c.b16 %v7541, %v7537
    %v7726 = vpack.c.b16 %v7542, %v7538
    %v7727 = vpack.c.b16 %v7543, %v7539
    %v7728 = vpack.c.b16 %v7548, %v7544
    %v7729 = vpack.c.b16 %v7549, %v7545
    %v7730 = vpack.c.b16 %v7550, %v7546
    %v7731 = vpack.c.b16 %v7551, %v7547
    %v7732 = vpack.c.b16 %v7556, %v7552
    %v7733 = vpack.c.b16 %v7557, %v7553
    %v7734 = vpack.c.b16 %v7558, %v7554
    %v7735 = vpack.c.b16 %v7559, %v7555
    %v7736 = vpack.c.b16 %v7564, %v7560
    %v7737 = vpack.c.b16 %v7565, %v7561
    %v7738 = vpack.c.b16 %v7566, %v7562
    %v7739 = vpack.c.b16 %v7567, %v7563
    %v7740 = vpack.c.b16 %v7572, %v7568
    %v7741 = vpack.c.b16 %v7573, %v7569
    %v7742 = vpack.c.b16 %v7574, %v7570
    %v7743 = vpack.c.b16 %v7575, %v7571
    %v7744 = vpack.c.b16 %v7580, %v7576
    %v7745 = vpack.c.b16 %v7581, %v7577
    %v7746 = vpack.c.b16 %v7582, %v7578
    %v7747 = vpack.c.b16 %v7583, %v7579
    %v7748 = vpack.c.b16 %v7588, %v7584
    %v7749 = vpack.c.b16 %v7589, %v7585
    %v7750 = vpack.c.b16 %v7590, %v7586
    %v7751 = vpack.c.b16 %v7591, %v7587
    %v7752 = vpack.c.b16 %v7596, %v7592
    %v7753 = vpack.c.b16 %v7597, %v7593
    %v7754 = vpack.c.b16 %v7598, %v7594
    %v7755 = vpack.c.b16 %v7599, %v7595
    %v7756 = vpack.c.b16 %v7604, %v7600
    %v7757 = vpack.c.b16 %v7605, %v7601
    %v7758 = vpack.c.b16 %v7606, %v7602
    %v7759 = vpack.c.b16 %v7607, %v7603
    %v7760 = vpack.c.b16 %v7612, %v7608
    %v7761 = vpack.c.b16 %v7613, %v7609
    %v7762 = vpack.c.b16 %v7614, %v7610
    %v7763 = vpack.c.b16 %v7615, %v7611
    %v7764 = vpack.c.b16 %v7620, %v7616
    %v7765 = vpack.c.b16 %v7621, %v7617
    %v7766 = vpack.c.b16 %v7622, %v7618
    %v7767 = vpack.c.b16 %v7623, %v7619
    %v7768 = vpack.c.b16 %v7628, %v7624
    %v7769 = vpack.c.b16 %v7629, %v7625
    %v7770 = vpack.c.b16 %v7630, %v7626
    %v7771 = vpack.c.b16 %v7631, %v7627
    %v7772 = vpack.c.b16 %v7636, %v7632
    %v7773 = vpack.c.b16 %v7637, %v7633
    %v7774 = vpack.c.b16 %v7638, %v7634
    %v7775 = vpack.c.b16 %v7639, %v7635
    %v7776 = vpack.c.b16 %v7644, %v7640
    %v7777 = vpack.c.b16 %v7645, %v7641
    %v7778 = vpack.c.b16 %v7646, %v7642
    %v7779 = vpack.c.b16 %v7647, %v7643
    %v7780 = vpack.c.b16 %v7652, %v7648
    %v7781 = vpack.c.b16 %v7653, %v7649
    %v7782 = vpack.c.b16 %v7654, %v7650
    %v7783 = vpack.c.b16 %v7655, %v7651
    %7912 = vmatprep.subr.bf16.mxu0 %v7685
    %7913 = vmatpush1.bf16.msra.mxu0 %v7684
    %7914 = vmatprep.subr.bf16.mxu0 %v7681
    %7915 = vmatpush1.bf16.msra.mxu0 %v7680
    %7916 = vmatprep.subr.bf16.mxu0 %v7677
    %7917 = vmatpush1.bf16.msra.mxu0 %v7676
    %7918 = vmatprep.subr.bf16.mxu0 %v7673
    %7919 = vmatpush1.bf16.msra.mxu0 %v7672
    %7920 = vmatprep.subr.bf16.mxu0 %v7669
    %7921 = vmatpush1.bf16.msra.mxu0 %v7668
    %7922 = vmatprep.subr.bf16.mxu0 %v7665
    %7923 = vmatpush1.bf16.msra.mxu0 %v7664
    %7924 = vmatprep.subr.bf16.mxu0 %v7661
    %7925 = vmatpush1.bf16.msra.mxu0 %v7660
    %7926 = vmatprep.subr.bf16.mxu0 %v7657
    %7927 = vmatpush1.bf16.msra.mxu0 %v7656
    %7928 = vmatprep.subr.bf16.mxu0 %v7717
    %7929 = vmatpush2.bf16.msra.mxu0 %v7716
    %7930 = vmatprep.subr.bf16.mxu0 %v7713
    %7931 = vmatpush2.bf16.msra.mxu0 %v7712
    %7932 = vmatprep.subr.bf16.mxu0 %v7709
    %7933 = vmatpush2.bf16.msra.mxu0 %v7708
    %7934 = vmatprep.subr.bf16.mxu0 %v7705
    %7935 = vmatpush2.bf16.msra.mxu0 %v7704
    %7936 = vmatprep.subr.bf16.mxu0 %v7701
    %7937 = vmatpush2.bf16.msra.mxu0 %v7700
    %7938 = vmatprep.subr.bf16.mxu0 %v7697
    %7939 = vmatpush2.bf16.msra.mxu0 %v7696
    %7940 = vmatprep.subr.bf16.mxu0 %v7693
    %7941 = vmatpush2.bf16.msra.mxu0 %v7692
    %7942 = vmatprep.subr.bf16.mxu0 %v7689
    %7943 = vmatpush2.bf16.msra.mxu0 %v7688
    %7944 = vmatprep.mubr.bf16.mxu0 %v7141
    %7945 = vmatmul.mubr.bf16.gmra.mxu0 %v7140
    %v7946 = vpop.f32.mrf.mxu0
    %v7947 = vadd.f32 0.0, %v7946
    %v7948 = vpop.f32.mrf.mxu0
    %v7949 = vadd.f32 0.0, %v7948
    %v7950 = vpop.f32.mrf.mxu0
    %v7951 = vpop.f32.mrf.mxu0
    %7952 = vdwg.mxu0
    %7953 = vmatprep.subr.bf16.mxu0 %v7749
    %7954 = vmatpush1.bf16.msra.mxu0 %v7748
    %7955 = vmatprep.subr.bf16.mxu0 %v7745
    %7956 = vmatpush1.bf16.msra.mxu0 %v7744
    %7957 = vmatprep.subr.bf16.mxu0 %v7741
    %7958 = vmatpush1.bf16.msra.mxu0 %v7740
    %7959 = vmatprep.subr.bf16.mxu0 %v7737
    %7960 = vmatpush1.bf16.msra.mxu0 %v7736
    %7961 = vmatprep.subr.bf16.mxu0 %v7733
    %7962 = vmatpush1.bf16.msra.mxu0 %v7732
    %7963 = vmatprep.subr.bf16.mxu0 %v7729
    %7964 = vmatpush1.bf16.msra.mxu0 %v7728
    %7965 = vmatprep.subr.bf16.mxu0 %v7725
    %7966 = vmatpush1.bf16.msra.mxu0 %v7724
    %7967 = vmatprep.subr.bf16.mxu0 %v7721
    %7968 = vmatpush1.bf16.msra.mxu0 %v7720
    %7969 = vmatprep.subr.bf16.mxu0 %v7781
    %7970 = vmatpush2.bf16.msra.mxu0 %v7780
    %7971 = vmatprep.subr.bf16.mxu0 %v7777
    %7972 = vmatpush2.bf16.msra.mxu0 %v7776
    %7973 = vmatprep.subr.bf16.mxu0 %v7773
    %7974 = vmatpush2.bf16.msra.mxu0 %v7772
    %7975 = vmatprep.subr.bf16.mxu0 %v7769
    %7976 = vmatpush2.bf16.msra.mxu0 %v7768
    %7977 = vmatprep.subr.bf16.mxu0 %v7765
    %7978 = vmatpush2.bf16.msra.mxu0 %v7764
    %7979 = vmatprep.subr.bf16.mxu0 %v7761
    %7980 = vmatpush2.bf16.msra.mxu0 %v7760
    %7981 = vmatprep.subr.bf16.mxu0 %v7757
    %7982 = vmatpush2.bf16.msra.mxu0 %v7756
    %7983 = vmatprep.subr.bf16.mxu0 %v7753
    %7984 = vmatpush2.bf16.msra.mxu0 %v7752
    %7985 = vmatprep.mubr.bf16.mxu0 %v7143
    %7986 = vmatmul.mubr.bf16.gmra.mxu0 %v7142
    %v7987 = vpop.f32.mrf.mxu0
    %v7988 = vadd.f32 %v7947, %v7987
    %v7989 = vpop.f32.mrf.mxu0
    %v7990 = vadd.f32 %v7949, %v7989
    %v7991 = vpop.f32.mrf.mxu0
    %v7992 = vpop.f32.mrf.mxu0
    %7993 = vdwg.mxu0
    %7994 = vmatprep.subr.bf16.mxu0 %v7687
    %7995 = vmatpush1.bf16.msra.mxu0 %v7686
    %7996 = vmatprep.subr.bf16.mxu0 %v7683
    %7997 = vmatpush1.bf16.msra.mxu0 %v7682
    %7998 = vmatprep.subr.bf16.mxu0 %v7679
    %7999 = vmatpush1.bf16.msra.mxu0 %v7678
    %8000 = vmatprep.subr.bf16.mxu0 %v7675
    %8001 = vmatpush1.bf16.msra.mxu0 %v7674
    %8002 = vmatprep.subr.bf16.mxu0 %v7671
    %8003 = vmatpush1.bf16.msra.mxu0 %v7670
    %8004 = vmatprep.subr.bf16.mxu0 %v7667
    %8005 = vmatpush1.bf16.msra.mxu0 %v7666
    %8006 = vmatprep.subr.bf16.mxu0 %v7663
    %8007 = vmatpush1.bf16.msra.mxu0 %v7662
    %8008 = vmatprep.subr.bf16.mxu0 %v7659
    %8009 = vmatpush1.bf16.msra.mxu0 %v7658
    %8010 = vmatprep.subr.bf16.mxu0 %v7719
    %8011 = vmatpush2.bf16.msra.mxu0 %v7718
    %8012 = vmatprep.subr.bf16.mxu0 %v7715
    %8013 = vmatpush2.bf16.msra.mxu0 %v7714
    %8014 = vmatprep.subr.bf16.mxu0 %v7711
    %8015 = vmatpush2.bf16.msra.mxu0 %v7710
    %8016 = vmatprep.subr.bf16.mxu0 %v7707
    %8017 = vmatpush2.bf16.msra.mxu0 %v7706
    %8018 = vmatprep.subr.bf16.mxu0 %v7703
    %8019 = vmatpush2.bf16.msra.mxu0 %v7702
    %8020 = vmatprep.subr.bf16.mxu0 %v7699
    %8021 = vmatpush2.bf16.msra.mxu0 %v7698
    %8022 = vmatprep.subr.bf16.mxu0 %v7695
    %8023 = vmatpush2.bf16.msra.mxu0 %v7694
    %8024 = vmatprep.subr.bf16.mxu0 %v7691
    %8025 = vmatpush2.bf16.msra.mxu0 %v7690
    %8026 = vmatprep.mubr.bf16.mxu0 %v7141
    %8027 = vmatmul.mubr.bf16.gmra.mxu0 %v7140
    %v8028 = vpop.f32.mrf.mxu0
    %v8029 = vadd.f32 0.0, %v8028
    %v8030 = vpop.f32.mrf.mxu0
    %v8031 = vadd.f32 0.0, %v8030
    %v8032 = vpop.f32.mrf.mxu0
    %v8033 = vpop.f32.mrf.mxu0
    %8034 = vdwg.mxu0
    %8035 = vmatprep.subr.bf16.mxu0 %v7751
    %8036 = vmatpush1.bf16.msra.mxu0 %v7750
    %8037 = vmatprep.subr.bf16.mxu0 %v7747
    %8038 = vmatpush1.bf16.msra.mxu0 %v7746
    %8039 = vmatprep.subr.bf16.mxu0 %v7743
    %8040 = vmatpush1.bf16.msra.mxu0 %v7742
    %8041 = vmatprep.subr.bf16.mxu0 %v7739
    %8042 = vmatpush1.bf16.msra.mxu0 %v7738
    %8043 = vmatprep.subr.bf16.mxu0 %v7735
    %8044 = vmatpush1.bf16.msra.mxu0 %v7734
    %8045 = vmatprep.subr.bf16.mxu0 %v7731
    %8046 = vmatpush1.bf16.msra.mxu0 %v7730
    %8047 = vmatprep.subr.bf16.mxu0 %v7727
    %8048 = vmatpush1.bf16.msra.mxu0 %v7726
    %8049 = vmatprep.subr.bf16.mxu0 %v7723
    %8050 = vmatpush1.bf16.msra.mxu0 %v7722
    %8051 = vmatprep.subr.bf16.mxu0 %v7783
    %8052 = vmatpush2.bf16.msra.mxu0 %v7782
    %8053 = vmatprep.subr.bf16.mxu0 %v7779
    %8054 = vmatpush2.bf16.msra.mxu0 %v7778
    %8055 = vmatprep.subr.bf16.mxu0 %v7775
    %8056 = vmatpush2.bf16.msra.mxu0 %v7774
    %8057 = vmatprep.subr.bf16.mxu0 %v7771
    %8058 = vmatpush2.bf16.msra.mxu0 %v7770
    %8059 = vmatprep.subr.bf16.mxu0 %v7767
    %8060 = vmatpush2.bf16.msra.mxu0 %v7766
    %8061 = vmatprep.subr.bf16.mxu0 %v7763
    %8062 = vmatpush2.bf16.msra.mxu0 %v7762
    %8063 = vmatprep.subr.bf16.mxu0 %v7759
    %8064 = vmatpush2.bf16.msra.mxu0 %v7758
    %8065 = vmatprep.subr.bf16.mxu0 %v7755
    %8066 = vmatpush2.bf16.msra.mxu0 %v7754
    %8067 = vmatprep.mubr.bf16.mxu0 %v7143
    %8068 = vmatmul.mubr.bf16.gmra.mxu0 %v7142
    %v8069 = vpop.f32.mrf.mxu0
    %v8070 = vadd.f32 %v8029, %v8069
    %v8071 = vpop.f32.mrf.mxu0
    %v8072 = vadd.f32 %v8031, %v8071
    %v8073 = vpop.f32.mrf.mxu0
    %v8074 = vpop.f32.mrf.mxu0
    %8075 = vdwg.mxu0
    %v8076 = vadd.f32 %v7136, %v7988
    %v8077 = vadd.f32 %v7137, %v7990
    %v8078 = vadd.f32 %v7138, %v8070
    %v8079 = vadd.f32 %v7139, %v8072
    %v8080 = vpack.c.bf16 %v1500, %v1500
    %v8081 = vpack.c.bf16 %v1501, %v1501
    %v8082 = vpack.c.bf16 %v1502, %v1502
    %v8083 = vpack.c.bf16 %v1503, %v1503
    %v8084 = vld [vmem:[#allocation9 + $0x1c00] sm:$0xff]
    %v8085 = vld [vmem:[#allocation9 + $0x1c08] sm:$0xff]
    %v8086 = vld [vmem:[#allocation9 + $0x1c10] sm:$0xff]
    %v8087 = vld [vmem:[#allocation9 + $0x1c18] sm:$0xff]
    %v8088 = vld [vmem:[#allocation9 + $0x1c20] sm:$0xff]
    %v8089 = vld [vmem:[#allocation9 + $0x1c28] sm:$0xff]
    %v8090 = vld [vmem:[#allocation9 + $0x1c30] sm:$0xff]
    %v8091 = vld [vmem:[#allocation9 + $0x1c38] sm:$0xff]
    %v8092 = vld [vmem:[#allocation9 + $0x1c40] sm:$0xff]
    %v8093 = vld [vmem:[#allocation9 + $0x1c48] sm:$0xff]
    %v8094 = vld [vmem:[#allocation9 + $0x1c50] sm:$0xff]
    %v8095 = vld [vmem:[#allocation9 + $0x1c58] sm:$0xff]
    %v8096 = vld [vmem:[#allocation9 + $0x1c60] sm:$0xff]
    %v8097 = vld [vmem:[#allocation9 + $0x1c68] sm:$0xff]
    %v8098 = vld [vmem:[#allocation9 + $0x1c70] sm:$0xff]
    %v8099 = vld [vmem:[#allocation9 + $0x1c78] sm:$0xff]
    %v8100 = vld [vmem:[#allocation9 + $0x1c80] sm:$0xff]
    %v8101 = vld [vmem:[#allocation9 + $0x1c88] sm:$0xff]
    %v8102 = vld [vmem:[#allocation9 + $0x1c90] sm:$0xff]
    %v8103 = vld [vmem:[#allocation9 + $0x1c98] sm:$0xff]
    %v8104 = vld [vmem:[#allocation9 + $0x1ca0] sm:$0xff]
    %v8105 = vld [vmem:[#allocation9 + $0x1ca8] sm:$0xff]
    %v8106 = vld [vmem:[#allocation9 + $0x1cb0] sm:$0xff]
    %v8107 = vld [vmem:[#allocation9 + $0x1cb8] sm:$0xff]
    %v8108 = vld [vmem:[#allocation9 + $0x1cc0] sm:$0xff]
    %v8109 = vld [vmem:[#allocation9 + $0x1cc8] sm:$0xff]
    %v8110 = vld [vmem:[#allocation9 + $0x1cd0] sm:$0xff]
    %v8111 = vld [vmem:[#allocation9 + $0x1cd8] sm:$0xff]
    %v8112 = vld [vmem:[#allocation9 + $0x1ce0] sm:$0xff]
    %v8113 = vld [vmem:[#allocation9 + $0x1ce8] sm:$0xff]
    %v8114 = vld [vmem:[#allocation9 + $0x1cf0] sm:$0xff]
    %v8115 = vld [vmem:[#allocation9 + $0x1cf8] sm:$0xff]
    %v8116 = vld [vmem:[#allocation9 + $0x1d00] sm:$0xff]
    %v8117 = vld [vmem:[#allocation9 + $0x1d08] sm:$0xff]
    %v8118 = vld [vmem:[#allocation9 + $0x1d10] sm:$0xff]
    %v8119 = vld [vmem:[#allocation9 + $0x1d18] sm:$0xff]
    %v8120 = vld [vmem:[#allocation9 + $0x1d20] sm:$0xff]
    %v8121 = vld [vmem:[#allocation9 + $0x1d28] sm:$0xff]
    %v8122 = vld [vmem:[#allocation9 + $0x1d30] sm:$0xff]
    %v8123 = vld [vmem:[#allocation9 + $0x1d38] sm:$0xff]
    %v8124 = vld [vmem:[#allocation9 + $0x1d40] sm:$0xff]
    %v8125 = vld [vmem:[#allocation9 + $0x1d48] sm:$0xff]
    %v8126 = vld [vmem:[#allocation9 + $0x1d50] sm:$0xff]
    %v8127 = vld [vmem:[#allocation9 + $0x1d58] sm:$0xff]
    %v8128 = vld [vmem:[#allocation9 + $0x1d60] sm:$0xff]
    %v8129 = vld [vmem:[#allocation9 + $0x1d68] sm:$0xff]
    %v8130 = vld [vmem:[#allocation9 + $0x1d70] sm:$0xff]
    %v8131 = vld [vmem:[#allocation9 + $0x1d78] sm:$0xff]
    %v8132 = vld [vmem:[#allocation9 + $0x1d80] sm:$0xff]
    %v8133 = vld [vmem:[#allocation9 + $0x1d88] sm:$0xff]
    %v8134 = vld [vmem:[#allocation9 + $0x1d90] sm:$0xff]
    %v8135 = vld [vmem:[#allocation9 + $0x1d98] sm:$0xff]
    %v8136 = vld [vmem:[#allocation9 + $0x1da0] sm:$0xff]
    %v8137 = vld [vmem:[#allocation9 + $0x1da8] sm:$0xff]
    %v8138 = vld [vmem:[#allocation9 + $0x1db0] sm:$0xff]
    %v8139 = vld [vmem:[#allocation9 + $0x1db8] sm:$0xff]
    %v8140 = vld [vmem:[#allocation9 + $0x1dc0] sm:$0xff]
    %v8141 = vld [vmem:[#allocation9 + $0x1dc8] sm:$0xff]
    %v8142 = vld [vmem:[#allocation9 + $0x1dd0] sm:$0xff]
    %v8143 = vld [vmem:[#allocation9 + $0x1dd8] sm:$0xff]
    %v8144 = vld [vmem:[#allocation9 + $0x1de0] sm:$0xff]
    %v8145 = vld [vmem:[#allocation9 + $0x1de8] sm:$0xff]
    %v8146 = vld [vmem:[#allocation9 + $0x1df0] sm:$0xff]
    %v8147 = vld [vmem:[#allocation9 + $0x1df8] sm:$0xff]
    %v8148 = vld [vmem:[#allocation9 + $0x1e00] sm:$0xff]
    %v8149 = vld [vmem:[#allocation9 + $0x1e08] sm:$0xff]
    %v8150 = vld [vmem:[#allocation9 + $0x1e10] sm:$0xff]
    %v8151 = vld [vmem:[#allocation9 + $0x1e18] sm:$0xff]
    %v8152 = vld [vmem:[#allocation9 + $0x1e20] sm:$0xff]
    %v8153 = vld [vmem:[#allocation9 + $0x1e28] sm:$0xff]
    %v8154 = vld [vmem:[#allocation9 + $0x1e30] sm:$0xff]
    %v8155 = vld [vmem:[#allocation9 + $0x1e38] sm:$0xff]
    %v8156 = vld [vmem:[#allocation9 + $0x1e40] sm:$0xff]
    %v8157 = vld [vmem:[#allocation9 + $0x1e48] sm:$0xff]
    %v8158 = vld [vmem:[#allocation9 + $0x1e50] sm:$0xff]
    %v8159 = vld [vmem:[#allocation9 + $0x1e58] sm:$0xff]
    %v8160 = vld [vmem:[#allocation9 + $0x1e60] sm:$0xff]
    %v8161 = vld [vmem:[#allocation9 + $0x1e68] sm:$0xff]
    %v8162 = vld [vmem:[#allocation9 + $0x1e70] sm:$0xff]
    %v8163 = vld [vmem:[#allocation9 + $0x1e78] sm:$0xff]
    %v8164 = vld [vmem:[#allocation9 + $0x1e80] sm:$0xff]
    %v8165 = vld [vmem:[#allocation9 + $0x1e88] sm:$0xff]
    %v8166 = vld [vmem:[#allocation9 + $0x1e90] sm:$0xff]
    %v8167 = vld [vmem:[#allocation9 + $0x1e98] sm:$0xff]
    %v8168 = vld [vmem:[#allocation9 + $0x1ea0] sm:$0xff]
    %v8169 = vld [vmem:[#allocation9 + $0x1ea8] sm:$0xff]
    %v8170 = vld [vmem:[#allocation9 + $0x1eb0] sm:$0xff]
    %v8171 = vld [vmem:[#allocation9 + $0x1eb8] sm:$0xff]
    %v8172 = vld [vmem:[#allocation9 + $0x1ec0] sm:$0xff]
    %v8173 = vld [vmem:[#allocation9 + $0x1ec8] sm:$0xff]
    %v8174 = vld [vmem:[#allocation9 + $0x1ed0] sm:$0xff]
    %v8175 = vld [vmem:[#allocation9 + $0x1ed8] sm:$0xff]
    %v8176 = vld [vmem:[#allocation9 + $0x1ee0] sm:$0xff]
    %v8177 = vld [vmem:[#allocation9 + $0x1ee8] sm:$0xff]
    %v8178 = vld [vmem:[#allocation9 + $0x1ef0] sm:$0xff]
    %v8179 = vld [vmem:[#allocation9 + $0x1ef8] sm:$0xff]
    %v8180 = vld [vmem:[#allocation9 + $0x1f00] sm:$0xff]
    %v8181 = vld [vmem:[#allocation9 + $0x1f08] sm:$0xff]
    %v8182 = vld [vmem:[#allocation9 + $0x1f10] sm:$0xff]
    %v8183 = vld [vmem:[#allocation9 + $0x1f18] sm:$0xff]
    %v8184 = vld [vmem:[#allocation9 + $0x1f20] sm:$0xff]
    %v8185 = vld [vmem:[#allocation9 + $0x1f28] sm:$0xff]
    %v8186 = vld [vmem:[#allocation9 + $0x1f30] sm:$0xff]
    %v8187 = vld [vmem:[#allocation9 + $0x1f38] sm:$0xff]
    %v8188 = vld [vmem:[#allocation9 + $0x1f40] sm:$0xff]
    %v8189 = vld [vmem:[#allocation9 + $0x1f48] sm:$0xff]
    %v8190 = vld [vmem:[#allocation9 + $0x1f50] sm:$0xff]
    %v8191 = vld [vmem:[#allocation9 + $0x1f58] sm:$0xff]
    %v8192 = vld [vmem:[#allocation9 + $0x1f60] sm:$0xff]
    %v8193 = vld [vmem:[#allocation9 + $0x1f68] sm:$0xff]
    %v8194 = vld [vmem:[#allocation9 + $0x1f70] sm:$0xff]
    %v8195 = vld [vmem:[#allocation9 + $0x1f78] sm:$0xff]
    %v8196 = vld [vmem:[#allocation9 + $0x1f80] sm:$0xff]
    %v8197 = vld [vmem:[#allocation9 + $0x1f88] sm:$0xff]
    %v8198 = vld [vmem:[#allocation9 + $0x1f90] sm:$0xff]
    %v8199 = vld [vmem:[#allocation9 + $0x1f98] sm:$0xff]
    %v8200 = vld [vmem:[#allocation9 + $0x1fa0] sm:$0xff]
    %v8201 = vld [vmem:[#allocation9 + $0x1fa8] sm:$0xff]
    %v8202 = vld [vmem:[#allocation9 + $0x1fb0] sm:$0xff]
    %v8203 = vld [vmem:[#allocation9 + $0x1fb8] sm:$0xff]
    %v8204 = vld [vmem:[#allocation9 + $0x1fc0] sm:$0xff]
    %v8205 = vld [vmem:[#allocation9 + $0x1fc8] sm:$0xff]
    %v8206 = vld [vmem:[#allocation9 + $0x1fd0] sm:$0xff]
    %v8207 = vld [vmem:[#allocation9 + $0x1fd8] sm:$0xff]
    %v8208 = vld [vmem:[#allocation9 + $0x1fe0] sm:$0xff]
    %v8209 = vld [vmem:[#allocation9 + $0x1fe8] sm:$0xff]
    %v8210 = vld [vmem:[#allocation9 + $0x1ff0] sm:$0xff]
    %v8211 = vld [vmem:[#allocation9 + $0x1ff8] sm:$0xff]
    %v8340 = vunpack.c.l.b16 %v8084
    %v8341 = vunpack.c.h.b16 %v8084
    %v8342 = vunpack.c.l.b16 %v8085
    %v8343 = vunpack.c.h.b16 %v8085
    %v8344 = vunpack.c.l.b16 %v8086
    %v8345 = vunpack.c.h.b16 %v8086
    %v8346 = vunpack.c.l.b16 %v8087
    %v8347 = vunpack.c.h.b16 %v8087
    %v8348 = vunpack.c.l.b16 %v8088
    %v8349 = vunpack.c.h.b16 %v8088
    %v8350 = vunpack.c.l.b16 %v8089
    %v8351 = vunpack.c.h.b16 %v8089
    %v8352 = vunpack.c.l.b16 %v8090
    %v8353 = vunpack.c.h.b16 %v8090
    %v8354 = vunpack.c.l.b16 %v8091
    %v8355 = vunpack.c.h.b16 %v8091
    %v8356 = vunpack.c.l.b16 %v8092
    %v8357 = vunpack.c.h.b16 %v8092
    %v8358 = vunpack.c.l.b16 %v8093
    %v8359 = vunpack.c.h.b16 %v8093
    %v8360 = vunpack.c.l.b16 %v8094
    %v8361 = vunpack.c.h.b16 %v8094
    %v8362 = vunpack.c.l.b16 %v8095
    %v8363 = vunpack.c.h.b16 %v8095
    %v8364 = vunpack.c.l.b16 %v8096
    %v8365 = vunpack.c.h.b16 %v8096
    %v8366 = vunpack.c.l.b16 %v8097
    %v8367 = vunpack.c.h.b16 %v8097
    %v8368 = vunpack.c.l.b16 %v8098
    %v8369 = vunpack.c.h.b16 %v8098
    %v8370 = vunpack.c.l.b16 %v8099
    %v8371 = vunpack.c.h.b16 %v8099
    %v8372 = vunpack.c.l.b16 %v8100
    %v8373 = vunpack.c.h.b16 %v8100
    %v8374 = vunpack.c.l.b16 %v8101
    %v8375 = vunpack.c.h.b16 %v8101
    %v8376 = vunpack.c.l.b16 %v8102
    %v8377 = vunpack.c.h.b16 %v8102
    %v8378 = vunpack.c.l.b16 %v8103
    %v8379 = vunpack.c.h.b16 %v8103
    %v8380 = vunpack.c.l.b16 %v8104
    %v8381 = vunpack.c.h.b16 %v8104
    %v8382 = vunpack.c.l.b16 %v8105
    %v8383 = vunpack.c.h.b16 %v8105
    %v8384 = vunpack.c.l.b16 %v8106
    %v8385 = vunpack.c.h.b16 %v8106
    %v8386 = vunpack.c.l.b16 %v8107
    %v8387 = vunpack.c.h.b16 %v8107
    %v8388 = vunpack.c.l.b16 %v8108
    %v8389 = vunpack.c.h.b16 %v8108
    %v8390 = vunpack.c.l.b16 %v8109
    %v8391 = vunpack.c.h.b16 %v8109
    %v8392 = vunpack.c.l.b16 %v8110
    %v8393 = vunpack.c.h.b16 %v8110
    %v8394 = vunpack.c.l.b16 %v8111
    %v8395 = vunpack.c.h.b16 %v8111
    %v8396 = vunpack.c.l.b16 %v8112
    %v8397 = vunpack.c.h.b16 %v8112
    %v8398 = vunpack.c.l.b16 %v8113
    %v8399 = vunpack.c.h.b16 %v8113
    %v8400 = vunpack.c.l.b16 %v8114
    %v8401 = vunpack.c.h.b16 %v8114
    %v8402 = vunpack.c.l.b16 %v8115
    %v8403 = vunpack.c.h.b16 %v8115
    %v8404 = vunpack.c.l.b16 %v8116
    %v8405 = vunpack.c.h.b16 %v8116
    %v8406 = vunpack.c.l.b16 %v8117
    %v8407 = vunpack.c.h.b16 %v8117
    %v8408 = vunpack.c.l.b16 %v8118
    %v8409 = vunpack.c.h.b16 %v8118
    %v8410 = vunpack.c.l.b16 %v8119
    %v8411 = vunpack.c.h.b16 %v8119
    %v8412 = vunpack.c.l.b16 %v8120
    %v8413 = vunpack.c.h.b16 %v8120
    %v8414 = vunpack.c.l.b16 %v8121
    %v8415 = vunpack.c.h.b16 %v8121
    %v8416 = vunpack.c.l.b16 %v8122
    %v8417 = vunpack.c.h.b16 %v8122
    %v8418 = vunpack.c.l.b16 %v8123
    %v8419 = vunpack.c.h.b16 %v8123
    %v8420 = vunpack.c.l.b16 %v8124
    %v8421 = vunpack.c.h.b16 %v8124
    %v8422 = vunpack.c.l.b16 %v8125
    %v8423 = vunpack.c.h.b16 %v8125
    %v8424 = vunpack.c.l.b16 %v8126
    %v8425 = vunpack.c.h.b16 %v8126
    %v8426 = vunpack.c.l.b16 %v8127
    %v8427 = vunpack.c.h.b16 %v8127
    %v8428 = vunpack.c.l.b16 %v8128
    %v8429 = vunpack.c.h.b16 %v8128
    %v8430 = vunpack.c.l.b16 %v8129
    %v8431 = vunpack.c.h.b16 %v8129
    %v8432 = vunpack.c.l.b16 %v8130
    %v8433 = vunpack.c.h.b16 %v8130
    %v8434 = vunpack.c.l.b16 %v8131
    %v8435 = vunpack.c.h.b16 %v8131
    %v8436 = vunpack.c.l.b16 %v8132
    %v8437 = vunpack.c.h.b16 %v8132
    %v8438 = vunpack.c.l.b16 %v8133
    %v8439 = vunpack.c.h.b16 %v8133
    %v8440 = vunpack.c.l.b16 %v8134
    %v8441 = vunpack.c.h.b16 %v8134
    %v8442 = vunpack.c.l.b16 %v8135
    %v8443 = vunpack.c.h.b16 %v8135
    %v8444 = vunpack.c.l.b16 %v8136
    %v8445 = vunpack.c.h.b16 %v8136
    %v8446 = vunpack.c.l.b16 %v8137
    %v8447 = vunpack.c.h.b16 %v8137
    %v8448 = vunpack.c.l.b16 %v8138
    %v8449 = vunpack.c.h.b16 %v8138
    %v8450 = vunpack.c.l.b16 %v8139
    %v8451 = vunpack.c.h.b16 %v8139
    %v8452 = vunpack.c.l.b16 %v8140
    %v8453 = vunpack.c.h.b16 %v8140
    %v8454 = vunpack.c.l.b16 %v8141
    %v8455 = vunpack.c.h.b16 %v8141
    %v8456 = vunpack.c.l.b16 %v8142
    %v8457 = vunpack.c.h.b16 %v8142
    %v8458 = vunpack.c.l.b16 %v8143
    %v8459 = vunpack.c.h.b16 %v8143
    %v8460 = vunpack.c.l.b16 %v8144
    %v8461 = vunpack.c.h.b16 %v8144
    %v8462 = vunpack.c.l.b16 %v8145
    %v8463 = vunpack.c.h.b16 %v8145
    %v8464 = vunpack.c.l.b16 %v8146
    %v8465 = vunpack.c.h.b16 %v8146
    %v8466 = vunpack.c.l.b16 %v8147
    %v8467 = vunpack.c.h.b16 %v8147
    %v8468 = vunpack.c.l.b16 %v8148
    %v8469 = vunpack.c.h.b16 %v8148
    %v8470 = vunpack.c.l.b16 %v8149
    %v8471 = vunpack.c.h.b16 %v8149
    %v8472 = vunpack.c.l.b16 %v8150
    %v8473 = vunpack.c.h.b16 %v8150
    %v8474 = vunpack.c.l.b16 %v8151
    %v8475 = vunpack.c.h.b16 %v8151
    %v8476 = vunpack.c.l.b16 %v8152
    %v8477 = vunpack.c.h.b16 %v8152
    %v8478 = vunpack.c.l.b16 %v8153
    %v8479 = vunpack.c.h.b16 %v8153
    %v8480 = vunpack.c.l.b16 %v8154
    %v8481 = vunpack.c.h.b16 %v8154
    %v8482 = vunpack.c.l.b16 %v8155
    %v8483 = vunpack.c.h.b16 %v8155
    %v8484 = vunpack.c.l.b16 %v8156
    %v8485 = vunpack.c.h.b16 %v8156
    %v8486 = vunpack.c.l.b16 %v8157
    %v8487 = vunpack.c.h.b16 %v8157
    %v8488 = vunpack.c.l.b16 %v8158
    %v8489 = vunpack.c.h.b16 %v8158
    %v8490 = vunpack.c.l.b16 %v8159
    %v8491 = vunpack.c.h.b16 %v8159
    %v8492 = vunpack.c.l.b16 %v8160
    %v8493 = vunpack.c.h.b16 %v8160
    %v8494 = vunpack.c.l.b16 %v8161
    %v8495 = vunpack.c.h.b16 %v8161
    %v8496 = vunpack.c.l.b16 %v8162
    %v8497 = vunpack.c.h.b16 %v8162
    %v8498 = vunpack.c.l.b16 %v8163
    %v8499 = vunpack.c.h.b16 %v8163
    %v8500 = vunpack.c.l.b16 %v8164
    %v8501 = vunpack.c.h.b16 %v8164
    %v8502 = vunpack.c.l.b16 %v8165
    %v8503 = vunpack.c.h.b16 %v8165
    %v8504 = vunpack.c.l.b16 %v8166
    %v8505 = vunpack.c.h.b16 %v8166
    %v8506 = vunpack.c.l.b16 %v8167
    %v8507 = vunpack.c.h.b16 %v8167
    %v8508 = vunpack.c.l.b16 %v8168
    %v8509 = vunpack.c.h.b16 %v8168
    %v8510 = vunpack.c.l.b16 %v8169
    %v8511 = vunpack.c.h.b16 %v8169
    %v8512 = vunpack.c.l.b16 %v8170
    %v8513 = vunpack.c.h.b16 %v8170
    %v8514 = vunpack.c.l.b16 %v8171
    %v8515 = vunpack.c.h.b16 %v8171
    %v8516 = vunpack.c.l.b16 %v8172
    %v8517 = vunpack.c.h.b16 %v8172
    %v8518 = vunpack.c.l.b16 %v8173
    %v8519 = vunpack.c.h.b16 %v8173
    %v8520 = vunpack.c.l.b16 %v8174
    %v8521 = vunpack.c.h.b16 %v8174
    %v8522 = vunpack.c.l.b16 %v8175
    %v8523 = vunpack.c.h.b16 %v8175
    %v8524 = vunpack.c.l.b16 %v8176
    %v8525 = vunpack.c.h.b16 %v8176
    %v8526 = vunpack.c.l.b16 %v8177
    %v8527 = vunpack.c.h.b16 %v8177
    %v8528 = vunpack.c.l.b16 %v8178
    %v8529 = vunpack.c.h.b16 %v8178
    %v8530 = vunpack.c.l.b16 %v8179
    %v8531 = vunpack.c.h.b16 %v8179
    %v8532 = vunpack.c.l.b16 %v8180
    %v8533 = vunpack.c.h.b16 %v8180
    %v8534 = vunpack.c.l.b16 %v8181
    %v8535 = vunpack.c.h.b16 %v8181
    %v8536 = vunpack.c.l.b16 %v8182
    %v8537 = vunpack.c.h.b16 %v8182
    %v8538 = vunpack.c.l.b16 %v8183
    %v8539 = vunpack.c.h.b16 %v8183
    %v8540 = vunpack.c.l.b16 %v8184
    %v8541 = vunpack.c.h.b16 %v8184
    %v8542 = vunpack.c.l.b16 %v8185
    %v8543 = vunpack.c.h.b16 %v8185
    %v8544 = vunpack.c.l.b16 %v8186
    %v8545 = vunpack.c.h.b16 %v8186
    %v8546 = vunpack.c.l.b16 %v8187
    %v8547 = vunpack.c.h.b16 %v8187
    %v8548 = vunpack.c.l.b16 %v8188
    %v8549 = vunpack.c.h.b16 %v8188
    %v8550 = vunpack.c.l.b16 %v8189
    %v8551 = vunpack.c.h.b16 %v8189
    %v8552 = vunpack.c.l.b16 %v8190
    %v8553 = vunpack.c.h.b16 %v8190
    %v8554 = vunpack.c.l.b16 %v8191
    %v8555 = vunpack.c.h.b16 %v8191
    %v8556 = vunpack.c.l.b16 %v8192
    %v8557 = vunpack.c.h.b16 %v8192
    %v8558 = vunpack.c.l.b16 %v8193
    %v8559 = vunpack.c.h.b16 %v8193
    %v8560 = vunpack.c.l.b16 %v8194
    %v8561 = vunpack.c.h.b16 %v8194
    %v8562 = vunpack.c.l.b16 %v8195
    %v8563 = vunpack.c.h.b16 %v8195
    %v8564 = vunpack.c.l.b16 %v8196
    %v8565 = vunpack.c.h.b16 %v8196
    %v8566 = vunpack.c.l.b16 %v8197
    %v8567 = vunpack.c.h.b16 %v8197
    %v8568 = vunpack.c.l.b16 %v8198
    %v8569 = vunpack.c.h.b16 %v8198
    %v8570 = vunpack.c.l.b16 %v8199
    %v8571 = vunpack.c.h.b16 %v8199
    %v8572 = vunpack.c.l.b16 %v8200
    %v8573 = vunpack.c.h.b16 %v8200
    %v8574 = vunpack.c.l.b16 %v8201
    %v8575 = vunpack.c.h.b16 %v8201
    %v8576 = vunpack.c.l.b16 %v8202
    %v8577 = vunpack.c.h.b16 %v8202
    %v8578 = vunpack.c.l.b16 %v8203
    %v8579 = vunpack.c.h.b16 %v8203
    %v8580 = vunpack.c.l.b16 %v8204
    %v8581 = vunpack.c.h.b16 %v8204
    %v8582 = vunpack.c.l.b16 %v8205
    %v8583 = vunpack.c.h.b16 %v8205
    %v8584 = vunpack.c.l.b16 %v8206
    %v8585 = vunpack.c.h.b16 %v8206
    %v8586 = vunpack.c.l.b16 %v8207
    %v8587 = vunpack.c.h.b16 %v8207
    %v8588 = vunpack.c.l.b16 %v8208
    %v8589 = vunpack.c.h.b16 %v8208
    %v8590 = vunpack.c.l.b16 %v8209
    %v8591 = vunpack.c.h.b16 %v8209
    %v8592 = vunpack.c.l.b16 %v8210
    %v8593 = vunpack.c.h.b16 %v8210
    %v8594 = vunpack.c.l.b16 %v8211
    %v8595 = vunpack.c.h.b16 %v8211
    %v8596 = vpack.c.b16 %v8344, %v8340
    %v8597 = vpack.c.b16 %v8345, %v8341
    %v8598 = vpack.c.b16 %v8346, %v8342
    %v8599 = vpack.c.b16 %v8347, %v8343
    %v8600 = vpack.c.b16 %v8352, %v8348
    %v8601 = vpack.c.b16 %v8353, %v8349
    %v8602 = vpack.c.b16 %v8354, %v8350
    %v8603 = vpack.c.b16 %v8355, %v8351
    %v8604 = vpack.c.b16 %v8360, %v8356
    %v8605 = vpack.c.b16 %v8361, %v8357
    %v8606 = vpack.c.b16 %v8362, %v8358
    %v8607 = vpack.c.b16 %v8363, %v8359
    %v8608 = vpack.c.b16 %v8368, %v8364
    %v8609 = vpack.c.b16 %v8369, %v8365
    %v8610 = vpack.c.b16 %v8370, %v8366
    %v8611 = vpack.c.b16 %v8371, %v8367
    %v8612 = vpack.c.b16 %v8376, %v8372
    %v8613 = vpack.c.b16 %v8377, %v8373
    %v8614 = vpack.c.b16 %v8378, %v8374
    %v8615 = vpack.c.b16 %v8379, %v8375
    %v8616 = vpack.c.b16 %v8384, %v8380
    %v8617 = vpack.c.b16 %v8385, %v8381
    %v8618 = vpack.c.b16 %v8386, %v8382
    %v8619 = vpack.c.b16 %v8387, %v8383
    %v8620 = vpack.c.b16 %v8392, %v8388
    %v8621 = vpack.c.b16 %v8393, %v8389
    %v8622 = vpack.c.b16 %v8394, %v8390
    %v8623 = vpack.c.b16 %v8395, %v8391
    %v8624 = vpack.c.b16 %v8400, %v8396
    %v8625 = vpack.c.b16 %v8401, %v8397
    %v8626 = vpack.c.b16 %v8402, %v8398
    %v8627 = vpack.c.b16 %v8403, %v8399
    %v8628 = vpack.c.b16 %v8408, %v8404
    %v8629 = vpack.c.b16 %v8409, %v8405
    %v8630 = vpack.c.b16 %v8410, %v8406
    %v8631 = vpack.c.b16 %v8411, %v8407
    %v8632 = vpack.c.b16 %v8416, %v8412
    %v8633 = vpack.c.b16 %v8417, %v8413
    %v8634 = vpack.c.b16 %v8418, %v8414
    %v8635 = vpack.c.b16 %v8419, %v8415
    %v8636 = vpack.c.b16 %v8424, %v8420
    %v8637 = vpack.c.b16 %v8425, %v8421
    %v8638 = vpack.c.b16 %v8426, %v8422
    %v8639 = vpack.c.b16 %v8427, %v8423
    %v8640 = vpack.c.b16 %v8432, %v8428
    %v8641 = vpack.c.b16 %v8433, %v8429
    %v8642 = vpack.c.b16 %v8434, %v8430
    %v8643 = vpack.c.b16 %v8435, %v8431
    %v8644 = vpack.c.b16 %v8440, %v8436
    %v8645 = vpack.c.b16 %v8441, %v8437
    %v8646 = vpack.c.b16 %v8442, %v8438
    %v8647 = vpack.c.b16 %v8443, %v8439
    %v8648 = vpack.c.b16 %v8448, %v8444
    %v8649 = vpack.c.b16 %v8449, %v8445
    %v8650 = vpack.c.b16 %v8450, %v8446
    %v8651 = vpack.c.b16 %v8451, %v8447
    %v8652 = vpack.c.b16 %v8456, %v8452
    %v8653 = vpack.c.b16 %v8457, %v8453
    %v8654 = vpack.c.b16 %v8458, %v8454
    %v8655 = vpack.c.b16 %v8459, %v8455
    %v8656 = vpack.c.b16 %v8464, %v8460
    %v8657 = vpack.c.b16 %v8465, %v8461
    %v8658 = vpack.c.b16 %v8466, %v8462
    %v8659 = vpack.c.b16 %v8467, %v8463
    %v8660 = vpack.c.b16 %v8472, %v8468
    %v8661 = vpack.c.b16 %v8473, %v8469
    %v8662 = vpack.c.b16 %v8474, %v8470
    %v8663 = vpack.c.b16 %v8475, %v8471
    %v8664 = vpack.c.b16 %v8480, %v8476
    %v8665 = vpack.c.b16 %v8481, %v8477
    %v8666 = vpack.c.b16 %v8482, %v8478
    %v8667 = vpack.c.b16 %v8483, %v8479
    %v8668 = vpack.c.b16 %v8488, %v8484
    %v8669 = vpack.c.b16 %v8489, %v8485
    %v8670 = vpack.c.b16 %v8490, %v8486
    %v8671 = vpack.c.b16 %v8491, %v8487
    %v8672 = vpack.c.b16 %v8496, %v8492
    %v8673 = vpack.c.b16 %v8497, %v8493
    %v8674 = vpack.c.b16 %v8498, %v8494
    %v8675 = vpack.c.b16 %v8499, %v8495
    %v8676 = vpack.c.b16 %v8504, %v8500
    %v8677 = vpack.c.b16 %v8505, %v8501
    %v8678 = vpack.c.b16 %v8506, %v8502
    %v8679 = vpack.c.b16 %v8507, %v8503
    %v8680 = vpack.c.b16 %v8512, %v8508
    %v8681 = vpack.c.b16 %v8513, %v8509
    %v8682 = vpack.c.b16 %v8514, %v8510
    %v8683 = vpack.c.b16 %v8515, %v8511
    %v8684 = vpack.c.b16 %v8520, %v8516
    %v8685 = vpack.c.b16 %v8521, %v8517
    %v8686 = vpack.c.b16 %v8522, %v8518
    %v8687 = vpack.c.b16 %v8523, %v8519
    %v8688 = vpack.c.b16 %v8528, %v8524
    %v8689 = vpack.c.b16 %v8529, %v8525
    %v8690 = vpack.c.b16 %v8530, %v8526
    %v8691 = vpack.c.b16 %v8531, %v8527
    %v8692 = vpack.c.b16 %v8536, %v8532
    %v8693 = vpack.c.b16 %v8537, %v8533
    %v8694 = vpack.c.b16 %v8538, %v8534
    %v8695 = vpack.c.b16 %v8539, %v8535
    %v8696 = vpack.c.b16 %v8544, %v8540
    %v8697 = vpack.c.b16 %v8545, %v8541
    %v8698 = vpack.c.b16 %v8546, %v8542
    %v8699 = vpack.c.b16 %v8547, %v8543
    %v8700 = vpack.c.b16 %v8552, %v8548
    %v8701 = vpack.c.b16 %v8553, %v8549
    %v8702 = vpack.c.b16 %v8554, %v8550
    %v8703 = vpack.c.b16 %v8555, %v8551
    %v8704 = vpack.c.b16 %v8560, %v8556
    %v8705 = vpack.c.b16 %v8561, %v8557
    %v8706 = vpack.c.b16 %v8562, %v8558
    %v8707 = vpack.c.b16 %v8563, %v8559
    %v8708 = vpack.c.b16 %v8568, %v8564
    %v8709 = vpack.c.b16 %v8569, %v8565
    %v8710 = vpack.c.b16 %v8570, %v8566
    %v8711 = vpack.c.b16 %v8571, %v8567
    %v8712 = vpack.c.b16 %v8576, %v8572
    %v8713 = vpack.c.b16 %v8577, %v8573
    %v8714 = vpack.c.b16 %v8578, %v8574
    %v8715 = vpack.c.b16 %v8579, %v8575
    %v8716 = vpack.c.b16 %v8584, %v8580
    %v8717 = vpack.c.b16 %v8585, %v8581
    %v8718 = vpack.c.b16 %v8586, %v8582
    %v8719 = vpack.c.b16 %v8587, %v8583
    %v8720 = vpack.c.b16 %v8592, %v8588
    %v8721 = vpack.c.b16 %v8593, %v8589
    %v8722 = vpack.c.b16 %v8594, %v8590
    %v8723 = vpack.c.b16 %v8595, %v8591
    %8852 = vmatprep.subr.bf16.mxu0 %v8625
    %8853 = vmatpush1.bf16.msra.mxu0 %v8624
    %8854 = vmatprep.subr.bf16.mxu0 %v8621
    %8855 = vmatpush1.bf16.msra.mxu0 %v8620
    %8856 = vmatprep.subr.bf16.mxu0 %v8617
    %8857 = vmatpush1.bf16.msra.mxu0 %v8616
    %8858 = vmatprep.subr.bf16.mxu0 %v8613
    %8859 = vmatpush1.bf16.msra.mxu0 %v8612
    %8860 = vmatprep.subr.bf16.mxu0 %v8609
    %8861 = vmatpush1.bf16.msra.mxu0 %v8608
    %8862 = vmatprep.subr.bf16.mxu0 %v8605
    %8863 = vmatpush1.bf16.msra.mxu0 %v8604
    %8864 = vmatprep.subr.bf16.mxu0 %v8601
    %8865 = vmatpush1.bf16.msra.mxu0 %v8600
    %8866 = vmatprep.subr.bf16.mxu0 %v8597
    %8867 = vmatpush1.bf16.msra.mxu0 %v8596
    %8868 = vmatprep.subr.bf16.mxu0 %v8657
    %8869 = vmatpush2.bf16.msra.mxu0 %v8656
    %8870 = vmatprep.subr.bf16.mxu0 %v8653
    %8871 = vmatpush2.bf16.msra.mxu0 %v8652
    %8872 = vmatprep.subr.bf16.mxu0 %v8649
    %8873 = vmatpush2.bf16.msra.mxu0 %v8648
    %8874 = vmatprep.subr.bf16.mxu0 %v8645
    %8875 = vmatpush2.bf16.msra.mxu0 %v8644
    %8876 = vmatprep.subr.bf16.mxu0 %v8641
    %8877 = vmatpush2.bf16.msra.mxu0 %v8640
    %8878 = vmatprep.subr.bf16.mxu0 %v8637
    %8879 = vmatpush2.bf16.msra.mxu0 %v8636
    %8880 = vmatprep.subr.bf16.mxu0 %v8633
    %8881 = vmatpush2.bf16.msra.mxu0 %v8632
    %8882 = vmatprep.subr.bf16.mxu0 %v8629
    %8883 = vmatpush2.bf16.msra.mxu0 %v8628
    %8884 = vmatprep.mubr.bf16.mxu0 %v8081
    %8885 = vmatmul.mubr.bf16.gmra.mxu0 %v8080
    %v8886 = vpop.f32.mrf.mxu0
    %v8887 = vadd.f32 0.0, %v8886
    %v8888 = vpop.f32.mrf.mxu0
    %v8889 = vadd.f32 0.0, %v8888
    %v8890 = vpop.f32.mrf.mxu0
    %v8891 = vpop.f32.mrf.mxu0
    %8892 = vdwg.mxu0
    %8893 = vmatprep.subr.bf16.mxu0 %v8689
    %8894 = vmatpush1.bf16.msra.mxu0 %v8688
    %8895 = vmatprep.subr.bf16.mxu0 %v8685
    %8896 = vmatpush1.bf16.msra.mxu0 %v8684
    %8897 = vmatprep.subr.bf16.mxu0 %v8681
    %8898 = vmatpush1.bf16.msra.mxu0 %v8680
    %8899 = vmatprep.subr.bf16.mxu0 %v8677
    %8900 = vmatpush1.bf16.msra.mxu0 %v8676
    %8901 = vmatprep.subr.bf16.mxu0 %v8673
    %8902 = vmatpush1.bf16.msra.mxu0 %v8672
    %8903 = vmatprep.subr.bf16.mxu0 %v8669
    %8904 = vmatpush1.bf16.msra.mxu0 %v8668
    %8905 = vmatprep.subr.bf16.mxu0 %v8665
    %8906 = vmatpush1.bf16.msra.mxu0 %v8664
    %8907 = vmatprep.subr.bf16.mxu0 %v8661
    %8908 = vmatpush1.bf16.msra.mxu0 %v8660
    %8909 = vmatprep.subr.bf16.mxu0 %v8721
    %8910 = vmatpush2.bf16.msra.mxu0 %v8720
    %8911 = vmatprep.subr.bf16.mxu0 %v8717
    %8912 = vmatpush2.bf16.msra.mxu0 %v8716
    %8913 = vmatprep.subr.bf16.mxu0 %v8713
    %8914 = vmatpush2.bf16.msra.mxu0 %v8712
    %8915 = vmatprep.subr.bf16.mxu0 %v8709
    %8916 = vmatpush2.bf16.msra.mxu0 %v8708
    %8917 = vmatprep.subr.bf16.mxu0 %v8705
    %8918 = vmatpush2.bf16.msra.mxu0 %v8704
    %8919 = vmatprep.subr.bf16.mxu0 %v8701
    %8920 = vmatpush2.bf16.msra.mxu0 %v8700
    %8921 = vmatprep.subr.bf16.mxu0 %v8697
    %8922 = vmatpush2.bf16.msra.mxu0 %v8696
    %8923 = vmatprep.subr.bf16.mxu0 %v8693
    %8924 = vmatpush2.bf16.msra.mxu0 %v8692
    %8925 = vmatprep.mubr.bf16.mxu0 %v8083
    %8926 = vmatmul.mubr.bf16.gmra.mxu0 %v8082
    %v8927 = vpop.f32.mrf.mxu0
    %v8928 = vadd.f32 %v8887, %v8927
    %v8929 = vpop.f32.mrf.mxu0
    %v8930 = vadd.f32 %v8889, %v8929
    %v8931 = vpop.f32.mrf.mxu0
    %v8932 = vpop.f32.mrf.mxu0
    %8933 = vdwg.mxu0
    %8934 = vmatprep.subr.bf16.mxu0 %v8627
    %8935 = vmatpush1.bf16.msra.mxu0 %v8626
    %8936 = vmatprep.subr.bf16.mxu0 %v8623
    %8937 = vmatpush1.bf16.msra.mxu0 %v8622
    %8938 = vmatprep.subr.bf16.mxu0 %v8619
    %8939 = vmatpush1.bf16.msra.mxu0 %v8618
    %8940 = vmatprep.subr.bf16.mxu0 %v8615
    %8941 = vmatpush1.bf16.msra.mxu0 %v8614
    %8942 = vmatprep.subr.bf16.mxu0 %v8611
    %8943 = vmatpush1.bf16.msra.mxu0 %v8610
    %8944 = vmatprep.subr.bf16.mxu0 %v8607
    %8945 = vmatpush1.bf16.msra.mxu0 %v8606
    %8946 = vmatprep.subr.bf16.mxu0 %v8603
    %8947 = vmatpush1.bf16.msra.mxu0 %v8602
    %8948 = vmatprep.subr.bf16.mxu0 %v8599
    %8949 = vmatpush1.bf16.msra.mxu0 %v8598
    %8950 = vmatprep.subr.bf16.mxu0 %v8659
    %8951 = vmatpush2.bf16.msra.mxu0 %v8658
    %8952 = vmatprep.subr.bf16.mxu0 %v8655
    %8953 = vmatpush2.bf16.msra.mxu0 %v8654
    %8954 = vmatprep.subr.bf16.mxu0 %v8651
    %8955 = vmatpush2.bf16.msra.mxu0 %v8650
    %8956 = vmatprep.subr.bf16.mxu0 %v8647
    %8957 = vmatpush2.bf16.msra.mxu0 %v8646
    %8958 = vmatprep.subr.bf16.mxu0 %v8643
    %8959 = vmatpush2.bf16.msra.mxu0 %v8642
    %8960 = vmatprep.subr.bf16.mxu0 %v8639
    %8961 = vmatpush2.bf16.msra.mxu0 %v8638
    %8962 = vmatprep.subr.bf16.mxu0 %v8635
    %8963 = vmatpush2.bf16.msra.mxu0 %v8634
    %8964 = vmatprep.subr.bf16.mxu0 %v8631
    %8965 = vmatpush2.bf16.msra.mxu0 %v8630
    %8966 = vmatprep.mubr.bf16.mxu0 %v8081
    %8967 = vmatmul.mubr.bf16.gmra.mxu0 %v8080
    %v8968 = vpop.f32.mrf.mxu0
    %v8969 = vadd.f32 0.0, %v8968
    %v8970 = vpop.f32.mrf.mxu0
    %v8971 = vadd.f32 0.0, %v8970
    %v8972 = vpop.f32.mrf.mxu0
    %v8973 = vpop.f32.mrf.mxu0
    %8974 = vdwg.mxu0
    %8975 = vmatprep.subr.bf16.mxu0 %v8691
    %8976 = vmatpush1.bf16.msra.mxu0 %v8690
    %8977 = vmatprep.subr.bf16.mxu0 %v8687
    %8978 = vmatpush1.bf16.msra.mxu0 %v8686
    %8979 = vmatprep.subr.bf16.mxu0 %v8683
    %8980 = vmatpush1.bf16.msra.mxu0 %v8682
    %8981 = vmatprep.subr.bf16.mxu0 %v8679
    %8982 = vmatpush1.bf16.msra.mxu0 %v8678
    %8983 = vmatprep.subr.bf16.mxu0 %v8675
    %8984 = vmatpush1.bf16.msra.mxu0 %v8674
    %8985 = vmatprep.subr.bf16.mxu0 %v8671
    %8986 = vmatpush1.bf16.msra.mxu0 %v8670
    %8987 = vmatprep.subr.bf16.mxu0 %v8667
    %8988 = vmatpush1.bf16.msra.mxu0 %v8666
    %8989 = vmatprep.subr.bf16.mxu0 %v8663
    %8990 = vmatpush1.bf16.msra.mxu0 %v8662
    %8991 = vmatprep.subr.bf16.mxu0 %v8723
    %8992 = vmatpush2.bf16.msra.mxu0 %v8722
    %8993 = vmatprep.subr.bf16.mxu0 %v8719
    %8994 = vmatpush2.bf16.msra.mxu0 %v8718
    %8995 = vmatprep.subr.bf16.mxu0 %v8715
    %8996 = vmatpush2.bf16.msra.mxu0 %v8714
    %8997 = vmatprep.subr.bf16.mxu0 %v8711
    %8998 = vmatpush2.bf16.msra.mxu0 %v8710
    %8999 = vmatprep.subr.bf16.mxu0 %v8707
    %9000 = vmatpush2.bf16.msra.mxu0 %v8706
    %9001 = vmatprep.subr.bf16.mxu0 %v8703
    %9002 = vmatpush2.bf16.msra.mxu0 %v8702
    %9003 = vmatprep.subr.bf16.mxu0 %v8699
    %9004 = vmatpush2.bf16.msra.mxu0 %v8698
    %9005 = vmatprep.subr.bf16.mxu0 %v8695
    %9006 = vmatpush2.bf16.msra.mxu0 %v8694
    %9007 = vmatprep.mubr.bf16.mxu0 %v8083
    %9008 = vmatmul.mubr.bf16.gmra.mxu0 %v8082
    %v9009 = vpop.f32.mrf.mxu0
    %v9010 = vadd.f32 %v8969, %v9009
    %v9011 = vpop.f32.mrf.mxu0
    %v9012 = vadd.f32 %v8971, %v9011
    %v9013 = vpop.f32.mrf.mxu0
    %v9014 = vpop.f32.mrf.mxu0
    %9015 = vdwg.mxu0
    %v9016 = vadd.f32 %v8076, %v8928
    %v9017 = vadd.f32 %v8077, %v8930
    %v9018 = vadd.f32 %v8078, %v9010
    %v9019 = vadd.f32 %v8079, %v9012
    %v9020 = vpack.c.bf16 %v1504, %v1504
    %v9021 = vpack.c.bf16 %v1505, %v1505
    %v9022 = vpack.c.bf16 %v1506, %v1506
    %v9023 = vpack.c.bf16 %v1507, %v1507
    %v9024 = vld [vmem:[#allocation9 + $0x2000] sm:$0xff]
    %v9025 = vld [vmem:[#allocation9 + $0x2008] sm:$0xff]
    %v9026 = vld [vmem:[#allocation9 + $0x2010] sm:$0xff]
    %v9027 = vld [vmem:[#allocation9 + $0x2018] sm:$0xff]
    %v9028 = vld [vmem:[#allocation9 + $0x2020] sm:$0xff]
    %v9029 = vld [vmem:[#allocation9 + $0x2028] sm:$0xff]
    %v9030 = vld [vmem:[#allocation9 + $0x2030] sm:$0xff]
    %v9031 = vld [vmem:[#allocation9 + $0x2038] sm:$0xff]
    %v9032 = vld [vmem:[#allocation9 + $0x2040] sm:$0xff]
    %v9033 = vld [vmem:[#allocation9 + $0x2048] sm:$0xff]
    %v9034 = vld [vmem:[#allocation9 + $0x2050] sm:$0xff]
    %v9035 = vld [vmem:[#allocation9 + $0x2058] sm:$0xff]
    %v9036 = vld [vmem:[#allocation9 + $0x2060] sm:$0xff]
    %v9037 = vld [vmem:[#allocation9 + $0x2068] sm:$0xff]
    %v9038 = vld [vmem:[#allocation9 + $0x2070] sm:$0xff]
    %v9039 = vld [vmem:[#allocation9 + $0x2078] sm:$0xff]
    %v9040 = vld [vmem:[#allocation9 + $0x2080] sm:$0xff]
    %v9041 = vld [vmem:[#allocation9 + $0x2088] sm:$0xff]
    %v9042 = vld [vmem:[#allocation9 + $0x2090] sm:$0xff]
    %v9043 = vld [vmem:[#allocation9 + $0x2098] sm:$0xff]
    %v9044 = vld [vmem:[#allocation9 + $0x20a0] sm:$0xff]
    %v9045 = vld [vmem:[#allocation9 + $0x20a8] sm:$0xff]
    %v9046 = vld [vmem:[#allocation9 + $0x20b0] sm:$0xff]
    %v9047 = vld [vmem:[#allocation9 + $0x20b8] sm:$0xff]
    %v9048 = vld [vmem:[#allocation9 + $0x20c0] sm:$0xff]
    %v9049 = vld [vmem:[#allocation9 + $0x20c8] sm:$0xff]
    %v9050 = vld [vmem:[#allocation9 + $0x20d0] sm:$0xff]
    %v9051 = vld [vmem:[#allocation9 + $0x20d8] sm:$0xff]
    %v9052 = vld [vmem:[#allocation9 + $0x20e0] sm:$0xff]
    %v9053 = vld [vmem:[#allocation9 + $0x20e8] sm:$0xff]
    %v9054 = vld [vmem:[#allocation9 + $0x20f0] sm:$0xff]
    %v9055 = vld [vmem:[#allocation9 + $0x20f8] sm:$0xff]
    %v9056 = vld [vmem:[#allocation9 + $0x2100] sm:$0xff]
    %v9057 = vld [vmem:[#allocation9 + $0x2108] sm:$0xff]
    %v9058 = vld [vmem:[#allocation9 + $0x2110] sm:$0xff]
    %v9059 = vld [vmem:[#allocation9 + $0x2118] sm:$0xff]
    %v9060 = vld [vmem:[#allocation9 + $0x2120] sm:$0xff]
    %v9061 = vld [vmem:[#allocation9 + $0x2128] sm:$0xff]
    %v9062 = vld [vmem:[#allocation9 + $0x2130] sm:$0xff]
    %v9063 = vld [vmem:[#allocation9 + $0x2138] sm:$0xff]
    %v9064 = vld [vmem:[#allocation9 + $0x2140] sm:$0xff]
    %v9065 = vld [vmem:[#allocation9 + $0x2148] sm:$0xff]
    %v9066 = vld [vmem:[#allocation9 + $0x2150] sm:$0xff]
    %v9067 = vld [vmem:[#allocation9 + $0x2158] sm:$0xff]
    %v9068 = vld [vmem:[#allocation9 + $0x2160] sm:$0xff]
    %v9069 = vld [vmem:[#allocation9 + $0x2168] sm:$0xff]
    %v9070 = vld [vmem:[#allocation9 + $0x2170] sm:$0xff]
    %v9071 = vld [vmem:[#allocation9 + $0x2178] sm:$0xff]
    %v9072 = vld [vmem:[#allocation9 + $0x2180] sm:$0xff]
    %v9073 = vld [vmem:[#allocation9 + $0x2188] sm:$0xff]
    %v9074 = vld [vmem:[#allocation9 + $0x2190] sm:$0xff]
    %v9075 = vld [vmem:[#allocation9 + $0x2198] sm:$0xff]
    %v9076 = vld [vmem:[#allocation9 + $0x21a0] sm:$0xff]
    %v9077 = vld [vmem:[#allocation9 + $0x21a8] sm:$0xff]
    %v9078 = vld [vmem:[#allocation9 + $0x21b0] sm:$0xff]
    %v9079 = vld [vmem:[#allocation9 + $0x21b8] sm:$0xff]
    %v9080 = vld [vmem:[#allocation9 + $0x21c0] sm:$0xff]
    %v9081 = vld [vmem:[#allocation9 + $0x21c8] sm:$0xff]
    %v9082 = vld [vmem:[#allocation9 + $0x21d0] sm:$0xff]
    %v9083 = vld [vmem:[#allocation9 + $0x21d8] sm:$0xff]
    %v9084 = vld [vmem:[#allocation9 + $0x21e0] sm:$0xff]
    %v9085 = vld [vmem:[#allocation9 + $0x21e8] sm:$0xff]
    %v9086 = vld [vmem:[#allocation9 + $0x21f0] sm:$0xff]
    %v9087 = vld [vmem:[#allocation9 + $0x21f8] sm:$0xff]
    %v9088 = vld [vmem:[#allocation9 + $0x2200] sm:$0xff]
    %v9089 = vld [vmem:[#allocation9 + $0x2208] sm:$0xff]
    %v9090 = vld [vmem:[#allocation9 + $0x2210] sm:$0xff]
    %v9091 = vld [vmem:[#allocation9 + $0x2218] sm:$0xff]
    %v9092 = vld [vmem:[#allocation9 + $0x2220] sm:$0xff]
    %v9093 = vld [vmem:[#allocation9 + $0x2228] sm:$0xff]
    %v9094 = vld [vmem:[#allocation9 + $0x2230] sm:$0xff]
    %v9095 = vld [vmem:[#allocation9 + $0x2238] sm:$0xff]
    %v9096 = vld [vmem:[#allocation9 + $0x2240] sm:$0xff]
    %v9097 = vld [vmem:[#allocation9 + $0x2248] sm:$0xff]
    %v9098 = vld [vmem:[#allocation9 + $0x2250] sm:$0xff]
    %v9099 = vld [vmem:[#allocation9 + $0x2258] sm:$0xff]
    %v9100 = vld [vmem:[#allocation9 + $0x2260] sm:$0xff]
    %v9101 = vld [vmem:[#allocation9 + $0x2268] sm:$0xff]
    %v9102 = vld [vmem:[#allocation9 + $0x2270] sm:$0xff]
    %v9103 = vld [vmem:[#allocation9 + $0x2278] sm:$0xff]
    %v9104 = vld [vmem:[#allocation9 + $0x2280] sm:$0xff]
    %v9105 = vld [vmem:[#allocation9 + $0x2288] sm:$0xff]
    %v9106 = vld [vmem:[#allocation9 + $0x2290] sm:$0xff]
    %v9107 = vld [vmem:[#allocation9 + $0x2298] sm:$0xff]
    %v9108 = vld [vmem:[#allocation9 + $0x22a0] sm:$0xff]
    %v9109 = vld [vmem:[#allocation9 + $0x22a8] sm:$0xff]
    %v9110 = vld [vmem:[#allocation9 + $0x22b0] sm:$0xff]
    %v9111 = vld [vmem:[#allocation9 + $0x22b8] sm:$0xff]
    %v9112 = vld [vmem:[#allocation9 + $0x22c0] sm:$0xff]
    %v9113 = vld [vmem:[#allocation9 + $0x22c8] sm:$0xff]
    %v9114 = vld [vmem:[#allocation9 + $0x22d0] sm:$0xff]
    %v9115 = vld [vmem:[#allocation9 + $0x22d8] sm:$0xff]
    %v9116 = vld [vmem:[#allocation9 + $0x22e0] sm:$0xff]
    %v9117 = vld [vmem:[#allocation9 + $0x22e8] sm:$0xff]
    %v9118 = vld [vmem:[#allocation9 + $0x22f0] sm:$0xff]
    %v9119 = vld [vmem:[#allocation9 + $0x22f8] sm:$0xff]
    %v9120 = vld [vmem:[#allocation9 + $0x2300] sm:$0xff]
    %v9121 = vld [vmem:[#allocation9 + $0x2308] sm:$0xff]
    %v9122 = vld [vmem:[#allocation9 + $0x2310] sm:$0xff]
    %v9123 = vld [vmem:[#allocation9 + $0x2318] sm:$0xff]
    %v9124 = vld [vmem:[#allocation9 + $0x2320] sm:$0xff]
    %v9125 = vld [vmem:[#allocation9 + $0x2328] sm:$0xff]
    %v9126 = vld [vmem:[#allocation9 + $0x2330] sm:$0xff]
    %v9127 = vld [vmem:[#allocation9 + $0x2338] sm:$0xff]
    %v9128 = vld [vmem:[#allocation9 + $0x2340] sm:$0xff]
    %v9129 = vld [vmem:[#allocation9 + $0x2348] sm:$0xff]
    %v9130 = vld [vmem:[#allocation9 + $0x2350] sm:$0xff]
    %v9131 = vld [vmem:[#allocation9 + $0x2358] sm:$0xff]
    %v9132 = vld [vmem:[#allocation9 + $0x2360] sm:$0xff]
    %v9133 = vld [vmem:[#allocation9 + $0x2368] sm:$0xff]
    %v9134 = vld [vmem:[#allocation9 + $0x2370] sm:$0xff]
    %v9135 = vld [vmem:[#allocation9 + $0x2378] sm:$0xff]
    %v9136 = vld [vmem:[#allocation9 + $0x2380] sm:$0xff]
    %v9137 = vld [vmem:[#allocation9 + $0x2388] sm:$0xff]
    %v9138 = vld [vmem:[#allocation9 + $0x2390] sm:$0xff]
    %v9139 = vld [vmem:[#allocation9 + $0x2398] sm:$0xff]
    %v9140 = vld [vmem:[#allocation9 + $0x23a0] sm:$0xff]
    %v9141 = vld [vmem:[#allocation9 + $0x23a8] sm:$0xff]
    %v9142 = vld [vmem:[#allocation9 + $0x23b0] sm:$0xff]
    %v9143 = vld [vmem:[#allocation9 + $0x23b8] sm:$0xff]
    %v9144 = vld [vmem:[#allocation9 + $0x23c0] sm:$0xff]
    %v9145 = vld [vmem:[#allocation9 + $0x23c8] sm:$0xff]
    %v9146 = vld [vmem:[#allocation9 + $0x23d0] sm:$0xff]
    %v9147 = vld [vmem:[#allocation9 + $0x23d8] sm:$0xff]
    %v9148 = vld [vmem:[#allocation9 + $0x23e0] sm:$0xff]
    %v9149 = vld [vmem:[#allocation9 + $0x23e8] sm:$0xff]
    %v9150 = vld [vmem:[#allocation9 + $0x23f0] sm:$0xff]
    %v9151 = vld [vmem:[#allocation9 + $0x23f8] sm:$0xff]
    %v9280 = vunpack.c.l.b16 %v9024
    %v9281 = vunpack.c.h.b16 %v9024
    %v9282 = vunpack.c.l.b16 %v9025
    %v9283 = vunpack.c.h.b16 %v9025
    %v9284 = vunpack.c.l.b16 %v9026
    %v9285 = vunpack.c.h.b16 %v9026
    %v9286 = vunpack.c.l.b16 %v9027
    %v9287 = vunpack.c.h.b16 %v9027
    %v9288 = vunpack.c.l.b16 %v9028
    %v9289 = vunpack.c.h.b16 %v9028
    %v9290 = vunpack.c.l.b16 %v9029
    %v9291 = vunpack.c.h.b16 %v9029
    %v9292 = vunpack.c.l.b16 %v9030
    %v9293 = vunpack.c.h.b16 %v9030
    %v9294 = vunpack.c.l.b16 %v9031
    %v9295 = vunpack.c.h.b16 %v9031
    %v9296 = vunpack.c.l.b16 %v9032
    %v9297 = vunpack.c.h.b16 %v9032
    %v9298 = vunpack.c.l.b16 %v9033
    %v9299 = vunpack.c.h.b16 %v9033
    %v9300 = vunpack.c.l.b16 %v9034
    %v9301 = vunpack.c.h.b16 %v9034
    %v9302 = vunpack.c.l.b16 %v9035
    %v9303 = vunpack.c.h.b16 %v9035
    %v9304 = vunpack.c.l.b16 %v9036
    %v9305 = vunpack.c.h.b16 %v9036
    %v9306 = vunpack.c.l.b16 %v9037
    %v9307 = vunpack.c.h.b16 %v9037
    %v9308 = vunpack.c.l.b16 %v9038
    %v9309 = vunpack.c.h.b16 %v9038
    %v9310 = vunpack.c.l.b16 %v9039
    %v9311 = vunpack.c.h.b16 %v9039
    %v9312 = vunpack.c.l.b16 %v9040
    %v9313 = vunpack.c.h.b16 %v9040
    %v9314 = vunpack.c.l.b16 %v9041
    %v9315 = vunpack.c.h.b16 %v9041
    %v9316 = vunpack.c.l.b16 %v9042
    %v9317 = vunpack.c.h.b16 %v9042
    %v9318 = vunpack.c.l.b16 %v9043
    %v9319 = vunpack.c.h.b16 %v9043
    %v9320 = vunpack.c.l.b16 %v9044
    %v9321 = vunpack.c.h.b16 %v9044
    %v9322 = vunpack.c.l.b16 %v9045
    %v9323 = vunpack.c.h.b16 %v9045
    %v9324 = vunpack.c.l.b16 %v9046
    %v9325 = vunpack.c.h.b16 %v9046
    %v9326 = vunpack.c.l.b16 %v9047
    %v9327 = vunpack.c.h.b16 %v9047
    %v9328 = vunpack.c.l.b16 %v9048
    %v9329 = vunpack.c.h.b16 %v9048
    %v9330 = vunpack.c.l.b16 %v9049
    %v9331 = vunpack.c.h.b16 %v9049
    %v9332 = vunpack.c.l.b16 %v9050
    %v9333 = vunpack.c.h.b16 %v9050
    %v9334 = vunpack.c.l.b16 %v9051
    %v9335 = vunpack.c.h.b16 %v9051
    %v9336 = vunpack.c.l.b16 %v9052
    %v9337 = vunpack.c.h.b16 %v9052
    %v9338 = vunpack.c.l.b16 %v9053
    %v9339 = vunpack.c.h.b16 %v9053
    %v9340 = vunpack.c.l.b16 %v9054
    %v9341 = vunpack.c.h.b16 %v9054
    %v9342 = vunpack.c.l.b16 %v9055
    %v9343 = vunpack.c.h.b16 %v9055
    %v9344 = vunpack.c.l.b16 %v9056
    %v9345 = vunpack.c.h.b16 %v9056
    %v9346 = vunpack.c.l.b16 %v9057
    %v9347 = vunpack.c.h.b16 %v9057
    %v9348 = vunpack.c.l.b16 %v9058
    %v9349 = vunpack.c.h.b16 %v9058
    %v9350 = vunpack.c.l.b16 %v9059
    %v9351 = vunpack.c.h.b16 %v9059
    %v9352 = vunpack.c.l.b16 %v9060
    %v9353 = vunpack.c.h.b16 %v9060
    %v9354 = vunpack.c.l.b16 %v9061
    %v9355 = vunpack.c.h.b16 %v9061
    %v9356 = vunpack.c.l.b16 %v9062
    %v9357 = vunpack.c.h.b16 %v9062
    %v9358 = vunpack.c.l.b16 %v9063
    %v9359 = vunpack.c.h.b16 %v9063
    %v9360 = vunpack.c.l.b16 %v9064
    %v9361 = vunpack.c.h.b16 %v9064
    %v9362 = vunpack.c.l.b16 %v9065
    %v9363 = vunpack.c.h.b16 %v9065
    %v9364 = vunpack.c.l.b16 %v9066
    %v9365 = vunpack.c.h.b16 %v9066
    %v9366 = vunpack.c.l.b16 %v9067
    %v9367 = vunpack.c.h.b16 %v9067
    %v9368 = vunpack.c.l.b16 %v9068
    %v9369 = vunpack.c.h.b16 %v9068
    %v9370 = vunpack.c.l.b16 %v9069
    %v9371 = vunpack.c.h.b16 %v9069
    %v9372 = vunpack.c.l.b16 %v9070
    %v9373 = vunpack.c.h.b16 %v9070
    %v9374 = vunpack.c.l.b16 %v9071
    %v9375 = vunpack.c.h.b16 %v9071
    %v9376 = vunpack.c.l.b16 %v9072
    %v9377 = vunpack.c.h.b16 %v9072
    %v9378 = vunpack.c.l.b16 %v9073
    %v9379 = vunpack.c.h.b16 %v9073
    %v9380 = vunpack.c.l.b16 %v9074
    %v9381 = vunpack.c.h.b16 %v9074
    %v9382 = vunpack.c.l.b16 %v9075
    %v9383 = vunpack.c.h.b16 %v9075
    %v9384 = vunpack.c.l.b16 %v9076
    %v9385 = vunpack.c.h.b16 %v9076
    %v9386 = vunpack.c.l.b16 %v9077
    %v9387 = vunpack.c.h.b16 %v9077
    %v9388 = vunpack.c.l.b16 %v9078
    %v9389 = vunpack.c.h.b16 %v9078
    %v9390 = vunpack.c.l.b16 %v9079
    %v9391 = vunpack.c.h.b16 %v9079
    %v9392 = vunpack.c.l.b16 %v9080
    %v9393 = vunpack.c.h.b16 %v9080
    %v9394 = vunpack.c.l.b16 %v9081
    %v9395 = vunpack.c.h.b16 %v9081
    %v9396 = vunpack.c.l.b16 %v9082
    %v9397 = vunpack.c.h.b16 %v9082
    %v9398 = vunpack.c.l.b16 %v9083
    %v9399 = vunpack.c.h.b16 %v9083
    %v9400 = vunpack.c.l.b16 %v9084
    %v9401 = vunpack.c.h.b16 %v9084
    %v9402 = vunpack.c.l.b16 %v9085
    %v9403 = vunpack.c.h.b16 %v9085
    %v9404 = vunpack.c.l.b16 %v9086
    %v9405 = vunpack.c.h.b16 %v9086
    %v9406 = vunpack.c.l.b16 %v9087
    %v9407 = vunpack.c.h.b16 %v9087
    %v9408 = vunpack.c.l.b16 %v9088
    %v9409 = vunpack.c.h.b16 %v9088
    %v9410 = vunpack.c.l.b16 %v9089
    %v9411 = vunpack.c.h.b16 %v9089
    %v9412 = vunpack.c.l.b16 %v9090
    %v9413 = vunpack.c.h.b16 %v9090
    %v9414 = vunpack.c.l.b16 %v9091
    %v9415 = vunpack.c.h.b16 %v9091
    %v9416 = vunpack.c.l.b16 %v9092
    %v9417 = vunpack.c.h.b16 %v9092
    %v9418 = vunpack.c.l.b16 %v9093
    %v9419 = vunpack.c.h.b16 %v9093
    %v9420 = vunpack.c.l.b16 %v9094
    %v9421 = vunpack.c.h.b16 %v9094
    %v9422 = vunpack.c.l.b16 %v9095
    %v9423 = vunpack.c.h.b16 %v9095
    %v9424 = vunpack.c.l.b16 %v9096
    %v9425 = vunpack.c.h.b16 %v9096
    %v9426 = vunpack.c.l.b16 %v9097
    %v9427 = vunpack.c.h.b16 %v9097
    %v9428 = vunpack.c.l.b16 %v9098
    %v9429 = vunpack.c.h.b16 %v9098
    %v9430 = vunpack.c.l.b16 %v9099
    %v9431 = vunpack.c.h.b16 %v9099
    %v9432 = vunpack.c.l.b16 %v9100
    %v9433 = vunpack.c.h.b16 %v9100
    %v9434 = vunpack.c.l.b16 %v9101
    %v9435 = vunpack.c.h.b16 %v9101
    %v9436 = vunpack.c.l.b16 %v9102
    %v9437 = vunpack.c.h.b16 %v9102
    %v9438 = vunpack.c.l.b16 %v9103
    %v9439 = vunpack.c.h.b16 %v9103
    %v9440 = vunpack.c.l.b16 %v9104
    %v9441 = vunpack.c.h.b16 %v9104
    %v9442 = vunpack.c.l.b16 %v9105
    %v9443 = vunpack.c.h.b16 %v9105
    %v9444 = vunpack.c.l.b16 %v9106
    %v9445 = vunpack.c.h.b16 %v9106
    %v9446 = vunpack.c.l.b16 %v9107
    %v9447 = vunpack.c.h.b16 %v9107
    %v9448 = vunpack.c.l.b16 %v9108
    %v9449 = vunpack.c.h.b16 %v9108
    %v9450 = vunpack.c.l.b16 %v9109
    %v9451 = vunpack.c.h.b16 %v9109
    %v9452 = vunpack.c.l.b16 %v9110
    %v9453 = vunpack.c.h.b16 %v9110
    %v9454 = vunpack.c.l.b16 %v9111
    %v9455 = vunpack.c.h.b16 %v9111
    %v9456 = vunpack.c.l.b16 %v9112
    %v9457 = vunpack.c.h.b16 %v9112
    %v9458 = vunpack.c.l.b16 %v9113
    %v9459 = vunpack.c.h.b16 %v9113
    %v9460 = vunpack.c.l.b16 %v9114
    %v9461 = vunpack.c.h.b16 %v9114
    %v9462 = vunpack.c.l.b16 %v9115
    %v9463 = vunpack.c.h.b16 %v9115
    %v9464 = vunpack.c.l.b16 %v9116
    %v9465 = vunpack.c.h.b16 %v9116
    %v9466 = vunpack.c.l.b16 %v9117
    %v9467 = vunpack.c.h.b16 %v9117
    %v9468 = vunpack.c.l.b16 %v9118
    %v9469 = vunpack.c.h.b16 %v9118
    %v9470 = vunpack.c.l.b16 %v9119
    %v9471 = vunpack.c.h.b16 %v9119
    %v9472 = vunpack.c.l.b16 %v9120
    %v9473 = vunpack.c.h.b16 %v9120
    %v9474 = vunpack.c.l.b16 %v9121
    %v9475 = vunpack.c.h.b16 %v9121
    %v9476 = vunpack.c.l.b16 %v9122
    %v9477 = vunpack.c.h.b16 %v9122
    %v9478 = vunpack.c.l.b16 %v9123
    %v9479 = vunpack.c.h.b16 %v9123
    %v9480 = vunpack.c.l.b16 %v9124
    %v9481 = vunpack.c.h.b16 %v9124
    %v9482 = vunpack.c.l.b16 %v9125
    %v9483 = vunpack.c.h.b16 %v9125
    %v9484 = vunpack.c.l.b16 %v9126
    %v9485 = vunpack.c.h.b16 %v9126
    %v9486 = vunpack.c.l.b16 %v9127
    %v9487 = vunpack.c.h.b16 %v9127
    %v9488 = vunpack.c.l.b16 %v9128
    %v9489 = vunpack.c.h.b16 %v9128
    %v9490 = vunpack.c.l.b16 %v9129
    %v9491 = vunpack.c.h.b16 %v9129
    %v9492 = vunpack.c.l.b16 %v9130
    %v9493 = vunpack.c.h.b16 %v9130
    %v9494 = vunpack.c.l.b16 %v9131
    %v9495 = vunpack.c.h.b16 %v9131
    %v9496 = vunpack.c.l.b16 %v9132
    %v9497 = vunpack.c.h.b16 %v9132
    %v9498 = vunpack.c.l.b16 %v9133
    %v9499 = vunpack.c.h.b16 %v9133
    %v9500 = vunpack.c.l.b16 %v9134
    %v9501 = vunpack.c.h.b16 %v9134
    %v9502 = vunpack.c.l.b16 %v9135
    %v9503 = vunpack.c.h.b16 %v9135
    %v9504 = vunpack.c.l.b16 %v9136
    %v9505 = vunpack.c.h.b16 %v9136
    %v9506 = vunpack.c.l.b16 %v9137
    %v9507 = vunpack.c.h.b16 %v9137
    %v9508 = vunpack.c.l.b16 %v9138
    %v9509 = vunpack.c.h.b16 %v9138
    %v9510 = vunpack.c.l.b16 %v9139
    %v9511 = vunpack.c.h.b16 %v9139
    %v9512 = vunpack.c.l.b16 %v9140
    %v9513 = vunpack.c.h.b16 %v9140
    %v9514 = vunpack.c.l.b16 %v9141
    %v9515 = vunpack.c.h.b16 %v9141
    %v9516 = vunpack.c.l.b16 %v9142
    %v9517 = vunpack.c.h.b16 %v9142
    %v9518 = vunpack.c.l.b16 %v9143
    %v9519 = vunpack.c.h.b16 %v9143
    %v9520 = vunpack.c.l.b16 %v9144
    %v9521 = vunpack.c.h.b16 %v9144
    %v9522 = vunpack.c.l.b16 %v9145
    %v9523 = vunpack.c.h.b16 %v9145
    %v9524 = vunpack.c.l.b16 %v9146
    %v9525 = vunpack.c.h.b16 %v9146
    %v9526 = vunpack.c.l.b16 %v9147
    %v9527 = vunpack.c.h.b16 %v9147
    %v9528 = vunpack.c.l.b16 %v9148
    %v9529 = vunpack.c.h.b16 %v9148
    %v9530 = vunpack.c.l.b16 %v9149
    %v9531 = vunpack.c.h.b16 %v9149
    %v9532 = vunpack.c.l.b16 %v9150
    %v9533 = vunpack.c.h.b16 %v9150
    %v9534 = vunpack.c.l.b16 %v9151
    %v9535 = vunpack.c.h.b16 %v9151
    %v9536 = vpack.c.b16 %v9284, %v9280
    %v9537 = vpack.c.b16 %v9285, %v9281
    %v9538 = vpack.c.b16 %v9286, %v9282
    %v9539 = vpack.c.b16 %v9287, %v9283
    %v9540 = vpack.c.b16 %v9292, %v9288
    %v9541 = vpack.c.b16 %v9293, %v9289
    %v9542 = vpack.c.b16 %v9294, %v9290
    %v9543 = vpack.c.b16 %v9295, %v9291
    %v9544 = vpack.c.b16 %v9300, %v9296
    %v9545 = vpack.c.b16 %v9301, %v9297
    %v9546 = vpack.c.b16 %v9302, %v9298
    %v9547 = vpack.c.b16 %v9303, %v9299
    %v9548 = vpack.c.b16 %v9308, %v9304
    %v9549 = vpack.c.b16 %v9309, %v9305
    %v9550 = vpack.c.b16 %v9310, %v9306
    %v9551 = vpack.c.b16 %v9311, %v9307
    %v9552 = vpack.c.b16 %v9316, %v9312
    %v9553 = vpack.c.b16 %v9317, %v9313
    %v9554 = vpack.c.b16 %v9318, %v9314
    %v9555 = vpack.c.b16 %v9319, %v9315
    %v9556 = vpack.c.b16 %v9324, %v9320
    %v9557 = vpack.c.b16 %v9325, %v9321
    %v9558 = vpack.c.b16 %v9326, %v9322
    %v9559 = vpack.c.b16 %v9327, %v9323
    %v9560 = vpack.c.b16 %v9332, %v9328
    %v9561 = vpack.c.b16 %v9333, %v9329
    %v9562 = vpack.c.b16 %v9334, %v9330
    %v9563 = vpack.c.b16 %v9335, %v9331
    %v9564 = vpack.c.b16 %v9340, %v9336
    %v9565 = vpack.c.b16 %v9341, %v9337
    %v9566 = vpack.c.b16 %v9342, %v9338
    %v9567 = vpack.c.b16 %v9343, %v9339
    %v9568 = vpack.c.b16 %v9348, %v9344
    %v9569 = vpack.c.b16 %v9349, %v9345
    %v9570 = vpack.c.b16 %v9350, %v9346
    %v9571 = vpack.c.b16 %v9351, %v9347
    %v9572 = vpack.c.b16 %v9356, %v9352
    %v9573 = vpack.c.b16 %v9357, %v9353
    %v9574 = vpack.c.b16 %v9358, %v9354
    %v9575 = vpack.c.b16 %v9359, %v9355
    %v9576 = vpack.c.b16 %v9364, %v9360
    %v9577 = vpack.c.b16 %v9365, %v9361
    %v9578 = vpack.c.b16 %v9366, %v9362
    %v9579 = vpack.c.b16 %v9367, %v9363
    %v9580 = vpack.c.b16 %v9372, %v9368
    %v9581 = vpack.c.b16 %v9373, %v9369
    %v9582 = vpack.c.b16 %v9374, %v9370
    %v9583 = vpack.c.b16 %v9375, %v9371
    %v9584 = vpack.c.b16 %v9380, %v9376
    %v9585 = vpack.c.b16 %v9381, %v9377
    %v9586 = vpack.c.b16 %v9382, %v9378
    %v9587 = vpack.c.b16 %v9383, %v9379
    %v9588 = vpack.c.b16 %v9388, %v9384
    %v9589 = vpack.c.b16 %v9389, %v9385
    %v9590 = vpack.c.b16 %v9390, %v9386
    %v9591 = vpack.c.b16 %v9391, %v9387
    %v9592 = vpack.c.b16 %v9396, %v9392
    %v9593 = vpack.c.b16 %v9397, %v9393
    %v9594 = vpack.c.b16 %v9398, %v9394
    %v9595 = vpack.c.b16 %v9399, %v9395
    %v9596 = vpack.c.b16 %v9404, %v9400
    %v9597 = vpack.c.b16 %v9405, %v9401
    %v9598 = vpack.c.b16 %v9406, %v9402
    %v9599 = vpack.c.b16 %v9407, %v9403
    %v9600 = vpack.c.b16 %v9412, %v9408
    %v9601 = vpack.c.b16 %v9413, %v9409
    %v9602 = vpack.c.b16 %v9414, %v9410
    %v9603 = vpack.c.b16 %v9415, %v9411
    %v9604 = vpack.c.b16 %v9420, %v9416
    %v9605 = vpack.c.b16 %v9421, %v9417
    %v9606 = vpack.c.b16 %v9422, %v9418
    %v9607 = vpack.c.b16 %v9423, %v9419
    %v9608 = vpack.c.b16 %v9428, %v9424
    %v9609 = vpack.c.b16 %v9429, %v9425
    %v9610 = vpack.c.b16 %v9430, %v9426
    %v9611 = vpack.c.b16 %v9431, %v9427
    %v9612 = vpack.c.b16 %v9436, %v9432
    %v9613 = vpack.c.b16 %v9437, %v9433
    %v9614 = vpack.c.b16 %v9438, %v9434
    %v9615 = vpack.c.b16 %v9439, %v9435
    %v9616 = vpack.c.b16 %v9444, %v9440
    %v9617 = vpack.c.b16 %v9445, %v9441
    %v9618 = vpack.c.b16 %v9446, %v9442
    %v9619 = vpack.c.b16 %v9447, %v9443
    %v9620 = vpack.c.b16 %v9452, %v9448
    %v9621 = vpack.c.b16 %v9453, %v9449
    %v9622 = vpack.c.b16 %v9454, %v9450
    %v9623 = vpack.c.b16 %v9455, %v9451
    %v9624 = vpack.c.b16 %v9460, %v9456
    %v9625 = vpack.c.b16 %v9461, %v9457
    %v9626 = vpack.c.b16 %v9462, %v9458
    %v9627 = vpack.c.b16 %v9463, %v9459
    %v9628 = vpack.c.b16 %v9468, %v9464
    %v9629 = vpack.c.b16 %v9469, %v9465
    %v9630 = vpack.c.b16 %v9470, %v9466
    %v9631 = vpack.c.b16 %v9471, %v9467
    %v9632 = vpack.c.b16 %v9476, %v9472
    %v9633 = vpack.c.b16 %v9477, %v9473
    %v9634 = vpack.c.b16 %v9478, %v9474
    %v9635 = vpack.c.b16 %v9479, %v9475
    %v9636 = vpack.c.b16 %v9484, %v9480
    %v9637 = vpack.c.b16 %v9485, %v9481
    %v9638 = vpack.c.b16 %v9486, %v9482
    %v9639 = vpack.c.b16 %v9487, %v9483
    %v9640 = vpack.c.b16 %v9492, %v9488
    %v9641 = vpack.c.b16 %v9493, %v9489
    %v9642 = vpack.c.b16 %v9494, %v9490
    %v9643 = vpack.c.b16 %v9495, %v9491
    %v9644 = vpack.c.b16 %v9500, %v9496
    %v9645 = vpack.c.b16 %v9501, %v9497
    %v9646 = vpack.c.b16 %v9502, %v9498
    %v9647 = vpack.c.b16 %v9503, %v9499
    %v9648 = vpack.c.b16 %v9508, %v9504
    %v9649 = vpack.c.b16 %v9509, %v9505
    %v9650 = vpack.c.b16 %v9510, %v9506
    %v9651 = vpack.c.b16 %v9511, %v9507
    %v9652 = vpack.c.b16 %v9516, %v9512
    %v9653 = vpack.c.b16 %v9517, %v9513
    %v9654 = vpack.c.b16 %v9518, %v9514
    %v9655 = vpack.c.b16 %v9519, %v9515
    %v9656 = vpack.c.b16 %v9524, %v9520
    %v9657 = vpack.c.b16 %v9525, %v9521
    %v9658 = vpack.c.b16 %v9526, %v9522
    %v9659 = vpack.c.b16 %v9527, %v9523
    %v9660 = vpack.c.b16 %v9532, %v9528
    %v9661 = vpack.c.b16 %v9533, %v9529
    %v9662 = vpack.c.b16 %v9534, %v9530
    %v9663 = vpack.c.b16 %v9535, %v9531
    %9792 = vmatprep.subr.bf16.mxu0 %v9565
    %9793 = vmatpush1.bf16.msra.mxu0 %v9564
    %9794 = vmatprep.subr.bf16.mxu0 %v9561
    %9795 = vmatpush1.bf16.msra.mxu0 %v9560
    %9796 = vmatprep.subr.bf16.mxu0 %v9557
    %9797 = vmatpush1.bf16.msra.mxu0 %v9556
    %9798 = vmatprep.subr.bf16.mxu0 %v9553
    %9799 = vmatpush1.bf16.msra.mxu0 %v9552
    %9800 = vmatprep.subr.bf16.mxu0 %v9549
    %9801 = vmatpush1.bf16.msra.mxu0 %v9548
    %9802 = vmatprep.subr.bf16.mxu0 %v9545
    %9803 = vmatpush1.bf16.msra.mxu0 %v9544
    %9804 = vmatprep.subr.bf16.mxu0 %v9541
    %9805 = vmatpush1.bf16.msra.mxu0 %v9540
    %9806 = vmatprep.subr.bf16.mxu0 %v9537
    %9807 = vmatpush1.bf16.msra.mxu0 %v9536
    %9808 = vmatprep.subr.bf16.mxu0 %v9597
    %9809 = vmatpush2.bf16.msra.mxu0 %v9596
    %9810 = vmatprep.subr.bf16.mxu0 %v9593
    %9811 = vmatpush2.bf16.msra.mxu0 %v9592
    %9812 = vmatprep.subr.bf16.mxu0 %v9589
    %9813 = vmatpush2.bf16.msra.mxu0 %v9588
    %9814 = vmatprep.subr.bf16.mxu0 %v9585
    %9815 = vmatpush2.bf16.msra.mxu0 %v9584
    %9816 = vmatprep.subr.bf16.mxu0 %v9581
    %9817 = vmatpush2.bf16.msra.mxu0 %v9580
    %9818 = vmatprep.subr.bf16.mxu0 %v9577
    %9819 = vmatpush2.bf16.msra.mxu0 %v9576
    %9820 = vmatprep.subr.bf16.mxu0 %v9573
    %9821 = vmatpush2.bf16.msra.mxu0 %v9572
    %9822 = vmatprep.subr.bf16.mxu0 %v9569
    %9823 = vmatpush2.bf16.msra.mxu0 %v9568
    %9824 = vmatprep.mubr.bf16.mxu0 %v9021
    %9825 = vmatmul.mubr.bf16.gmra.mxu0 %v9020
    %v9826 = vpop.f32.mrf.mxu0
    %v9827 = vadd.f32 0.0, %v9826
    %v9828 = vpop.f32.mrf.mxu0
    %v9829 = vadd.f32 0.0, %v9828
    %v9830 = vpop.f32.mrf.mxu0
    %v9831 = vpop.f32.mrf.mxu0
    %9832 = vdwg.mxu0
    %9833 = vmatprep.subr.bf16.mxu0 %v9629
    %9834 = vmatpush1.bf16.msra.mxu0 %v9628
    %9835 = vmatprep.subr.bf16.mxu0 %v9625
    %9836 = vmatpush1.bf16.msra.mxu0 %v9624
    %9837 = vmatprep.subr.bf16.mxu0 %v9621
    %9838 = vmatpush1.bf16.msra.mxu0 %v9620
    %9839 = vmatprep.subr.bf16.mxu0 %v9617
    %9840 = vmatpush1.bf16.msra.mxu0 %v9616
    %9841 = vmatprep.subr.bf16.mxu0 %v9613
    %9842 = vmatpush1.bf16.msra.mxu0 %v9612
    %9843 = vmatprep.subr.bf16.mxu0 %v9609
    %9844 = vmatpush1.bf16.msra.mxu0 %v9608
    %9845 = vmatprep.subr.bf16.mxu0 %v9605
    %9846 = vmatpush1.bf16.msra.mxu0 %v9604
    %9847 = vmatprep.subr.bf16.mxu0 %v9601
    %9848 = vmatpush1.bf16.msra.mxu0 %v9600
    %9849 = vmatprep.subr.bf16.mxu0 %v9661
    %9850 = vmatpush2.bf16.msra.mxu0 %v9660
    %9851 = vmatprep.subr.bf16.mxu0 %v9657
    %9852 = vmatpush2.bf16.msra.mxu0 %v9656
    %9853 = vmatprep.subr.bf16.mxu0 %v9653
    %9854 = vmatpush2.bf16.msra.mxu0 %v9652
    %9855 = vmatprep.subr.bf16.mxu0 %v9649
    %9856 = vmatpush2.bf16.msra.mxu0 %v9648
    %9857 = vmatprep.subr.bf16.mxu0 %v9645
    %9858 = vmatpush2.bf16.msra.mxu0 %v9644
    %9859 = vmatprep.subr.bf16.mxu0 %v9641
    %9860 = vmatpush2.bf16.msra.mxu0 %v9640
    %9861 = vmatprep.subr.bf16.mxu0 %v9637
    %9862 = vmatpush2.bf16.msra.mxu0 %v9636
    %9863 = vmatprep.subr.bf16.mxu0 %v9633
    %9864 = vmatpush2.bf16.msra.mxu0 %v9632
    %9865 = vmatprep.mubr.bf16.mxu0 %v9023
    %9866 = vmatmul.mubr.bf16.gmra.mxu0 %v9022
    %v9867 = vpop.f32.mrf.mxu0
    %v9868 = vadd.f32 %v9827, %v9867
    %v9869 = vpop.f32.mrf.mxu0
    %v9870 = vadd.f32 %v9829, %v9869
    %v9871 = vpop.f32.mrf.mxu0
    %v9872 = vpop.f32.mrf.mxu0
    %9873 = vdwg.mxu0
    %9874 = vmatprep.subr.bf16.mxu0 %v9567
    %9875 = vmatpush1.bf16.msra.mxu0 %v9566
    %9876 = vmatprep.subr.bf16.mxu0 %v9563
    %9877 = vmatpush1.bf16.msra.mxu0 %v9562
    %9878 = vmatprep.subr.bf16.mxu0 %v9559
    %9879 = vmatpush1.bf16.msra.mxu0 %v9558
    %9880 = vmatprep.subr.bf16.mxu0 %v9555
    %9881 = vmatpush1.bf16.msra.mxu0 %v9554
    %9882 = vmatprep.subr.bf16.mxu0 %v9551
    %9883 = vmatpush1.bf16.msra.mxu0 %v9550
    %9884 = vmatprep.subr.bf16.mxu0 %v9547
    %9885 = vmatpush1.bf16.msra.mxu0 %v9546
    %9886 = vmatprep.subr.bf16.mxu0 %v9543
    %9887 = vmatpush1.bf16.msra.mxu0 %v9542
    %9888 = vmatprep.subr.bf16.mxu0 %v9539
    %9889 = vmatpush1.bf16.msra.mxu0 %v9538
    %9890 = vmatprep.subr.bf16.mxu0 %v9599
    %9891 = vmatpush2.bf16.msra.mxu0 %v9598
    %9892 = vmatprep.subr.bf16.mxu0 %v9595
    %9893 = vmatpush2.bf16.msra.mxu0 %v9594
    %9894 = vmatprep.subr.bf16.mxu0 %v9591
    %9895 = vmatpush2.bf16.msra.mxu0 %v9590
    %9896 = vmatprep.subr.bf16.mxu0 %v9587
    %9897 = vmatpush2.bf16.msra.mxu0 %v9586
    %9898 = vmatprep.subr.bf16.mxu0 %v9583
    %9899 = vmatpush2.bf16.msra.mxu0 %v9582
    %9900 = vmatprep.subr.bf16.mxu0 %v9579
    %9901 = vmatpush2.bf16.msra.mxu0 %v9578
    %9902 = vmatprep.subr.bf16.mxu0 %v9575
    %9903 = vmatpush2.bf16.msra.mxu0 %v9574
    %9904 = vmatprep.subr.bf16.mxu0 %v9571
    %9905 = vmatpush2.bf16.msra.mxu0 %v9570
    %9906 = vmatprep.mubr.bf16.mxu0 %v9021
    %9907 = vmatmul.mubr.bf16.gmra.mxu0 %v9020
    %v9908 = vpop.f32.mrf.mxu0
    %v9909 = vadd.f32 0.0, %v9908
    %v9910 = vpop.f32.mrf.mxu0
    %v9911 = vadd.f32 0.0, %v9910
    %v9912 = vpop.f32.mrf.mxu0
    %v9913 = vpop.f32.mrf.mxu0
    %9914 = vdwg.mxu0
    %9915 = vmatprep.subr.bf16.mxu0 %v9631
    %9916 = vmatpush1.bf16.msra.mxu0 %v9630
    %9917 = vmatprep.subr.bf16.mxu0 %v9627
    %9918 = vmatpush1.bf16.msra.mxu0 %v9626
    %9919 = vmatprep.subr.bf16.mxu0 %v9623
    %9920 = vmatpush1.bf16.msra.mxu0 %v9622
    %9921 = vmatprep.subr.bf16.mxu0 %v9619
    %9922 = vmatpush1.bf16.msra.mxu0 %v9618
    %9923 = vmatprep.subr.bf16.mxu0 %v9615
    %9924 = vmatpush1.bf16.msra.mxu0 %v9614
    %9925 = vmatprep.subr.bf16.mxu0 %v9611
    %9926 = vmatpush1.bf16.msra.mxu0 %v9610
    %9927 = vmatprep.subr.bf16.mxu0 %v9607
    %9928 = vmatpush1.bf16.msra.mxu0 %v9606
    %9929 = vmatprep.subr.bf16.mxu0 %v9603
    %9930 = vmatpush1.bf16.msra.mxu0 %v9602
    %9931 = vmatprep.subr.bf16.mxu0 %v9663
    %9932 = vmatpush2.bf16.msra.mxu0 %v9662
    %9933 = vmatprep.subr.bf16.mxu0 %v9659
    %9934 = vmatpush2.bf16.msra.mxu0 %v9658
    %9935 = vmatprep.subr.bf16.mxu0 %v9655
    %9936 = vmatpush2.bf16.msra.mxu0 %v9654
    %9937 = vmatprep.subr.bf16.mxu0 %v9651
    %9938 = vmatpush2.bf16.msra.mxu0 %v9650
    %9939 = vmatprep.subr.bf16.mxu0 %v9647
    %9940 = vmatpush2.bf16.msra.mxu0 %v9646
    %9941 = vmatprep.subr.bf16.mxu0 %v9643
    %9942 = vmatpush2.bf16.msra.mxu0 %v9642
    %9943 = vmatprep.subr.bf16.mxu0 %v9639
    %9944 = vmatpush2.bf16.msra.mxu0 %v9638
    %9945 = vmatprep.subr.bf16.mxu0 %v9635
    %9946 = vmatpush2.bf16.msra.mxu0 %v9634
    %9947 = vmatprep.mubr.bf16.mxu0 %v9023
    %9948 = vmatmul.mubr.bf16.gmra.mxu0 %v9022
    %v9949 = vpop.f32.mrf.mxu0
    %v9950 = vadd.f32 %v9909, %v9949
    %v9951 = vpop.f32.mrf.mxu0
    %v9952 = vadd.f32 %v9911, %v9951
    %v9953 = vpop.f32.mrf.mxu0
    %v9954 = vpop.f32.mrf.mxu0
    %9955 = vdwg.mxu0
    %v9956 = vadd.f32 %v9016, %v9868
    %v9957 = vadd.f32 %v9017, %v9870
    %v9958 = vadd.f32 %v9018, %v9950
    %v9959 = vadd.f32 %v9019, %v9952
    %v9960 = vld [vmem:[#allocation10] sm:$0xf]
    %v9962 = vlaneseq
    %v9963 = vshrl.u32 %v9962, 7
    %v9964 = vsub.s32 0, %v9963
    %v9965 = vrot.slane %v9960, %v9964
    %v9966 = vlaneseq
    %v9967 = vshrl.u32 %v9966, 7
    %v9968 = vsub.s32 1, %v9967
    %v9969 = vrot.slane %v9960, %v9968
    %v9970 = vlaneseq
    %v9971 = vshrl.u32 %v9970, 7
    %v9972 = vsub.s32 2, %v9971
    %v9973 = vrot.slane %v9960, %v9972
    %v9974 = vlaneseq
    %v9975 = vshrl.u32 %v9974, 7
    %v9976 = vsub.s32 3, %v9975
    %v9977 = vrot.slane %v9960, %v9976
    %v9982 = vadd.f32 %v9956, %v9965
    %v9983 = vadd.f32 %v9957, %v9969
    %v9984 = vadd.f32 %v9958, %v9973
    %v9985 = vadd.f32 %v9959, %v9977
    %v9986 = vmax.f32 %v9982, 0.0
    %v9987 = vmax.f32 %v9983, 0.0
    %v9988 = vmax.f32 %v9984, 0.0
    %v9989 = vmax.f32 %v9985, 0.0
    %v9990 = vpack.c.bf16 %v9986, %v9986
    %v9991 = vpack.c.bf16 %v9987, %v9987
    %v9992 = vpack.c.bf16 %v9988, %v9988
    %v9993 = vpack.c.bf16 %v9989, %v9989
    %v9994 = vld [vmem:[#allocation12] sm:$0xf]
    %v9995 = vld [vmem:[#allocation12 + $0x4] sm:$0xf]
    %v9996 = vld [vmem:[#allocation12 + $0x8] sm:$0xf]
    %v9997 = vld [vmem:[#allocation12 + $0xc] sm:$0xf]
    %v9998 = vld [vmem:[#allocation12 + $0x10] sm:$0xf]
    %v9999 = vld [vmem:[#allocation12 + $0x14] sm:$0xf]
    %v10000 = vld [vmem:[#allocation12 + $0x18] sm:$0xf]
    %v10001 = vld [vmem:[#allocation12 + $0x1c] sm:$0xf]
    %v10002 = vld [vmem:[#allocation12 + $0x20] sm:$0xf]
    %v10003 = vld [vmem:[#allocation12 + $0x24] sm:$0xf]
    %v10004 = vld [vmem:[#allocation12 + $0x28] sm:$0xf]
    %v10005 = vld [vmem:[#allocation12 + $0x2c] sm:$0xf]
    %v10006 = vld [vmem:[#allocation12 + $0x30] sm:$0xf]
    %v10007 = vld [vmem:[#allocation12 + $0x34] sm:$0xf]
    %v10008 = vld [vmem:[#allocation12 + $0x38] sm:$0xf]
    %v10009 = vld [vmem:[#allocation12 + $0x3c] sm:$0xf]
    %v10010 = vld [vmem:[#allocation12 + $0x40] sm:$0xf]
    %v10011 = vld [vmem:[#allocation12 + $0x44] sm:$0xf]
    %v10012 = vld [vmem:[#allocation12 + $0x48] sm:$0xf]
    %v10013 = vld [vmem:[#allocation12 + $0x4c] sm:$0xf]
    %v10014 = vld [vmem:[#allocation12 + $0x50] sm:$0xf]
    %v10015 = vld [vmem:[#allocation12 + $0x54] sm:$0xf]
    %v10016 = vld [vmem:[#allocation12 + $0x58] sm:$0xf]
    %v10017 = vld [vmem:[#allocation12 + $0x5c] sm:$0xf]
    %v10018 = vld [vmem:[#allocation12 + $0x60] sm:$0xf]
    %v10019 = vld [vmem:[#allocation12 + $0x64] sm:$0xf]
    %v10020 = vld [vmem:[#allocation12 + $0x68] sm:$0xf]
    %v10021 = vld [vmem:[#allocation12 + $0x6c] sm:$0xf]
    %v10022 = vld [vmem:[#allocation12 + $0x70] sm:$0xf]
    %v10023 = vld [vmem:[#allocation12 + $0x74] sm:$0xf]
    %v10024 = vld [vmem:[#allocation12 + $0x78] sm:$0xf]
    %v10025 = vld [vmem:[#allocation12 + $0x7c] sm:$0xf]
    %v10026 = vld [vmem:[#allocation12 + $0x80] sm:$0xf]
    %v10027 = vld [vmem:[#allocation12 + $0x84] sm:$0xf]
    %v10028 = vld [vmem:[#allocation12 + $0x88] sm:$0xf]
    %v10029 = vld [vmem:[#allocation12 + $0x8c] sm:$0xf]
    %v10030 = vld [vmem:[#allocation12 + $0x90] sm:$0xf]
    %v10031 = vld [vmem:[#allocation12 + $0x94] sm:$0xf]
    %v10032 = vld [vmem:[#allocation12 + $0x98] sm:$0xf]
    %v10033 = vld [vmem:[#allocation12 + $0x9c] sm:$0xf]
    %v10034 = vld [vmem:[#allocation12 + $0xa0] sm:$0xf]
    %v10035 = vld [vmem:[#allocation12 + $0xa4] sm:$0xf]
    %v10036 = vld [vmem:[#allocation12 + $0xa8] sm:$0xf]
    %v10037 = vld [vmem:[#allocation12 + $0xac] sm:$0xf]
    %v10038 = vld [vmem:[#allocation12 + $0xb0] sm:$0xf]
    %v10039 = vld [vmem:[#allocation12 + $0xb4] sm:$0xf]
    %v10040 = vld [vmem:[#allocation12 + $0xb8] sm:$0xf]
    %v10041 = vld [vmem:[#allocation12 + $0xbc] sm:$0xf]
    %v10042 = vld [vmem:[#allocation12 + $0xc0] sm:$0xf]
    %v10043 = vld [vmem:[#allocation12 + $0xc4] sm:$0xf]
    %v10044 = vld [vmem:[#allocation12 + $0xc8] sm:$0xf]
    %v10045 = vld [vmem:[#allocation12 + $0xcc] sm:$0xf]
    %v10046 = vld [vmem:[#allocation12 + $0xd0] sm:$0xf]
    %v10047 = vld [vmem:[#allocation12 + $0xd4] sm:$0xf]
    %v10048 = vld [vmem:[#allocation12 + $0xd8] sm:$0xf]
    %v10049 = vld [vmem:[#allocation12 + $0xdc] sm:$0xf]
    %v10050 = vld [vmem:[#allocation12 + $0xe0] sm:$0xf]
    %v10051 = vld [vmem:[#allocation12 + $0xe4] sm:$0xf]
    %v10052 = vld [vmem:[#allocation12 + $0xe8] sm:$0xf]
    %v10053 = vld [vmem:[#allocation12 + $0xec] sm:$0xf]
    %v10054 = vld [vmem:[#allocation12 + $0xf0] sm:$0xf]
    %v10055 = vld [vmem:[#allocation12 + $0xf4] sm:$0xf]
    %v10056 = vld [vmem:[#allocation12 + $0xf8] sm:$0xf]
    %v10057 = vld [vmem:[#allocation12 + $0xfc] sm:$0xf]
    %v10058 = vld [vmem:[#allocation13] sm:$0x1]
    %v10060 = vlaneseq
    %v10061 = vshrl.u32 %v10060, 7
    %v10062 = vsub.s32 0, %v10061
    %v10063 = vrot.slane %v10058, %v10062
    %v10129 = vunpack.c.l.b16 %v9994
    %v10130 = vunpack.c.l.b16 %v9995
    %v10131 = vunpack.c.l.b16 %v9996
    %v10132 = vunpack.c.l.b16 %v9997
    %v10133 = vunpack.c.l.b16 %v9998
    %v10134 = vunpack.c.l.b16 %v9999
    %v10135 = vunpack.c.l.b16 %v10000
    %v10136 = vunpack.c.l.b16 %v10001
    %v10137 = vunpack.c.l.b16 %v10002
    %v10138 = vunpack.c.l.b16 %v10003
    %v10139 = vunpack.c.l.b16 %v10004
    %v10140 = vunpack.c.l.b16 %v10005
    %v10141 = vunpack.c.l.b16 %v10006
    %v10142 = vunpack.c.l.b16 %v10007
    %v10143 = vunpack.c.l.b16 %v10008
    %v10144 = vunpack.c.l.b16 %v10009
    %v10145 = vunpack.c.l.b16 %v10010
    %v10146 = vunpack.c.l.b16 %v10011
    %v10147 = vunpack.c.l.b16 %v10012
    %v10148 = vunpack.c.l.b16 %v10013
    %v10149 = vunpack.c.l.b16 %v10014
    %v10150 = vunpack.c.l.b16 %v10015
    %v10151 = vunpack.c.l.b16 %v10016
    %v10152 = vunpack.c.l.b16 %v10017
    %v10153 = vunpack.c.l.b16 %v10018
    %v10154 = vunpack.c.l.b16 %v10019
    %v10155 = vunpack.c.l.b16 %v10020
    %v10156 = vunpack.c.l.b16 %v10021
    %v10157 = vunpack.c.l.b16 %v10022
    %v10158 = vunpack.c.l.b16 %v10023
    %v10159 = vunpack.c.l.b16 %v10024
    %v10160 = vunpack.c.l.b16 %v10025
    %v10161 = vunpack.c.l.b16 %v10026
    %v10162 = vunpack.c.l.b16 %v10027
    %v10163 = vunpack.c.l.b16 %v10028
    %v10164 = vunpack.c.l.b16 %v10029
    %v10165 = vunpack.c.l.b16 %v10030
    %v10166 = vunpack.c.l.b16 %v10031
    %v10167 = vunpack.c.l.b16 %v10032
    %v10168 = vunpack.c.l.b16 %v10033
    %v10169 = vunpack.c.l.b16 %v10034
    %v10170 = vunpack.c.l.b16 %v10035
    %v10171 = vunpack.c.l.b16 %v10036
    %v10172 = vunpack.c.l.b16 %v10037
    %v10173 = vunpack.c.l.b16 %v10038
    %v10174 = vunpack.c.l.b16 %v10039
    %v10175 = vunpack.c.l.b16 %v10040
    %v10176 = vunpack.c.l.b16 %v10041
    %v10177 = vunpack.c.l.b16 %v10042
    %v10178 = vunpack.c.l.b16 %v10043
    %v10179 = vunpack.c.l.b16 %v10044
    %v10180 = vunpack.c.l.b16 %v10045
    %v10181 = vunpack.c.l.b16 %v10046
    %v10182 = vunpack.c.l.b16 %v10047
    %v10183 = vunpack.c.l.b16 %v10048
    %v10184 = vunpack.c.l.b16 %v10049
    %v10185 = vunpack.c.l.b16 %v10050
    %v10186 = vunpack.c.l.b16 %v10051
    %v10187 = vunpack.c.l.b16 %v10052
    %v10188 = vunpack.c.l.b16 %v10053
    %v10189 = vunpack.c.l.b16 %v10054
    %v10190 = vunpack.c.l.b16 %v10055
    %v10191 = vunpack.c.l.b16 %v10056
    %v10192 = vunpack.c.l.b16 %v10057
    %v10193 = vpack.c.b16 %v10130, %v10129
    %v10194 = vpack.c.b16 %v10132, %v10131
    %v10195 = vpack.c.b16 %v10134, %v10133
    %v10196 = vpack.c.b16 %v10136, %v10135
    %v10197 = vpack.c.b16 %v10138, %v10137
    %v10198 = vpack.c.b16 %v10140, %v10139
    %v10199 = vpack.c.b16 %v10142, %v10141
    %v10200 = vpack.c.b16 %v10144, %v10143
    %v10201 = vpack.c.b16 %v10146, %v10145
    %v10202 = vpack.c.b16 %v10148, %v10147
    %v10203 = vpack.c.b16 %v10150, %v10149
    %v10204 = vpack.c.b16 %v10152, %v10151
    %v10205 = vpack.c.b16 %v10154, %v10153
    %v10206 = vpack.c.b16 %v10156, %v10155
    %v10207 = vpack.c.b16 %v10158, %v10157
    %v10208 = vpack.c.b16 %v10160, %v10159
    %v10209 = vpack.c.b16 %v10162, %v10161
    %v10210 = vpack.c.b16 %v10164, %v10163
    %v10211 = vpack.c.b16 %v10166, %v10165
    %v10212 = vpack.c.b16 %v10168, %v10167
    %v10213 = vpack.c.b16 %v10170, %v10169
    %v10214 = vpack.c.b16 %v10172, %v10171
    %v10215 = vpack.c.b16 %v10174, %v10173
    %v10216 = vpack.c.b16 %v10176, %v10175
    %v10217 = vpack.c.b16 %v10178, %v10177
    %v10218 = vpack.c.b16 %v10180, %v10179
    %v10219 = vpack.c.b16 %v10182, %v10181
    %v10220 = vpack.c.b16 %v10184, %v10183
    %v10221 = vpack.c.b16 %v10186, %v10185
    %v10222 = vpack.c.b16 %v10188, %v10187
    %v10223 = vpack.c.b16 %v10190, %v10189
    %v10224 = vpack.c.b16 %v10192, %v10191
    %10257 = vmatprep.subr.bf16.mxu0 0
    %10258 = vmatpush1.bf16.msra.mxu0 %v10200
    %10259 = vmatprep.subr.bf16.mxu0 0
    %10260 = vmatpush1.bf16.msra.mxu0 %v10199
    %10261 = vmatprep.subr.bf16.mxu0 0
    %10262 = vmatpush1.bf16.msra.mxu0 %v10198
    %10263 = vmatprep.subr.bf16.mxu0 0
    %10264 = vmatpush1.bf16.msra.mxu0 %v10197
    %10265 = vmatprep.subr.bf16.mxu0 0
    %10266 = vmatpush1.bf16.msra.mxu0 %v10196
    %10267 = vmatprep.subr.bf16.mxu0 0
    %10268 = vmatpush1.bf16.msra.mxu0 %v10195
    %10269 = vmatprep.subr.bf16.mxu0 0
    %10270 = vmatpush1.bf16.msra.mxu0 %v10194
    %10271 = vmatprep.subr.bf16.mxu0 0
    %10272 = vmatpush1.bf16.msra.mxu0 %v10193
    %10273 = vmatprep.subr.bf16.mxu0 0
    %10274 = vmatpush2.bf16.msra.mxu0 %v10208
    %10275 = vmatprep.subr.bf16.mxu0 0
    %10276 = vmatpush2.bf16.msra.mxu0 %v10207
    %10277 = vmatprep.subr.bf16.mxu0 0
    %10278 = vmatpush2.bf16.msra.mxu0 %v10206
    %10279 = vmatprep.subr.bf16.mxu0 0
    %10280 = vmatpush2.bf16.msra.mxu0 %v10205
    %10281 = vmatprep.subr.bf16.mxu0 0
    %10282 = vmatpush2.bf16.msra.mxu0 %v10204
    %10283 = vmatprep.subr.bf16.mxu0 0
    %10284 = vmatpush2.bf16.msra.mxu0 %v10203
    %10285 = vmatprep.subr.bf16.mxu0 0
    %10286 = vmatpush2.bf16.msra.mxu0 %v10202
    %10287 = vmatprep.subr.bf16.mxu0 0
    %10288 = vmatpush2.bf16.msra.mxu0 %v10201
    %10289 = vmatprep.mubr.bf16.mxu0 %v9991
    %10290 = vmatmul.mubr.bf16.gmra.mxu0 %v9990
    %v10291 = vpop.f32.mrf.mxu0
    %v10292 = vadd.f32 %v10063, %v10291
    %v10293 = vpop.f32.mrf.mxu0
    %v10294 = vpop.f32.mrf.mxu0
    %v10295 = vpop.f32.mrf.mxu0
    %10296 = vdwg.mxu0
    %10297 = vmatprep.subr.bf16.mxu0 0
    %10298 = vmatpush1.bf16.msra.mxu0 %v10216
    %10299 = vmatprep.subr.bf16.mxu0 0
    %10300 = vmatpush1.bf16.msra.mxu0 %v10215
    %10301 = vmatprep.subr.bf16.mxu0 0
    %10302 = vmatpush1.bf16.msra.mxu0 %v10214
    %10303 = vmatprep.subr.bf16.mxu0 0
    %10304 = vmatpush1.bf16.msra.mxu0 %v10213
    %10305 = vmatprep.subr.bf16.mxu0 0
    %10306 = vmatpush1.bf16.msra.mxu0 %v10212
    %10307 = vmatprep.subr.bf16.mxu0 0
    %10308 = vmatpush1.bf16.msra.mxu0 %v10211
    %10309 = vmatprep.subr.bf16.mxu0 0
    %10310 = vmatpush1.bf16.msra.mxu0 %v10210
    %10311 = vmatprep.subr.bf16.mxu0 0
    %10312 = vmatpush1.bf16.msra.mxu0 %v10209
    %10313 = vmatprep.subr.bf16.mxu0 0
    %10314 = vmatpush2.bf16.msra.mxu0 %v10224
    %10315 = vmatprep.subr.bf16.mxu0 0
    %10316 = vmatpush2.bf16.msra.mxu0 %v10223
    %10317 = vmatprep.subr.bf16.mxu0 0
    %10318 = vmatpush2.bf16.msra.mxu0 %v10222
    %10319 = vmatprep.subr.bf16.mxu0 0
    %10320 = vmatpush2.bf16.msra.mxu0 %v10221
    %10321 = vmatprep.subr.bf16.mxu0 0
    %10322 = vmatpush2.bf16.msra.mxu0 %v10220
    %10323 = vmatprep.subr.bf16.mxu0 0
    %10324 = vmatpush2.bf16.msra.mxu0 %v10219
    %10325 = vmatprep.subr.bf16.mxu0 0
    %10326 = vmatpush2.bf16.msra.mxu0 %v10218
    %10327 = vmatprep.subr.bf16.mxu0 0
    %10328 = vmatpush2.bf16.msra.mxu0 %v10217
    %10329 = vmatprep.mubr.bf16.mxu0 %v9993
    %10330 = vmatmul.mubr.bf16.gmra.mxu0 %v9992
    %v10331 = vpop.f32.mrf.mxu0
    %v10332 = vadd.f32 %v10292, %v10331
    %v10333 = vpop.f32.mrf.mxu0
    %v10334 = vpop.f32.mrf.mxu0
    %v10335 = vpop.f32.mrf.mxu0
    %10336 = vdwg.mxu0
    %10337 = vst [vmem:[%s9] sm:$0xff] %v10332
    // Predicated region
    $region70: #{dqn_forward.1} parent=1 // pred_check
      _
    $region71: #{dqn_forward.1} parent=1 // pred_check_branch
      %10339 = sbr.rel (0) target = $region73
    $region72: #{dqn_forward.1} parent=1 // pred_region
      _
    $region73: #{dqn_forward.1} parent=1 // pred_fallthru
      _
    // Predicated region
    $region74: #{dqn_forward.1} parent=1 // pred_check
      _
    $region75: #{dqn_forward.1} parent=1 // pred_check_branch
      %10341 = sbr.rel (0) target = $region77
    $region76: #{dqn_forward.1} parent=1 // pred_region
      _
    $region77: #{dqn_forward.1} parent=1 // pred_fallthru
      _
    %10342 = vsyncpa [#allocation3], 1
    %10343 = vsyncpa [#allocation5], 1
    %10344 = vsyncpa [#allocation8], 1
    %10345 = vsyncpa [#allocation11], 1
    %10346 = vsyncpa [#allocation14], 1

</llo_original>
